<compile_context>
chip_gen: v7x
topology: tpu7x:2x2x1
jax: 0.10.0
libtpu: 0.0.40
codegen_flags: <defaults>
</compile_context>

<pallas_src>
from functools import partial

import jax
import jax.numpy as jnp
import numpy as np
from jax.experimental import pallas as pl
from jax.experimental.pallas import tpu as pltpu


def conv_bn_relu_kernel(xs_ref, w_ref, gamma_ref, beta_ref, o_ref, *,
                        inCh, LH, LW, OH, OW, r0, c0, cpg, eps):
    # xs_ref:   (N, inCh, H+4, W+4) input zero-padded by 2, VMEM (tiny, resident)
    # w_ref:    (outCh*inCh*9,) flattened conv weights, SMEM (scalar-indexed)
    # gamma_ref/beta_ref: (outCh,) BN affine params, SMEM
    # o_ref:    (N, cpg, OH, OW) output slab for `cpg` consecutive output channels
    g = pl.program_id(0)
    n = xs_ref.shape[0]
    count = float(n * OH * OW)       # full BatchNorm population (zeros included analytically)
    win_count = float(n * LH * LW)   # live (nonzero) window population

    # Load the tiny padded input once (~24 vregs).  Every shifted (ci,kh,kw) slice is
    # built from this register-resident value exactly once and consumed immediately by
    # all `cpg` channels of this grid step (perf review: hoist slices out of the cc loop).
    x = xs_ref[...]

    accs = [jnp.zeros((n, LH, LW), jnp.float32) for _ in range(cpg)]
    for ci in range(inCh):
        for kh in range(3):
            for kw in range(3):
                sl = x[:, ci, kh:kh + LH, kw:kw + LW]        # one materialisation
                for cc in range(cpg):
                    co = g * cpg + cc
                    w_s = w_ref[co * (inCh * 9) + ci * 9 + kh * 3 + kw]
                    accs[cc] = accs[cc] + sl * w_s

    for cc in range(cpg):
        co = g * cpg + cc
        acc = accs[cc]

        # Training-mode BatchNorm2d stats over the FULL (N, OH, OW) population.
        # Everything outside the live window is exactly 0, so it contributes 0 to the
        # sum and mean^2 per element to the centered sum of squares.
        mean = jnp.sum(acc) / count
        centered = acc - mean
        var = (jnp.sum(centered * centered)
               + (count - win_count) * mean * mean) / count   # biased variance, as in BN
        inv_std = jax.lax.rsqrt(var + eps)
        scale = inv_std * gamma_ref[co]
        shift = beta_ref[co] - mean * scale
        bg = jnp.maximum(shift, 0.0)          # ReLU of the normalized zero background

        # Constant background fill for this channel, then overwrite the live window
        # with the normalized + ReLU'd conv result.
        o_ref[:, cc, :, :] = jnp.broadcast_to(bg, (n, OH, OW)).astype(o_ref.dtype)
        win = jnp.maximum(acc * scale + shift, 0.0).astype(o_ref.dtype)
        o_ref[:, cc, r0:r0 + LH, c0:c0 + LW] = win


def fwd1_pallas(x, w, gamma, beta, *, padding=158, eps=1e-5):
    N, inCh, H, W = x.shape
    outCh, inCh_w, KH, KW = w.shape
    assert inCh_w == inCh
    # Assumptions behind the analytic zero-border optimization (review correctness concern).
    assert (KH, KW) == (3, 3), "kernel assumes a 3x3 convolution (stride 1, no dilation)"
    assert padding >= 2, "analytic zero-border optimization requires padding >= 2"

    OH = H + 2 * padding - 2
    OW = W + 2 * padding - 2
    # Live (nonzero) conv-output window: size (H+2, W+2) starting at (padding-2, padding-2).
    LH, LW = H + 2, W + 2
    r0 = c0 = padding - 2

    # 2 channels per grid step: grid=(outCh//2,) keeps >=2 pipelined steps per v7x core
    # and amortizes the ~0.35us per-step overhead on v5e/v6e.
    cpg = 2 if outCh % 2 == 0 else 1

    # Only pad by 2 (the conv halo of the live window); the huge zero border is analytic.
    xs = jnp.pad(x.astype(jnp.float32), ((0, 0), (0, 0), (2, 2), (2, 2)))
    w_flat = w.reshape(-1).astype(jnp.float32)

    kernel = partial(conv_bn_relu_kernel, inCh=inCh, LH=LH, LW=LW,
                     OH=OH, OW=OW, r0=r0, c0=c0, cpg=cpg, eps=eps)

    return pl.pallas_call(
        kernel,
        out_shape=jax.ShapeDtypeStruct((N, outCh, OH, OW), jnp.float32),
        grid_spec=pltpu.PrefetchScalarGridSpec(
            num_scalar_prefetch=0,
            grid=(outCh // cpg,),
            in_specs=[
                # Tiny padded input (N, inCh, H+4, W+4), resident across all grid steps.
                pl.BlockSpec((N, inCh, H + 4, W + 4), lambda g: (0, 0, 0, 0)),
                # Small scalar-indexed parameters live in SMEM.
                pl.BlockSpec(memory_space=pltpu.MemorySpace.SMEM),
                pl.BlockSpec(memory_space=pltpu.MemorySpace.SMEM),
                pl.BlockSpec(memory_space=pltpu.MemorySpace.SMEM),
            ],
            out_specs=pl.BlockSpec((N, cpg, OH, OW), lambda g: (0, g, 0, 0)),
        ),
        compiler_params=pltpu.CompilerParams(
            # Output channels are fully independent -> shard across TensorCores on v7x.
            dimension_semantics=("parallel",),
            # Live VMEM is ~4.5 MiB; 32 MiB leaves ample headroom even on v7x (64 MiB).
            vmem_limit_bytes=32 * 1024 * 1024,
        ),
    )(xs, w_flat, gamma.astype(jnp.float32), beta.astype(jnp.float32))


def fwd1_ref(x, w, gamma, beta, padding=158, eps=1e-5):
    """Pure-JAX reference matching PyTorch fwd1 (module in default train() mode)."""
    y = jax.lax.conv_general_dilated(
        x, w, window_strides=(1, 1),
        padding=[(padding, padding), (padding, padding)],
        dimension_numbers=("NCHW", "OIHW", "NCHW"),
        precision=jax.lax.Precision.HIGHEST,
    )
    mean = y.mean(axis=(0, 2, 3), keepdims=True)
    var = ((y - mean) ** 2).mean(axis=(0, 2, 3), keepdims=True)  # biased, as in BN
    yn = (y - mean) * jax.lax.rsqrt(var + eps)
    yn = yn * gamma.reshape(1, -1, 1, 1) + beta.reshape(1, -1, 1, 1)
    return jnp.maximum(yn, 0.0)


if __name__ == "__main__":
    key = jax.random.PRNGKey(0)
    k1, k2, k3, k4 = jax.random.split(key, 4)

    N, inCh, H, W = 2, 4, 16, 16
    outCh = 8

    x = jax.random.normal(k1, (N, inCh, H, W), jnp.float32)
    w = jax.random.normal(k2, (outCh, inCh, 3, 3), jnp.float32) / np.sqrt(inCh * 9)
    gamma = 1.0 + 0.1 * jax.random.normal(k3, (outCh,), jnp.float32)
    beta = 0.1 * jax.random.normal(k4, (outCh,), jnp.float32)

    out = fwd1_pallas(x, w, gamma, beta)
    out = jax.block_until_ready(out)

    ref = fwd1_ref(x, w, gamma, beta)
    expected_hw = H + 2 * 158 - 2  # 330
    assert out.shape == (N, outCh, expected_hw, expected_hw), out.shape

    if not jnp.allclose(out, ref, atol=1e-2, rtol=1e-3):
        max_err = float(jnp.max(jnp.abs(out - ref)))
        raise AssertionError(f"Pallas kernel mismatch vs reference, max abs err = {max_err}")

    print("KERNEL_OK")
</pallas_src>

<mosaic_0001>
module attributes {stable_mosaic.version = 11 : i64} {
  func.func @conv_bn_relu_kernel(%arg0: i32, %arg1: memref<2x4x20x20xf32, #tpu.memory_space<vmem>>, %arg2: memref<288xf32, #tpu.memory_space<smem>>, %arg3: memref<8xf32, #tpu.memory_space<smem>>, %arg4: memref<8xf32, #tpu.memory_space<smem>>, %arg5: memref<2x2x330x330xf32, #tpu.memory_space<vmem>>) attributes {dimension_semantics = [#tpu.dimension_semantics<parallel>], iteration_bounds = array<i64: 4>, scalar_prefetch = 0 : i64, scratch_operands = 0 : i64, tpu.core_type = #tpu.core_type<tc>, window_params = [{pipeline_mode = #tpu.pipeline_mode<synchronous>, transform_indices = @transform_0, window_bounds = array<i64: 2, 4, 20, 20>}, {transform_indices = @transform_1, window_bounds = array<i64: 288>}, {transform_indices = @transform_2, window_bounds = array<i64: 8>}, {transform_indices = @transform_3, window_bounds = array<i64: 8>}, {transform_indices = @transform_4, window_bounds = array<i64: 2, 2, 330, 330>}]} {
    %c0 = arith.constant 0 : index
    %c0_0 = arith.constant 0 : index
    %c0_1 = arith.constant 0 : index
    %c0_2 = arith.constant 0 : index
    %0 = vector.load %arg1[%c0, %c0_0, %c0_1, %c0_2] : memref<2x4x20x20xf32, #tpu.memory_space<vmem>>, vector<2x4x20x20xf32>
    %cst = arith.constant 0.000000e+00 : f32
    %1 = vector.broadcast %cst : f32 to vector<2x18x18xf32>
    %cst_3 = arith.constant 0.000000e+00 : f32
    %2 = vector.broadcast %cst_3 : f32 to vector<2x18x18xf32>
    %3 = vector.extract_strided_slice %0 {offsets = [0, 0, 0, 0], sizes = [2, 1, 18, 18], strides = [1, 1, 1, 1]} : vector<2x4x20x20xf32> to vector<2x1x18x18xf32>
    %4 = vector.shape_cast %3 : vector<2x1x18x18xf32> to vector<2x18x18xf32>
    %c2_i32 = arith.constant 2 : i32
    %5 = arith.muli %arg0, %c2_i32 : i32
    %c0_i32 = arith.constant 0 : i32
    %6 = arith.addi %5, %c0_i32 : i32
    %c36_i32 = arith.constant 36 : i32
    %7 = arith.muli %6, %c36_i32 : i32
    %c0_i32_4 = arith.constant 0 : i32
    %8 = arith.addi %7, %c0_i32_4 : i32
    %c0_i32_5 = arith.constant 0 : i32
    %9 = arith.addi %8, %c0_i32_5 : i32
    %c0_i32_6 = arith.constant 0 : i32
    %10 = arith.addi %9, %c0_i32_6 : i32
    %11 = arith.index_cast %10 : i32 to index
    %12 = memref.load %arg2[%11] : memref<288xf32, #tpu.memory_space<smem>>
    %13 = vector.broadcast %12 : f32 to vector<2x18x18xf32>
    %14 = arith.mulf %4, %13 : vector<2x18x18xf32>
    %15 = arith.addf %1, %14 : vector<2x18x18xf32>
    %c2_i32_7 = arith.constant 2 : i32
    %16 = arith.muli %arg0, %c2_i32_7 : i32
    %c1_i32 = arith.constant 1 : i32
    %17 = arith.addi %16, %c1_i32 : i32
    %c36_i32_8 = arith.constant 36 : i32
    %18 = arith.muli %17, %c36_i32_8 : i32
    %c0_i32_9 = arith.constant 0 : i32
    %19 = arith.addi %18, %c0_i32_9 : i32
    %c0_i32_10 = arith.constant 0 : i32
    %20 = arith.addi %19, %c0_i32_10 : i32
    %c0_i32_11 = arith.constant 0 : i32
    %21 = arith.addi %20, %c0_i32_11 : i32
    %22 = arith.index_cast %21 : i32 to index
    %23 = memref.load %arg2[%22] : memref<288xf32, #tpu.memory_space<smem>>
    %24 = vector.broadcast %23 : f32 to vector<2x18x18xf32>
    %25 = arith.mulf %4, %24 : vector<2x18x18xf32>
    %26 = arith.addf %2, %25 : vector<2x18x18xf32>
    %27 = vector.extract_strided_slice %0 {offsets = [0, 0, 0, 1], sizes = [2, 1, 18, 18], strides = [1, 1, 1, 1]} : vector<2x4x20x20xf32> to vector<2x1x18x18xf32>
    %28 = vector.shape_cast %27 : vector<2x1x18x18xf32> to vector<2x18x18xf32>
    %c2_i32_12 = arith.constant 2 : i32
    %29 = arith.muli %arg0, %c2_i32_12 : i32
    %c0_i32_13 = arith.constant 0 : i32
    %30 = arith.addi %29, %c0_i32_13 : i32
    %c36_i32_14 = arith.constant 36 : i32
    %31 = arith.muli %30, %c36_i32_14 : i32
    %c0_i32_15 = arith.constant 0 : i32
    %32 = arith.addi %31, %c0_i32_15 : i32
    %c0_i32_16 = arith.constant 0 : i32
    %33 = arith.addi %32, %c0_i32_16 : i32
    %c1_i32_17 = arith.constant 1 : i32
    %34 = arith.addi %33, %c1_i32_17 : i32
    %35 = arith.index_cast %34 : i32 to index
    %36 = memref.load %arg2[%35] : memref<288xf32, #tpu.memory_space<smem>>
    %37 = vector.broadcast %36 : f32 to vector<2x18x18xf32>
    %38 = arith.mulf %28, %37 : vector<2x18x18xf32>
    %39 = arith.addf %15, %38 : vector<2x18x18xf32>
    %c2_i32_18 = arith.constant 2 : i32
    %40 = arith.muli %arg0, %c2_i32_18 : i32
    %c1_i32_19 = arith.constant 1 : i32
    %41 = arith.addi %40, %c1_i32_19 : i32
    %c36_i32_20 = arith.constant 36 : i32
    %42 = arith.muli %41, %c36_i32_20 : i32
    %c0_i32_21 = arith.constant 0 : i32
    %43 = arith.addi %42, %c0_i32_21 : i32
    %c0_i32_22 = arith.constant 0 : i32
    %44 = arith.addi %43, %c0_i32_22 : i32
    %c1_i32_23 = arith.constant 1 : i32
    %45 = arith.addi %44, %c1_i32_23 : i32
    %46 = arith.index_cast %45 : i32 to index
    %47 = memref.load %arg2[%46] : memref<288xf32, #tpu.memory_space<smem>>
    %48 = vector.broadcast %47 : f32 to vector<2x18x18xf32>
    %49 = arith.mulf %28, %48 : vector<2x18x18xf32>
    %50 = arith.addf %26, %49 : vector<2x18x18xf32>
    %51 = vector.extract_strided_slice %0 {offsets = [0, 0, 0, 2], sizes = [2, 1, 18, 18], strides = [1, 1, 1, 1]} : vector<2x4x20x20xf32> to vector<2x1x18x18xf32>
    %52 = vector.shape_cast %51 : vector<2x1x18x18xf32> to vector<2x18x18xf32>
    %c2_i32_24 = arith.constant 2 : i32
    %53 = arith.muli %arg0, %c2_i32_24 : i32
    %c0_i32_25 = arith.constant 0 : i32
    %54 = arith.addi %53, %c0_i32_25 : i32
    %c36_i32_26 = arith.constant 36 : i32
    %55 = arith.muli %54, %c36_i32_26 : i32
    %c0_i32_27 = arith.constant 0 : i32
    %56 = arith.addi %55, %c0_i32_27 : i32
    %c0_i32_28 = arith.constant 0 : i32
    %57 = arith.addi %56, %c0_i32_28 : i32
    %c2_i32_29 = arith.constant 2 : i32
    %58 = arith.addi %57, %c2_i32_29 : i32
    %59 = arith.index_cast %58 : i32 to index
    %60 = memref.load %arg2[%59] : memref<288xf32, #tpu.memory_space<smem>>
    %61 = vector.broadcast %60 : f32 to vector<2x18x18xf32>
    %62 = arith.mulf %52, %61 : vector<2x18x18xf32>
    %63 = arith.addf %39, %62 : vector<2x18x18xf32>
    %c2_i32_30 = arith.constant 2 : i32
    %64 = arith.muli %arg0, %c2_i32_30 : i32
    %c1_i32_31 = arith.constant 1 : i32
    %65 = arith.addi %64, %c1_i32_31 : i32
    %c36_i32_32 = arith.constant 36 : i32
    %66 = arith.muli %65, %c36_i32_32 : i32
    %c0_i32_33 = arith.constant 0 : i32
    %67 = arith.addi %66, %c0_i32_33 : i32
    %c0_i32_34 = arith.constant 0 : i32
    %68 = arith.addi %67, %c0_i32_34 : i32
    %c2_i32_35 = arith.constant 2 : i32
    %69 = arith.addi %68, %c2_i32_35 : i32
    %70 = arith.index_cast %69 : i32 to index
    %71 = memref.load %arg2[%70] : memref<288xf32, #tpu.memory_space<smem>>
    %72 = vector.broadcast %71 : f32 to vector<2x18x18xf32>
    %73 = arith.mulf %52, %72 : vector<2x18x18xf32>
    %74 = arith.addf %50, %73 : vector<2x18x18xf32>
    %75 = vector.extract_strided_slice %0 {offsets = [0, 0, 1, 0], sizes = [2, 1, 18, 18], strides = [1, 1, 1, 1]} : vector<2x4x20x20xf32> to vector<2x1x18x18xf32>
    %76 = vector.shape_cast %75 : vector<2x1x18x18xf32> to vector<2x18x18xf32>
    %c2_i32_36 = arith.constant 2 : i32
    %77 = arith.muli %arg0, %c2_i32_36 : i32
    %c0_i32_37 = arith.constant 0 : i32
    %78 = arith.addi %77, %c0_i32_37 : i32
    %c36_i32_38 = arith.constant 36 : i32
    %79 = arith.muli %78, %c36_i32_38 : i32
    %c0_i32_39 = arith.constant 0 : i32
    %80 = arith.addi %79, %c0_i32_39 : i32
    %c3_i32 = arith.constant 3 : i32
    %81 = arith.addi %80, %c3_i32 : i32
    %c0_i32_40 = arith.constant 0 : i32
    %82 = arith.addi %81, %c0_i32_40 : i32
    %83 = arith.index_cast %82 : i32 to index
    %84 = memref.load %arg2[%83] : memref<288xf32, #tpu.memory_space<smem>>
    %85 = vector.broadcast %84 : f32 to vector<2x18x18xf32>
    %86 = arith.mulf %76, %85 : vector<2x18x18xf32>
    %87 = arith.addf %63, %86 : vector<2x18x18xf32>
    %c2_i32_41 = arith.constant 2 : i32
    %88 = arith.muli %arg0, %c2_i32_41 : i32
    %c1_i32_42 = arith.constant 1 : i32
    %89 = arith.addi %88, %c1_i32_42 : i32
    %c36_i32_43 = arith.constant 36 : i32
    %90 = arith.muli %89, %c36_i32_43 : i32
    %c0_i32_44 = arith.constant 0 : i32
    %91 = arith.addi %90, %c0_i32_44 : i32
    %c3_i32_45 = arith.constant 3 : i32
    %92 = arith.addi %91, %c3_i32_45 : i32
    %c0_i32_46 = arith.constant 0 : i32
    %93 = arith.addi %92, %c0_i32_46 : i32
    %94 = arith.index_cast %93 : i32 to index
    %95 = memref.load %arg2[%94] : memref<288xf32, #tpu.memory_space<smem>>
    %96 = vector.broadcast %95 : f32 to vector<2x18x18xf32>
    %97 = arith.mulf %76, %96 : vector<2x18x18xf32>
    %98 = arith.addf %74, %97 : vector<2x18x18xf32>
    %99 = vector.extract_strided_slice %0 {offsets = [0, 0, 1, 1], sizes = [2, 1, 18, 18], strides = [1, 1, 1, 1]} : vector<2x4x20x20xf32> to vector<2x1x18x18xf32>
    %100 = vector.shape_cast %99 : vector<2x1x18x18xf32> to vector<2x18x18xf32>
    %c2_i32_47 = arith.constant 2 : i32
    %101 = arith.muli %arg0, %c2_i32_47 : i32
    %c0_i32_48 = arith.constant 0 : i32
    %102 = arith.addi %101, %c0_i32_48 : i32
    %c36_i32_49 = arith.constant 36 : i32
    %103 = arith.muli %102, %c36_i32_49 : i32
    %c0_i32_50 = arith.constant 0 : i32
    %104 = arith.addi %103, %c0_i32_50 : i32
    %c3_i32_51 = arith.constant 3 : i32
    %105 = arith.addi %104, %c3_i32_51 : i32
    %c1_i32_52 = arith.constant 1 : i32
    %106 = arith.addi %105, %c1_i32_52 : i32
    %107 = arith.index_cast %106 : i32 to index
    %108 = memref.load %arg2[%107] : memref<288xf32, #tpu.memory_space<smem>>
    %109 = vector.broadcast %108 : f32 to vector<2x18x18xf32>
    %110 = arith.mulf %100, %109 : vector<2x18x18xf32>
    %111 = arith.addf %87, %110 : vector<2x18x18xf32>
    %c2_i32_53 = arith.constant 2 : i32
    %112 = arith.muli %arg0, %c2_i32_53 : i32
    %c1_i32_54 = arith.constant 1 : i32
    %113 = arith.addi %112, %c1_i32_54 : i32
    %c36_i32_55 = arith.constant 36 : i32
    %114 = arith.muli %113, %c36_i32_55 : i32
    %c0_i32_56 = arith.constant 0 : i32
    %115 = arith.addi %114, %c0_i32_56 : i32
    %c3_i32_57 = arith.constant 3 : i32
    %116 = arith.addi %115, %c3_i32_57 : i32
    %c1_i32_58 = arith.constant 1 : i32
    %117 = arith.addi %116, %c1_i32_58 : i32
    %118 = arith.index_cast %117 : i32 to index
    %119 = memref.load %arg2[%118] : memref<288xf32, #tpu.memory_space<smem>>
    %120 = vector.broadcast %119 : f32 to vector<2x18x18xf32>
    %121 = arith.mulf %100, %120 : vector<2x18x18xf32>
    %122 = arith.addf %98, %121 : vector<2x18x18xf32>
    %123 = vector.extract_strided_slice %0 {offsets = [0, 0, 1, 2], sizes = [2, 1, 18, 18], strides = [1, 1, 1, 1]} : vector<2x4x20x20xf32> to vector<2x1x18x18xf32>
    %124 = vector.shape_cast %123 : vector<2x1x18x18xf32> to vector<2x18x18xf32>
    %c2_i32_59 = arith.constant 2 : i32
    %125 = arith.muli %arg0, %c2_i32_59 : i32
    %c0_i32_60 = arith.constant 0 : i32
    %126 = arith.addi %125, %c0_i32_60 : i32
    %c36_i32_61 = arith.constant 36 : i32
    %127 = arith.muli %126, %c36_i32_61 : i32
    %c0_i32_62 = arith.constant 0 : i32
    %128 = arith.addi %127, %c0_i32_62 : i32
    %c3_i32_63 = arith.constant 3 : i32
    %129 = arith.addi %128, %c3_i32_63 : i32
    %c2_i32_64 = arith.constant 2 : i32
    %130 = arith.addi %129, %c2_i32_64 : i32
    %131 = arith.index_cast %130 : i32 to index
    %132 = memref.load %arg2[%131] : memref<288xf32, #tpu.memory_space<smem>>
    %133 = vector.broadcast %132 : f32 to vector<2x18x18xf32>
    %134 = arith.mulf %124, %133 : vector<2x18x18xf32>
    %135 = arith.addf %111, %134 : vector<2x18x18xf32>
    %c2_i32_65 = arith.constant 2 : i32
    %136 = arith.muli %arg0, %c2_i32_65 : i32
    %c1_i32_66 = arith.constant 1 : i32
    %137 = arith.addi %136, %c1_i32_66 : i32
    %c36_i32_67 = arith.constant 36 : i32
    %138 = arith.muli %137, %c36_i32_67 : i32
    %c0_i32_68 = arith.constant 0 : i32
    %139 = arith.addi %138, %c0_i32_68 : i32
    %c3_i32_69 = arith.constant 3 : i32
    %140 = arith.addi %139, %c3_i32_69 : i32
    %c2_i32_70 = arith.constant 2 : i32
    %141 = arith.addi %140, %c2_i32_70 : i32
    %142 = arith.index_cast %141 : i32 to index
    %143 = memref.load %arg2[%142] : memref<288xf32, #tpu.memory_space<smem>>
    %144 = vector.broadcast %143 : f32 to vector<2x18x18xf32>
    %145 = arith.mulf %124, %144 : vector<2x18x18xf32>
    %146 = arith.addf %122, %145 : vector<2x18x18xf32>
    %147 = vector.extract_strided_slice %0 {offsets = [0, 0, 2, 0], sizes = [2, 1, 18, 18], strides = [1, 1, 1, 1]} : vector<2x4x20x20xf32> to vector<2x1x18x18xf32>
    %148 = vector.shape_cast %147 : vector<2x1x18x18xf32> to vector<2x18x18xf32>
    %c2_i32_71 = arith.constant 2 : i32
    %149 = arith.muli %arg0, %c2_i32_71 : i32
    %c0_i32_72 = arith.constant 0 : i32
    %150 = arith.addi %149, %c0_i32_72 : i32
    %c36_i32_73 = arith.constant 36 : i32
    %151 = arith.muli %150, %c36_i32_73 : i32
    %c0_i32_74 = arith.constant 0 : i32
    %152 = arith.addi %151, %c0_i32_74 : i32
    %c6_i32 = arith.constant 6 : i32
    %153 = arith.addi %152, %c6_i32 : i32
    %c0_i32_75 = arith.constant 0 : i32
    %154 = arith.addi %153, %c0_i32_75 : i32
    %155 = arith.index_cast %154 : i32 to index
    %156 = memref.load %arg2[%155] : memref<288xf32, #tpu.memory_space<smem>>
    %157 = vector.broadcast %156 : f32 to vector<2x18x18xf32>
    %158 = arith.mulf %148, %157 : vector<2x18x18xf32>
    %159 = arith.addf %135, %158 : vector<2x18x18xf32>
    %c2_i32_76 = arith.constant 2 : i32
    %160 = arith.muli %arg0, %c2_i32_76 : i32
    %c1_i32_77 = arith.constant 1 : i32
    %161 = arith.addi %160, %c1_i32_77 : i32
    %c36_i32_78 = arith.constant 36 : i32
    %162 = arith.muli %161, %c36_i32_78 : i32
    %c0_i32_79 = arith.constant 0 : i32
    %163 = arith.addi %162, %c0_i32_79 : i32
    %c6_i32_80 = arith.constant 6 : i32
    %164 = arith.addi %163, %c6_i32_80 : i32
    %c0_i32_81 = arith.constant 0 : i32
    %165 = arith.addi %164, %c0_i32_81 : i32
    %166 = arith.index_cast %165 : i32 to index
    %167 = memref.load %arg2[%166] : memref<288xf32, #tpu.memory_space<smem>>
    %168 = vector.broadcast %167 : f32 to vector<2x18x18xf32>
    %169 = arith.mulf %148, %168 : vector<2x18x18xf32>
    %170 = arith.addf %146, %169 : vector<2x18x18xf32>
    %171 = vector.extract_strided_slice %0 {offsets = [0, 0, 2, 1], sizes = [2, 1, 18, 18], strides = [1, 1, 1, 1]} : vector<2x4x20x20xf32> to vector<2x1x18x18xf32>
    %172 = vector.shape_cast %171 : vector<2x1x18x18xf32> to vector<2x18x18xf32>
    %c2_i32_82 = arith.constant 2 : i32
    %173 = arith.muli %arg0, %c2_i32_82 : i32
    %c0_i32_83 = arith.constant 0 : i32
    %174 = arith.addi %173, %c0_i32_83 : i32
    %c36_i32_84 = arith.constant 36 : i32
    %175 = arith.muli %174, %c36_i32_84 : i32
    %c0_i32_85 = arith.constant 0 : i32
    %176 = arith.addi %175, %c0_i32_85 : i32
    %c6_i32_86 = arith.constant 6 : i32
    %177 = arith.addi %176, %c6_i32_86 : i32
    %c1_i32_87 = arith.constant 1 : i32
    %178 = arith.addi %177, %c1_i32_87 : i32
    %179 = arith.index_cast %178 : i32 to index
    %180 = memref.load %arg2[%179] : memref<288xf32, #tpu.memory_space<smem>>
    %181 = vector.broadcast %180 : f32 to vector<2x18x18xf32>
    %182 = arith.mulf %172, %181 : vector<2x18x18xf32>
    %183 = arith.addf %159, %182 : vector<2x18x18xf32>
    %c2_i32_88 = arith.constant 2 : i32
    %184 = arith.muli %arg0, %c2_i32_88 : i32
    %c1_i32_89 = arith.constant 1 : i32
    %185 = arith.addi %184, %c1_i32_89 : i32
    %c36_i32_90 = arith.constant 36 : i32
    %186 = arith.muli %185, %c36_i32_90 : i32
    %c0_i32_91 = arith.constant 0 : i32
    %187 = arith.addi %186, %c0_i32_91 : i32
    %c6_i32_92 = arith.constant 6 : i32
    %188 = arith.addi %187, %c6_i32_92 : i32
    %c1_i32_93 = arith.constant 1 : i32
    %189 = arith.addi %188, %c1_i32_93 : i32
    %190 = arith.index_cast %189 : i32 to index
    %191 = memref.load %arg2[%190] : memref<288xf32, #tpu.memory_space<smem>>
    %192 = vector.broadcast %191 : f32 to vector<2x18x18xf32>
    %193 = arith.mulf %172, %192 : vector<2x18x18xf32>
    %194 = arith.addf %170, %193 : vector<2x18x18xf32>
    %195 = vector.extract_strided_slice %0 {offsets = [0, 0, 2, 2], sizes = [2, 1, 18, 18], strides = [1, 1, 1, 1]} : vector<2x4x20x20xf32> to vector<2x1x18x18xf32>
    %196 = vector.shape_cast %195 : vector<2x1x18x18xf32> to vector<2x18x18xf32>
    %c2_i32_94 = arith.constant 2 : i32
    %197 = arith.muli %arg0, %c2_i32_94 : i32
    %c0_i32_95 = arith.constant 0 : i32
    %198 = arith.addi %197, %c0_i32_95 : i32
    %c36_i32_96 = arith.constant 36 : i32
    %199 = arith.muli %198, %c36_i32_96 : i32
    %c0_i32_97 = arith.constant 0 : i32
    %200 = arith.addi %199, %c0_i32_97 : i32
    %c6_i32_98 = arith.constant 6 : i32
    %201 = arith.addi %200, %c6_i32_98 : i32
    %c2_i32_99 = arith.constant 2 : i32
    %202 = arith.addi %201, %c2_i32_99 : i32
    %203 = arith.index_cast %202 : i32 to index
    %204 = memref.load %arg2[%203] : memref<288xf32, #tpu.memory_space<smem>>
    %205 = vector.broadcast %204 : f32 to vector<2x18x18xf32>
    %206 = arith.mulf %196, %205 : vector<2x18x18xf32>
    %207 = arith.addf %183, %206 : vector<2x18x18xf32>
    %c2_i32_100 = arith.constant 2 : i32
    %208 = arith.muli %arg0, %c2_i32_100 : i32
    %c1_i32_101 = arith.constant 1 : i32
    %209 = arith.addi %208, %c1_i32_101 : i32
    %c36_i32_102 = arith.constant 36 : i32
    %210 = arith.muli %209, %c36_i32_102 : i32
    %c0_i32_103 = arith.constant 0 : i32
    %211 = arith.addi %210, %c0_i32_103 : i32
    %c6_i32_104 = arith.constant 6 : i32
    %212 = arith.addi %211, %c6_i32_104 : i32
    %c2_i32_105 = arith.constant 2 : i32
    %213 = arith.addi %212, %c2_i32_105 : i32
    %214 = arith.index_cast %213 : i32 to index
    %215 = memref.load %arg2[%214] : memref<288xf32, #tpu.memory_space<smem>>
    %216 = vector.broadcast %215 : f32 to vector<2x18x18xf32>
    %217 = arith.mulf %196, %216 : vector<2x18x18xf32>
    %218 = arith.addf %194, %217 : vector<2x18x18xf32>
    %219 = vector.extract_strided_slice %0 {offsets = [0, 1, 0, 0], sizes = [2, 1, 18, 18], strides = [1, 1, 1, 1]} : vector<2x4x20x20xf32> to vector<2x1x18x18xf32>
    %220 = vector.shape_cast %219 : vector<2x1x18x18xf32> to vector<2x18x18xf32>
    %c2_i32_106 = arith.constant 2 : i32
    %221 = arith.muli %arg0, %c2_i32_106 : i32
    %c0_i32_107 = arith.constant 0 : i32
    %222 = arith.addi %221, %c0_i32_107 : i32
    %c36_i32_108 = arith.constant 36 : i32
    %223 = arith.muli %222, %c36_i32_108 : i32
    %c9_i32 = arith.constant 9 : i32
    %224 = arith.addi %223, %c9_i32 : i32
    %c0_i32_109 = arith.constant 0 : i32
    %225 = arith.addi %224, %c0_i32_109 : i32
    %c0_i32_110 = arith.constant 0 : i32
    %226 = arith.addi %225, %c0_i32_110 : i32
    %227 = arith.index_cast %226 : i32 to index
    %228 = memref.load %arg2[%227] : memref<288xf32, #tpu.memory_space<smem>>
    %229 = vector.broadcast %228 : f32 to vector<2x18x18xf32>
    %230 = arith.mulf %220, %229 : vector<2x18x18xf32>
    %231 = arith.addf %207, %230 : vector<2x18x18xf32>
    %c2_i32_111 = arith.constant 2 : i32
    %232 = arith.muli %arg0, %c2_i32_111 : i32
    %c1_i32_112 = arith.constant 1 : i32
    %233 = arith.addi %232, %c1_i32_112 : i32
    %c36_i32_113 = arith.constant 36 : i32
    %234 = arith.muli %233, %c36_i32_113 : i32
    %c9_i32_114 = arith.constant 9 : i32
    %235 = arith.addi %234, %c9_i32_114 : i32
    %c0_i32_115 = arith.constant 0 : i32
    %236 = arith.addi %235, %c0_i32_115 : i32
    %c0_i32_116 = arith.constant 0 : i32
    %237 = arith.addi %236, %c0_i32_116 : i32
    %238 = arith.index_cast %237 : i32 to index
    %239 = memref.load %arg2[%238] : memref<288xf32, #tpu.memory_space<smem>>
    %240 = vector.broadcast %239 : f32 to vector<2x18x18xf32>
    %241 = arith.mulf %220, %240 : vector<2x18x18xf32>
    %242 = arith.addf %218, %241 : vector<2x18x18xf32>
    %243 = vector.extract_strided_slice %0 {offsets = [0, 1, 0, 1], sizes = [2, 1, 18, 18], strides = [1, 1, 1, 1]} : vector<2x4x20x20xf32> to vector<2x1x18x18xf32>
    %244 = vector.shape_cast %243 : vector<2x1x18x18xf32> to vector<2x18x18xf32>
    %c2_i32_117 = arith.constant 2 : i32
    %245 = arith.muli %arg0, %c2_i32_117 : i32
    %c0_i32_118 = arith.constant 0 : i32
    %246 = arith.addi %245, %c0_i32_118 : i32
    %c36_i32_119 = arith.constant 36 : i32
    %247 = arith.muli %246, %c36_i32_119 : i32
    %c9_i32_120 = arith.constant 9 : i32
    %248 = arith.addi %247, %c9_i32_120 : i32
    %c0_i32_121 = arith.constant 0 : i32
    %249 = arith.addi %248, %c0_i32_121 : i32
    %c1_i32_122 = arith.constant 1 : i32
    %250 = arith.addi %249, %c1_i32_122 : i32
    %251 = arith.index_cast %250 : i32 to index
    %252 = memref.load %arg2[%251] : memref<288xf32, #tpu.memory_space<smem>>
    %253 = vector.broadcast %252 : f32 to vector<2x18x18xf32>
    %254 = arith.mulf %244, %253 : vector<2x18x18xf32>
    %255 = arith.addf %231, %254 : vector<2x18x18xf32>
    %c2_i32_123 = arith.constant 2 : i32
    %256 = arith.muli %arg0, %c2_i32_123 : i32
    %c1_i32_124 = arith.constant 1 : i32
    %257 = arith.addi %256, %c1_i32_124 : i32
    %c36_i32_125 = arith.constant 36 : i32
    %258 = arith.muli %257, %c36_i32_125 : i32
    %c9_i32_126 = arith.constant 9 : i32
    %259 = arith.addi %258, %c9_i32_126 : i32
    %c0_i32_127 = arith.constant 0 : i32
    %260 = arith.addi %259, %c0_i32_127 : i32
    %c1_i32_128 = arith.constant 1 : i32
    %261 = arith.addi %260, %c1_i32_128 : i32
    %262 = arith.index_cast %261 : i32 to index
    %263 = memref.load %arg2[%262] : memref<288xf32, #tpu.memory_space<smem>>
    %264 = vector.broadcast %263 : f32 to vector<2x18x18xf32>
    %265 = arith.mulf %244, %264 : vector<2x18x18xf32>
    %266 = arith.addf %242, %265 : vector<2x18x18xf32>
    %267 = vector.extract_strided_slice %0 {offsets = [0, 1, 0, 2], sizes = [2, 1, 18, 18], strides = [1, 1, 1, 1]} : vector<2x4x20x20xf32> to vector<2x1x18x18xf32>
    %268 = vector.shape_cast %267 : vector<2x1x18x18xf32> to vector<2x18x18xf32>
    %c2_i32_129 = arith.constant 2 : i32
    %269 = arith.muli %arg0, %c2_i32_129 : i32
    %c0_i32_130 = arith.constant 0 : i32
    %270 = arith.addi %269, %c0_i32_130 : i32
    %c36_i32_131 = arith.constant 36 : i32
    %271 = arith.muli %270, %c36_i32_131 : i32
    %c9_i32_132 = arith.constant 9 : i32
    %272 = arith.addi %271, %c9_i32_132 : i32
    %c0_i32_133 = arith.constant 0 : i32
    %273 = arith.addi %272, %c0_i32_133 : i32
    %c2_i32_134 = arith.constant 2 : i32
    %274 = arith.addi %273, %c2_i32_134 : i32
    %275 = arith.index_cast %274 : i32 to index
    %276 = memref.load %arg2[%275] : memref<288xf32, #tpu.memory_space<smem>>
    %277 = vector.broadcast %276 : f32 to vector<2x18x18xf32>
    %278 = arith.mulf %268, %277 : vector<2x18x18xf32>
    %279 = arith.addf %255, %278 : vector<2x18x18xf32>
    %c2_i32_135 = arith.constant 2 : i32
    %280 = arith.muli %arg0, %c2_i32_135 : i32
    %c1_i32_136 = arith.constant 1 : i32
    %281 = arith.addi %280, %c1_i32_136 : i32
    %c36_i32_137 = arith.constant 36 : i32
    %282 = arith.muli %281, %c36_i32_137 : i32
    %c9_i32_138 = arith.constant 9 : i32
    %283 = arith.addi %282, %c9_i32_138 : i32
    %c0_i32_139 = arith.constant 0 : i32
    %284 = arith.addi %283, %c0_i32_139 : i32
    %c2_i32_140 = arith.constant 2 : i32
    %285 = arith.addi %284, %c2_i32_140 : i32
    %286 = arith.index_cast %285 : i32 to index
    %287 = memref.load %arg2[%286] : memref<288xf32, #tpu.memory_space<smem>>
    %288 = vector.broadcast %287 : f32 to vector<2x18x18xf32>
    %289 = arith.mulf %268, %288 : vector<2x18x18xf32>
    %290 = arith.addf %266, %289 : vector<2x18x18xf32>
    %291 = vector.extract_strided_slice %0 {offsets = [0, 1, 1, 0], sizes = [2, 1, 18, 18], strides = [1, 1, 1, 1]} : vector<2x4x20x20xf32> to vector<2x1x18x18xf32>
    %292 = vector.shape_cast %291 : vector<2x1x18x18xf32> to vector<2x18x18xf32>
    %c2_i32_141 = arith.constant 2 : i32
    %293 = arith.muli %arg0, %c2_i32_141 : i32
    %c0_i32_142 = arith.constant 0 : i32
    %294 = arith.addi %293, %c0_i32_142 : i32
    %c36_i32_143 = arith.constant 36 : i32
    %295 = arith.muli %294, %c36_i32_143 : i32
    %c9_i32_144 = arith.constant 9 : i32
    %296 = arith.addi %295, %c9_i32_144 : i32
    %c3_i32_145 = arith.constant 3 : i32
    %297 = arith.addi %296, %c3_i32_145 : i32
    %c0_i32_146 = arith.constant 0 : i32
    %298 = arith.addi %297, %c0_i32_146 : i32
    %299 = arith.index_cast %298 : i32 to index
    %300 = memref.load %arg2[%299] : memref<288xf32, #tpu.memory_space<smem>>
    %301 = vector.broadcast %300 : f32 to vector<2x18x18xf32>
    %302 = arith.mulf %292, %301 : vector<2x18x18xf32>
    %303 = arith.addf %279, %302 : vector<2x18x18xf32>
    %c2_i32_147 = arith.constant 2 : i32
    %304 = arith.muli %arg0, %c2_i32_147 : i32
    %c1_i32_148 = arith.constant 1 : i32
    %305 = arith.addi %304, %c1_i32_148 : i32
    %c36_i32_149 = arith.constant 36 : i32
    %306 = arith.muli %305, %c36_i32_149 : i32
    %c9_i32_150 = arith.constant 9 : i32
    %307 = arith.addi %306, %c9_i32_150 : i32
    %c3_i32_151 = arith.constant 3 : i32
    %308 = arith.addi %307, %c3_i32_151 : i32
    %c0_i32_152 = arith.constant 0 : i32
    %309 = arith.addi %308, %c0_i32_152 : i32
    %310 = arith.index_cast %309 : i32 to index
    %311 = memref.load %arg2[%310] : memref<288xf32, #tpu.memory_space<smem>>
    %312 = vector.broadcast %311 : f32 to vector<2x18x18xf32>
    %313 = arith.mulf %292, %312 : vector<2x18x18xf32>
    %314 = arith.addf %290, %313 : vector<2x18x18xf32>
    %315 = vector.extract_strided_slice %0 {offsets = [0, 1, 1, 1], sizes = [2, 1, 18, 18], strides = [1, 1, 1, 1]} : vector<2x4x20x20xf32> to vector<2x1x18x18xf32>
    %316 = vector.shape_cast %315 : vector<2x1x18x18xf32> to vector<2x18x18xf32>
    %c2_i32_153 = arith.constant 2 : i32
    %317 = arith.muli %arg0, %c2_i32_153 : i32
    %c0_i32_154 = arith.constant 0 : i32
    %318 = arith.addi %317, %c0_i32_154 : i32
    %c36_i32_155 = arith.constant 36 : i32
    %319 = arith.muli %318, %c36_i32_155 : i32
    %c9_i32_156 = arith.constant 9 : i32
    %320 = arith.addi %319, %c9_i32_156 : i32
    %c3_i32_157 = arith.constant 3 : i32
    %321 = arith.addi %320, %c3_i32_157 : i32
    %c1_i32_158 = arith.constant 1 : i32
    %322 = arith.addi %321, %c1_i32_158 : i32
    %323 = arith.index_cast %322 : i32 to index
    %324 = memref.load %arg2[%323] : memref<288xf32, #tpu.memory_space<smem>>
    %325 = vector.broadcast %324 : f32 to vector<2x18x18xf32>
    %326 = arith.mulf %316, %325 : vector<2x18x18xf32>
    %327 = arith.addf %303, %326 : vector<2x18x18xf32>
    %c2_i32_159 = arith.constant 2 : i32
    %328 = arith.muli %arg0, %c2_i32_159 : i32
    %c1_i32_160 = arith.constant 1 : i32
    %329 = arith.addi %328, %c1_i32_160 : i32
    %c36_i32_161 = arith.constant 36 : i32
    %330 = arith.muli %329, %c36_i32_161 : i32
    %c9_i32_162 = arith.constant 9 : i32
    %331 = arith.addi %330, %c9_i32_162 : i32
    %c3_i32_163 = arith.constant 3 : i32
    %332 = arith.addi %331, %c3_i32_163 : i32
    %c1_i32_164 = arith.constant 1 : i32
    %333 = arith.addi %332, %c1_i32_164 : i32
    %334 = arith.index_cast %333 : i32 to index
    %335 = memref.load %arg2[%334] : memref<288xf32, #tpu.memory_space<smem>>
    %336 = vector.broadcast %335 : f32 to vector<2x18x18xf32>
    %337 = arith.mulf %316, %336 : vector<2x18x18xf32>
    %338 = arith.addf %314, %337 : vector<2x18x18xf32>
    %339 = vector.extract_strided_slice %0 {offsets = [0, 1, 1, 2], sizes = [2, 1, 18, 18], strides = [1, 1, 1, 1]} : vector<2x4x20x20xf32> to vector<2x1x18x18xf32>
    %340 = vector.shape_cast %339 : vector<2x1x18x18xf32> to vector<2x18x18xf32>
    %c2_i32_165 = arith.constant 2 : i32
    %341 = arith.muli %arg0, %c2_i32_165 : i32
    %c0_i32_166 = arith.constant 0 : i32
    %342 = arith.addi %341, %c0_i32_166 : i32
    %c36_i32_167 = arith.constant 36 : i32
    %343 = arith.muli %342, %c36_i32_167 : i32
    %c9_i32_168 = arith.constant 9 : i32
    %344 = arith.addi %343, %c9_i32_168 : i32
    %c3_i32_169 = arith.constant 3 : i32
    %345 = arith.addi %344, %c3_i32_169 : i32
    %c2_i32_170 = arith.constant 2 : i32
    %346 = arith.addi %345, %c2_i32_170 : i32
    %347 = arith.index_cast %346 : i32 to index
    %348 = memref.load %arg2[%347] : memref<288xf32, #tpu.memory_space<smem>>
    %349 = vector.broadcast %348 : f32 to vector<2x18x18xf32>
    %350 = arith.mulf %340, %349 : vector<2x18x18xf32>
    %351 = arith.addf %327, %350 : vector<2x18x18xf32>
    %c2_i32_171 = arith.constant 2 : i32
    %352 = arith.muli %arg0, %c2_i32_171 : i32
    %c1_i32_172 = arith.constant 1 : i32
    %353 = arith.addi %352, %c1_i32_172 : i32
    %c36_i32_173 = arith.constant 36 : i32
    %354 = arith.muli %353, %c36_i32_173 : i32
    %c9_i32_174 = arith.constant 9 : i32
    %355 = arith.addi %354, %c9_i32_174 : i32
    %c3_i32_175 = arith.constant 3 : i32
    %356 = arith.addi %355, %c3_i32_175 : i32
    %c2_i32_176 = arith.constant 2 : i32
    %357 = arith.addi %356, %c2_i32_176 : i32
    %358 = arith.index_cast %357 : i32 to index
    %359 = memref.load %arg2[%358] : memref<288xf32, #tpu.memory_space<smem>>
    %360 = vector.broadcast %359 : f32 to vector<2x18x18xf32>
    %361 = arith.mulf %340, %360 : vector<2x18x18xf32>
    %362 = arith.addf %338, %361 : vector<2x18x18xf32>
    %363 = vector.extract_strided_slice %0 {offsets = [0, 1, 2, 0], sizes = [2, 1, 18, 18], strides = [1, 1, 1, 1]} : vector<2x4x20x20xf32> to vector<2x1x18x18xf32>
    %364 = vector.shape_cast %363 : vector<2x1x18x18xf32> to vector<2x18x18xf32>
    %c2_i32_177 = arith.constant 2 : i32
    %365 = arith.muli %arg0, %c2_i32_177 : i32
    %c0_i32_178 = arith.constant 0 : i32
    %366 = arith.addi %365, %c0_i32_178 : i32
    %c36_i32_179 = arith.constant 36 : i32
    %367 = arith.muli %366, %c36_i32_179 : i32
    %c9_i32_180 = arith.constant 9 : i32
    %368 = arith.addi %367, %c9_i32_180 : i32
    %c6_i32_181 = arith.constant 6 : i32
    %369 = arith.addi %368, %c6_i32_181 : i32
    %c0_i32_182 = arith.constant 0 : i32
    %370 = arith.addi %369, %c0_i32_182 : i32
    %371 = arith.index_cast %370 : i32 to index
    %372 = memref.load %arg2[%371] : memref<288xf32, #tpu.memory_space<smem>>
    %373 = vector.broadcast %372 : f32 to vector<2x18x18xf32>
    %374 = arith.mulf %364, %373 : vector<2x18x18xf32>
    %375 = arith.addf %351, %374 : vector<2x18x18xf32>
    %c2_i32_183 = arith.constant 2 : i32
    %376 = arith.muli %arg0, %c2_i32_183 : i32
    %c1_i32_184 = arith.constant 1 : i32
    %377 = arith.addi %376, %c1_i32_184 : i32
    %c36_i32_185 = arith.constant 36 : i32
    %378 = arith.muli %377, %c36_i32_185 : i32
    %c9_i32_186 = arith.constant 9 : i32
    %379 = arith.addi %378, %c9_i32_186 : i32
    %c6_i32_187 = arith.constant 6 : i32
    %380 = arith.addi %379, %c6_i32_187 : i32
    %c0_i32_188 = arith.constant 0 : i32
    %381 = arith.addi %380, %c0_i32_188 : i32
    %382 = arith.index_cast %381 : i32 to index
    %383 = memref.load %arg2[%382] : memref<288xf32, #tpu.memory_space<smem>>
    %384 = vector.broadcast %383 : f32 to vector<2x18x18xf32>
    %385 = arith.mulf %364, %384 : vector<2x18x18xf32>
    %386 = arith.addf %362, %385 : vector<2x18x18xf32>
    %387 = vector.extract_strided_slice %0 {offsets = [0, 1, 2, 1], sizes = [2, 1, 18, 18], strides = [1, 1, 1, 1]} : vector<2x4x20x20xf32> to vector<2x1x18x18xf32>
    %388 = vector.shape_cast %387 : vector<2x1x18x18xf32> to vector<2x18x18xf32>
    %c2_i32_189 = arith.constant 2 : i32
    %389 = arith.muli %arg0, %c2_i32_189 : i32
    %c0_i32_190 = arith.constant 0 : i32
    %390 = arith.addi %389, %c0_i32_190 : i32
    %c36_i32_191 = arith.constant 36 : i32
    %391 = arith.muli %390, %c36_i32_191 : i32
    %c9_i32_192 = arith.constant 9 : i32
    %392 = arith.addi %391, %c9_i32_192 : i32
    %c6_i32_193 = arith.constant 6 : i32
    %393 = arith.addi %392, %c6_i32_193 : i32
    %c1_i32_194 = arith.constant 1 : i32
    %394 = arith.addi %393, %c1_i32_194 : i32
    %395 = arith.index_cast %394 : i32 to index
    %396 = memref.load %arg2[%395] : memref<288xf32, #tpu.memory_space<smem>>
    %397 = vector.broadcast %396 : f32 to vector<2x18x18xf32>
    %398 = arith.mulf %388, %397 : vector<2x18x18xf32>
    %399 = arith.addf %375, %398 : vector<2x18x18xf32>
    %c2_i32_195 = arith.constant 2 : i32
    %400 = arith.muli %arg0, %c2_i32_195 : i32
    %c1_i32_196 = arith.constant 1 : i32
    %401 = arith.addi %400, %c1_i32_196 : i32
    %c36_i32_197 = arith.constant 36 : i32
    %402 = arith.muli %401, %c36_i32_197 : i32
    %c9_i32_198 = arith.constant 9 : i32
    %403 = arith.addi %402, %c9_i32_198 : i32
    %c6_i32_199 = arith.constant 6 : i32
    %404 = arith.addi %403, %c6_i32_199 : i32
    %c1_i32_200 = arith.constant 1 : i32
    %405 = arith.addi %404, %c1_i32_200 : i32
    %406 = arith.index_cast %405 : i32 to index
    %407 = memref.load %arg2[%406] : memref<288xf32, #tpu.memory_space<smem>>
    %408 = vector.broadcast %407 : f32 to vector<2x18x18xf32>
    %409 = arith.mulf %388, %408 : vector<2x18x18xf32>
    %410 = arith.addf %386, %409 : vector<2x18x18xf32>
    %411 = vector.extract_strided_slice %0 {offsets = [0, 1, 2, 2], sizes = [2, 1, 18, 18], strides = [1, 1, 1, 1]} : vector<2x4x20x20xf32> to vector<2x1x18x18xf32>
    %412 = vector.shape_cast %411 : vector<2x1x18x18xf32> to vector<2x18x18xf32>
    %c2_i32_201 = arith.constant 2 : i32
    %413 = arith.muli %arg0, %c2_i32_201 : i32
    %c0_i32_202 = arith.constant 0 : i32
    %414 = arith.addi %413, %c0_i32_202 : i32
    %c36_i32_203 = arith.constant 36 : i32
    %415 = arith.muli %414, %c36_i32_203 : i32
    %c9_i32_204 = arith.constant 9 : i32
    %416 = arith.addi %415, %c9_i32_204 : i32
    %c6_i32_205 = arith.constant 6 : i32
    %417 = arith.addi %416, %c6_i32_205 : i32
    %c2_i32_206 = arith.constant 2 : i32
    %418 = arith.addi %417, %c2_i32_206 : i32
    %419 = arith.index_cast %418 : i32 to index
    %420 = memref.load %arg2[%419] : memref<288xf32, #tpu.memory_space<smem>>
    %421 = vector.broadcast %420 : f32 to vector<2x18x18xf32>
    %422 = arith.mulf %412, %421 : vector<2x18x18xf32>
    %423 = arith.addf %399, %422 : vector<2x18x18xf32>
    %c2_i32_207 = arith.constant 2 : i32
    %424 = arith.muli %arg0, %c2_i32_207 : i32
    %c1_i32_208 = arith.constant 1 : i32
    %425 = arith.addi %424, %c1_i32_208 : i32
    %c36_i32_209 = arith.constant 36 : i32
    %426 = arith.muli %425, %c36_i32_209 : i32
    %c9_i32_210 = arith.constant 9 : i32
    %427 = arith.addi %426, %c9_i32_210 : i32
    %c6_i32_211 = arith.constant 6 : i32
    %428 = arith.addi %427, %c6_i32_211 : i32
    %c2_i32_212 = arith.constant 2 : i32
    %429 = arith.addi %428, %c2_i32_212 : i32
    %430 = arith.index_cast %429 : i32 to index
    %431 = memref.load %arg2[%430] : memref<288xf32, #tpu.memory_space<smem>>
    %432 = vector.broadcast %431 : f32 to vector<2x18x18xf32>
    %433 = arith.mulf %412, %432 : vector<2x18x18xf32>
    %434 = arith.addf %410, %433 : vector<2x18x18xf32>
    %435 = vector.extract_strided_slice %0 {offsets = [0, 2, 0, 0], sizes = [2, 1, 18, 18], strides = [1, 1, 1, 1]} : vector<2x4x20x20xf32> to vector<2x1x18x18xf32>
    %436 = vector.shape_cast %435 : vector<2x1x18x18xf32> to vector<2x18x18xf32>
    %c2_i32_213 = arith.constant 2 : i32
    %437 = arith.muli %arg0, %c2_i32_213 : i32
    %c0_i32_214 = arith.constant 0 : i32
    %438 = arith.addi %437, %c0_i32_214 : i32
    %c36_i32_215 = arith.constant 36 : i32
    %439 = arith.muli %438, %c36_i32_215 : i32
    %c18_i32 = arith.constant 18 : i32
    %440 = arith.addi %439, %c18_i32 : i32
    %c0_i32_216 = arith.constant 0 : i32
    %441 = arith.addi %440, %c0_i32_216 : i32
    %c0_i32_217 = arith.constant 0 : i32
    %442 = arith.addi %441, %c0_i32_217 : i32
    %443 = arith.index_cast %442 : i32 to index
    %444 = memref.load %arg2[%443] : memref<288xf32, #tpu.memory_space<smem>>
    %445 = vector.broadcast %444 : f32 to vector<2x18x18xf32>
    %446 = arith.mulf %436, %445 : vector<2x18x18xf32>
    %447 = arith.addf %423, %446 : vector<2x18x18xf32>
    %c2_i32_218 = arith.constant 2 : i32
    %448 = arith.muli %arg0, %c2_i32_218 : i32
    %c1_i32_219 = arith.constant 1 : i32
    %449 = arith.addi %448, %c1_i32_219 : i32
    %c36_i32_220 = arith.constant 36 : i32
    %450 = arith.muli %449, %c36_i32_220 : i32
    %c18_i32_221 = arith.constant 18 : i32
    %451 = arith.addi %450, %c18_i32_221 : i32
    %c0_i32_222 = arith.constant 0 : i32
    %452 = arith.addi %451, %c0_i32_222 : i32
    %c0_i32_223 = arith.constant 0 : i32
    %453 = arith.addi %452, %c0_i32_223 : i32
    %454 = arith.index_cast %453 : i32 to index
    %455 = memref.load %arg2[%454] : memref<288xf32, #tpu.memory_space<smem>>
    %456 = vector.broadcast %455 : f32 to vector<2x18x18xf32>
    %457 = arith.mulf %436, %456 : vector<2x18x18xf32>
    %458 = arith.addf %434, %457 : vector<2x18x18xf32>
    %459 = vector.extract_strided_slice %0 {offsets = [0, 2, 0, 1], sizes = [2, 1, 18, 18], strides = [1, 1, 1, 1]} : vector<2x4x20x20xf32> to vector<2x1x18x18xf32>
    %460 = vector.shape_cast %459 : vector<2x1x18x18xf32> to vector<2x18x18xf32>
    %c2_i32_224 = arith.constant 2 : i32
    %461 = arith.muli %arg0, %c2_i32_224 : i32
    %c0_i32_225 = arith.constant 0 : i32
    %462 = arith.addi %461, %c0_i32_225 : i32
    %c36_i32_226 = arith.constant 36 : i32
    %463 = arith.muli %462, %c36_i32_226 : i32
    %c18_i32_227 = arith.constant 18 : i32
    %464 = arith.addi %463, %c18_i32_227 : i32
    %c0_i32_228 = arith.constant 0 : i32
    %465 = arith.addi %464, %c0_i32_228 : i32
    %c1_i32_229 = arith.constant 1 : i32
    %466 = arith.addi %465, %c1_i32_229 : i32
    %467 = arith.index_cast %466 : i32 to index
    %468 = memref.load %arg2[%467] : memref<288xf32, #tpu.memory_space<smem>>
    %469 = vector.broadcast %468 : f32 to vector<2x18x18xf32>
    %470 = arith.mulf %460, %469 : vector<2x18x18xf32>
    %471 = arith.addf %447, %470 : vector<2x18x18xf32>
    %c2_i32_230 = arith.constant 2 : i32
    %472 = arith.muli %arg0, %c2_i32_230 : i32
    %c1_i32_231 = arith.constant 1 : i32
    %473 = arith.addi %472, %c1_i32_231 : i32
    %c36_i32_232 = arith.constant 36 : i32
    %474 = arith.muli %473, %c36_i32_232 : i32
    %c18_i32_233 = arith.constant 18 : i32
    %475 = arith.addi %474, %c18_i32_233 : i32
    %c0_i32_234 = arith.constant 0 : i32
    %476 = arith.addi %475, %c0_i32_234 : i32
    %c1_i32_235 = arith.constant 1 : i32
    %477 = arith.addi %476, %c1_i32_235 : i32
    %478 = arith.index_cast %477 : i32 to index
    %479 = memref.load %arg2[%478] : memref<288xf32, #tpu.memory_space<smem>>
    %480 = vector.broadcast %479 : f32 to vector<2x18x18xf32>
    %481 = arith.mulf %460, %480 : vector<2x18x18xf32>
    %482 = arith.addf %458, %481 : vector<2x18x18xf32>
    %483 = vector.extract_strided_slice %0 {offsets = [0, 2, 0, 2], sizes = [2, 1, 18, 18], strides = [1, 1, 1, 1]} : vector<2x4x20x20xf32> to vector<2x1x18x18xf32>
    %484 = vector.shape_cast %483 : vector<2x1x18x18xf32> to vector<2x18x18xf32>
    %c2_i32_236 = arith.constant 2 : i32
    %485 = arith.muli %arg0, %c2_i32_236 : i32
    %c0_i32_237 = arith.constant 0 : i32
    %486 = arith.addi %485, %c0_i32_237 : i32
    %c36_i32_238 = arith.constant 36 : i32
    %487 = arith.muli %486, %c36_i32_238 : i32
    %c18_i32_239 = arith.constant 18 : i32
    %488 = arith.addi %487, %c18_i32_239 : i32
    %c0_i32_240 = arith.constant 0 : i32
    %489 = arith.addi %488, %c0_i32_240 : i32
    %c2_i32_241 = arith.constant 2 : i32
    %490 = arith.addi %489, %c2_i32_241 : i32
    %491 = arith.index_cast %490 : i32 to index
    %492 = memref.load %arg2[%491] : memref<288xf32, #tpu.memory_space<smem>>
    %493 = vector.broadcast %492 : f32 to vector<2x18x18xf32>
    %494 = arith.mulf %484, %493 : vector<2x18x18xf32>
    %495 = arith.addf %471, %494 : vector<2x18x18xf32>
    %c2_i32_242 = arith.constant 2 : i32
    %496 = arith.muli %arg0, %c2_i32_242 : i32
    %c1_i32_243 = arith.constant 1 : i32
    %497 = arith.addi %496, %c1_i32_243 : i32
    %c36_i32_244 = arith.constant 36 : i32
    %498 = arith.muli %497, %c36_i32_244 : i32
    %c18_i32_245 = arith.constant 18 : i32
    %499 = arith.addi %498, %c18_i32_245 : i32
    %c0_i32_246 = arith.constant 0 : i32
    %500 = arith.addi %499, %c0_i32_246 : i32
    %c2_i32_247 = arith.constant 2 : i32
    %501 = arith.addi %500, %c2_i32_247 : i32
    %502 = arith.index_cast %501 : i32 to index
    %503 = memref.load %arg2[%502] : memref<288xf32, #tpu.memory_space<smem>>
    %504 = vector.broadcast %503 : f32 to vector<2x18x18xf32>
    %505 = arith.mulf %484, %504 : vector<2x18x18xf32>
    %506 = arith.addf %482, %505 : vector<2x18x18xf32>
    %507 = vector.extract_strided_slice %0 {offsets = [0, 2, 1, 0], sizes = [2, 1, 18, 18], strides = [1, 1, 1, 1]} : vector<2x4x20x20xf32> to vector<2x1x18x18xf32>
    %508 = vector.shape_cast %507 : vector<2x1x18x18xf32> to vector<2x18x18xf32>
    %c2_i32_248 = arith.constant 2 : i32
    %509 = arith.muli %arg0, %c2_i32_248 : i32
    %c0_i32_249 = arith.constant 0 : i32
    %510 = arith.addi %509, %c0_i32_249 : i32
    %c36_i32_250 = arith.constant 36 : i32
    %511 = arith.muli %510, %c36_i32_250 : i32
    %c18_i32_251 = arith.constant 18 : i32
    %512 = arith.addi %511, %c18_i32_251 : i32
    %c3_i32_252 = arith.constant 3 : i32
    %513 = arith.addi %512, %c3_i32_252 : i32
    %c0_i32_253 = arith.constant 0 : i32
    %514 = arith.addi %513, %c0_i32_253 : i32
    %515 = arith.index_cast %514 : i32 to index
    %516 = memref.load %arg2[%515] : memref<288xf32, #tpu.memory_space<smem>>
    %517 = vector.broadcast %516 : f32 to vector<2x18x18xf32>
    %518 = arith.mulf %508, %517 : vector<2x18x18xf32>
    %519 = arith.addf %495, %518 : vector<2x18x18xf32>
    %c2_i32_254 = arith.constant 2 : i32
    %520 = arith.muli %arg0, %c2_i32_254 : i32
    %c1_i32_255 = arith.constant 1 : i32
    %521 = arith.addi %520, %c1_i32_255 : i32
    %c36_i32_256 = arith.constant 36 : i32
    %522 = arith.muli %521, %c36_i32_256 : i32
    %c18_i32_257 = arith.constant 18 : i32
    %523 = arith.addi %522, %c18_i32_257 : i32
    %c3_i32_258 = arith.constant 3 : i32
    %524 = arith.addi %523, %c3_i32_258 : i32
    %c0_i32_259 = arith.constant 0 : i32
    %525 = arith.addi %524, %c0_i32_259 : i32
    %526 = arith.index_cast %525 : i32 to index
    %527 = memref.load %arg2[%526] : memref<288xf32, #tpu.memory_space<smem>>
    %528 = vector.broadcast %527 : f32 to vector<2x18x18xf32>
    %529 = arith.mulf %508, %528 : vector<2x18x18xf32>
    %530 = arith.addf %506, %529 : vector<2x18x18xf32>
    %531 = vector.extract_strided_slice %0 {offsets = [0, 2, 1, 1], sizes = [2, 1, 18, 18], strides = [1, 1, 1, 1]} : vector<2x4x20x20xf32> to vector<2x1x18x18xf32>
    %532 = vector.shape_cast %531 : vector<2x1x18x18xf32> to vector<2x18x18xf32>
    %c2_i32_260 = arith.constant 2 : i32
    %533 = arith.muli %arg0, %c2_i32_260 : i32
    %c0_i32_261 = arith.constant 0 : i32
    %534 = arith.addi %533, %c0_i32_261 : i32
    %c36_i32_262 = arith.constant 36 : i32
    %535 = arith.muli %534, %c36_i32_262 : i32
    %c18_i32_263 = arith.constant 18 : i32
    %536 = arith.addi %535, %c18_i32_263 : i32
    %c3_i32_264 = arith.constant 3 : i32
    %537 = arith.addi %536, %c3_i32_264 : i32
    %c1_i32_265 = arith.constant 1 : i32
    %538 = arith.addi %537, %c1_i32_265 : i32
    %539 = arith.index_cast %538 : i32 to index
    %540 = memref.load %arg2[%539] : memref<288xf32, #tpu.memory_space<smem>>
    %541 = vector.broadcast %540 : f32 to vector<2x18x18xf32>
    %542 = arith.mulf %532, %541 : vector<2x18x18xf32>
    %543 = arith.addf %519, %542 : vector<2x18x18xf32>
    %c2_i32_266 = arith.constant 2 : i32
    %544 = arith.muli %arg0, %c2_i32_266 : i32
    %c1_i32_267 = arith.constant 1 : i32
    %545 = arith.addi %544, %c1_i32_267 : i32
    %c36_i32_268 = arith.constant 36 : i32
    %546 = arith.muli %545, %c36_i32_268 : i32
    %c18_i32_269 = arith.constant 18 : i32
    %547 = arith.addi %546, %c18_i32_269 : i32
    %c3_i32_270 = arith.constant 3 : i32
    %548 = arith.addi %547, %c3_i32_270 : i32
    %c1_i32_271 = arith.constant 1 : i32
    %549 = arith.addi %548, %c1_i32_271 : i32
    %550 = arith.index_cast %549 : i32 to index
    %551 = memref.load %arg2[%550] : memref<288xf32, #tpu.memory_space<smem>>
    %552 = vector.broadcast %551 : f32 to vector<2x18x18xf32>
    %553 = arith.mulf %532, %552 : vector<2x18x18xf32>
    %554 = arith.addf %530, %553 : vector<2x18x18xf32>
    %555 = vector.extract_strided_slice %0 {offsets = [0, 2, 1, 2], sizes = [2, 1, 18, 18], strides = [1, 1, 1, 1]} : vector<2x4x20x20xf32> to vector<2x1x18x18xf32>
    %556 = vector.shape_cast %555 : vector<2x1x18x18xf32> to vector<2x18x18xf32>
    %c2_i32_272 = arith.constant 2 : i32
    %557 = arith.muli %arg0, %c2_i32_272 : i32
    %c0_i32_273 = arith.constant 0 : i32
    %558 = arith.addi %557, %c0_i32_273 : i32
    %c36_i32_274 = arith.constant 36 : i32
    %559 = arith.muli %558, %c36_i32_274 : i32
    %c18_i32_275 = arith.constant 18 : i32
    %560 = arith.addi %559, %c18_i32_275 : i32
    %c3_i32_276 = arith.constant 3 : i32
    %561 = arith.addi %560, %c3_i32_276 : i32
    %c2_i32_277 = arith.constant 2 : i32
    %562 = arith.addi %561, %c2_i32_277 : i32
    %563 = arith.index_cast %562 : i32 to index
    %564 = memref.load %arg2[%563] : memref<288xf32, #tpu.memory_space<smem>>
    %565 = vector.broadcast %564 : f32 to vector<2x18x18xf32>
    %566 = arith.mulf %556, %565 : vector<2x18x18xf32>
    %567 = arith.addf %543, %566 : vector<2x18x18xf32>
    %c2_i32_278 = arith.constant 2 : i32
    %568 = arith.muli %arg0, %c2_i32_278 : i32
    %c1_i32_279 = arith.constant 1 : i32
    %569 = arith.addi %568, %c1_i32_279 : i32
    %c36_i32_280 = arith.constant 36 : i32
    %570 = arith.muli %569, %c36_i32_280 : i32
    %c18_i32_281 = arith.constant 18 : i32
    %571 = arith.addi %570, %c18_i32_281 : i32
    %c3_i32_282 = arith.constant 3 : i32
    %572 = arith.addi %571, %c3_i32_282 : i32
    %c2_i32_283 = arith.constant 2 : i32
    %573 = arith.addi %572, %c2_i32_283 : i32
    %574 = arith.index_cast %573 : i32 to index
    %575 = memref.load %arg2[%574] : memref<288xf32, #tpu.memory_space<smem>>
    %576 = vector.broadcast %575 : f32 to vector<2x18x18xf32>
    %577 = arith.mulf %556, %576 : vector<2x18x18xf32>
    %578 = arith.addf %554, %577 : vector<2x18x18xf32>
    %579 = vector.extract_strided_slice %0 {offsets = [0, 2, 2, 0], sizes = [2, 1, 18, 18], strides = [1, 1, 1, 1]} : vector<2x4x20x20xf32> to vector<2x1x18x18xf32>
    %580 = vector.shape_cast %579 : vector<2x1x18x18xf32> to vector<2x18x18xf32>
    %c2_i32_284 = arith.constant 2 : i32
    %581 = arith.muli %arg0, %c2_i32_284 : i32
    %c0_i32_285 = arith.constant 0 : i32
    %582 = arith.addi %581, %c0_i32_285 : i32
    %c36_i32_286 = arith.constant 36 : i32
    %583 = arith.muli %582, %c36_i32_286 : i32
    %c18_i32_287 = arith.constant 18 : i32
    %584 = arith.addi %583, %c18_i32_287 : i32
    %c6_i32_288 = arith.constant 6 : i32
    %585 = arith.addi %584, %c6_i32_288 : i32
    %c0_i32_289 = arith.constant 0 : i32
    %586 = arith.addi %585, %c0_i32_289 : i32
    %587 = arith.index_cast %586 : i32 to index
    %588 = memref.load %arg2[%587] : memref<288xf32, #tpu.memory_space<smem>>
    %589 = vector.broadcast %588 : f32 to vector<2x18x18xf32>
    %590 = arith.mulf %580, %589 : vector<2x18x18xf32>
    %591 = arith.addf %567, %590 : vector<2x18x18xf32>
    %c2_i32_290 = arith.constant 2 : i32
    %592 = arith.muli %arg0, %c2_i32_290 : i32
    %c1_i32_291 = arith.constant 1 : i32
    %593 = arith.addi %592, %c1_i32_291 : i32
    %c36_i32_292 = arith.constant 36 : i32
    %594 = arith.muli %593, %c36_i32_292 : i32
    %c18_i32_293 = arith.constant 18 : i32
    %595 = arith.addi %594, %c18_i32_293 : i32
    %c6_i32_294 = arith.constant 6 : i32
    %596 = arith.addi %595, %c6_i32_294 : i32
    %c0_i32_295 = arith.constant 0 : i32
    %597 = arith.addi %596, %c0_i32_295 : i32
    %598 = arith.index_cast %597 : i32 to index
    %599 = memref.load %arg2[%598] : memref<288xf32, #tpu.memory_space<smem>>
    %600 = vector.broadcast %599 : f32 to vector<2x18x18xf32>
    %601 = arith.mulf %580, %600 : vector<2x18x18xf32>
    %602 = arith.addf %578, %601 : vector<2x18x18xf32>
    %603 = vector.extract_strided_slice %0 {offsets = [0, 2, 2, 1], sizes = [2, 1, 18, 18], strides = [1, 1, 1, 1]} : vector<2x4x20x20xf32> to vector<2x1x18x18xf32>
    %604 = vector.shape_cast %603 : vector<2x1x18x18xf32> to vector<2x18x18xf32>
    %c2_i32_296 = arith.constant 2 : i32
    %605 = arith.muli %arg0, %c2_i32_296 : i32
    %c0_i32_297 = arith.constant 0 : i32
    %606 = arith.addi %605, %c0_i32_297 : i32
    %c36_i32_298 = arith.constant 36 : i32
    %607 = arith.muli %606, %c36_i32_298 : i32
    %c18_i32_299 = arith.constant 18 : i32
    %608 = arith.addi %607, %c18_i32_299 : i32
    %c6_i32_300 = arith.constant 6 : i32
    %609 = arith.addi %608, %c6_i32_300 : i32
    %c1_i32_301 = arith.constant 1 : i32
    %610 = arith.addi %609, %c1_i32_301 : i32
    %611 = arith.index_cast %610 : i32 to index
    %612 = memref.load %arg2[%611] : memref<288xf32, #tpu.memory_space<smem>>
    %613 = vector.broadcast %612 : f32 to vector<2x18x18xf32>
    %614 = arith.mulf %604, %613 : vector<2x18x18xf32>
    %615 = arith.addf %591, %614 : vector<2x18x18xf32>
    %c2_i32_302 = arith.constant 2 : i32
    %616 = arith.muli %arg0, %c2_i32_302 : i32
    %c1_i32_303 = arith.constant 1 : i32
    %617 = arith.addi %616, %c1_i32_303 : i32
    %c36_i32_304 = arith.constant 36 : i32
    %618 = arith.muli %617, %c36_i32_304 : i32
    %c18_i32_305 = arith.constant 18 : i32
    %619 = arith.addi %618, %c18_i32_305 : i32
    %c6_i32_306 = arith.constant 6 : i32
    %620 = arith.addi %619, %c6_i32_306 : i32
    %c1_i32_307 = arith.constant 1 : i32
    %621 = arith.addi %620, %c1_i32_307 : i32
    %622 = arith.index_cast %621 : i32 to index
    %623 = memref.load %arg2[%622] : memref<288xf32, #tpu.memory_space<smem>>
    %624 = vector.broadcast %623 : f32 to vector<2x18x18xf32>
    %625 = arith.mulf %604, %624 : vector<2x18x18xf32>
    %626 = arith.addf %602, %625 : vector<2x18x18xf32>
    %627 = vector.extract_strided_slice %0 {offsets = [0, 2, 2, 2], sizes = [2, 1, 18, 18], strides = [1, 1, 1, 1]} : vector<2x4x20x20xf32> to vector<2x1x18x18xf32>
    %628 = vector.shape_cast %627 : vector<2x1x18x18xf32> to vector<2x18x18xf32>
    %c2_i32_308 = arith.constant 2 : i32
    %629 = arith.muli %arg0, %c2_i32_308 : i32
    %c0_i32_309 = arith.constant 0 : i32
    %630 = arith.addi %629, %c0_i32_309 : i32
    %c36_i32_310 = arith.constant 36 : i32
    %631 = arith.muli %630, %c36_i32_310 : i32
    %c18_i32_311 = arith.constant 18 : i32
    %632 = arith.addi %631, %c18_i32_311 : i32
    %c6_i32_312 = arith.constant 6 : i32
    %633 = arith.addi %632, %c6_i32_312 : i32
    %c2_i32_313 = arith.constant 2 : i32
    %634 = arith.addi %633, %c2_i32_313 : i32
    %635 = arith.index_cast %634 : i32 to index
    %636 = memref.load %arg2[%635] : memref<288xf32, #tpu.memory_space<smem>>
    %637 = vector.broadcast %636 : f32 to vector<2x18x18xf32>
    %638 = arith.mulf %628, %637 : vector<2x18x18xf32>
    %639 = arith.addf %615, %638 : vector<2x18x18xf32>
    %c2_i32_314 = arith.constant 2 : i32
    %640 = arith.muli %arg0, %c2_i32_314 : i32
    %c1_i32_315 = arith.constant 1 : i32
    %641 = arith.addi %640, %c1_i32_315 : i32
    %c36_i32_316 = arith.constant 36 : i32
    %642 = arith.muli %641, %c36_i32_316 : i32
    %c18_i32_317 = arith.constant 18 : i32
    %643 = arith.addi %642, %c18_i32_317 : i32
    %c6_i32_318 = arith.constant 6 : i32
    %644 = arith.addi %643, %c6_i32_318 : i32
    %c2_i32_319 = arith.constant 2 : i32
    %645 = arith.addi %644, %c2_i32_319 : i32
    %646 = arith.index_cast %645 : i32 to index
    %647 = memref.load %arg2[%646] : memref<288xf32, #tpu.memory_space<smem>>
    %648 = vector.broadcast %647 : f32 to vector<2x18x18xf32>
    %649 = arith.mulf %628, %648 : vector<2x18x18xf32>
    %650 = arith.addf %626, %649 : vector<2x18x18xf32>
    %651 = vector.extract_strided_slice %0 {offsets = [0, 3, 0, 0], sizes = [2, 1, 18, 18], strides = [1, 1, 1, 1]} : vector<2x4x20x20xf32> to vector<2x1x18x18xf32>
    %652 = vector.shape_cast %651 : vector<2x1x18x18xf32> to vector<2x18x18xf32>
    %c2_i32_320 = arith.constant 2 : i32
    %653 = arith.muli %arg0, %c2_i32_320 : i32
    %c0_i32_321 = arith.constant 0 : i32
    %654 = arith.addi %653, %c0_i32_321 : i32
    %c36_i32_322 = arith.constant 36 : i32
    %655 = arith.muli %654, %c36_i32_322 : i32
    %c27_i32 = arith.constant 27 : i32
    %656 = arith.addi %655, %c27_i32 : i32
    %c0_i32_323 = arith.constant 0 : i32
    %657 = arith.addi %656, %c0_i32_323 : i32
    %c0_i32_324 = arith.constant 0 : i32
    %658 = arith.addi %657, %c0_i32_324 : i32
    %659 = arith.index_cast %658 : i32 to index
    %660 = memref.load %arg2[%659] : memref<288xf32, #tpu.memory_space<smem>>
    %661 = vector.broadcast %660 : f32 to vector<2x18x18xf32>
    %662 = arith.mulf %652, %661 : vector<2x18x18xf32>
    %663 = arith.addf %639, %662 : vector<2x18x18xf32>
    %c2_i32_325 = arith.constant 2 : i32
    %664 = arith.muli %arg0, %c2_i32_325 : i32
    %c1_i32_326 = arith.constant 1 : i32
    %665 = arith.addi %664, %c1_i32_326 : i32
    %c36_i32_327 = arith.constant 36 : i32
    %666 = arith.muli %665, %c36_i32_327 : i32
    %c27_i32_328 = arith.constant 27 : i32
    %667 = arith.addi %666, %c27_i32_328 : i32
    %c0_i32_329 = arith.constant 0 : i32
    %668 = arith.addi %667, %c0_i32_329 : i32
    %c0_i32_330 = arith.constant 0 : i32
    %669 = arith.addi %668, %c0_i32_330 : i32
    %670 = arith.index_cast %669 : i32 to index
    %671 = memref.load %arg2[%670] : memref<288xf32, #tpu.memory_space<smem>>
    %672 = vector.broadcast %671 : f32 to vector<2x18x18xf32>
    %673 = arith.mulf %652, %672 : vector<2x18x18xf32>
    %674 = arith.addf %650, %673 : vector<2x18x18xf32>
    %675 = vector.extract_strided_slice %0 {offsets = [0, 3, 0, 1], sizes = [2, 1, 18, 18], strides = [1, 1, 1, 1]} : vector<2x4x20x20xf32> to vector<2x1x18x18xf32>
    %676 = vector.shape_cast %675 : vector<2x1x18x18xf32> to vector<2x18x18xf32>
    %c2_i32_331 = arith.constant 2 : i32
    %677 = arith.muli %arg0, %c2_i32_331 : i32
    %c0_i32_332 = arith.constant 0 : i32
    %678 = arith.addi %677, %c0_i32_332 : i32
    %c36_i32_333 = arith.constant 36 : i32
    %679 = arith.muli %678, %c36_i32_333 : i32
    %c27_i32_334 = arith.constant 27 : i32
    %680 = arith.addi %679, %c27_i32_334 : i32
    %c0_i32_335 = arith.constant 0 : i32
    %681 = arith.addi %680, %c0_i32_335 : i32
    %c1_i32_336 = arith.constant 1 : i32
    %682 = arith.addi %681, %c1_i32_336 : i32
    %683 = arith.index_cast %682 : i32 to index
    %684 = memref.load %arg2[%683] : memref<288xf32, #tpu.memory_space<smem>>
    %685 = vector.broadcast %684 : f32 to vector<2x18x18xf32>
    %686 = arith.mulf %676, %685 : vector<2x18x18xf32>
    %687 = arith.addf %663, %686 : vector<2x18x18xf32>
    %c2_i32_337 = arith.constant 2 : i32
    %688 = arith.muli %arg0, %c2_i32_337 : i32
    %c1_i32_338 = arith.constant 1 : i32
    %689 = arith.addi %688, %c1_i32_338 : i32
    %c36_i32_339 = arith.constant 36 : i32
    %690 = arith.muli %689, %c36_i32_339 : i32
    %c27_i32_340 = arith.constant 27 : i32
    %691 = arith.addi %690, %c27_i32_340 : i32
    %c0_i32_341 = arith.constant 0 : i32
    %692 = arith.addi %691, %c0_i32_341 : i32
    %c1_i32_342 = arith.constant 1 : i32
    %693 = arith.addi %692, %c1_i32_342 : i32
    %694 = arith.index_cast %693 : i32 to index
    %695 = memref.load %arg2[%694] : memref<288xf32, #tpu.memory_space<smem>>
    %696 = vector.broadcast %695 : f32 to vector<2x18x18xf32>
    %697 = arith.mulf %676, %696 : vector<2x18x18xf32>
    %698 = arith.addf %674, %697 : vector<2x18x18xf32>
    %699 = vector.extract_strided_slice %0 {offsets = [0, 3, 0, 2], sizes = [2, 1, 18, 18], strides = [1, 1, 1, 1]} : vector<2x4x20x20xf32> to vector<2x1x18x18xf32>
    %700 = vector.shape_cast %699 : vector<2x1x18x18xf32> to vector<2x18x18xf32>
    %c2_i32_343 = arith.constant 2 : i32
    %701 = arith.muli %arg0, %c2_i32_343 : i32
    %c0_i32_344 = arith.constant 0 : i32
    %702 = arith.addi %701, %c0_i32_344 : i32
    %c36_i32_345 = arith.constant 36 : i32
    %703 = arith.muli %702, %c36_i32_345 : i32
    %c27_i32_346 = arith.constant 27 : i32
    %704 = arith.addi %703, %c27_i32_346 : i32
    %c0_i32_347 = arith.constant 0 : i32
    %705 = arith.addi %704, %c0_i32_347 : i32
    %c2_i32_348 = arith.constant 2 : i32
    %706 = arith.addi %705, %c2_i32_348 : i32
    %707 = arith.index_cast %706 : i32 to index
    %708 = memref.load %arg2[%707] : memref<288xf32, #tpu.memory_space<smem>>
    %709 = vector.broadcast %708 : f32 to vector<2x18x18xf32>
    %710 = arith.mulf %700, %709 : vector<2x18x18xf32>
    %711 = arith.addf %687, %710 : vector<2x18x18xf32>
    %c2_i32_349 = arith.constant 2 : i32
    %712 = arith.muli %arg0, %c2_i32_349 : i32
    %c1_i32_350 = arith.constant 1 : i32
    %713 = arith.addi %712, %c1_i32_350 : i32
    %c36_i32_351 = arith.constant 36 : i32
    %714 = arith.muli %713, %c36_i32_351 : i32
    %c27_i32_352 = arith.constant 27 : i32
    %715 = arith.addi %714, %c27_i32_352 : i32
    %c0_i32_353 = arith.constant 0 : i32
    %716 = arith.addi %715, %c0_i32_353 : i32
    %c2_i32_354 = arith.constant 2 : i32
    %717 = arith.addi %716, %c2_i32_354 : i32
    %718 = arith.index_cast %717 : i32 to index
    %719 = memref.load %arg2[%718] : memref<288xf32, #tpu.memory_space<smem>>
    %720 = vector.broadcast %719 : f32 to vector<2x18x18xf32>
    %721 = arith.mulf %700, %720 : vector<2x18x18xf32>
    %722 = arith.addf %698, %721 : vector<2x18x18xf32>
    %723 = vector.extract_strided_slice %0 {offsets = [0, 3, 1, 0], sizes = [2, 1, 18, 18], strides = [1, 1, 1, 1]} : vector<2x4x20x20xf32> to vector<2x1x18x18xf32>
    %724 = vector.shape_cast %723 : vector<2x1x18x18xf32> to vector<2x18x18xf32>
    %c2_i32_355 = arith.constant 2 : i32
    %725 = arith.muli %arg0, %c2_i32_355 : i32
    %c0_i32_356 = arith.constant 0 : i32
    %726 = arith.addi %725, %c0_i32_356 : i32
    %c36_i32_357 = arith.constant 36 : i32
    %727 = arith.muli %726, %c36_i32_357 : i32
    %c27_i32_358 = arith.constant 27 : i32
    %728 = arith.addi %727, %c27_i32_358 : i32
    %c3_i32_359 = arith.constant 3 : i32
    %729 = arith.addi %728, %c3_i32_359 : i32
    %c0_i32_360 = arith.constant 0 : i32
    %730 = arith.addi %729, %c0_i32_360 : i32
    %731 = arith.index_cast %730 : i32 to index
    %732 = memref.load %arg2[%731] : memref<288xf32, #tpu.memory_space<smem>>
    %733 = vector.broadcast %732 : f32 to vector<2x18x18xf32>
    %734 = arith.mulf %724, %733 : vector<2x18x18xf32>
    %735 = arith.addf %711, %734 : vector<2x18x18xf32>
    %c2_i32_361 = arith.constant 2 : i32
    %736 = arith.muli %arg0, %c2_i32_361 : i32
    %c1_i32_362 = arith.constant 1 : i32
    %737 = arith.addi %736, %c1_i32_362 : i32
    %c36_i32_363 = arith.constant 36 : i32
    %738 = arith.muli %737, %c36_i32_363 : i32
    %c27_i32_364 = arith.constant 27 : i32
    %739 = arith.addi %738, %c27_i32_364 : i32
    %c3_i32_365 = arith.constant 3 : i32
    %740 = arith.addi %739, %c3_i32_365 : i32
    %c0_i32_366 = arith.constant 0 : i32
    %741 = arith.addi %740, %c0_i32_366 : i32
    %742 = arith.index_cast %741 : i32 to index
    %743 = memref.load %arg2[%742] : memref<288xf32, #tpu.memory_space<smem>>
    %744 = vector.broadcast %743 : f32 to vector<2x18x18xf32>
    %745 = arith.mulf %724, %744 : vector<2x18x18xf32>
    %746 = arith.addf %722, %745 : vector<2x18x18xf32>
    %747 = vector.extract_strided_slice %0 {offsets = [0, 3, 1, 1], sizes = [2, 1, 18, 18], strides = [1, 1, 1, 1]} : vector<2x4x20x20xf32> to vector<2x1x18x18xf32>
    %748 = vector.shape_cast %747 : vector<2x1x18x18xf32> to vector<2x18x18xf32>
    %c2_i32_367 = arith.constant 2 : i32
    %749 = arith.muli %arg0, %c2_i32_367 : i32
    %c0_i32_368 = arith.constant 0 : i32
    %750 = arith.addi %749, %c0_i32_368 : i32
    %c36_i32_369 = arith.constant 36 : i32
    %751 = arith.muli %750, %c36_i32_369 : i32
    %c27_i32_370 = arith.constant 27 : i32
    %752 = arith.addi %751, %c27_i32_370 : i32
    %c3_i32_371 = arith.constant 3 : i32
    %753 = arith.addi %752, %c3_i32_371 : i32
    %c1_i32_372 = arith.constant 1 : i32
    %754 = arith.addi %753, %c1_i32_372 : i32
    %755 = arith.index_cast %754 : i32 to index
    %756 = memref.load %arg2[%755] : memref<288xf32, #tpu.memory_space<smem>>
    %757 = vector.broadcast %756 : f32 to vector<2x18x18xf32>
    %758 = arith.mulf %748, %757 : vector<2x18x18xf32>
    %759 = arith.addf %735, %758 : vector<2x18x18xf32>
    %c2_i32_373 = arith.constant 2 : i32
    %760 = arith.muli %arg0, %c2_i32_373 : i32
    %c1_i32_374 = arith.constant 1 : i32
    %761 = arith.addi %760, %c1_i32_374 : i32
    %c36_i32_375 = arith.constant 36 : i32
    %762 = arith.muli %761, %c36_i32_375 : i32
    %c27_i32_376 = arith.constant 27 : i32
    %763 = arith.addi %762, %c27_i32_376 : i32
    %c3_i32_377 = arith.constant 3 : i32
    %764 = arith.addi %763, %c3_i32_377 : i32
    %c1_i32_378 = arith.constant 1 : i32
    %765 = arith.addi %764, %c1_i32_378 : i32
    %766 = arith.index_cast %765 : i32 to index
    %767 = memref.load %arg2[%766] : memref<288xf32, #tpu.memory_space<smem>>
    %768 = vector.broadcast %767 : f32 to vector<2x18x18xf32>
    %769 = arith.mulf %748, %768 : vector<2x18x18xf32>
    %770 = arith.addf %746, %769 : vector<2x18x18xf32>
    %771 = vector.extract_strided_slice %0 {offsets = [0, 3, 1, 2], sizes = [2, 1, 18, 18], strides = [1, 1, 1, 1]} : vector<2x4x20x20xf32> to vector<2x1x18x18xf32>
    %772 = vector.shape_cast %771 : vector<2x1x18x18xf32> to vector<2x18x18xf32>
    %c2_i32_379 = arith.constant 2 : i32
    %773 = arith.muli %arg0, %c2_i32_379 : i32
    %c0_i32_380 = arith.constant 0 : i32
    %774 = arith.addi %773, %c0_i32_380 : i32
    %c36_i32_381 = arith.constant 36 : i32
    %775 = arith.muli %774, %c36_i32_381 : i32
    %c27_i32_382 = arith.constant 27 : i32
    %776 = arith.addi %775, %c27_i32_382 : i32
    %c3_i32_383 = arith.constant 3 : i32
    %777 = arith.addi %776, %c3_i32_383 : i32
    %c2_i32_384 = arith.constant 2 : i32
    %778 = arith.addi %777, %c2_i32_384 : i32
    %779 = arith.index_cast %778 : i32 to index
    %780 = memref.load %arg2[%779] : memref<288xf32, #tpu.memory_space<smem>>
    %781 = vector.broadcast %780 : f32 to vector<2x18x18xf32>
    %782 = arith.mulf %772, %781 : vector<2x18x18xf32>
    %783 = arith.addf %759, %782 : vector<2x18x18xf32>
    %c2_i32_385 = arith.constant 2 : i32
    %784 = arith.muli %arg0, %c2_i32_385 : i32
    %c1_i32_386 = arith.constant 1 : i32
    %785 = arith.addi %784, %c1_i32_386 : i32
    %c36_i32_387 = arith.constant 36 : i32
    %786 = arith.muli %785, %c36_i32_387 : i32
    %c27_i32_388 = arith.constant 27 : i32
    %787 = arith.addi %786, %c27_i32_388 : i32
    %c3_i32_389 = arith.constant 3 : i32
    %788 = arith.addi %787, %c3_i32_389 : i32
    %c2_i32_390 = arith.constant 2 : i32
    %789 = arith.addi %788, %c2_i32_390 : i32
    %790 = arith.index_cast %789 : i32 to index
    %791 = memref.load %arg2[%790] : memref<288xf32, #tpu.memory_space<smem>>
    %792 = vector.broadcast %791 : f32 to vector<2x18x18xf32>
    %793 = arith.mulf %772, %792 : vector<2x18x18xf32>
    %794 = arith.addf %770, %793 : vector<2x18x18xf32>
    %795 = vector.extract_strided_slice %0 {offsets = [0, 3, 2, 0], sizes = [2, 1, 18, 18], strides = [1, 1, 1, 1]} : vector<2x4x20x20xf32> to vector<2x1x18x18xf32>
    %796 = vector.shape_cast %795 : vector<2x1x18x18xf32> to vector<2x18x18xf32>
    %c2_i32_391 = arith.constant 2 : i32
    %797 = arith.muli %arg0, %c2_i32_391 : i32
    %c0_i32_392 = arith.constant 0 : i32
    %798 = arith.addi %797, %c0_i32_392 : i32
    %c36_i32_393 = arith.constant 36 : i32
    %799 = arith.muli %798, %c36_i32_393 : i32
    %c27_i32_394 = arith.constant 27 : i32
    %800 = arith.addi %799, %c27_i32_394 : i32
    %c6_i32_395 = arith.constant 6 : i32
    %801 = arith.addi %800, %c6_i32_395 : i32
    %c0_i32_396 = arith.constant 0 : i32
    %802 = arith.addi %801, %c0_i32_396 : i32
    %803 = arith.index_cast %802 : i32 to index
    %804 = memref.load %arg2[%803] : memref<288xf32, #tpu.memory_space<smem>>
    %805 = vector.broadcast %804 : f32 to vector<2x18x18xf32>
    %806 = arith.mulf %796, %805 : vector<2x18x18xf32>
    %807 = arith.addf %783, %806 : vector<2x18x18xf32>
    %c2_i32_397 = arith.constant 2 : i32
    %808 = arith.muli %arg0, %c2_i32_397 : i32
    %c1_i32_398 = arith.constant 1 : i32
    %809 = arith.addi %808, %c1_i32_398 : i32
    %c36_i32_399 = arith.constant 36 : i32
    %810 = arith.muli %809, %c36_i32_399 : i32
    %c27_i32_400 = arith.constant 27 : i32
    %811 = arith.addi %810, %c27_i32_400 : i32
    %c6_i32_401 = arith.constant 6 : i32
    %812 = arith.addi %811, %c6_i32_401 : i32
    %c0_i32_402 = arith.constant 0 : i32
    %813 = arith.addi %812, %c0_i32_402 : i32
    %814 = arith.index_cast %813 : i32 to index
    %815 = memref.load %arg2[%814] : memref<288xf32, #tpu.memory_space<smem>>
    %816 = vector.broadcast %815 : f32 to vector<2x18x18xf32>
    %817 = arith.mulf %796, %816 : vector<2x18x18xf32>
    %818 = arith.addf %794, %817 : vector<2x18x18xf32>
    %819 = vector.extract_strided_slice %0 {offsets = [0, 3, 2, 1], sizes = [2, 1, 18, 18], strides = [1, 1, 1, 1]} : vector<2x4x20x20xf32> to vector<2x1x18x18xf32>
    %820 = vector.shape_cast %819 : vector<2x1x18x18xf32> to vector<2x18x18xf32>
    %c2_i32_403 = arith.constant 2 : i32
    %821 = arith.muli %arg0, %c2_i32_403 : i32
    %c0_i32_404 = arith.constant 0 : i32
    %822 = arith.addi %821, %c0_i32_404 : i32
    %c36_i32_405 = arith.constant 36 : i32
    %823 = arith.muli %822, %c36_i32_405 : i32
    %c27_i32_406 = arith.constant 27 : i32
    %824 = arith.addi %823, %c27_i32_406 : i32
    %c6_i32_407 = arith.constant 6 : i32
    %825 = arith.addi %824, %c6_i32_407 : i32
    %c1_i32_408 = arith.constant 1 : i32
    %826 = arith.addi %825, %c1_i32_408 : i32
    %827 = arith.index_cast %826 : i32 to index
    %828 = memref.load %arg2[%827] : memref<288xf32, #tpu.memory_space<smem>>
    %829 = vector.broadcast %828 : f32 to vector<2x18x18xf32>
    %830 = arith.mulf %820, %829 : vector<2x18x18xf32>
    %831 = arith.addf %807, %830 : vector<2x18x18xf32>
    %c2_i32_409 = arith.constant 2 : i32
    %832 = arith.muli %arg0, %c2_i32_409 : i32
    %c1_i32_410 = arith.constant 1 : i32
    %833 = arith.addi %832, %c1_i32_410 : i32
    %c36_i32_411 = arith.constant 36 : i32
    %834 = arith.muli %833, %c36_i32_411 : i32
    %c27_i32_412 = arith.constant 27 : i32
    %835 = arith.addi %834, %c27_i32_412 : i32
    %c6_i32_413 = arith.constant 6 : i32
    %836 = arith.addi %835, %c6_i32_413 : i32
    %c1_i32_414 = arith.constant 1 : i32
    %837 = arith.addi %836, %c1_i32_414 : i32
    %838 = arith.index_cast %837 : i32 to index
    %839 = memref.load %arg2[%838] : memref<288xf32, #tpu.memory_space<smem>>
    %840 = vector.broadcast %839 : f32 to vector<2x18x18xf32>
    %841 = arith.mulf %820, %840 : vector<2x18x18xf32>
    %842 = arith.addf %818, %841 : vector<2x18x18xf32>
    %843 = vector.extract_strided_slice %0 {offsets = [0, 3, 2, 2], sizes = [2, 1, 18, 18], strides = [1, 1, 1, 1]} : vector<2x4x20x20xf32> to vector<2x1x18x18xf32>
    %844 = vector.shape_cast %843 : vector<2x1x18x18xf32> to vector<2x18x18xf32>
    %c2_i32_415 = arith.constant 2 : i32
    %845 = arith.muli %arg0, %c2_i32_415 : i32
    %c0_i32_416 = arith.constant 0 : i32
    %846 = arith.addi %845, %c0_i32_416 : i32
    %c36_i32_417 = arith.constant 36 : i32
    %847 = arith.muli %846, %c36_i32_417 : i32
    %c27_i32_418 = arith.constant 27 : i32
    %848 = arith.addi %847, %c27_i32_418 : i32
    %c6_i32_419 = arith.constant 6 : i32
    %849 = arith.addi %848, %c6_i32_419 : i32
    %c2_i32_420 = arith.constant 2 : i32
    %850 = arith.addi %849, %c2_i32_420 : i32
    %851 = arith.index_cast %850 : i32 to index
    %852 = memref.load %arg2[%851] : memref<288xf32, #tpu.memory_space<smem>>
    %853 = vector.broadcast %852 : f32 to vector<2x18x18xf32>
    %854 = arith.mulf %844, %853 : vector<2x18x18xf32>
    %855 = arith.addf %831, %854 : vector<2x18x18xf32>
    %c2_i32_421 = arith.constant 2 : i32
    %856 = arith.muli %arg0, %c2_i32_421 : i32
    %c1_i32_422 = arith.constant 1 : i32
    %857 = arith.addi %856, %c1_i32_422 : i32
    %c36_i32_423 = arith.constant 36 : i32
    %858 = arith.muli %857, %c36_i32_423 : i32
    %c27_i32_424 = arith.constant 27 : i32
    %859 = arith.addi %858, %c27_i32_424 : i32
    %c6_i32_425 = arith.constant 6 : i32
    %860 = arith.addi %859, %c6_i32_425 : i32
    %c2_i32_426 = arith.constant 2 : i32
    %861 = arith.addi %860, %c2_i32_426 : i32
    %862 = arith.index_cast %861 : i32 to index
    %863 = memref.load %arg2[%862] : memref<288xf32, #tpu.memory_space<smem>>
    %864 = vector.broadcast %863 : f32 to vector<2x18x18xf32>
    %865 = arith.mulf %844, %864 : vector<2x18x18xf32>
    %866 = arith.addf %842, %865 : vector<2x18x18xf32>
    %c2_i32_427 = arith.constant 2 : i32
    %867 = arith.muli %arg0, %c2_i32_427 : i32
    %c0_i32_428 = arith.constant 0 : i32
    %868 = arith.addi %867, %c0_i32_428 : i32
    %869 = vector.shape_cast %855 : vector<2x18x18xf32> to vector<1x2x18x18xf32>
    %cst_429 = arith.constant dense<0.000000e+00> : vector<1xf32>
    %870 = vector.multi_reduction <add>, %869, %cst_429 [1, 2, 3] : vector<1x2x18x18xf32> to vector<1xf32>
    %871 = vector.shape_cast %870 : vector<1xf32> to vector<1x1x1x1xf32>
    %872 = vector.extract %871[0, 0, 0, 0] : f32 from vector<1x1x1x1xf32>
    %cst_430 = arith.constant 2.178000e+05 : f32
    %873 = arith.divf %872, %cst_430 : f32
    %874 = vector.broadcast %873 : f32 to vector<2x18x18xf32>
    %875 = arith.subf %855, %874 : vector<2x18x18xf32>
    %876 = arith.mulf %875, %875 : vector<2x18x18xf32>
    %877 = vector.shape_cast %876 : vector<2x18x18xf32> to vector<1x2x18x18xf32>
    %cst_431 = arith.constant dense<0.000000e+00> : vector<1xf32>
    %878 = vector.multi_reduction <add>, %877, %cst_431 [1, 2, 3] : vector<1x2x18x18xf32> to vector<1xf32>
    %879 = vector.shape_cast %878 : vector<1xf32> to vector<1x1x1x1xf32>
    %880 = vector.extract %879[0, 0, 0, 0] : f32 from vector<1x1x1x1xf32>
    %cst_432 = arith.constant 2.171520e+05 : f32
    %881 = arith.mulf %cst_432, %873 : f32
    %882 = arith.mulf %881, %873 : f32
    %883 = arith.addf %880, %882 : f32
    %cst_433 = arith.constant 2.178000e+05 : f32
    %884 = arith.divf %883, %cst_433 : f32
    %cst_434 = arith.constant 9.99999974E-6 : f32
    %885 = arith.addf %884, %cst_434 : f32
    %886 = math.rsqrt %885 : f32
    %887 = arith.index_cast %868 : i32 to index
    %888 = memref.load %arg3[%887] : memref<8xf32, #tpu.memory_space<smem>>
    %889 = arith.mulf %886, %888 : f32
    %890 = arith.index_cast %868 : i32 to index
    %891 = memref.load %arg4[%890] : memref<8xf32, #tpu.memory_space<smem>>
    %892 = arith.mulf %873, %889 : f32
    %893 = arith.subf %891, %892 : f32
    %cst_435 = arith.constant 0.000000e+00 : f32
    %894 = arith.maximumf %893, %cst_435 : f32
    %895 = vector.broadcast %894 : f32 to vector<2x330x330xf32>
    %c0_436 = arith.constant 0 : index
    %c0_437 = arith.constant 0 : index
    %c0_438 = arith.constant 0 : index
    %c0_439 = arith.constant 0 : index
    %896 = vector.load %arg5[%c0_436, %c0_437, %c0_438, %c0_439] : memref<2x2x330x330xf32, #tpu.memory_space<vmem>>, vector<2x1x330x330xf32>
    %897 = vector.shape_cast %896 : vector<2x1x330x330xf32> to vector<2x330x330xf32>
    %898 = vector.shape_cast %895 : vector<2x330x330xf32> to vector<2x1x330x330xf32>
    tpu.vector_store %arg5[%c0_436, %c0_437, %c0_438, %c0_439], %898 {strides = array<i32>} : memref<2x2x330x330xf32, #tpu.memory_space<vmem>>, vector<2x1x330x330xf32>,
    %899 = vector.broadcast %889 : f32 to vector<2x18x18xf32>
    %900 = arith.mulf %855, %899 : vector<2x18x18xf32>
    %901 = vector.broadcast %893 : f32 to vector<2x18x18xf32>
    %902 = arith.addf %900, %901 : vector<2x18x18xf32>
    %cst_440 = arith.constant 0.000000e+00 : f32
    %903 = vector.broadcast %cst_440 : f32 to vector<2x18x18xf32>
    %904 = arith.maximumf %902, %903 : vector<2x18x18xf32>
    %c0_441 = arith.constant 0 : index
    %c0_442 = arith.constant 0 : index
    %c156 = arith.constant 156 : index
    %c156_443 = arith.constant 156 : index
    %905 = vector.load %arg5[%c0_441, %c0_442, %c156, %c156_443] : memref<2x2x330x330xf32, #tpu.memory_space<vmem>>, vector<2x1x18x18xf32>
    %906 = vector.shape_cast %905 : vector<2x1x18x18xf32> to vector<2x18x18xf32>
    %907 = vector.shape_cast %904 : vector<2x18x18xf32> to vector<2x1x18x18xf32>
    tpu.vector_store %arg5[%c0_441, %c0_442, %c156, %c156_443], %907 {strides = array<i32>} : memref<2x2x330x330xf32, #tpu.memory_space<vmem>>, vector<2x1x18x18xf32>,
    %c2_i32_444 = arith.constant 2 : i32
    %908 = arith.muli %arg0, %c2_i32_444 : i32
    %c1_i32_445 = arith.constant 1 : i32
    %909 = arith.addi %908, %c1_i32_445 : i32
    %910 = vector.shape_cast %866 : vector<2x18x18xf32> to vector<1x2x18x18xf32>
    %cst_446 = arith.constant dense<0.000000e+00> : vector<1xf32>
    %911 = vector.multi_reduction <add>, %910, %cst_446 [1, 2, 3] : vector<1x2x18x18xf32> to vector<1xf32>
    %912 = vector.shape_cast %911 : vector<1xf32> to vector<1x1x1x1xf32>
    %913 = vector.extract %912[0, 0, 0, 0] : f32 from vector<1x1x1x1xf32>
    %cst_447 = arith.constant 2.178000e+05 : f32
    %914 = arith.divf %913, %cst_447 : f32
    %915 = vector.broadcast %914 : f32 to vector<2x18x18xf32>
    %916 = arith.subf %866, %915 : vector<2x18x18xf32>
    %917 = arith.mulf %916, %916 : vector<2x18x18xf32>
    %918 = vector.shape_cast %917 : vector<2x18x18xf32> to vector<1x2x18x18xf32>
    %cst_448 = arith.constant dense<0.000000e+00> : vector<1xf32>
    %919 = vector.multi_reduction <add>, %918, %cst_448 [1, 2, 3] : vector<1x2x18x18xf32> to vector<1xf32>
    %920 = vector.shape_cast %919 : vector<1xf32> to vector<1x1x1x1xf32>
    %921 = vector.extract %920[0, 0, 0, 0] : f32 from vector<1x1x1x1xf32>
    %cst_449 = arith.constant 2.171520e+05 : f32
    %922 = arith.mulf %cst_449, %914 : f32
    %923 = arith.mulf %922, %914 : f32
    %924 = arith.addf %921, %923 : f32
    %cst_450 = arith.constant 2.178000e+05 : f32
    %925 = arith.divf %924, %cst_450 : f32
    %cst_451 = arith.constant 9.99999974E-6 : f32
    %926 = arith.addf %925, %cst_451 : f32
    %927 = math.rsqrt %926 : f32
    %928 = arith.index_cast %909 : i32 to index
    %929 = memref.load %arg3[%928] : memref<8xf32, #tpu.memory_space<smem>>
    %930 = arith.mulf %927, %929 : f32
    %931 = arith.index_cast %909 : i32 to index
    %932 = memref.load %arg4[%931] : memref<8xf32, #tpu.memory_space<smem>>
    %933 = arith.mulf %914, %930 : f32
    %934 = arith.subf %932, %933 : f32
    %cst_452 = arith.constant 0.000000e+00 : f32
    %935 = arith.maximumf %934, %cst_452 : f32
    %936 = vector.broadcast %935 : f32 to vector<2x330x330xf32>
    %c0_453 = arith.constant 0 : index
    %c1 = arith.constant 1 : index
    %c0_454 = arith.constant 0 : index
    %c0_455 = arith.constant 0 : index
    %937 = vector.load %arg5[%c0_453, %c1, %c0_454, %c0_455] : memref<2x2x330x330xf32, #tpu.memory_space<vmem>>, vector<2x1x330x330xf32>
    %938 = vector.shape_cast %937 : vector<2x1x330x330xf32> to vector<2x330x330xf32>
    %939 = vector.shape_cast %936 : vector<2x330x330xf32> to vector<2x1x330x330xf32>
    tpu.vector_store %arg5[%c0_453, %c1, %c0_454, %c0_455], %939 {strides = array<i32>} : memref<2x2x330x330xf32, #tpu.memory_space<vmem>>, vector<2x1x330x330xf32>,
    %940 = vector.broadcast %930 : f32 to vector<2x18x18xf32>
    %941 = arith.mulf %866, %940 : vector<2x18x18xf32>
    %942 = vector.broadcast %934 : f32 to vector<2x18x18xf32>
    %943 = arith.addf %941, %942 : vector<2x18x18xf32>
    %cst_456 = arith.constant 0.000000e+00 : f32
    %944 = vector.broadcast %cst_456 : f32 to vector<2x18x18xf32>
    %945 = arith.maximumf %943, %944 : vector<2x18x18xf32>
    %c0_457 = arith.constant 0 : index
    %c1_458 = arith.constant 1 : index
    %c156_459 = arith.constant 156 : index
    %c156_460 = arith.constant 156 : index
    %946 = vector.load %arg5[%c0_457, %c1_458, %c156_459, %c156_460] : memref<2x2x330x330xf32, #tpu.memory_space<vmem>>, vector<2x1x18x18xf32>
    %947 = vector.shape_cast %946 : vector<2x1x18x18xf32> to vector<2x18x18xf32>
    %948 = vector.shape_cast %945 : vector<2x18x18xf32> to vector<2x1x18x18xf32>
    tpu.vector_store %arg5[%c0_457, %c1_458, %c156_459, %c156_460], %948 {strides = array<i32>} : memref<2x2x330x330xf32, #tpu.memory_space<vmem>>, vector<2x1x18x18xf32>,
    return
  }
  func.func @transform_0(%arg0: i32) -> (i32, i32, i32, i32) {
    %c0_i32 = arith.constant 0 : i32
    %c0_i32_0 = arith.constant 0 : i32
    %c0_i32_1 = arith.constant 0 : i32
    %c0_i32_2 = arith.constant 0 : i32
    %c0_i32_3 = arith.constant 0 : i32
    return %c0_i32, %c0_i32_0, %c0_i32_1, %c0_i32_2 : i32, i32, i32, i32
  }
  func.func @transform_1(%arg0: i32) -> i32 {
    %c0_i32 = arith.constant 0 : i32
    %c0_i32_0 = arith.constant 0 : i32
    return %c0_i32 : i32
  }
  func.func @transform_2(%arg0: i32) -> i32 {
    %c0_i32 = arith.constant 0 : i32
    %c0_i32_0 = arith.constant 0 : i32
    return %c0_i32 : i32
  }
  func.func @transform_3(%arg0: i32) -> i32 {
    %c0_i32 = arith.constant 0 : i32
    %c0_i32_0 = arith.constant 0 : i32
    return %c0_i32 : i32
  }
  func.func @transform_4(%arg0: i32) -> (i32, i32, i32, i32) {
    %c0_i32 = arith.constant 0 : i32
    %c0_i32_0 = arith.constant 0 : i32
    %c0_i32_1 = arith.constant 0 : i32
    %c0_i32_2 = arith.constant 0 : i32
    return %c0_i32, %arg0, %c0_i32_0, %c0_i32_1 : i32, i32, i32, i32
  }
}

</mosaic_0001>

<llo_original>
// kernel: tpu_custom_call.1
$region0: #{tpu_custom_call.1}
  #allocation0 [shape = 'u32[]', space=smem, size = 0x4, offset = 0x4, fixed_abs, tag = 'smem constant byte address 0x4 - core index']
  #allocation1 [shape = 'u32[144,128]{1,0:T(1,128)}', space=vmem, size = 0x12000, scoped, tag = 'internal scratch']
  %s0 = inlined_call_operand.vmem [shape: f32[2,4,20,20], index: 0, kind: input, shape index: {}]
  %s1 = inlined_call_operand.hbm [shape: f32[288], index: 1, kind: input, shape index: {}]
  %s2 = inlined_call_operand.hbm [shape: f32[8], index: 2, kind: input, shape index: {}]
  %s3 = inlined_call_operand.hbm [shape: f32[8], index: 3, kind: input, shape index: {}]
  %s4 = inlined_call_operand.vmem [shape: f32[2,8,330,330], index: 4, kind: output, shape index: {}]
  %s5 = sld [smem:[#allocation0]]
  $region80: #{tpu_custom_call.1} parent=0
    _
  %s7 = ssub.s32 1, %s5
  %s8 = scalar_select 0, %s7, %s5
  $region1: #{tpu_custom_call.1} parent=0
    #allocation2 [shape = 'u8[1536]{0}', space=smem, size = 0x600, scoped, tag = 'input window, operand 1, single buffered']
    #allocation3 [shape = 's32[2]{0}', space=sflag, size = 0x8, scoped, tag = 'scoped memory for tpu_custom_call.1']
    #allocation4 [shape = 'u8[512]{0}', space=smem, size = 0x200, scoped, tag = 'input window, operand 2, single buffered']
    #allocation5 [shape = 's32[1]{0}', space=sflag, size = 0x4, scoped, tag = 'scoped memory for tpu_custom_call.1']
    #allocation6 [shape = 'u8[512]{0}', space=smem, size = 0x200, scoped, tag = 'input window, operand 3, single buffered']
    #allocation7 [shape = 'u8[4128768]{0}', space=vmem, size = 0x3f0000, scoped, tag = 'output window, operand 0']
    %9 = vsyncpa [#allocation3], 0
    %10 = vsyncpa [#allocation5], 0
    loop: start=0, step=1, limit=6
    $region2: #{tpu_custom_call.1} parent=1 // loop_pre_header
      _
    $region3: #{tpu_custom_call.1} parent=1 // loop_header
      %s12 = sphi 0, %s16
      %p13 = scmp.ge.s32.totalorder %s12, 6
      %s20 = sphi 0, %s20
      %s22 = sphi 0, %s20
      %s23 = sphi 0, %s22
      %s37 = sphi 0, %s23
      %s41 = sphi 0, %s41
      %s43 = sphi 0, %s41
      %s44 = sphi 0, %s43
      %s58 = sphi 0, %s44
      %s62 = sphi 0, %s62
      %s64 = sphi 0, %s62
      %s65 = sphi 0, %s64
      %s79 = sphi 0, %s65
      %s83 = sphi 0, %s83
      %s85 = sphi 0, %s83
      %s86 = sphi 0, %s85
      %s100 = sphi 0, %s86
      %s106 = sphi 0, %s108
      %s109 = sphi 0, %s106
      %s110 = sphi 0, %s109
      %s126 = sphi 0, %s110
    $region4: #{tpu_custom_call.1} parent=1 // loop_header_branch
      %15 = sbr.rel (%p13) target = $region8
    $region5: #{tpu_custom_call.1} parent=1 // loop_body
      %s17 = ssub.s32 %s12, 1
      %s18 = ssub.s32 %s12, 2
      %s19 = sadd.s32 %s12, 1
      %s21 = sadd.s32 %s20, 1
      %p24 = scmp.eq.s32.totalorder %s12, 3
      %p25 = scmp.ne.s32.totalorder %s20, %s22
      %p26 = scmp.eq.s32.totalorder %s12, 0
      %p27 = por %p25, %p26
      %p28 = scmp.ne.s32.totalorder %s20, %s22
      %p29 = scmp.eq.s32.totalorder %s17, 3
      %p30 = por %p28, %p29
      %p31 = scmp.ne.s32.totalorder %s22, %s23
      %p32 = scmp.eq.s32.totalorder %s17, 0
      %p33 = por %p31, %p32
      %p34 = scmp.ne.s32.totalorder %s22, %s23
      %p35 = scmp.eq.s32.totalorder %s18, 3
      %p36 = por %p34, %p35
      %p38 = scmp.ne.s32.totalorder %s23, %s37
      %p39 = scmp.eq.s32.totalorder %s18, 0
      %p40 = por %p38, %p39
      %s42 = sadd.s32 %s41, 1
      %p45 = scmp.eq.s32.totalorder %s12, 3
      %p46 = scmp.ne.s32.totalorder %s41, %s43
      %p47 = scmp.eq.s32.totalorder %s12, 0
      %p48 = por %p46, %p47
      %p49 = scmp.ne.s32.totalorder %s41, %s43
      %p50 = scmp.eq.s32.totalorder %s17, 3
      %p51 = por %p49, %p50
      %p52 = scmp.ne.s32.totalorder %s43, %s44
      %p53 = scmp.eq.s32.totalorder %s17, 0
      %p54 = por %p52, %p53
      %p55 = scmp.ne.s32.totalorder %s43, %s44
      %p56 = scmp.eq.s32.totalorder %s18, 3
      %p57 = por %p55, %p56
      %p59 = scmp.ne.s32.totalorder %s44, %s58
      %p60 = scmp.eq.s32.totalorder %s18, 0
      %p61 = por %p59, %p60
      %s63 = sadd.s32 %s62, 1
      %p66 = scmp.eq.s32.totalorder %s12, 3
      %p67 = scmp.ne.s32.totalorder %s62, %s64
      %p68 = scmp.eq.s32.totalorder %s12, 0
      %p69 = por %p67, %p68
      %p70 = scmp.ne.s32.totalorder %s62, %s64
      %p71 = scmp.eq.s32.totalorder %s17, 3
      %p72 = por %p70, %p71
      %p73 = scmp.ne.s32.totalorder %s64, %s65
      %p74 = scmp.eq.s32.totalorder %s17, 0
      %p75 = por %p73, %p74
      %p76 = scmp.ne.s32.totalorder %s64, %s65
      %p77 = scmp.eq.s32.totalorder %s18, 3
      %p78 = por %p76, %p77
      %p80 = scmp.ne.s32.totalorder %s65, %s79
      %p81 = scmp.eq.s32.totalorder %s18, 0
      %p82 = por %p80, %p81
      %s84 = sadd.s32 %s83, 1
      %p87 = scmp.eq.s32.totalorder %s12, 3
      %p88 = scmp.ne.s32.totalorder %s83, %s85
      %p89 = scmp.eq.s32.totalorder %s12, 0
      %p90 = por %p88, %p89
      %p91 = scmp.ne.s32.totalorder %s83, %s85
      %p92 = scmp.eq.s32.totalorder %s17, 3
      %p93 = por %p91, %p92
      %p94 = scmp.ne.s32.totalorder %s85, %s86
      %p95 = scmp.eq.s32.totalorder %s17, 0
      %p96 = por %p94, %p95
      %p97 = scmp.ne.s32.totalorder %s85, %s86
      %p98 = scmp.eq.s32.totalorder %s18, 3
      %p99 = por %p97, %p98
      %p101 = scmp.ne.s32.totalorder %s86, %s100
      %p102 = scmp.eq.s32.totalorder %s18, 0
      %p103 = por %p101, %p102
      %s104 = ssub.s32 %s12, %s19
      %p105 = scmp.eq.s32.totalorder %s104, 0
      %s107 = sadd.s32 %s106, 1
      %s108 = scalar_select %p105, %s106, %s107
      %p111 = pneg %p105
      %p112 = scmp.eq.s32.totalorder %s12, 3
      %p113 = por %p111, %p112
      %p114 = scmp.ne.s32.totalorder %s106, %s109
      %p115 = scmp.eq.s32.totalorder %s12, 0
      %p116 = por %p114, %p115
      %p117 = scmp.ne.s32.totalorder %s106, %s109
      %p118 = scmp.eq.s32.totalorder %s17, 3
      %p119 = por %p117, %p118
      %p120 = scmp.ne.s32.totalorder %s109, %s110
      %p121 = scmp.eq.s32.totalorder %s17, 0
      %p122 = por %p120, %p121
      %p123 = scmp.ne.s32.totalorder %s109, %s110
      %p124 = scmp.eq.s32.totalorder %s18, 3
      %p125 = por %p123, %p124
      %p127 = scmp.ne.s32.totalorder %s110, %s126
      %p128 = scmp.eq.s32.totalorder %s18, 0
      %p129 = por %p127, %p128
      %p130 = scmp.le.s32.totalorder 1, %s12
      %p131 = scmp.lt.s32.totalorder %s12, 5
      %p132 = pnand %p130, %p131
      %p133 = pneg %p132
      // Predicated region
      $region9: #{tpu_custom_call.1} parent=5 // pred_check
        _
      $region10: #{tpu_custom_call.1} parent=5 // pred_check_branch
        %135 = sbr.rel (%p132) target = $region12
      $region11: #{tpu_custom_call.1} parent=5 // pred_region
        %s136 = ssub.s32 %s12, 1
        // Predicated region
        $region13: #{tpu_custom_call.1} parent=11 // pred_check
          %p137 = pneg %p33
        $region14: #{tpu_custom_call.1} parent=11 // pred_check_branch
          %139 = sbr.rel (%p137) target = $region16
        $region15: #{tpu_custom_call.1} parent=11 // pred_region
          _
        $region16: #{tpu_custom_call.1} parent=11 // pred_fallthru
          _
        // Predicated region
        $region17: #{tpu_custom_call.1} parent=11 // pred_check
          %p140 = pneg %p54
        $region18: #{tpu_custom_call.1} parent=11 // pred_check_branch
          %142 = sbr.rel (%p140) target = $region20
        $region19: #{tpu_custom_call.1} parent=11 // pred_region
          %s144 = ssub.s32 48, 48
          %145 = vsyncadd [#allocation3], %s144
          %148 = dma.hbm_to_smem %s1, 48, [#allocation2], [#allocation3]
        $region20: #{tpu_custom_call.1} parent=11 // pred_fallthru
          _
        // Predicated region
        $region21: #{tpu_custom_call.1} parent=11 // pred_check
          %p149 = pneg %p75
        $region22: #{tpu_custom_call.1} parent=11 // pred_check_branch
          %151 = sbr.rel (%p149) target = $region24
        $region23: #{tpu_custom_call.1} parent=11 // pred_region
          %s153 = ssub.s32 16, 16
          %154 = vsyncadd [#allocation5], %s153
          %157 = dma.hbm_to_smem %s2, 16, [#allocation4], [#allocation5]
        $region24: #{tpu_custom_call.1} parent=11 // pred_fallthru
          _
        // Predicated region
        $region25: #{tpu_custom_call.1} parent=11 // pred_check
          %p158 = pneg %p96
        $region26: #{tpu_custom_call.1} parent=11 // pred_check_branch
          %160 = sbr.rel (%p158) target = $region28
        $region27: #{tpu_custom_call.1} parent=11 // pred_region
          %s162 = ssub.s32 16, 16
          %163 = vsyncadd [#allocation5], %s162
          %166 = dma.hbm_to_smem %s3, 16, [#allocation6], [#allocation5]
        $region28: #{tpu_custom_call.1} parent=11 // pred_fallthru
          _
      $region12: #{tpu_custom_call.1} parent=5 // pred_fallthru
        _
      %p167 = scmp.lt.s32.totalorder %s12, 4
      // Predicated region
      $region29: #{tpu_custom_call.1} parent=5 // pred_check
        %p168 = pneg %p167
      $region30: #{tpu_custom_call.1} parent=5 // pred_check_branch
        %170 = sbr.rel (%p168) target = $region32
      $region31: #{tpu_custom_call.1} parent=5 // pred_region
        _
      $region32: #{tpu_custom_call.1} parent=5 // pred_fallthru
        _
      %p171 = scmp.le.s32.totalorder 1, %s12
      %p172 = scmp.lt.s32.totalorder %s12, 5
      %p173 = pnand %p171, %p172
      %p174 = pneg %p173
      // Predicated region
      $region33: #{tpu_custom_call.1} parent=5 // pred_check
        _
      $region34: #{tpu_custom_call.1} parent=5 // pred_check_branch
        %176 = sbr.rel (%p173) target = $region36
      $region35: #{tpu_custom_call.1} parent=5 // pred_region
        %s177 = ssub.s32 %s12, 1
        // Predicated region
        $region37: #{tpu_custom_call.1} parent=35 // pred_check
          %p178 = pneg %p54
        $region38: #{tpu_custom_call.1} parent=35 // pred_check_branch
          %180 = sbr.rel (%p178) target = $region40
        $region39: #{tpu_custom_call.1} parent=35 // pred_region
          %181 = dma.done [#allocation3], 48
        $region40: #{tpu_custom_call.1} parent=35 // pred_fallthru
          _
        // Predicated region
        $region41: #{tpu_custom_call.1} parent=35 // pred_check
          %p182 = pneg %p75
        $region42: #{tpu_custom_call.1} parent=35 // pred_check_branch
          %184 = sbr.rel (%p182) target = $region44
        $region43: #{tpu_custom_call.1} parent=35 // pred_region
          %185 = dma.done [#allocation5], 16
        $region44: #{tpu_custom_call.1} parent=35 // pred_fallthru
          _
        // Predicated region
        $region45: #{tpu_custom_call.1} parent=35 // pred_check
          %p186 = pneg %p96
        $region46: #{tpu_custom_call.1} parent=35 // pred_check_branch
          %188 = sbr.rel (%p186) target = $region48
        $region47: #{tpu_custom_call.1} parent=35 // pred_region
          %189 = dma.done [#allocation5], 16
        $region48: #{tpu_custom_call.1} parent=35 // pred_fallthru
          _
        %190 = sfence
        %p191 = pneg %p33
        %p192 = pneg %p30
        %p193 = pneg %p54
        %p194 = pneg %p51
        %p195 = pneg %p75
        %p196 = pneg %p72
        %p197 = pneg %p96
        %p198 = pneg %p93
        %p199 = pneg %p122
        %p200 = pneg %p119
        %s201 = sand.u32 %s109, 1
        %s202 = sand.u32 %s109, 1
        %s203 = smul.addr %s202, 4032
        %s204 = scalar_lea.vmem [#allocation7], %s203
        %s205 = smul.u32 2, %s17
        %v206 = vld [vmem:[%s0] sm:$0xff]
        %v207 = vld [vmem:[%s0 + $0x8] sm:$0xff]
        %v208 = vld [vmem:[%s0 + $0x10] sm:$0xf]
        %v209 = vld [vmem:[%s0 + $0x18] sm:$0xff]
        %v210 = vld [vmem:[%s0 + $0x20] sm:$0xff]
        %v211 = vld [vmem:[%s0 + $0x28] sm:$0xf]
        %v212 = vld [vmem:[%s0 + $0x30] sm:$0xff]
        %v213 = vld [vmem:[%s0 + $0x38] sm:$0xff]
        %v214 = vld [vmem:[%s0 + $0x40] sm:$0xf]
        %v215 = vld [vmem:[%s0 + $0x48] sm:$0xff]
        %v216 = vld [vmem:[%s0 + $0x50] sm:$0xff]
        %v217 = vld [vmem:[%s0 + $0x58] sm:$0xf]
        %v218 = vld [vmem:[%s0 + $0x60] sm:$0xff]
        %v219 = vld [vmem:[%s0 + $0x68] sm:$0xff]
        %v220 = vld [vmem:[%s0 + $0x70] sm:$0xf]
        %v221 = vld [vmem:[%s0 + $0x78] sm:$0xff]
        %v222 = vld [vmem:[%s0 + $0x80] sm:$0xff]
        %v223 = vld [vmem:[%s0 + $0x88] sm:$0xf]
        %v224 = vld [vmem:[%s0 + $0x90] sm:$0xff]
        %v225 = vld [vmem:[%s0 + $0x98] sm:$0xff]
        %v226 = vld [vmem:[%s0 + $0xa0] sm:$0xf]
        %v227 = vld [vmem:[%s0 + $0xa8] sm:$0xff]
        %v228 = vld [vmem:[%s0 + $0xb0] sm:$0xff]
        %v229 = vld [vmem:[%s0 + $0xb8] sm:$0xf]
        %s230 = smul.u32 %s17, 72
        %s231 = sld [smem:[#allocation2 + %s230]]
        %v232 = vstv %s231
        %v233 = vmul.f32 %v206, %v232
        %v234 = vmul.f32 %v207, %v232
        %v235 = vmul.f32 %v208, %v232
        %v236 = vmul.f32 %v218, %v232
        %v237 = vmul.f32 %v219, %v232
        %v238 = vmul.f32 %v220, %v232
        %v239 = vadd.f32 %v233, 0.0
        %v240 = vadd.f32 %v234, 0.0
        %v241 = vadd.f32 %v235, 0.0
        %v242 = vadd.f32 %v236, 0.0
        %v243 = vadd.f32 %v237, 0.0
        %v244 = vadd.f32 %v238, 0.0
        %s245 = smul.u32 %s17, 2
        %s246 = sadd.s32 %s245, 1
        %s247 = smul.u32 %s246, 36
        %s248 = sld [smem:[#allocation2 + %s247]]
        %v249 = vstv %s248
        %v250 = vmul.f32 %v206, %v249
        %v251 = vmul.f32 %v207, %v249
        %v252 = vmul.f32 %v208, %v249
        %v253 = vmul.f32 %v218, %v249
        %v254 = vmul.f32 %v219, %v249
        %v255 = vmul.f32 %v220, %v249
        %v256 = vadd.f32 %v250, 0.0
        %v257 = vadd.f32 %v251, 0.0
        %v258 = vadd.f32 %v252, 0.0
        %v259 = vadd.f32 %v253, 0.0
        %v260 = vadd.f32 %v254, 0.0
        %v261 = vadd.f32 %v255, 0.0
        %s262 = sadd.s32 %s230, 1
        %s263 = sld [smem:[#allocation2 + %s262]]
        %v264 = vstv %s263
        %v265 = vmul.f32 %v206, %v264
        %v266 = vmul.f32 %v207, %v264
        %v267 = vmul.f32 %v208, %v264
        %v268 = vmul.f32 %v218, %v264
        %v269 = vmul.f32 %v219, %v264
        %v270 = vmul.f32 %v220, %v264
        %277 = vrot.lane.b32.xlu0 %v265, 127
        %v278 = vpop.permute.xlu0 %277
        %279 = vrot.lane.b32.xlu0 %v266, 127
        %v280 = vpop.permute.xlu0 %279
        %281 = vrot.lane.b32.xlu0 %v267, 127
        %v282 = vpop.permute.xlu0 %281
        %283 = vrot.lane.b32.xlu0 %v268, 127
        %v284 = vpop.permute.xlu0 %283
        %285 = vrot.lane.b32.xlu0 %v269, 127
        %v286 = vpop.permute.xlu0 %285
        %287 = vrot.lane.b32.xlu0 %v270, 127
        %v288 = vpop.permute.xlu0 %287
        %v295 = vadd.f32 %v239, %v278
        %v296 = vadd.f32 %v240, %v280
        %v297 = vadd.f32 %v241, %v282
        %v298 = vadd.f32 %v242, %v284
        %v299 = vadd.f32 %v243, %v286
        %v300 = vadd.f32 %v244, %v288
        %s301 = sadd.s32 %s247, 1
        %s302 = sld [smem:[#allocation2 + %s301]]
        %v303 = vstv %s302
        %v304 = vmul.f32 %v206, %v303
        %v305 = vmul.f32 %v207, %v303
        %v306 = vmul.f32 %v208, %v303
        %v307 = vmul.f32 %v218, %v303
        %v308 = vmul.f32 %v219, %v303
        %v309 = vmul.f32 %v220, %v303
        %316 = vrot.lane.b32.xlu0 %v304, 127
        %v317 = vpop.permute.xlu0 %316
        %318 = vrot.lane.b32.xlu0 %v305, 127
        %v319 = vpop.permute.xlu0 %318
        %320 = vrot.lane.b32.xlu0 %v306, 127
        %v321 = vpop.permute.xlu0 %320
        %322 = vrot.lane.b32.xlu0 %v307, 127
        %v323 = vpop.permute.xlu0 %322
        %324 = vrot.lane.b32.xlu0 %v308, 127
        %v325 = vpop.permute.xlu0 %324
        %326 = vrot.lane.b32.xlu0 %v309, 127
        %v327 = vpop.permute.xlu0 %326
        %v334 = vadd.f32 %v256, %v317
        %v335 = vadd.f32 %v257, %v319
        %v336 = vadd.f32 %v258, %v321
        %v337 = vadd.f32 %v259, %v323
        %v338 = vadd.f32 %v260, %v325
        %v339 = vadd.f32 %v261, %v327
        %s340 = sadd.s32 %s230, 2
        %s341 = sld [smem:[#allocation2 + %s340]]
        %v342 = vstv %s341
        %v343 = vmul.f32 %v206, %v342
        %v344 = vmul.f32 %v207, %v342
        %v345 = vmul.f32 %v208, %v342
        %v346 = vmul.f32 %v218, %v342
        %v347 = vmul.f32 %v219, %v342
        %v348 = vmul.f32 %v220, %v342
        %355 = vrot.lane.b32.xlu0 %v343, 126
        %v356 = vpop.permute.xlu0 %355
        %357 = vrot.lane.b32.xlu0 %v344, 126
        %v358 = vpop.permute.xlu0 %357
        %359 = vrot.lane.b32.xlu0 %v345, 126
        %v360 = vpop.permute.xlu0 %359
        %361 = vrot.lane.b32.xlu0 %v346, 126
        %v362 = vpop.permute.xlu0 %361
        %363 = vrot.lane.b32.xlu0 %v347, 126
        %v364 = vpop.permute.xlu0 %363
        %365 = vrot.lane.b32.xlu0 %v348, 126
        %v366 = vpop.permute.xlu0 %365
        %v373 = vadd.f32 %v295, %v356
        %v374 = vadd.f32 %v296, %v358
        %v375 = vadd.f32 %v297, %v360
        %v376 = vadd.f32 %v298, %v362
        %v377 = vadd.f32 %v299, %v364
        %v378 = vadd.f32 %v300, %v366
        %s379 = sadd.s32 %s247, 2
        %s380 = sld [smem:[#allocation2 + %s379]]
        %v381 = vstv %s380
        %v382 = vmul.f32 %v206, %v381
        %v383 = vmul.f32 %v207, %v381
        %v384 = vmul.f32 %v208, %v381
        %v385 = vmul.f32 %v218, %v381
        %v386 = vmul.f32 %v219, %v381
        %v387 = vmul.f32 %v220, %v381
        %394 = vrot.lane.b32.xlu0 %v382, 126
        %v395 = vpop.permute.xlu0 %394
        %396 = vrot.lane.b32.xlu0 %v383, 126
        %v397 = vpop.permute.xlu0 %396
        %398 = vrot.lane.b32.xlu0 %v384, 126
        %v399 = vpop.permute.xlu0 %398
        %400 = vrot.lane.b32.xlu0 %v385, 126
        %v401 = vpop.permute.xlu0 %400
        %402 = vrot.lane.b32.xlu0 %v386, 126
        %v403 = vpop.permute.xlu0 %402
        %404 = vrot.lane.b32.xlu0 %v387, 126
        %v405 = vpop.permute.xlu0 %404
        %v412 = vadd.f32 %v334, %v395
        %v413 = vadd.f32 %v335, %v397
        %v414 = vadd.f32 %v336, %v399
        %v415 = vadd.f32 %v337, %v401
        %v416 = vadd.f32 %v338, %v403
        %v417 = vadd.f32 %v339, %v405
        %s418 = sadd.s32 %s230, 3
        %s419 = sld [smem:[#allocation2 + %s418]]
        %v420 = vstv %s419
        %v421 = vmul.f32 %v206, %v420
        %v422 = vmul.f32 %v207, %v420
        %v423 = vmul.f32 %v208, %v420
        %v424 = vmul.f32 %v218, %v420
        %v425 = vmul.f32 %v219, %v420
        %v426 = vmul.f32 %v220, %v420
        %vm433 = vcmask 1046528
        %v434 = vrot.slane %v421, 1
        %v435 = vrot.slane %v422, 1
        %v436 = vsel %vm433, %v434, %v435
        %v437 = vrot.slane %v423, 1
        %v438 = vsel %vm433, %v435, %v437
        %v439 = vrot.slane %v424, 1
        %v440 = vrot.slane %v425, 1
        %v441 = vsel %vm433, %v439, %v440
        %v442 = vrot.slane %v426, 1
        %v443 = vsel %vm433, %v440, %v442
        %v450 = vadd.f32 %v373, %v436
        %v451 = vadd.f32 %v374, %v438
        %v452 = vadd.f32 %v375, %v437
        %v453 = vadd.f32 %v376, %v441
        %v454 = vadd.f32 %v377, %v443
        %v455 = vadd.f32 %v378, %v442
        %s456 = sadd.s32 %s247, 3
        %s457 = sld [smem:[#allocation2 + %s456]]
        %v458 = vstv %s457
        %v459 = vmul.f32 %v206, %v458
        %v460 = vmul.f32 %v207, %v458
        %v461 = vmul.f32 %v208, %v458
        %v462 = vmul.f32 %v218, %v458
        %v463 = vmul.f32 %v219, %v458
        %v464 = vmul.f32 %v220, %v458
        %v471 = vrot.slane %v459, 1
        %v472 = vrot.slane %v460, 1
        %v473 = vsel %vm433, %v471, %v472
        %v474 = vrot.slane %v461, 1
        %v475 = vsel %vm433, %v472, %v474
        %v476 = vrot.slane %v462, 1
        %v477 = vrot.slane %v463, 1
        %v478 = vsel %vm433, %v476, %v477
        %v479 = vrot.slane %v464, 1
        %v480 = vsel %vm433, %v477, %v479
        %v487 = vadd.f32 %v412, %v473
        %v488 = vadd.f32 %v413, %v475
        %v489 = vadd.f32 %v414, %v474
        %v490 = vadd.f32 %v415, %v478
        %v491 = vadd.f32 %v416, %v480
        %v492 = vadd.f32 %v417, %v479
        %s493 = sadd.s32 %s230, 4
        %s494 = sld [smem:[#allocation2 + %s493]]
        %v495 = vstv %s494
        %v496 = vmul.f32 %v206, %v495
        %v497 = vmul.f32 %v207, %v495
        %v498 = vmul.f32 %v208, %v495
        %v499 = vmul.f32 %v218, %v495
        %v500 = vmul.f32 %v219, %v495
        %v501 = vmul.f32 %v220, %v495
        %v508 = vrot.slane %v496, 1
        %v509 = vrot.slane %v497, 1
        %v510 = vsel %vm433, %v508, %v509
        %v511 = vrot.slane %v498, 1
        %v512 = vsel %vm433, %v509, %v511
        %v513 = vrot.slane %v499, 1
        %v514 = vrot.slane %v500, 1
        %v515 = vsel %vm433, %v513, %v514
        %v516 = vrot.slane %v501, 1
        %v517 = vsel %vm433, %v514, %v516
        %518 = vrot.lane.b32.xlu0 %v510, 127
        %v519 = vpop.permute.xlu0 %518
        %520 = vrot.lane.b32.xlu0 %v512, 127
        %v521 = vpop.permute.xlu0 %520
        %522 = vrot.lane.b32.xlu0 %v511, 127
        %v523 = vpop.permute.xlu0 %522
        %524 = vrot.lane.b32.xlu0 %v515, 127
        %v525 = vpop.permute.xlu0 %524
        %526 = vrot.lane.b32.xlu0 %v517, 127
        %v527 = vpop.permute.xlu0 %526
        %528 = vrot.lane.b32.xlu0 %v516, 127
        %v529 = vpop.permute.xlu0 %528
        %v536 = vadd.f32 %v450, %v519
        %v537 = vadd.f32 %v451, %v521
        %v538 = vadd.f32 %v452, %v523
        %v539 = vadd.f32 %v453, %v525
        %v540 = vadd.f32 %v454, %v527
        %v541 = vadd.f32 %v455, %v529
        %s542 = sadd.s32 %s247, 4
        %s543 = sld [smem:[#allocation2 + %s542]]
        %v544 = vstv %s543
        %v545 = vmul.f32 %v206, %v544
        %v546 = vmul.f32 %v207, %v544
        %v547 = vmul.f32 %v208, %v544
        %v548 = vmul.f32 %v218, %v544
        %v549 = vmul.f32 %v219, %v544
        %v550 = vmul.f32 %v220, %v544
        %v557 = vrot.slane %v545, 1
        %v558 = vrot.slane %v546, 1
        %v559 = vsel %vm433, %v557, %v558
        %v560 = vrot.slane %v547, 1
        %v561 = vsel %vm433, %v558, %v560
        %v562 = vrot.slane %v548, 1
        %v563 = vrot.slane %v549, 1
        %v564 = vsel %vm433, %v562, %v563
        %v565 = vrot.slane %v550, 1
        %v566 = vsel %vm433, %v563, %v565
        %567 = vrot.lane.b32.xlu0 %v559, 127
        %v568 = vpop.permute.xlu0 %567
        %569 = vrot.lane.b32.xlu0 %v561, 127
        %v570 = vpop.permute.xlu0 %569
        %571 = vrot.lane.b32.xlu0 %v560, 127
        %v572 = vpop.permute.xlu0 %571
        %573 = vrot.lane.b32.xlu0 %v564, 127
        %v574 = vpop.permute.xlu0 %573
        %575 = vrot.lane.b32.xlu0 %v566, 127
        %v576 = vpop.permute.xlu0 %575
        %577 = vrot.lane.b32.xlu0 %v565, 127
        %v578 = vpop.permute.xlu0 %577
        %v585 = vadd.f32 %v487, %v568
        %v586 = vadd.f32 %v488, %v570
        %v587 = vadd.f32 %v489, %v572
        %v588 = vadd.f32 %v490, %v574
        %v589 = vadd.f32 %v491, %v576
        %v590 = vadd.f32 %v492, %v578
        %s591 = sadd.s32 %s230, 5
        %s592 = sld [smem:[#allocation2 + %s591]]
        %v593 = vstv %s592
        %v594 = vmul.f32 %v206, %v593
        %v595 = vmul.f32 %v207, %v593
        %v596 = vmul.f32 %v208, %v593
        %v597 = vmul.f32 %v218, %v593
        %v598 = vmul.f32 %v219, %v593
        %v599 = vmul.f32 %v220, %v593
        %v606 = vrot.slane %v594, 1
        %v607 = vrot.slane %v595, 1
        %v608 = vsel %vm433, %v606, %v607
        %v609 = vrot.slane %v596, 1
        %v610 = vsel %vm433, %v607, %v609
        %v611 = vrot.slane %v597, 1
        %v612 = vrot.slane %v598, 1
        %v613 = vsel %vm433, %v611, %v612
        %v614 = vrot.slane %v599, 1
        %v615 = vsel %vm433, %v612, %v614
        %616 = vrot.lane.b32.xlu0 %v608, 126
        %v617 = vpop.permute.xlu0 %616
        %618 = vrot.lane.b32.xlu0 %v610, 126
        %v619 = vpop.permute.xlu0 %618
        %620 = vrot.lane.b32.xlu0 %v609, 126
        %v621 = vpop.permute.xlu0 %620
        %622 = vrot.lane.b32.xlu0 %v613, 126
        %v623 = vpop.permute.xlu0 %622
        %624 = vrot.lane.b32.xlu0 %v615, 126
        %v625 = vpop.permute.xlu0 %624
        %626 = vrot.lane.b32.xlu0 %v614, 126
        %v627 = vpop.permute.xlu0 %626
        %v634 = vadd.f32 %v536, %v617
        %v635 = vadd.f32 %v537, %v619
        %v636 = vadd.f32 %v538, %v621
        %v637 = vadd.f32 %v539, %v623
        %v638 = vadd.f32 %v540, %v625
        %v639 = vadd.f32 %v541, %v627
        %s640 = sadd.s32 %s247, 5
        %s641 = sld [smem:[#allocation2 + %s640]]
        %v642 = vstv %s641
        %v643 = vmul.f32 %v206, %v642
        %v644 = vmul.f32 %v207, %v642
        %v645 = vmul.f32 %v208, %v642
        %v646 = vmul.f32 %v218, %v642
        %v647 = vmul.f32 %v219, %v642
        %v648 = vmul.f32 %v220, %v642
        %v655 = vrot.slane %v643, 1
        %v656 = vrot.slane %v644, 1
        %v657 = vsel %vm433, %v655, %v656
        %v658 = vrot.slane %v645, 1
        %v659 = vsel %vm433, %v656, %v658
        %v660 = vrot.slane %v646, 1
        %v661 = vrot.slane %v647, 1
        %v662 = vsel %vm433, %v660, %v661
        %v663 = vrot.slane %v648, 1
        %v664 = vsel %vm433, %v661, %v663
        %665 = vrot.lane.b32.xlu0 %v657, 126
        %v666 = vpop.permute.xlu0 %665
        %667 = vrot.lane.b32.xlu0 %v659, 126
        %v668 = vpop.permute.xlu0 %667
        %669 = vrot.lane.b32.xlu0 %v658, 126
        %v670 = vpop.permute.xlu0 %669
        %671 = vrot.lane.b32.xlu0 %v662, 126
        %v672 = vpop.permute.xlu0 %671
        %673 = vrot.lane.b32.xlu0 %v664, 126
        %v674 = vpop.permute.xlu0 %673
        %675 = vrot.lane.b32.xlu0 %v663, 126
        %v676 = vpop.permute.xlu0 %675
        %v683 = vadd.f32 %v585, %v666
        %v684 = vadd.f32 %v586, %v668
        %v685 = vadd.f32 %v587, %v670
        %v686 = vadd.f32 %v588, %v672
        %v687 = vadd.f32 %v589, %v674
        %v688 = vadd.f32 %v590, %v676
        %s689 = sadd.s32 %s230, 6
        %s690 = sld [smem:[#allocation2 + %s689]]
        %v691 = vstv %s690
        %v692 = vmul.f32 %v206, %v691
        %v693 = vmul.f32 %v207, %v691
        %v694 = vmul.f32 %v208, %v691
        %v695 = vmul.f32 %v218, %v691
        %v696 = vmul.f32 %v219, %v691
        %v697 = vmul.f32 %v220, %v691
        %vm704 = vcmask 1045504
        %v705 = vrot.slane %v692, 2
        %v706 = vrot.slane %v693, 2
        %v707 = vsel %vm704, %v705, %v706
        %v708 = vrot.slane %v694, 2
        %v709 = vsel %vm704, %v706, %v708
        %v710 = vrot.slane %v695, 2
        %v711 = vrot.slane %v696, 2
        %v712 = vsel %vm704, %v710, %v711
        %v713 = vrot.slane %v697, 2
        %v714 = vsel %vm704, %v711, %v713
        %v721 = vadd.f32 %v634, %v707
        %v722 = vadd.f32 %v635, %v709
        %v723 = vadd.f32 %v636, %v708
        %v724 = vadd.f32 %v637, %v712
        %v725 = vadd.f32 %v638, %v714
        %v726 = vadd.f32 %v639, %v713
        %s727 = sadd.s32 %s247, 6
        %s728 = sld [smem:[#allocation2 + %s727]]
        %v729 = vstv %s728
        %v730 = vmul.f32 %v206, %v729
        %v731 = vmul.f32 %v207, %v729
        %v732 = vmul.f32 %v208, %v729
        %v733 = vmul.f32 %v218, %v729
        %v734 = vmul.f32 %v219, %v729
        %v735 = vmul.f32 %v220, %v729
        %v742 = vrot.slane %v730, 2
        %v743 = vrot.slane %v731, 2
        %v744 = vsel %vm704, %v742, %v743
        %v745 = vrot.slane %v732, 2
        %v746 = vsel %vm704, %v743, %v745
        %v747 = vrot.slane %v733, 2
        %v748 = vrot.slane %v734, 2
        %v749 = vsel %vm704, %v747, %v748
        %v750 = vrot.slane %v735, 2
        %v751 = vsel %vm704, %v748, %v750
        %v758 = vadd.f32 %v683, %v744
        %v759 = vadd.f32 %v684, %v746
        %v760 = vadd.f32 %v685, %v745
        %v761 = vadd.f32 %v686, %v749
        %v762 = vadd.f32 %v687, %v751
        %v763 = vadd.f32 %v688, %v750
        %s764 = sadd.s32 %s230, 7
        %s765 = sld [smem:[#allocation2 + %s764]]
        %v766 = vstv %s765
        %v767 = vmul.f32 %v206, %v766
        %v768 = vmul.f32 %v207, %v766
        %v769 = vmul.f32 %v208, %v766
        %v770 = vmul.f32 %v218, %v766
        %v771 = vmul.f32 %v219, %v766
        %v772 = vmul.f32 %v220, %v766
        %v779 = vrot.slane %v767, 2
        %v780 = vrot.slane %v768, 2
        %v781 = vsel %vm704, %v779, %v780
        %v782 = vrot.slane %v769, 2
        %v783 = vsel %vm704, %v780, %v782
        %v784 = vrot.slane %v770, 2
        %v785 = vrot.slane %v771, 2
        %v786 = vsel %vm704, %v784, %v785
        %v787 = vrot.slane %v772, 2
        %v788 = vsel %vm704, %v785, %v787
        %789 = vrot.lane.b32.xlu0 %v781, 127
        %v790 = vpop.permute.xlu0 %789
        %791 = vrot.lane.b32.xlu0 %v783, 127
        %v792 = vpop.permute.xlu0 %791
        %793 = vrot.lane.b32.xlu0 %v782, 127
        %v794 = vpop.permute.xlu0 %793
        %795 = vrot.lane.b32.xlu0 %v786, 127
        %v796 = vpop.permute.xlu0 %795
        %797 = vrot.lane.b32.xlu0 %v788, 127
        %v798 = vpop.permute.xlu0 %797
        %799 = vrot.lane.b32.xlu0 %v787, 127
        %v800 = vpop.permute.xlu0 %799
        %v807 = vadd.f32 %v721, %v790
        %v808 = vadd.f32 %v722, %v792
        %v809 = vadd.f32 %v723, %v794
        %v810 = vadd.f32 %v724, %v796
        %v811 = vadd.f32 %v725, %v798
        %v812 = vadd.f32 %v726, %v800
        %s813 = sadd.s32 %s247, 7
        %s814 = sld [smem:[#allocation2 + %s813]]
        %v815 = vstv %s814
        %v816 = vmul.f32 %v206, %v815
        %v817 = vmul.f32 %v207, %v815
        %v818 = vmul.f32 %v208, %v815
        %v819 = vmul.f32 %v218, %v815
        %v820 = vmul.f32 %v219, %v815
        %v821 = vmul.f32 %v220, %v815
        %v828 = vrot.slane %v816, 2
        %v829 = vrot.slane %v817, 2
        %v830 = vsel %vm704, %v828, %v829
        %v831 = vrot.slane %v818, 2
        %v832 = vsel %vm704, %v829, %v831
        %v833 = vrot.slane %v819, 2
        %v834 = vrot.slane %v820, 2
        %v835 = vsel %vm704, %v833, %v834
        %v836 = vrot.slane %v821, 2
        %v837 = vsel %vm704, %v834, %v836
        %838 = vrot.lane.b32.xlu0 %v830, 127
        %v839 = vpop.permute.xlu0 %838
        %840 = vrot.lane.b32.xlu0 %v832, 127
        %v841 = vpop.permute.xlu0 %840
        %842 = vrot.lane.b32.xlu0 %v831, 127
        %v843 = vpop.permute.xlu0 %842
        %844 = vrot.lane.b32.xlu0 %v835, 127
        %v845 = vpop.permute.xlu0 %844
        %846 = vrot.lane.b32.xlu0 %v837, 127
        %v847 = vpop.permute.xlu0 %846
        %848 = vrot.lane.b32.xlu0 %v836, 127
        %v849 = vpop.permute.xlu0 %848
        %v856 = vadd.f32 %v758, %v839
        %v857 = vadd.f32 %v759, %v841
        %v858 = vadd.f32 %v760, %v843
        %v859 = vadd.f32 %v761, %v845
        %v860 = vadd.f32 %v762, %v847
        %v861 = vadd.f32 %v763, %v849
        %s862 = sadd.s32 %s230, 8
        %s863 = sld [smem:[#allocation2 + %s862]]
        %v864 = vstv %s863
        %v865 = vmul.f32 %v206, %v864
        %v866 = vmul.f32 %v207, %v864
        %v867 = vmul.f32 %v208, %v864
        %v868 = vmul.f32 %v218, %v864
        %v869 = vmul.f32 %v219, %v864
        %v870 = vmul.f32 %v220, %v864
        %v877 = vrot.slane %v865, 2
        %v878 = vrot.slane %v866, 2
        %v879 = vsel %vm704, %v877, %v878
        %v880 = vrot.slane %v867, 2
        %v881 = vsel %vm704, %v878, %v880
        %v882 = vrot.slane %v868, 2
        %v883 = vrot.slane %v869, 2
        %v884 = vsel %vm704, %v882, %v883
        %v885 = vrot.slane %v870, 2
        %v886 = vsel %vm704, %v883, %v885
        %887 = vrot.lane.b32.xlu0 %v879, 126
        %v888 = vpop.permute.xlu0 %887
        %889 = vrot.lane.b32.xlu0 %v881, 126
        %v890 = vpop.permute.xlu0 %889
        %891 = vrot.lane.b32.xlu0 %v880, 126
        %v892 = vpop.permute.xlu0 %891
        %893 = vrot.lane.b32.xlu0 %v884, 126
        %v894 = vpop.permute.xlu0 %893
        %895 = vrot.lane.b32.xlu0 %v886, 126
        %v896 = vpop.permute.xlu0 %895
        %897 = vrot.lane.b32.xlu0 %v885, 126
        %v898 = vpop.permute.xlu0 %897
        %v905 = vadd.f32 %v807, %v888
        %v906 = vadd.f32 %v808, %v890
        %v907 = vadd.f32 %v809, %v892
        %v908 = vadd.f32 %v810, %v894
        %v909 = vadd.f32 %v811, %v896
        %v910 = vadd.f32 %v812, %v898
        %s911 = sadd.s32 %s247, 8
        %s912 = sld [smem:[#allocation2 + %s911]]
        %v913 = vstv %s912
        %v914 = vmul.f32 %v206, %v913
        %v915 = vmul.f32 %v207, %v913
        %v916 = vmul.f32 %v208, %v913
        %v917 = vmul.f32 %v218, %v913
        %v918 = vmul.f32 %v219, %v913
        %v919 = vmul.f32 %v220, %v913
        %v926 = vrot.slane %v914, 2
        %v927 = vrot.slane %v915, 2
        %v928 = vsel %vm704, %v926, %v927
        %v929 = vrot.slane %v916, 2
        %v930 = vsel %vm704, %v927, %v929
        %v931 = vrot.slane %v917, 2
        %v932 = vrot.slane %v918, 2
        %v933 = vsel %vm704, %v931, %v932
        %v934 = vrot.slane %v919, 2
        %v935 = vsel %vm704, %v932, %v934
        %936 = vrot.lane.b32.xlu0 %v928, 126
        %v937 = vpop.permute.xlu0 %936
        %938 = vrot.lane.b32.xlu0 %v930, 126
        %v939 = vpop.permute.xlu0 %938
        %940 = vrot.lane.b32.xlu0 %v929, 126
        %v941 = vpop.permute.xlu0 %940
        %942 = vrot.lane.b32.xlu0 %v933, 126
        %v943 = vpop.permute.xlu0 %942
        %944 = vrot.lane.b32.xlu0 %v935, 126
        %v945 = vpop.permute.xlu0 %944
        %946 = vrot.lane.b32.xlu0 %v934, 126
        %v947 = vpop.permute.xlu0 %946
        %v954 = vadd.f32 %v856, %v937
        %v955 = vadd.f32 %v857, %v939
        %v956 = vadd.f32 %v858, %v941
        %v957 = vadd.f32 %v859, %v943
        %v958 = vadd.f32 %v860, %v945
        %v959 = vadd.f32 %v861, %v947
        %s960 = sadd.s32 %s230, 9
        %s961 = sld [smem:[#allocation2 + %s960]]
        %v962 = vstv %s961
        %v963 = vmul.f32 %v209, %v962
        %v964 = vmul.f32 %v210, %v962
        %v965 = vmul.f32 %v211, %v962
        %v966 = vmul.f32 %v221, %v962
        %v967 = vmul.f32 %v222, %v962
        %v968 = vmul.f32 %v223, %v962
        %v969 = vadd.f32 %v905, %v963
        %v970 = vadd.f32 %v906, %v964
        %v971 = vadd.f32 %v907, %v965
        %v972 = vadd.f32 %v908, %v966
        %v973 = vadd.f32 %v909, %v967
        %v974 = vadd.f32 %v910, %v968
        %s975 = sadd.s32 %s247, 9
        %s976 = sld [smem:[#allocation2 + %s975]]
        %v977 = vstv %s976
        %v978 = vmul.f32 %v209, %v977
        %v979 = vmul.f32 %v210, %v977
        %v980 = vmul.f32 %v211, %v977
        %v981 = vmul.f32 %v221, %v977
        %v982 = vmul.f32 %v222, %v977
        %v983 = vmul.f32 %v223, %v977
        %v984 = vadd.f32 %v954, %v978
        %v985 = vadd.f32 %v955, %v979
        %v986 = vadd.f32 %v956, %v980
        %v987 = vadd.f32 %v957, %v981
        %v988 = vadd.f32 %v958, %v982
        %v989 = vadd.f32 %v959, %v983
        %s990 = sadd.s32 %s230, 10
        %s991 = sld [smem:[#allocation2 + %s990]]
        %v992 = vstv %s991
        %v993 = vmul.f32 %v209, %v992
        %v994 = vmul.f32 %v210, %v992
        %v995 = vmul.f32 %v211, %v992
        %v996 = vmul.f32 %v221, %v992
        %v997 = vmul.f32 %v222, %v992
        %v998 = vmul.f32 %v223, %v992
        %1005 = vrot.lane.b32.xlu0 %v993, 127
        %v1006 = vpop.permute.xlu0 %1005
        %1007 = vrot.lane.b32.xlu0 %v994, 127
        %v1008 = vpop.permute.xlu0 %1007
        %1009 = vrot.lane.b32.xlu0 %v995, 127
        %v1010 = vpop.permute.xlu0 %1009
        %1011 = vrot.lane.b32.xlu0 %v996, 127
        %v1012 = vpop.permute.xlu0 %1011
        %1013 = vrot.lane.b32.xlu0 %v997, 127
        %v1014 = vpop.permute.xlu0 %1013
        %1015 = vrot.lane.b32.xlu0 %v998, 127
        %v1016 = vpop.permute.xlu0 %1015
        %v1023 = vadd.f32 %v969, %v1006
        %v1024 = vadd.f32 %v970, %v1008
        %v1025 = vadd.f32 %v971, %v1010
        %v1026 = vadd.f32 %v972, %v1012
        %v1027 = vadd.f32 %v973, %v1014
        %v1028 = vadd.f32 %v974, %v1016
        %s1029 = sadd.s32 %s247, 10
        %s1030 = sld [smem:[#allocation2 + %s1029]]
        %v1031 = vstv %s1030
        %v1032 = vmul.f32 %v209, %v1031
        %v1033 = vmul.f32 %v210, %v1031
        %v1034 = vmul.f32 %v211, %v1031
        %v1035 = vmul.f32 %v221, %v1031
        %v1036 = vmul.f32 %v222, %v1031
        %v1037 = vmul.f32 %v223, %v1031
        %1044 = vrot.lane.b32.xlu0 %v1032, 127
        %v1045 = vpop.permute.xlu0 %1044
        %1046 = vrot.lane.b32.xlu0 %v1033, 127
        %v1047 = vpop.permute.xlu0 %1046
        %1048 = vrot.lane.b32.xlu0 %v1034, 127
        %v1049 = vpop.permute.xlu0 %1048
        %1050 = vrot.lane.b32.xlu0 %v1035, 127
        %v1051 = vpop.permute.xlu0 %1050
        %1052 = vrot.lane.b32.xlu0 %v1036, 127
        %v1053 = vpop.permute.xlu0 %1052
        %1054 = vrot.lane.b32.xlu0 %v1037, 127
        %v1055 = vpop.permute.xlu0 %1054
        %v1062 = vadd.f32 %v984, %v1045
        %v1063 = vadd.f32 %v985, %v1047
        %v1064 = vadd.f32 %v986, %v1049
        %v1065 = vadd.f32 %v987, %v1051
        %v1066 = vadd.f32 %v988, %v1053
        %v1067 = vadd.f32 %v989, %v1055
        %s1068 = sadd.s32 %s230, 11
        %s1069 = sld [smem:[#allocation2 + %s1068]]
        %v1070 = vstv %s1069
        %v1071 = vmul.f32 %v209, %v1070
        %v1072 = vmul.f32 %v210, %v1070
        %v1073 = vmul.f32 %v211, %v1070
        %v1074 = vmul.f32 %v221, %v1070
        %v1075 = vmul.f32 %v222, %v1070
        %v1076 = vmul.f32 %v223, %v1070
        %1083 = vrot.lane.b32.xlu0 %v1071, 126
        %v1084 = vpop.permute.xlu0 %1083
        %1085 = vrot.lane.b32.xlu0 %v1072, 126
        %v1086 = vpop.permute.xlu0 %1085
        %1087 = vrot.lane.b32.xlu0 %v1073, 126
        %v1088 = vpop.permute.xlu0 %1087
        %1089 = vrot.lane.b32.xlu0 %v1074, 126
        %v1090 = vpop.permute.xlu0 %1089
        %1091 = vrot.lane.b32.xlu0 %v1075, 126
        %v1092 = vpop.permute.xlu0 %1091
        %1093 = vrot.lane.b32.xlu0 %v1076, 126
        %v1094 = vpop.permute.xlu0 %1093
        %v1101 = vadd.f32 %v1023, %v1084
        %v1102 = vadd.f32 %v1024, %v1086
        %v1103 = vadd.f32 %v1025, %v1088
        %v1104 = vadd.f32 %v1026, %v1090
        %v1105 = vadd.f32 %v1027, %v1092
        %v1106 = vadd.f32 %v1028, %v1094
        %s1107 = sadd.s32 %s247, 11
        %s1108 = sld [smem:[#allocation2 + %s1107]]
        %v1109 = vstv %s1108
        %v1110 = vmul.f32 %v209, %v1109
        %v1111 = vmul.f32 %v210, %v1109
        %v1112 = vmul.f32 %v211, %v1109
        %v1113 = vmul.f32 %v221, %v1109
        %v1114 = vmul.f32 %v222, %v1109
        %v1115 = vmul.f32 %v223, %v1109
        %1122 = vrot.lane.b32.xlu0 %v1110, 126
        %v1123 = vpop.permute.xlu0 %1122
        %1124 = vrot.lane.b32.xlu0 %v1111, 126
        %v1125 = vpop.permute.xlu0 %1124
        %1126 = vrot.lane.b32.xlu0 %v1112, 126
        %v1127 = vpop.permute.xlu0 %1126
        %1128 = vrot.lane.b32.xlu0 %v1113, 126
        %v1129 = vpop.permute.xlu0 %1128
        %1130 = vrot.lane.b32.xlu0 %v1114, 126
        %v1131 = vpop.permute.xlu0 %1130
        %1132 = vrot.lane.b32.xlu0 %v1115, 126
        %v1133 = vpop.permute.xlu0 %1132
        %v1140 = vadd.f32 %v1062, %v1123
        %v1141 = vadd.f32 %v1063, %v1125
        %v1142 = vadd.f32 %v1064, %v1127
        %v1143 = vadd.f32 %v1065, %v1129
        %v1144 = vadd.f32 %v1066, %v1131
        %v1145 = vadd.f32 %v1067, %v1133
        %s1146 = sadd.s32 %s230, 12
        %s1147 = sld [smem:[#allocation2 + %s1146]]
        %v1148 = vstv %s1147
        %v1149 = vmul.f32 %v209, %v1148
        %v1150 = vmul.f32 %v210, %v1148
        %v1151 = vmul.f32 %v211, %v1148
        %v1152 = vmul.f32 %v221, %v1148
        %v1153 = vmul.f32 %v222, %v1148
        %v1154 = vmul.f32 %v223, %v1148
        %v1161 = vrot.slane %v1149, 1
        %v1162 = vrot.slane %v1150, 1
        %v1163 = vsel %vm433, %v1161, %v1162
        %v1164 = vrot.slane %v1151, 1
        %v1165 = vsel %vm433, %v1162, %v1164
        %v1166 = vrot.slane %v1152, 1
        %v1167 = vrot.slane %v1153, 1
        %v1168 = vsel %vm433, %v1166, %v1167
        %v1169 = vrot.slane %v1154, 1
        %v1170 = vsel %vm433, %v1167, %v1169
        %v1177 = vadd.f32 %v1101, %v1163
        %v1178 = vadd.f32 %v1102, %v1165
        %v1179 = vadd.f32 %v1103, %v1164
        %v1180 = vadd.f32 %v1104, %v1168
        %v1181 = vadd.f32 %v1105, %v1170
        %v1182 = vadd.f32 %v1106, %v1169
        %s1183 = sadd.s32 %s247, 12
        %s1184 = sld [smem:[#allocation2 + %s1183]]
        %v1185 = vstv %s1184
        %v1186 = vmul.f32 %v209, %v1185
        %v1187 = vmul.f32 %v210, %v1185
        %v1188 = vmul.f32 %v211, %v1185
        %v1189 = vmul.f32 %v221, %v1185
        %v1190 = vmul.f32 %v222, %v1185
        %v1191 = vmul.f32 %v223, %v1185
        %v1198 = vrot.slane %v1186, 1
        %v1199 = vrot.slane %v1187, 1
        %v1200 = vsel %vm433, %v1198, %v1199
        %v1201 = vrot.slane %v1188, 1
        %v1202 = vsel %vm433, %v1199, %v1201
        %v1203 = vrot.slane %v1189, 1
        %v1204 = vrot.slane %v1190, 1
        %v1205 = vsel %vm433, %v1203, %v1204
        %v1206 = vrot.slane %v1191, 1
        %v1207 = vsel %vm433, %v1204, %v1206
        %v1214 = vadd.f32 %v1140, %v1200
        %v1215 = vadd.f32 %v1141, %v1202
        %v1216 = vadd.f32 %v1142, %v1201
        %v1217 = vadd.f32 %v1143, %v1205
        %v1218 = vadd.f32 %v1144, %v1207
        %v1219 = vadd.f32 %v1145, %v1206
        %s1220 = sadd.s32 %s230, 13
        %s1221 = sld [smem:[#allocation2 + %s1220]]
        %v1222 = vstv %s1221
        %v1223 = vmul.f32 %v209, %v1222
        %v1224 = vmul.f32 %v210, %v1222
        %v1225 = vmul.f32 %v211, %v1222
        %v1226 = vmul.f32 %v221, %v1222
        %v1227 = vmul.f32 %v222, %v1222
        %v1228 = vmul.f32 %v223, %v1222
        %v1235 = vrot.slane %v1223, 1
        %v1236 = vrot.slane %v1224, 1
        %v1237 = vsel %vm433, %v1235, %v1236
        %v1238 = vrot.slane %v1225, 1
        %v1239 = vsel %vm433, %v1236, %v1238
        %v1240 = vrot.slane %v1226, 1
        %v1241 = vrot.slane %v1227, 1
        %v1242 = vsel %vm433, %v1240, %v1241
        %v1243 = vrot.slane %v1228, 1
        %v1244 = vsel %vm433, %v1241, %v1243
        %1245 = vrot.lane.b32.xlu0 %v1237, 127
        %v1246 = vpop.permute.xlu0 %1245
        %1247 = vrot.lane.b32.xlu0 %v1239, 127
        %v1248 = vpop.permute.xlu0 %1247
        %1249 = vrot.lane.b32.xlu0 %v1238, 127
        %v1250 = vpop.permute.xlu0 %1249
        %1251 = vrot.lane.b32.xlu0 %v1242, 127
        %v1252 = vpop.permute.xlu0 %1251
        %1253 = vrot.lane.b32.xlu0 %v1244, 127
        %v1254 = vpop.permute.xlu0 %1253
        %1255 = vrot.lane.b32.xlu0 %v1243, 127
        %v1256 = vpop.permute.xlu0 %1255
        %v1263 = vadd.f32 %v1177, %v1246
        %v1264 = vadd.f32 %v1178, %v1248
        %v1265 = vadd.f32 %v1179, %v1250
        %v1266 = vadd.f32 %v1180, %v1252
        %v1267 = vadd.f32 %v1181, %v1254
        %v1268 = vadd.f32 %v1182, %v1256
        %s1269 = sadd.s32 %s247, 13
        %s1270 = sld [smem:[#allocation2 + %s1269]]
        %v1271 = vstv %s1270
        %v1272 = vmul.f32 %v209, %v1271
        %v1273 = vmul.f32 %v210, %v1271
        %v1274 = vmul.f32 %v211, %v1271
        %v1275 = vmul.f32 %v221, %v1271
        %v1276 = vmul.f32 %v222, %v1271
        %v1277 = vmul.f32 %v223, %v1271
        %v1284 = vrot.slane %v1272, 1
        %v1285 = vrot.slane %v1273, 1
        %v1286 = vsel %vm433, %v1284, %v1285
        %v1287 = vrot.slane %v1274, 1
        %v1288 = vsel %vm433, %v1285, %v1287
        %v1289 = vrot.slane %v1275, 1
        %v1290 = vrot.slane %v1276, 1
        %v1291 = vsel %vm433, %v1289, %v1290
        %v1292 = vrot.slane %v1277, 1
        %v1293 = vsel %vm433, %v1290, %v1292
        %1294 = vrot.lane.b32.xlu0 %v1286, 127
        %v1295 = vpop.permute.xlu0 %1294
        %1296 = vrot.lane.b32.xlu0 %v1288, 127
        %v1297 = vpop.permute.xlu0 %1296
        %1298 = vrot.lane.b32.xlu0 %v1287, 127
        %v1299 = vpop.permute.xlu0 %1298
        %1300 = vrot.lane.b32.xlu0 %v1291, 127
        %v1301 = vpop.permute.xlu0 %1300
        %1302 = vrot.lane.b32.xlu0 %v1293, 127
        %v1303 = vpop.permute.xlu0 %1302
        %1304 = vrot.lane.b32.xlu0 %v1292, 127
        %v1305 = vpop.permute.xlu0 %1304
        %v1312 = vadd.f32 %v1214, %v1295
        %v1313 = vadd.f32 %v1215, %v1297
        %v1314 = vadd.f32 %v1216, %v1299
        %v1315 = vadd.f32 %v1217, %v1301
        %v1316 = vadd.f32 %v1218, %v1303
        %v1317 = vadd.f32 %v1219, %v1305
        %s1318 = sadd.s32 %s230, 14
        %s1319 = sld [smem:[#allocation2 + %s1318]]
        %v1320 = vstv %s1319
        %v1321 = vmul.f32 %v209, %v1320
        %v1322 = vmul.f32 %v210, %v1320
        %v1323 = vmul.f32 %v211, %v1320
        %v1324 = vmul.f32 %v221, %v1320
        %v1325 = vmul.f32 %v222, %v1320
        %v1326 = vmul.f32 %v223, %v1320
        %v1333 = vrot.slane %v1321, 1
        %v1334 = vrot.slane %v1322, 1
        %v1335 = vsel %vm433, %v1333, %v1334
        %v1336 = vrot.slane %v1323, 1
        %v1337 = vsel %vm433, %v1334, %v1336
        %v1338 = vrot.slane %v1324, 1
        %v1339 = vrot.slane %v1325, 1
        %v1340 = vsel %vm433, %v1338, %v1339
        %v1341 = vrot.slane %v1326, 1
        %v1342 = vsel %vm433, %v1339, %v1341
        %1343 = vrot.lane.b32.xlu0 %v1335, 126
        %v1344 = vpop.permute.xlu0 %1343
        %1345 = vrot.lane.b32.xlu0 %v1337, 126
        %v1346 = vpop.permute.xlu0 %1345
        %1347 = vrot.lane.b32.xlu0 %v1336, 126
        %v1348 = vpop.permute.xlu0 %1347
        %1349 = vrot.lane.b32.xlu0 %v1340, 126
        %v1350 = vpop.permute.xlu0 %1349
        %1351 = vrot.lane.b32.xlu0 %v1342, 126
        %v1352 = vpop.permute.xlu0 %1351
        %1353 = vrot.lane.b32.xlu0 %v1341, 126
        %v1354 = vpop.permute.xlu0 %1353
        %v1361 = vadd.f32 %v1263, %v1344
        %v1362 = vadd.f32 %v1264, %v1346
        %v1363 = vadd.f32 %v1265, %v1348
        %v1364 = vadd.f32 %v1266, %v1350
        %v1365 = vadd.f32 %v1267, %v1352
        %v1366 = vadd.f32 %v1268, %v1354
        %s1367 = sadd.s32 %s247, 14
        %s1368 = sld [smem:[#allocation2 + %s1367]]
        %v1369 = vstv %s1368
        %v1370 = vmul.f32 %v209, %v1369
        %v1371 = vmul.f32 %v210, %v1369
        %v1372 = vmul.f32 %v211, %v1369
        %v1373 = vmul.f32 %v221, %v1369
        %v1374 = vmul.f32 %v222, %v1369
        %v1375 = vmul.f32 %v223, %v1369
        %v1382 = vrot.slane %v1370, 1
        %v1383 = vrot.slane %v1371, 1
        %v1384 = vsel %vm433, %v1382, %v1383
        %v1385 = vrot.slane %v1372, 1
        %v1386 = vsel %vm433, %v1383, %v1385
        %v1387 = vrot.slane %v1373, 1
        %v1388 = vrot.slane %v1374, 1
        %v1389 = vsel %vm433, %v1387, %v1388
        %v1390 = vrot.slane %v1375, 1
        %v1391 = vsel %vm433, %v1388, %v1390
        %1392 = vrot.lane.b32.xlu0 %v1384, 126
        %v1393 = vpop.permute.xlu0 %1392
        %1394 = vrot.lane.b32.xlu0 %v1386, 126
        %v1395 = vpop.permute.xlu0 %1394
        %1396 = vrot.lane.b32.xlu0 %v1385, 126
        %v1397 = vpop.permute.xlu0 %1396
        %1398 = vrot.lane.b32.xlu0 %v1389, 126
        %v1399 = vpop.permute.xlu0 %1398
        %1400 = vrot.lane.b32.xlu0 %v1391, 126
        %v1401 = vpop.permute.xlu0 %1400
        %1402 = vrot.lane.b32.xlu0 %v1390, 126
        %v1403 = vpop.permute.xlu0 %1402
        %v1410 = vadd.f32 %v1312, %v1393
        %v1411 = vadd.f32 %v1313, %v1395
        %v1412 = vadd.f32 %v1314, %v1397
        %v1413 = vadd.f32 %v1315, %v1399
        %v1414 = vadd.f32 %v1316, %v1401
        %v1415 = vadd.f32 %v1317, %v1403
        %s1416 = sadd.s32 %s230, 15
        %s1417 = sld [smem:[#allocation2 + %s1416]]
        %v1418 = vstv %s1417
        %v1419 = vmul.f32 %v209, %v1418
        %v1420 = vmul.f32 %v210, %v1418
        %v1421 = vmul.f32 %v211, %v1418
        %v1422 = vmul.f32 %v221, %v1418
        %v1423 = vmul.f32 %v222, %v1418
        %v1424 = vmul.f32 %v223, %v1418
        %v1431 = vrot.slane %v1419, 2
        %v1432 = vrot.slane %v1420, 2
        %v1433 = vsel %vm704, %v1431, %v1432
        %v1434 = vrot.slane %v1421, 2
        %v1435 = vsel %vm704, %v1432, %v1434
        %v1436 = vrot.slane %v1422, 2
        %v1437 = vrot.slane %v1423, 2
        %v1438 = vsel %vm704, %v1436, %v1437
        %v1439 = vrot.slane %v1424, 2
        %v1440 = vsel %vm704, %v1437, %v1439
        %v1447 = vadd.f32 %v1361, %v1433
        %v1448 = vadd.f32 %v1362, %v1435
        %v1449 = vadd.f32 %v1363, %v1434
        %v1450 = vadd.f32 %v1364, %v1438
        %v1451 = vadd.f32 %v1365, %v1440
        %v1452 = vadd.f32 %v1366, %v1439
        %s1453 = sadd.s32 %s247, 15
        %s1454 = sld [smem:[#allocation2 + %s1453]]
        %v1455 = vstv %s1454
        %v1456 = vmul.f32 %v209, %v1455
        %v1457 = vmul.f32 %v210, %v1455
        %v1458 = vmul.f32 %v211, %v1455
        %v1459 = vmul.f32 %v221, %v1455
        %v1460 = vmul.f32 %v222, %v1455
        %v1461 = vmul.f32 %v223, %v1455
        %v1468 = vrot.slane %v1456, 2
        %v1469 = vrot.slane %v1457, 2
        %v1470 = vsel %vm704, %v1468, %v1469
        %v1471 = vrot.slane %v1458, 2
        %v1472 = vsel %vm704, %v1469, %v1471
        %v1473 = vrot.slane %v1459, 2
        %v1474 = vrot.slane %v1460, 2
        %v1475 = vsel %vm704, %v1473, %v1474
        %v1476 = vrot.slane %v1461, 2
        %v1477 = vsel %vm704, %v1474, %v1476
        %v1484 = vadd.f32 %v1410, %v1470
        %v1485 = vadd.f32 %v1411, %v1472
        %v1486 = vadd.f32 %v1412, %v1471
        %v1487 = vadd.f32 %v1413, %v1475
        %v1488 = vadd.f32 %v1414, %v1477
        %v1489 = vadd.f32 %v1415, %v1476
        %s1490 = sadd.s32 %s230, 16
        %s1491 = sld [smem:[#allocation2 + %s1490]]
        %v1492 = vstv %s1491
        %v1493 = vmul.f32 %v209, %v1492
        %v1494 = vmul.f32 %v210, %v1492
        %v1495 = vmul.f32 %v211, %v1492
        %v1496 = vmul.f32 %v221, %v1492
        %v1497 = vmul.f32 %v222, %v1492
        %v1498 = vmul.f32 %v223, %v1492
        %v1505 = vrot.slane %v1493, 2
        %v1506 = vrot.slane %v1494, 2
        %v1507 = vsel %vm704, %v1505, %v1506
        %v1508 = vrot.slane %v1495, 2
        %v1509 = vsel %vm704, %v1506, %v1508
        %v1510 = vrot.slane %v1496, 2
        %v1511 = vrot.slane %v1497, 2
        %v1512 = vsel %vm704, %v1510, %v1511
        %v1513 = vrot.slane %v1498, 2
        %v1514 = vsel %vm704, %v1511, %v1513
        %1515 = vrot.lane.b32.xlu0 %v1507, 127
        %v1516 = vpop.permute.xlu0 %1515
        %1517 = vrot.lane.b32.xlu0 %v1509, 127
        %v1518 = vpop.permute.xlu0 %1517
        %1519 = vrot.lane.b32.xlu0 %v1508, 127
        %v1520 = vpop.permute.xlu0 %1519
        %1521 = vrot.lane.b32.xlu0 %v1512, 127
        %v1522 = vpop.permute.xlu0 %1521
        %1523 = vrot.lane.b32.xlu0 %v1514, 127
        %v1524 = vpop.permute.xlu0 %1523
        %1525 = vrot.lane.b32.xlu0 %v1513, 127
        %v1526 = vpop.permute.xlu0 %1525
        %v1533 = vadd.f32 %v1447, %v1516
        %v1534 = vadd.f32 %v1448, %v1518
        %v1535 = vadd.f32 %v1449, %v1520
        %v1536 = vadd.f32 %v1450, %v1522
        %v1537 = vadd.f32 %v1451, %v1524
        %v1538 = vadd.f32 %v1452, %v1526
        %s1539 = sadd.s32 %s247, 16
        %s1540 = sld [smem:[#allocation2 + %s1539]]
        %v1541 = vstv %s1540
        %v1542 = vmul.f32 %v209, %v1541
        %v1543 = vmul.f32 %v210, %v1541
        %v1544 = vmul.f32 %v211, %v1541
        %v1545 = vmul.f32 %v221, %v1541
        %v1546 = vmul.f32 %v222, %v1541
        %v1547 = vmul.f32 %v223, %v1541
        %v1554 = vrot.slane %v1542, 2
        %v1555 = vrot.slane %v1543, 2
        %v1556 = vsel %vm704, %v1554, %v1555
        %v1557 = vrot.slane %v1544, 2
        %v1558 = vsel %vm704, %v1555, %v1557
        %v1559 = vrot.slane %v1545, 2
        %v1560 = vrot.slane %v1546, 2
        %v1561 = vsel %vm704, %v1559, %v1560
        %v1562 = vrot.slane %v1547, 2
        %v1563 = vsel %vm704, %v1560, %v1562
        %1564 = vrot.lane.b32.xlu0 %v1556, 127
        %v1565 = vpop.permute.xlu0 %1564
        %1566 = vrot.lane.b32.xlu0 %v1558, 127
        %v1567 = vpop.permute.xlu0 %1566
        %1568 = vrot.lane.b32.xlu0 %v1557, 127
        %v1569 = vpop.permute.xlu0 %1568
        %1570 = vrot.lane.b32.xlu0 %v1561, 127
        %v1571 = vpop.permute.xlu0 %1570
        %1572 = vrot.lane.b32.xlu0 %v1563, 127
        %v1573 = vpop.permute.xlu0 %1572
        %1574 = vrot.lane.b32.xlu0 %v1562, 127
        %v1575 = vpop.permute.xlu0 %1574
        %v1582 = vadd.f32 %v1484, %v1565
        %v1583 = vadd.f32 %v1485, %v1567
        %v1584 = vadd.f32 %v1486, %v1569
        %v1585 = vadd.f32 %v1487, %v1571
        %v1586 = vadd.f32 %v1488, %v1573
        %v1587 = vadd.f32 %v1489, %v1575
        %s1588 = sadd.s32 %s230, 17
        %s1589 = sld [smem:[#allocation2 + %s1588]]
        %v1590 = vstv %s1589
        %v1591 = vmul.f32 %v209, %v1590
        %v1592 = vmul.f32 %v210, %v1590
        %v1593 = vmul.f32 %v211, %v1590
        %v1594 = vmul.f32 %v221, %v1590
        %v1595 = vmul.f32 %v222, %v1590
        %v1596 = vmul.f32 %v223, %v1590
        %v1603 = vrot.slane %v1591, 2
        %v1604 = vrot.slane %v1592, 2
        %v1605 = vsel %vm704, %v1603, %v1604
        %v1606 = vrot.slane %v1593, 2
        %v1607 = vsel %vm704, %v1604, %v1606
        %v1608 = vrot.slane %v1594, 2
        %v1609 = vrot.slane %v1595, 2
        %v1610 = vsel %vm704, %v1608, %v1609
        %v1611 = vrot.slane %v1596, 2
        %v1612 = vsel %vm704, %v1609, %v1611
        %1613 = vrot.lane.b32.xlu0 %v1605, 126
        %v1614 = vpop.permute.xlu0 %1613
        %1615 = vrot.lane.b32.xlu0 %v1607, 126
        %v1616 = vpop.permute.xlu0 %1615
        %1617 = vrot.lane.b32.xlu0 %v1606, 126
        %v1618 = vpop.permute.xlu0 %1617
        %1619 = vrot.lane.b32.xlu0 %v1610, 126
        %v1620 = vpop.permute.xlu0 %1619
        %1621 = vrot.lane.b32.xlu0 %v1612, 126
        %v1622 = vpop.permute.xlu0 %1621
        %1623 = vrot.lane.b32.xlu0 %v1611, 126
        %v1624 = vpop.permute.xlu0 %1623
        %v1631 = vadd.f32 %v1533, %v1614
        %v1632 = vadd.f32 %v1534, %v1616
        %v1633 = vadd.f32 %v1535, %v1618
        %v1634 = vadd.f32 %v1536, %v1620
        %v1635 = vadd.f32 %v1537, %v1622
        %v1636 = vadd.f32 %v1538, %v1624
        %s1637 = sadd.s32 %s247, 17
        %s1638 = sld [smem:[#allocation2 + %s1637]]
        %v1639 = vstv %s1638
        %v1640 = vmul.f32 %v209, %v1639
        %v1641 = vmul.f32 %v210, %v1639
        %v1642 = vmul.f32 %v211, %v1639
        %v1643 = vmul.f32 %v221, %v1639
        %v1644 = vmul.f32 %v222, %v1639
        %v1645 = vmul.f32 %v223, %v1639
        %v1652 = vrot.slane %v1640, 2
        %v1653 = vrot.slane %v1641, 2
        %v1654 = vsel %vm704, %v1652, %v1653
        %v1655 = vrot.slane %v1642, 2
        %v1656 = vsel %vm704, %v1653, %v1655
        %v1657 = vrot.slane %v1643, 2
        %v1658 = vrot.slane %v1644, 2
        %v1659 = vsel %vm704, %v1657, %v1658
        %v1660 = vrot.slane %v1645, 2
        %v1661 = vsel %vm704, %v1658, %v1660
        %1662 = vrot.lane.b32.xlu0 %v1654, 126
        %v1663 = vpop.permute.xlu0 %1662
        %1664 = vrot.lane.b32.xlu0 %v1656, 126
        %v1665 = vpop.permute.xlu0 %1664
        %1666 = vrot.lane.b32.xlu0 %v1655, 126
        %v1667 = vpop.permute.xlu0 %1666
        %1668 = vrot.lane.b32.xlu0 %v1659, 126
        %v1669 = vpop.permute.xlu0 %1668
        %1670 = vrot.lane.b32.xlu0 %v1661, 126
        %v1671 = vpop.permute.xlu0 %1670
        %1672 = vrot.lane.b32.xlu0 %v1660, 126
        %v1673 = vpop.permute.xlu0 %1672
        %v1680 = vadd.f32 %v1582, %v1663
        %v1681 = vadd.f32 %v1583, %v1665
        %v1682 = vadd.f32 %v1584, %v1667
        %v1683 = vadd.f32 %v1585, %v1669
        %v1684 = vadd.f32 %v1586, %v1671
        %v1685 = vadd.f32 %v1587, %v1673
        %s1686 = sadd.s32 %s230, 18
        %s1687 = sld [smem:[#allocation2 + %s1686]]
        %v1688 = vstv %s1687
        %v1689 = vmul.f32 %v212, %v1688
        %v1690 = vmul.f32 %v213, %v1688
        %v1691 = vmul.f32 %v214, %v1688
        %v1692 = vmul.f32 %v224, %v1688
        %v1693 = vmul.f32 %v225, %v1688
        %v1694 = vmul.f32 %v226, %v1688
        %v1695 = vadd.f32 %v1631, %v1689
        %v1696 = vadd.f32 %v1632, %v1690
        %v1697 = vadd.f32 %v1633, %v1691
        %v1698 = vadd.f32 %v1634, %v1692
        %v1699 = vadd.f32 %v1635, %v1693
        %v1700 = vadd.f32 %v1636, %v1694
        %s1701 = sadd.s32 %s247, 18
        %s1702 = sld [smem:[#allocation2 + %s1701]]
        %v1703 = vstv %s1702
        %v1704 = vmul.f32 %v212, %v1703
        %v1705 = vmul.f32 %v213, %v1703
        %v1706 = vmul.f32 %v214, %v1703
        %v1707 = vmul.f32 %v224, %v1703
        %v1708 = vmul.f32 %v225, %v1703
        %v1709 = vmul.f32 %v226, %v1703
        %v1710 = vadd.f32 %v1680, %v1704
        %v1711 = vadd.f32 %v1681, %v1705
        %v1712 = vadd.f32 %v1682, %v1706
        %v1713 = vadd.f32 %v1683, %v1707
        %v1714 = vadd.f32 %v1684, %v1708
        %v1715 = vadd.f32 %v1685, %v1709
        %s1716 = sadd.s32 %s230, 19
        %s1717 = sld [smem:[#allocation2 + %s1716]]
        %v1718 = vstv %s1717
        %v1719 = vmul.f32 %v212, %v1718
        %v1720 = vmul.f32 %v213, %v1718
        %v1721 = vmul.f32 %v214, %v1718
        %v1722 = vmul.f32 %v224, %v1718
        %v1723 = vmul.f32 %v225, %v1718
        %v1724 = vmul.f32 %v226, %v1718
        %1731 = vrot.lane.b32.xlu0 %v1719, 127
        %v1732 = vpop.permute.xlu0 %1731
        %1733 = vrot.lane.b32.xlu0 %v1720, 127
        %v1734 = vpop.permute.xlu0 %1733
        %1735 = vrot.lane.b32.xlu0 %v1721, 127
        %v1736 = vpop.permute.xlu0 %1735
        %1737 = vrot.lane.b32.xlu0 %v1722, 127
        %v1738 = vpop.permute.xlu0 %1737
        %1739 = vrot.lane.b32.xlu0 %v1723, 127
        %v1740 = vpop.permute.xlu0 %1739
        %1741 = vrot.lane.b32.xlu0 %v1724, 127
        %v1742 = vpop.permute.xlu0 %1741
        %v1749 = vadd.f32 %v1695, %v1732
        %v1750 = vadd.f32 %v1696, %v1734
        %v1751 = vadd.f32 %v1697, %v1736
        %v1752 = vadd.f32 %v1698, %v1738
        %v1753 = vadd.f32 %v1699, %v1740
        %v1754 = vadd.f32 %v1700, %v1742
        %s1755 = sadd.s32 %s247, 19
        %s1756 = sld [smem:[#allocation2 + %s1755]]
        %v1757 = vstv %s1756
        %v1758 = vmul.f32 %v212, %v1757
        %v1759 = vmul.f32 %v213, %v1757
        %v1760 = vmul.f32 %v214, %v1757
        %v1761 = vmul.f32 %v224, %v1757
        %v1762 = vmul.f32 %v225, %v1757
        %v1763 = vmul.f32 %v226, %v1757
        %1770 = vrot.lane.b32.xlu0 %v1758, 127
        %v1771 = vpop.permute.xlu0 %1770
        %1772 = vrot.lane.b32.xlu0 %v1759, 127
        %v1773 = vpop.permute.xlu0 %1772
        %1774 = vrot.lane.b32.xlu0 %v1760, 127
        %v1775 = vpop.permute.xlu0 %1774
        %1776 = vrot.lane.b32.xlu0 %v1761, 127
        %v1777 = vpop.permute.xlu0 %1776
        %1778 = vrot.lane.b32.xlu0 %v1762, 127
        %v1779 = vpop.permute.xlu0 %1778
        %1780 = vrot.lane.b32.xlu0 %v1763, 127
        %v1781 = vpop.permute.xlu0 %1780
        %v1788 = vadd.f32 %v1710, %v1771
        %v1789 = vadd.f32 %v1711, %v1773
        %v1790 = vadd.f32 %v1712, %v1775
        %v1791 = vadd.f32 %v1713, %v1777
        %v1792 = vadd.f32 %v1714, %v1779
        %v1793 = vadd.f32 %v1715, %v1781
        %s1794 = sadd.s32 %s230, 20
        %s1795 = sld [smem:[#allocation2 + %s1794]]
        %v1796 = vstv %s1795
        %v1797 = vmul.f32 %v212, %v1796
        %v1798 = vmul.f32 %v213, %v1796
        %v1799 = vmul.f32 %v214, %v1796
        %v1800 = vmul.f32 %v224, %v1796
        %v1801 = vmul.f32 %v225, %v1796
        %v1802 = vmul.f32 %v226, %v1796
        %1809 = vrot.lane.b32.xlu0 %v1797, 126
        %v1810 = vpop.permute.xlu0 %1809
        %1811 = vrot.lane.b32.xlu0 %v1798, 126
        %v1812 = vpop.permute.xlu0 %1811
        %1813 = vrot.lane.b32.xlu0 %v1799, 126
        %v1814 = vpop.permute.xlu0 %1813
        %1815 = vrot.lane.b32.xlu0 %v1800, 126
        %v1816 = vpop.permute.xlu0 %1815
        %1817 = vrot.lane.b32.xlu0 %v1801, 126
        %v1818 = vpop.permute.xlu0 %1817
        %1819 = vrot.lane.b32.xlu0 %v1802, 126
        %v1820 = vpop.permute.xlu0 %1819
        %v1827 = vadd.f32 %v1749, %v1810
        %v1828 = vadd.f32 %v1750, %v1812
        %v1829 = vadd.f32 %v1751, %v1814
        %v1830 = vadd.f32 %v1752, %v1816
        %v1831 = vadd.f32 %v1753, %v1818
        %v1832 = vadd.f32 %v1754, %v1820
        %s1833 = sadd.s32 %s247, 20
        %s1834 = sld [smem:[#allocation2 + %s1833]]
        %v1835 = vstv %s1834
        %v1836 = vmul.f32 %v212, %v1835
        %v1837 = vmul.f32 %v213, %v1835
        %v1838 = vmul.f32 %v214, %v1835
        %v1839 = vmul.f32 %v224, %v1835
        %v1840 = vmul.f32 %v225, %v1835
        %v1841 = vmul.f32 %v226, %v1835
        %1848 = vrot.lane.b32.xlu0 %v1836, 126
        %v1849 = vpop.permute.xlu0 %1848
        %1850 = vrot.lane.b32.xlu0 %v1837, 126
        %v1851 = vpop.permute.xlu0 %1850
        %1852 = vrot.lane.b32.xlu0 %v1838, 126
        %v1853 = vpop.permute.xlu0 %1852
        %1854 = vrot.lane.b32.xlu0 %v1839, 126
        %v1855 = vpop.permute.xlu0 %1854
        %1856 = vrot.lane.b32.xlu0 %v1840, 126
        %v1857 = vpop.permute.xlu0 %1856
        %1858 = vrot.lane.b32.xlu0 %v1841, 126
        %v1859 = vpop.permute.xlu0 %1858
        %v1866 = vadd.f32 %v1788, %v1849
        %v1867 = vadd.f32 %v1789, %v1851
        %v1868 = vadd.f32 %v1790, %v1853
        %v1869 = vadd.f32 %v1791, %v1855
        %v1870 = vadd.f32 %v1792, %v1857
        %v1871 = vadd.f32 %v1793, %v1859
        %s1872 = sadd.s32 %s230, 21
        %s1873 = sld [smem:[#allocation2 + %s1872]]
        %v1874 = vstv %s1873
        %v1875 = vmul.f32 %v212, %v1874
        %v1876 = vmul.f32 %v213, %v1874
        %v1877 = vmul.f32 %v214, %v1874
        %v1878 = vmul.f32 %v224, %v1874
        %v1879 = vmul.f32 %v225, %v1874
        %v1880 = vmul.f32 %v226, %v1874
        %v1887 = vrot.slane %v1875, 1
        %v1888 = vrot.slane %v1876, 1
        %v1889 = vsel %vm433, %v1887, %v1888
        %v1890 = vrot.slane %v1877, 1
        %v1891 = vsel %vm433, %v1888, %v1890
        %v1892 = vrot.slane %v1878, 1
        %v1893 = vrot.slane %v1879, 1
        %v1894 = vsel %vm433, %v1892, %v1893
        %v1895 = vrot.slane %v1880, 1
        %v1896 = vsel %vm433, %v1893, %v1895
        %v1903 = vadd.f32 %v1827, %v1889
        %v1904 = vadd.f32 %v1828, %v1891
        %v1905 = vadd.f32 %v1829, %v1890
        %v1906 = vadd.f32 %v1830, %v1894
        %v1907 = vadd.f32 %v1831, %v1896
        %v1908 = vadd.f32 %v1832, %v1895
        %s1909 = sadd.s32 %s247, 21
        %s1910 = sld [smem:[#allocation2 + %s1909]]
        %v1911 = vstv %s1910
        %v1912 = vmul.f32 %v212, %v1911
        %v1913 = vmul.f32 %v213, %v1911
        %v1914 = vmul.f32 %v214, %v1911
        %v1915 = vmul.f32 %v224, %v1911
        %v1916 = vmul.f32 %v225, %v1911
        %v1917 = vmul.f32 %v226, %v1911
        %v1924 = vrot.slane %v1912, 1
        %v1925 = vrot.slane %v1913, 1
        %v1926 = vsel %vm433, %v1924, %v1925
        %v1927 = vrot.slane %v1914, 1
        %v1928 = vsel %vm433, %v1925, %v1927
        %v1929 = vrot.slane %v1915, 1
        %v1930 = vrot.slane %v1916, 1
        %v1931 = vsel %vm433, %v1929, %v1930
        %v1932 = vrot.slane %v1917, 1
        %v1933 = vsel %vm433, %v1930, %v1932
        %v1940 = vadd.f32 %v1866, %v1926
        %v1941 = vadd.f32 %v1867, %v1928
        %v1942 = vadd.f32 %v1868, %v1927
        %v1943 = vadd.f32 %v1869, %v1931
        %v1944 = vadd.f32 %v1870, %v1933
        %v1945 = vadd.f32 %v1871, %v1932
        %s1946 = sadd.s32 %s230, 22
        %s1947 = sld [smem:[#allocation2 + %s1946]]
        %v1948 = vstv %s1947
        %v1949 = vmul.f32 %v212, %v1948
        %v1950 = vmul.f32 %v213, %v1948
        %v1951 = vmul.f32 %v214, %v1948
        %v1952 = vmul.f32 %v224, %v1948
        %v1953 = vmul.f32 %v225, %v1948
        %v1954 = vmul.f32 %v226, %v1948
        %v1961 = vrot.slane %v1949, 1
        %v1962 = vrot.slane %v1950, 1
        %v1963 = vsel %vm433, %v1961, %v1962
        %v1964 = vrot.slane %v1951, 1
        %v1965 = vsel %vm433, %v1962, %v1964
        %v1966 = vrot.slane %v1952, 1
        %v1967 = vrot.slane %v1953, 1
        %v1968 = vsel %vm433, %v1966, %v1967
        %v1969 = vrot.slane %v1954, 1
        %v1970 = vsel %vm433, %v1967, %v1969
        %1971 = vrot.lane.b32.xlu0 %v1963, 127
        %v1972 = vpop.permute.xlu0 %1971
        %1973 = vrot.lane.b32.xlu0 %v1965, 127
        %v1974 = vpop.permute.xlu0 %1973
        %1975 = vrot.lane.b32.xlu0 %v1964, 127
        %v1976 = vpop.permute.xlu0 %1975
        %1977 = vrot.lane.b32.xlu0 %v1968, 127
        %v1978 = vpop.permute.xlu0 %1977
        %1979 = vrot.lane.b32.xlu0 %v1970, 127
        %v1980 = vpop.permute.xlu0 %1979
        %1981 = vrot.lane.b32.xlu0 %v1969, 127
        %v1982 = vpop.permute.xlu0 %1981
        %v1989 = vadd.f32 %v1903, %v1972
        %v1990 = vadd.f32 %v1904, %v1974
        %v1991 = vadd.f32 %v1905, %v1976
        %v1992 = vadd.f32 %v1906, %v1978
        %v1993 = vadd.f32 %v1907, %v1980
        %v1994 = vadd.f32 %v1908, %v1982
        %s1995 = sadd.s32 %s247, 22
        %s1996 = sld [smem:[#allocation2 + %s1995]]
        %v1997 = vstv %s1996
        %v1998 = vmul.f32 %v212, %v1997
        %v1999 = vmul.f32 %v213, %v1997
        %v2000 = vmul.f32 %v214, %v1997
        %v2001 = vmul.f32 %v224, %v1997
        %v2002 = vmul.f32 %v225, %v1997
        %v2003 = vmul.f32 %v226, %v1997
        %v2010 = vrot.slane %v1998, 1
        %v2011 = vrot.slane %v1999, 1
        %v2012 = vsel %vm433, %v2010, %v2011
        %v2013 = vrot.slane %v2000, 1
        %v2014 = vsel %vm433, %v2011, %v2013
        %v2015 = vrot.slane %v2001, 1
        %v2016 = vrot.slane %v2002, 1
        %v2017 = vsel %vm433, %v2015, %v2016
        %v2018 = vrot.slane %v2003, 1
        %v2019 = vsel %vm433, %v2016, %v2018
        %2020 = vrot.lane.b32.xlu0 %v2012, 127
        %v2021 = vpop.permute.xlu0 %2020
        %2022 = vrot.lane.b32.xlu0 %v2014, 127
        %v2023 = vpop.permute.xlu0 %2022
        %2024 = vrot.lane.b32.xlu0 %v2013, 127
        %v2025 = vpop.permute.xlu0 %2024
        %2026 = vrot.lane.b32.xlu0 %v2017, 127
        %v2027 = vpop.permute.xlu0 %2026
        %2028 = vrot.lane.b32.xlu0 %v2019, 127
        %v2029 = vpop.permute.xlu0 %2028
        %2030 = vrot.lane.b32.xlu0 %v2018, 127
        %v2031 = vpop.permute.xlu0 %2030
        %v2038 = vadd.f32 %v1940, %v2021
        %v2039 = vadd.f32 %v1941, %v2023
        %v2040 = vadd.f32 %v1942, %v2025
        %v2041 = vadd.f32 %v1943, %v2027
        %v2042 = vadd.f32 %v1944, %v2029
        %v2043 = vadd.f32 %v1945, %v2031
        %s2044 = sadd.s32 %s230, 23
        %s2045 = sld [smem:[#allocation2 + %s2044]]
        %v2046 = vstv %s2045
        %v2047 = vmul.f32 %v212, %v2046
        %v2048 = vmul.f32 %v213, %v2046
        %v2049 = vmul.f32 %v214, %v2046
        %v2050 = vmul.f32 %v224, %v2046
        %v2051 = vmul.f32 %v225, %v2046
        %v2052 = vmul.f32 %v226, %v2046
        %v2059 = vrot.slane %v2047, 1
        %v2060 = vrot.slane %v2048, 1
        %v2061 = vsel %vm433, %v2059, %v2060
        %v2062 = vrot.slane %v2049, 1
        %v2063 = vsel %vm433, %v2060, %v2062
        %v2064 = vrot.slane %v2050, 1
        %v2065 = vrot.slane %v2051, 1
        %v2066 = vsel %vm433, %v2064, %v2065
        %v2067 = vrot.slane %v2052, 1
        %v2068 = vsel %vm433, %v2065, %v2067
        %2069 = vrot.lane.b32.xlu0 %v2061, 126
        %v2070 = vpop.permute.xlu0 %2069
        %2071 = vrot.lane.b32.xlu0 %v2063, 126
        %v2072 = vpop.permute.xlu0 %2071
        %2073 = vrot.lane.b32.xlu0 %v2062, 126
        %v2074 = vpop.permute.xlu0 %2073
        %2075 = vrot.lane.b32.xlu0 %v2066, 126
        %v2076 = vpop.permute.xlu0 %2075
        %2077 = vrot.lane.b32.xlu0 %v2068, 126
        %v2078 = vpop.permute.xlu0 %2077
        %2079 = vrot.lane.b32.xlu0 %v2067, 126
        %v2080 = vpop.permute.xlu0 %2079
        %v2087 = vadd.f32 %v1989, %v2070
        %v2088 = vadd.f32 %v1990, %v2072
        %v2089 = vadd.f32 %v1991, %v2074
        %v2090 = vadd.f32 %v1992, %v2076
        %v2091 = vadd.f32 %v1993, %v2078
        %v2092 = vadd.f32 %v1994, %v2080
        %s2093 = sadd.s32 %s247, 23
        %s2094 = sld [smem:[#allocation2 + %s2093]]
        %v2095 = vstv %s2094
        %v2096 = vmul.f32 %v212, %v2095
        %v2097 = vmul.f32 %v213, %v2095
        %v2098 = vmul.f32 %v214, %v2095
        %v2099 = vmul.f32 %v224, %v2095
        %v2100 = vmul.f32 %v225, %v2095
        %v2101 = vmul.f32 %v226, %v2095
        %v2108 = vrot.slane %v2096, 1
        %v2109 = vrot.slane %v2097, 1
        %v2110 = vsel %vm433, %v2108, %v2109
        %v2111 = vrot.slane %v2098, 1
        %v2112 = vsel %vm433, %v2109, %v2111
        %v2113 = vrot.slane %v2099, 1
        %v2114 = vrot.slane %v2100, 1
        %v2115 = vsel %vm433, %v2113, %v2114
        %v2116 = vrot.slane %v2101, 1
        %v2117 = vsel %vm433, %v2114, %v2116
        %2118 = vrot.lane.b32.xlu0 %v2110, 126
        %v2119 = vpop.permute.xlu0 %2118
        %2120 = vrot.lane.b32.xlu0 %v2112, 126
        %v2121 = vpop.permute.xlu0 %2120
        %2122 = vrot.lane.b32.xlu0 %v2111, 126
        %v2123 = vpop.permute.xlu0 %2122
        %2124 = vrot.lane.b32.xlu0 %v2115, 126
        %v2125 = vpop.permute.xlu0 %2124
        %2126 = vrot.lane.b32.xlu0 %v2117, 126
        %v2127 = vpop.permute.xlu0 %2126
        %2128 = vrot.lane.b32.xlu0 %v2116, 126
        %v2129 = vpop.permute.xlu0 %2128
        %v2136 = vadd.f32 %v2038, %v2119
        %v2137 = vadd.f32 %v2039, %v2121
        %v2138 = vadd.f32 %v2040, %v2123
        %v2139 = vadd.f32 %v2041, %v2125
        %v2140 = vadd.f32 %v2042, %v2127
        %v2141 = vadd.f32 %v2043, %v2129
        %s2142 = sadd.s32 %s230, 24
        %s2143 = sld [smem:[#allocation2 + %s2142]]
        %v2144 = vstv %s2143
        %v2145 = vmul.f32 %v212, %v2144
        %v2146 = vmul.f32 %v213, %v2144
        %v2147 = vmul.f32 %v214, %v2144
        %v2148 = vmul.f32 %v224, %v2144
        %v2149 = vmul.f32 %v225, %v2144
        %v2150 = vmul.f32 %v226, %v2144
        %v2157 = vrot.slane %v2145, 2
        %v2158 = vrot.slane %v2146, 2
        %v2159 = vsel %vm704, %v2157, %v2158
        %v2160 = vrot.slane %v2147, 2
        %v2161 = vsel %vm704, %v2158, %v2160
        %v2162 = vrot.slane %v2148, 2
        %v2163 = vrot.slane %v2149, 2
        %v2164 = vsel %vm704, %v2162, %v2163
        %v2165 = vrot.slane %v2150, 2
        %v2166 = vsel %vm704, %v2163, %v2165
        %v2173 = vadd.f32 %v2087, %v2159
        %v2174 = vadd.f32 %v2088, %v2161
        %v2175 = vadd.f32 %v2089, %v2160
        %v2176 = vadd.f32 %v2090, %v2164
        %v2177 = vadd.f32 %v2091, %v2166
        %v2178 = vadd.f32 %v2092, %v2165
        %s2179 = sadd.s32 %s247, 24
        %s2180 = sld [smem:[#allocation2 + %s2179]]
        %v2181 = vstv %s2180
        %v2182 = vmul.f32 %v212, %v2181
        %v2183 = vmul.f32 %v213, %v2181
        %v2184 = vmul.f32 %v214, %v2181
        %v2185 = vmul.f32 %v224, %v2181
        %v2186 = vmul.f32 %v225, %v2181
        %v2187 = vmul.f32 %v226, %v2181
        %v2194 = vrot.slane %v2182, 2
        %v2195 = vrot.slane %v2183, 2
        %v2196 = vsel %vm704, %v2194, %v2195
        %v2197 = vrot.slane %v2184, 2
        %v2198 = vsel %vm704, %v2195, %v2197
        %v2199 = vrot.slane %v2185, 2
        %v2200 = vrot.slane %v2186, 2
        %v2201 = vsel %vm704, %v2199, %v2200
        %v2202 = vrot.slane %v2187, 2
        %v2203 = vsel %vm704, %v2200, %v2202
        %v2210 = vadd.f32 %v2136, %v2196
        %v2211 = vadd.f32 %v2137, %v2198
        %v2212 = vadd.f32 %v2138, %v2197
        %v2213 = vadd.f32 %v2139, %v2201
        %v2214 = vadd.f32 %v2140, %v2203
        %v2215 = vadd.f32 %v2141, %v2202
        %s2216 = sadd.s32 %s230, 25
        %s2217 = sld [smem:[#allocation2 + %s2216]]
        %v2218 = vstv %s2217
        %v2219 = vmul.f32 %v212, %v2218
        %v2220 = vmul.f32 %v213, %v2218
        %v2221 = vmul.f32 %v214, %v2218
        %v2222 = vmul.f32 %v224, %v2218
        %v2223 = vmul.f32 %v225, %v2218
        %v2224 = vmul.f32 %v226, %v2218
        %v2231 = vrot.slane %v2219, 2
        %v2232 = vrot.slane %v2220, 2
        %v2233 = vsel %vm704, %v2231, %v2232
        %v2234 = vrot.slane %v2221, 2
        %v2235 = vsel %vm704, %v2232, %v2234
        %v2236 = vrot.slane %v2222, 2
        %v2237 = vrot.slane %v2223, 2
        %v2238 = vsel %vm704, %v2236, %v2237
        %v2239 = vrot.slane %v2224, 2
        %v2240 = vsel %vm704, %v2237, %v2239
        %2241 = vrot.lane.b32.xlu0 %v2233, 127
        %v2242 = vpop.permute.xlu0 %2241
        %2243 = vrot.lane.b32.xlu0 %v2235, 127
        %v2244 = vpop.permute.xlu0 %2243
        %2245 = vrot.lane.b32.xlu0 %v2234, 127
        %v2246 = vpop.permute.xlu0 %2245
        %2247 = vrot.lane.b32.xlu0 %v2238, 127
        %v2248 = vpop.permute.xlu0 %2247
        %2249 = vrot.lane.b32.xlu0 %v2240, 127
        %v2250 = vpop.permute.xlu0 %2249
        %2251 = vrot.lane.b32.xlu0 %v2239, 127
        %v2252 = vpop.permute.xlu0 %2251
        %v2259 = vadd.f32 %v2173, %v2242
        %v2260 = vadd.f32 %v2174, %v2244
        %v2261 = vadd.f32 %v2175, %v2246
        %v2262 = vadd.f32 %v2176, %v2248
        %v2263 = vadd.f32 %v2177, %v2250
        %v2264 = vadd.f32 %v2178, %v2252
        %s2265 = sadd.s32 %s247, 25
        %s2266 = sld [smem:[#allocation2 + %s2265]]
        %v2267 = vstv %s2266
        %v2268 = vmul.f32 %v212, %v2267
        %v2269 = vmul.f32 %v213, %v2267
        %v2270 = vmul.f32 %v214, %v2267
        %v2271 = vmul.f32 %v224, %v2267
        %v2272 = vmul.f32 %v225, %v2267
        %v2273 = vmul.f32 %v226, %v2267
        %v2280 = vrot.slane %v2268, 2
        %v2281 = vrot.slane %v2269, 2
        %v2282 = vsel %vm704, %v2280, %v2281
        %v2283 = vrot.slane %v2270, 2
        %v2284 = vsel %vm704, %v2281, %v2283
        %v2285 = vrot.slane %v2271, 2
        %v2286 = vrot.slane %v2272, 2
        %v2287 = vsel %vm704, %v2285, %v2286
        %v2288 = vrot.slane %v2273, 2
        %v2289 = vsel %vm704, %v2286, %v2288
        %2290 = vrot.lane.b32.xlu0 %v2282, 127
        %v2291 = vpop.permute.xlu0 %2290
        %2292 = vrot.lane.b32.xlu0 %v2284, 127
        %v2293 = vpop.permute.xlu0 %2292
        %2294 = vrot.lane.b32.xlu0 %v2283, 127
        %v2295 = vpop.permute.xlu0 %2294
        %2296 = vrot.lane.b32.xlu0 %v2287, 127
        %v2297 = vpop.permute.xlu0 %2296
        %2298 = vrot.lane.b32.xlu0 %v2289, 127
        %v2299 = vpop.permute.xlu0 %2298
        %2300 = vrot.lane.b32.xlu0 %v2288, 127
        %v2301 = vpop.permute.xlu0 %2300
        %v2308 = vadd.f32 %v2210, %v2291
        %v2309 = vadd.f32 %v2211, %v2293
        %v2310 = vadd.f32 %v2212, %v2295
        %v2311 = vadd.f32 %v2213, %v2297
        %v2312 = vadd.f32 %v2214, %v2299
        %v2313 = vadd.f32 %v2215, %v2301
        %s2314 = sadd.s32 %s230, 26
        %s2315 = sld [smem:[#allocation2 + %s2314]]
        %v2316 = vstv %s2315
        %v2317 = vmul.f32 %v212, %v2316
        %v2318 = vmul.f32 %v213, %v2316
        %v2319 = vmul.f32 %v214, %v2316
        %v2320 = vmul.f32 %v224, %v2316
        %v2321 = vmul.f32 %v225, %v2316
        %v2322 = vmul.f32 %v226, %v2316
        %v2329 = vrot.slane %v2317, 2
        %v2330 = vrot.slane %v2318, 2
        %v2331 = vsel %vm704, %v2329, %v2330
        %v2332 = vrot.slane %v2319, 2
        %v2333 = vsel %vm704, %v2330, %v2332
        %v2334 = vrot.slane %v2320, 2
        %v2335 = vrot.slane %v2321, 2
        %v2336 = vsel %vm704, %v2334, %v2335
        %v2337 = vrot.slane %v2322, 2
        %v2338 = vsel %vm704, %v2335, %v2337
        %2339 = vrot.lane.b32.xlu0 %v2331, 126
        %v2340 = vpop.permute.xlu0 %2339
        %2341 = vrot.lane.b32.xlu0 %v2333, 126
        %v2342 = vpop.permute.xlu0 %2341
        %2343 = vrot.lane.b32.xlu0 %v2332, 126
        %v2344 = vpop.permute.xlu0 %2343
        %2345 = vrot.lane.b32.xlu0 %v2336, 126
        %v2346 = vpop.permute.xlu0 %2345
        %2347 = vrot.lane.b32.xlu0 %v2338, 126
        %v2348 = vpop.permute.xlu0 %2347
        %2349 = vrot.lane.b32.xlu0 %v2337, 126
        %v2350 = vpop.permute.xlu0 %2349
        %v2357 = vadd.f32 %v2259, %v2340
        %v2358 = vadd.f32 %v2260, %v2342
        %v2359 = vadd.f32 %v2261, %v2344
        %v2360 = vadd.f32 %v2262, %v2346
        %v2361 = vadd.f32 %v2263, %v2348
        %v2362 = vadd.f32 %v2264, %v2350
        %s2363 = sadd.s32 %s247, 26
        %s2364 = sld [smem:[#allocation2 + %s2363]]
        %v2365 = vstv %s2364
        %v2366 = vmul.f32 %v212, %v2365
        %v2367 = vmul.f32 %v213, %v2365
        %v2368 = vmul.f32 %v214, %v2365
        %v2369 = vmul.f32 %v224, %v2365
        %v2370 = vmul.f32 %v225, %v2365
        %v2371 = vmul.f32 %v226, %v2365
        %v2378 = vrot.slane %v2366, 2
        %v2379 = vrot.slane %v2367, 2
        %v2380 = vsel %vm704, %v2378, %v2379
        %v2381 = vrot.slane %v2368, 2
        %v2382 = vsel %vm704, %v2379, %v2381
        %v2383 = vrot.slane %v2369, 2
        %v2384 = vrot.slane %v2370, 2
        %v2385 = vsel %vm704, %v2383, %v2384
        %v2386 = vrot.slane %v2371, 2
        %v2387 = vsel %vm704, %v2384, %v2386
        %2388 = vrot.lane.b32.xlu0 %v2380, 126
        %v2389 = vpop.permute.xlu0 %2388
        %2390 = vrot.lane.b32.xlu0 %v2382, 126
        %v2391 = vpop.permute.xlu0 %2390
        %2392 = vrot.lane.b32.xlu0 %v2381, 126
        %v2393 = vpop.permute.xlu0 %2392
        %2394 = vrot.lane.b32.xlu0 %v2385, 126
        %v2395 = vpop.permute.xlu0 %2394
        %2396 = vrot.lane.b32.xlu0 %v2387, 126
        %v2397 = vpop.permute.xlu0 %2396
        %2398 = vrot.lane.b32.xlu0 %v2386, 126
        %v2399 = vpop.permute.xlu0 %2398
        %v2406 = vadd.f32 %v2308, %v2389
        %v2407 = vadd.f32 %v2309, %v2391
        %v2408 = vadd.f32 %v2310, %v2393
        %v2409 = vadd.f32 %v2311, %v2395
        %v2410 = vadd.f32 %v2312, %v2397
        %v2411 = vadd.f32 %v2313, %v2399
        %s2412 = sadd.s32 %s230, 27
        %s2413 = sld [smem:[#allocation2 + %s2412]]
        %v2414 = vstv %s2413
        %v2415 = vmul.f32 %v215, %v2414
        %v2416 = vmul.f32 %v216, %v2414
        %v2417 = vmul.f32 %v217, %v2414
        %v2418 = vmul.f32 %v227, %v2414
        %v2419 = vmul.f32 %v228, %v2414
        %v2420 = vmul.f32 %v229, %v2414
        %v2421 = vadd.f32 %v2357, %v2415
        %v2422 = vadd.f32 %v2358, %v2416
        %v2423 = vadd.f32 %v2359, %v2417
        %v2424 = vadd.f32 %v2360, %v2418
        %v2425 = vadd.f32 %v2361, %v2419
        %v2426 = vadd.f32 %v2362, %v2420
        %s2427 = sadd.s32 %s247, 27
        %s2428 = sld [smem:[#allocation2 + %s2427]]
        %v2429 = vstv %s2428
        %v2430 = vmul.f32 %v215, %v2429
        %v2431 = vmul.f32 %v216, %v2429
        %v2432 = vmul.f32 %v217, %v2429
        %v2433 = vmul.f32 %v227, %v2429
        %v2434 = vmul.f32 %v228, %v2429
        %v2435 = vmul.f32 %v229, %v2429
        %v2436 = vadd.f32 %v2406, %v2430
        %v2437 = vadd.f32 %v2407, %v2431
        %v2438 = vadd.f32 %v2408, %v2432
        %v2439 = vadd.f32 %v2409, %v2433
        %v2440 = vadd.f32 %v2410, %v2434
        %v2441 = vadd.f32 %v2411, %v2435
        %s2442 = sadd.s32 %s230, 28
        %s2443 = sld [smem:[#allocation2 + %s2442]]
        %v2444 = vstv %s2443
        %v2445 = vmul.f32 %v215, %v2444
        %v2446 = vmul.f32 %v216, %v2444
        %v2447 = vmul.f32 %v217, %v2444
        %v2448 = vmul.f32 %v227, %v2444
        %v2449 = vmul.f32 %v228, %v2444
        %v2450 = vmul.f32 %v229, %v2444
        %2457 = vrot.lane.b32.xlu0 %v2445, 127
        %v2458 = vpop.permute.xlu0 %2457
        %2459 = vrot.lane.b32.xlu0 %v2446, 127
        %v2460 = vpop.permute.xlu0 %2459
        %2461 = vrot.lane.b32.xlu0 %v2447, 127
        %v2462 = vpop.permute.xlu0 %2461
        %2463 = vrot.lane.b32.xlu0 %v2448, 127
        %v2464 = vpop.permute.xlu0 %2463
        %2465 = vrot.lane.b32.xlu0 %v2449, 127
        %v2466 = vpop.permute.xlu0 %2465
        %2467 = vrot.lane.b32.xlu0 %v2450, 127
        %v2468 = vpop.permute.xlu0 %2467
        %v2475 = vadd.f32 %v2421, %v2458
        %v2476 = vadd.f32 %v2422, %v2460
        %v2477 = vadd.f32 %v2423, %v2462
        %v2478 = vadd.f32 %v2424, %v2464
        %v2479 = vadd.f32 %v2425, %v2466
        %v2480 = vadd.f32 %v2426, %v2468
        %s2481 = sadd.s32 %s247, 28
        %s2482 = sld [smem:[#allocation2 + %s2481]]
        %v2483 = vstv %s2482
        %v2484 = vmul.f32 %v215, %v2483
        %v2485 = vmul.f32 %v216, %v2483
        %v2486 = vmul.f32 %v217, %v2483
        %v2487 = vmul.f32 %v227, %v2483
        %v2488 = vmul.f32 %v228, %v2483
        %v2489 = vmul.f32 %v229, %v2483
        %2496 = vrot.lane.b32.xlu0 %v2484, 127
        %v2497 = vpop.permute.xlu0 %2496
        %2498 = vrot.lane.b32.xlu0 %v2485, 127
        %v2499 = vpop.permute.xlu0 %2498
        %2500 = vrot.lane.b32.xlu0 %v2486, 127
        %v2501 = vpop.permute.xlu0 %2500
        %2502 = vrot.lane.b32.xlu0 %v2487, 127
        %v2503 = vpop.permute.xlu0 %2502
        %2504 = vrot.lane.b32.xlu0 %v2488, 127
        %v2505 = vpop.permute.xlu0 %2504
        %2506 = vrot.lane.b32.xlu0 %v2489, 127
        %v2507 = vpop.permute.xlu0 %2506
        %v2514 = vadd.f32 %v2436, %v2497
        %v2515 = vadd.f32 %v2437, %v2499
        %v2516 = vadd.f32 %v2438, %v2501
        %v2517 = vadd.f32 %v2439, %v2503
        %v2518 = vadd.f32 %v2440, %v2505
        %v2519 = vadd.f32 %v2441, %v2507
        %s2520 = sadd.s32 %s230, 29
        %s2521 = sld [smem:[#allocation2 + %s2520]]
        %v2522 = vstv %s2521
        %v2523 = vmul.f32 %v215, %v2522
        %v2524 = vmul.f32 %v216, %v2522
        %v2525 = vmul.f32 %v217, %v2522
        %v2526 = vmul.f32 %v227, %v2522
        %v2527 = vmul.f32 %v228, %v2522
        %v2528 = vmul.f32 %v229, %v2522
        %2535 = vrot.lane.b32.xlu0 %v2523, 126
        %v2536 = vpop.permute.xlu0 %2535
        %2537 = vrot.lane.b32.xlu0 %v2524, 126
        %v2538 = vpop.permute.xlu0 %2537
        %2539 = vrot.lane.b32.xlu0 %v2525, 126
        %v2540 = vpop.permute.xlu0 %2539
        %2541 = vrot.lane.b32.xlu0 %v2526, 126
        %v2542 = vpop.permute.xlu0 %2541
        %2543 = vrot.lane.b32.xlu0 %v2527, 126
        %v2544 = vpop.permute.xlu0 %2543
        %2545 = vrot.lane.b32.xlu0 %v2528, 126
        %v2546 = vpop.permute.xlu0 %2545
        %v2553 = vadd.f32 %v2475, %v2536
        %v2554 = vadd.f32 %v2476, %v2538
        %v2555 = vadd.f32 %v2477, %v2540
        %v2556 = vadd.f32 %v2478, %v2542
        %v2557 = vadd.f32 %v2479, %v2544
        %v2558 = vadd.f32 %v2480, %v2546
        %s2559 = sadd.s32 %s247, 29
        %s2560 = sld [smem:[#allocation2 + %s2559]]
        %v2561 = vstv %s2560
        %v2562 = vmul.f32 %v215, %v2561
        %v2563 = vmul.f32 %v216, %v2561
        %v2564 = vmul.f32 %v217, %v2561
        %v2565 = vmul.f32 %v227, %v2561
        %v2566 = vmul.f32 %v228, %v2561
        %v2567 = vmul.f32 %v229, %v2561
        %2574 = vrot.lane.b32.xlu0 %v2562, 126
        %v2575 = vpop.permute.xlu0 %2574
        %2576 = vrot.lane.b32.xlu0 %v2563, 126
        %v2577 = vpop.permute.xlu0 %2576
        %2578 = vrot.lane.b32.xlu0 %v2564, 126
        %v2579 = vpop.permute.xlu0 %2578
        %2580 = vrot.lane.b32.xlu0 %v2565, 126
        %v2581 = vpop.permute.xlu0 %2580
        %2582 = vrot.lane.b32.xlu0 %v2566, 126
        %v2583 = vpop.permute.xlu0 %2582
        %2584 = vrot.lane.b32.xlu0 %v2567, 126
        %v2585 = vpop.permute.xlu0 %2584
        %v2592 = vadd.f32 %v2514, %v2575
        %v2593 = vadd.f32 %v2515, %v2577
        %v2594 = vadd.f32 %v2516, %v2579
        %v2595 = vadd.f32 %v2517, %v2581
        %v2596 = vadd.f32 %v2518, %v2583
        %v2597 = vadd.f32 %v2519, %v2585
        %s2598 = sadd.s32 %s230, 30
        %s2599 = sld [smem:[#allocation2 + %s2598]]
        %v2600 = vstv %s2599
        %v2601 = vmul.f32 %v215, %v2600
        %v2602 = vmul.f32 %v216, %v2600
        %v2603 = vmul.f32 %v217, %v2600
        %v2604 = vmul.f32 %v227, %v2600
        %v2605 = vmul.f32 %v228, %v2600
        %v2606 = vmul.f32 %v229, %v2600
        %v2613 = vrot.slane %v2601, 1
        %v2614 = vrot.slane %v2602, 1
        %v2615 = vsel %vm433, %v2613, %v2614
        %v2616 = vrot.slane %v2603, 1
        %v2617 = vsel %vm433, %v2614, %v2616
        %v2618 = vrot.slane %v2604, 1
        %v2619 = vrot.slane %v2605, 1
        %v2620 = vsel %vm433, %v2618, %v2619
        %v2621 = vrot.slane %v2606, 1
        %v2622 = vsel %vm433, %v2619, %v2621
        %v2629 = vadd.f32 %v2553, %v2615
        %v2630 = vadd.f32 %v2554, %v2617
        %v2631 = vadd.f32 %v2555, %v2616
        %v2632 = vadd.f32 %v2556, %v2620
        %v2633 = vadd.f32 %v2557, %v2622
        %v2634 = vadd.f32 %v2558, %v2621
        %s2635 = sadd.s32 %s247, 30
        %s2636 = sld [smem:[#allocation2 + %s2635]]
        %v2637 = vstv %s2636
        %v2638 = vmul.f32 %v215, %v2637
        %v2639 = vmul.f32 %v216, %v2637
        %v2640 = vmul.f32 %v217, %v2637
        %v2641 = vmul.f32 %v227, %v2637
        %v2642 = vmul.f32 %v228, %v2637
        %v2643 = vmul.f32 %v229, %v2637
        %v2650 = vrot.slane %v2638, 1
        %v2651 = vrot.slane %v2639, 1
        %v2652 = vsel %vm433, %v2650, %v2651
        %v2653 = vrot.slane %v2640, 1
        %v2654 = vsel %vm433, %v2651, %v2653
        %v2655 = vrot.slane %v2641, 1
        %v2656 = vrot.slane %v2642, 1
        %v2657 = vsel %vm433, %v2655, %v2656
        %v2658 = vrot.slane %v2643, 1
        %v2659 = vsel %vm433, %v2656, %v2658
        %v2666 = vadd.f32 %v2592, %v2652
        %v2667 = vadd.f32 %v2593, %v2654
        %v2668 = vadd.f32 %v2594, %v2653
        %v2669 = vadd.f32 %v2595, %v2657
        %v2670 = vadd.f32 %v2596, %v2659
        %v2671 = vadd.f32 %v2597, %v2658
        %s2672 = sadd.s32 %s230, 31
        %s2673 = sld [smem:[#allocation2 + %s2672]]
        %v2674 = vstv %s2673
        %v2675 = vmul.f32 %v215, %v2674
        %v2676 = vmul.f32 %v216, %v2674
        %v2677 = vmul.f32 %v217, %v2674
        %v2678 = vmul.f32 %v227, %v2674
        %v2679 = vmul.f32 %v228, %v2674
        %v2680 = vmul.f32 %v229, %v2674
        %v2687 = vrot.slane %v2675, 1
        %v2688 = vrot.slane %v2676, 1
        %v2689 = vsel %vm433, %v2687, %v2688
        %v2690 = vrot.slane %v2677, 1
        %v2691 = vsel %vm433, %v2688, %v2690
        %v2692 = vrot.slane %v2678, 1
        %v2693 = vrot.slane %v2679, 1
        %v2694 = vsel %vm433, %v2692, %v2693
        %v2695 = vrot.slane %v2680, 1
        %v2696 = vsel %vm433, %v2693, %v2695
        %2697 = vrot.lane.b32.xlu0 %v2689, 127
        %v2698 = vpop.permute.xlu0 %2697
        %2699 = vrot.lane.b32.xlu0 %v2691, 127
        %v2700 = vpop.permute.xlu0 %2699
        %2701 = vrot.lane.b32.xlu0 %v2690, 127
        %v2702 = vpop.permute.xlu0 %2701
        %2703 = vrot.lane.b32.xlu0 %v2694, 127
        %v2704 = vpop.permute.xlu0 %2703
        %2705 = vrot.lane.b32.xlu0 %v2696, 127
        %v2706 = vpop.permute.xlu0 %2705
        %2707 = vrot.lane.b32.xlu0 %v2695, 127
        %v2708 = vpop.permute.xlu0 %2707
        %v2715 = vadd.f32 %v2629, %v2698
        %v2716 = vadd.f32 %v2630, %v2700
        %v2717 = vadd.f32 %v2631, %v2702
        %v2718 = vadd.f32 %v2632, %v2704
        %v2719 = vadd.f32 %v2633, %v2706
        %v2720 = vadd.f32 %v2634, %v2708
        %s2721 = sadd.s32 %s247, 31
        %s2722 = sld [smem:[#allocation2 + %s2721]]
        %v2723 = vstv %s2722
        %v2724 = vmul.f32 %v215, %v2723
        %v2725 = vmul.f32 %v216, %v2723
        %v2726 = vmul.f32 %v217, %v2723
        %v2727 = vmul.f32 %v227, %v2723
        %v2728 = vmul.f32 %v228, %v2723
        %v2729 = vmul.f32 %v229, %v2723
        %v2736 = vrot.slane %v2724, 1
        %v2737 = vrot.slane %v2725, 1
        %v2738 = vsel %vm433, %v2736, %v2737
        %v2739 = vrot.slane %v2726, 1
        %v2740 = vsel %vm433, %v2737, %v2739
        %v2741 = vrot.slane %v2727, 1
        %v2742 = vrot.slane %v2728, 1
        %v2743 = vsel %vm433, %v2741, %v2742
        %v2744 = vrot.slane %v2729, 1
        %v2745 = vsel %vm433, %v2742, %v2744
        %2746 = vrot.lane.b32.xlu0 %v2738, 127
        %v2747 = vpop.permute.xlu0 %2746
        %2748 = vrot.lane.b32.xlu0 %v2740, 127
        %v2749 = vpop.permute.xlu0 %2748
        %2750 = vrot.lane.b32.xlu0 %v2739, 127
        %v2751 = vpop.permute.xlu0 %2750
        %2752 = vrot.lane.b32.xlu0 %v2743, 127
        %v2753 = vpop.permute.xlu0 %2752
        %2754 = vrot.lane.b32.xlu0 %v2745, 127
        %v2755 = vpop.permute.xlu0 %2754
        %2756 = vrot.lane.b32.xlu0 %v2744, 127
        %v2757 = vpop.permute.xlu0 %2756
        %v2764 = vadd.f32 %v2666, %v2747
        %v2765 = vadd.f32 %v2667, %v2749
        %v2766 = vadd.f32 %v2668, %v2751
        %v2767 = vadd.f32 %v2669, %v2753
        %v2768 = vadd.f32 %v2670, %v2755
        %v2769 = vadd.f32 %v2671, %v2757
        %s2770 = sadd.s32 %s230, 32
        %s2771 = sld [smem:[#allocation2 + %s2770]]
        %v2772 = vstv %s2771
        %v2773 = vmul.f32 %v215, %v2772
        %v2774 = vmul.f32 %v216, %v2772
        %v2775 = vmul.f32 %v217, %v2772
        %v2776 = vmul.f32 %v227, %v2772
        %v2777 = vmul.f32 %v228, %v2772
        %v2778 = vmul.f32 %v229, %v2772
        %v2785 = vrot.slane %v2773, 1
        %v2786 = vrot.slane %v2774, 1
        %v2787 = vsel %vm433, %v2785, %v2786
        %v2788 = vrot.slane %v2775, 1
        %v2789 = vsel %vm433, %v2786, %v2788
        %v2790 = vrot.slane %v2776, 1
        %v2791 = vrot.slane %v2777, 1
        %v2792 = vsel %vm433, %v2790, %v2791
        %v2793 = vrot.slane %v2778, 1
        %v2794 = vsel %vm433, %v2791, %v2793
        %2795 = vrot.lane.b32.xlu0 %v2787, 126
        %v2796 = vpop.permute.xlu0 %2795
        %2797 = vrot.lane.b32.xlu0 %v2789, 126
        %v2798 = vpop.permute.xlu0 %2797
        %2799 = vrot.lane.b32.xlu0 %v2788, 126
        %v2800 = vpop.permute.xlu0 %2799
        %2801 = vrot.lane.b32.xlu0 %v2792, 126
        %v2802 = vpop.permute.xlu0 %2801
        %2803 = vrot.lane.b32.xlu0 %v2794, 126
        %v2804 = vpop.permute.xlu0 %2803
        %2805 = vrot.lane.b32.xlu0 %v2793, 126
        %v2806 = vpop.permute.xlu0 %2805
        %v2813 = vadd.f32 %v2715, %v2796
        %v2814 = vadd.f32 %v2716, %v2798
        %v2815 = vadd.f32 %v2717, %v2800
        %v2816 = vadd.f32 %v2718, %v2802
        %v2817 = vadd.f32 %v2719, %v2804
        %v2818 = vadd.f32 %v2720, %v2806
        %s2819 = sadd.s32 %s247, 32
        %s2820 = sld [smem:[#allocation2 + %s2819]]
        %v2821 = vstv %s2820
        %v2822 = vmul.f32 %v215, %v2821
        %v2823 = vmul.f32 %v216, %v2821
        %v2824 = vmul.f32 %v217, %v2821
        %v2825 = vmul.f32 %v227, %v2821
        %v2826 = vmul.f32 %v228, %v2821
        %v2827 = vmul.f32 %v229, %v2821
        %v2834 = vrot.slane %v2822, 1
        %v2835 = vrot.slane %v2823, 1
        %v2836 = vsel %vm433, %v2834, %v2835
        %v2837 = vrot.slane %v2824, 1
        %v2838 = vsel %vm433, %v2835, %v2837
        %v2839 = vrot.slane %v2825, 1
        %v2840 = vrot.slane %v2826, 1
        %v2841 = vsel %vm433, %v2839, %v2840
        %v2842 = vrot.slane %v2827, 1
        %v2843 = vsel %vm433, %v2840, %v2842
        %2844 = vrot.lane.b32.xlu0 %v2836, 126
        %v2845 = vpop.permute.xlu0 %2844
        %2846 = vrot.lane.b32.xlu0 %v2838, 126
        %v2847 = vpop.permute.xlu0 %2846
        %2848 = vrot.lane.b32.xlu0 %v2837, 126
        %v2849 = vpop.permute.xlu0 %2848
        %2850 = vrot.lane.b32.xlu0 %v2841, 126
        %v2851 = vpop.permute.xlu0 %2850
        %2852 = vrot.lane.b32.xlu0 %v2843, 126
        %v2853 = vpop.permute.xlu0 %2852
        %2854 = vrot.lane.b32.xlu0 %v2842, 126
        %v2855 = vpop.permute.xlu0 %2854
        %v2862 = vadd.f32 %v2764, %v2845
        %v2863 = vadd.f32 %v2765, %v2847
        %v2864 = vadd.f32 %v2766, %v2849
        %v2865 = vadd.f32 %v2767, %v2851
        %v2866 = vadd.f32 %v2768, %v2853
        %v2867 = vadd.f32 %v2769, %v2855
        %s2868 = sadd.s32 %s230, 33
        %s2869 = sld [smem:[#allocation2 + %s2868]]
        %v2870 = vstv %s2869
        %v2871 = vmul.f32 %v215, %v2870
        %v2872 = vmul.f32 %v216, %v2870
        %v2873 = vmul.f32 %v217, %v2870
        %v2874 = vmul.f32 %v227, %v2870
        %v2875 = vmul.f32 %v228, %v2870
        %v2876 = vmul.f32 %v229, %v2870
        %v2883 = vrot.slane %v2871, 2
        %v2884 = vrot.slane %v2872, 2
        %v2885 = vsel %vm704, %v2883, %v2884
        %v2886 = vrot.slane %v2873, 2
        %v2887 = vsel %vm704, %v2884, %v2886
        %v2888 = vrot.slane %v2874, 2
        %v2889 = vrot.slane %v2875, 2
        %v2890 = vsel %vm704, %v2888, %v2889
        %v2891 = vrot.slane %v2876, 2
        %v2892 = vsel %vm704, %v2889, %v2891
        %v2899 = vadd.f32 %v2813, %v2885
        %v2900 = vadd.f32 %v2814, %v2887
        %v2901 = vadd.f32 %v2815, %v2886
        %v2902 = vadd.f32 %v2816, %v2890
        %v2903 = vadd.f32 %v2817, %v2892
        %v2904 = vadd.f32 %v2818, %v2891
        %s2905 = sadd.s32 %s247, 33
        %s2906 = sld [smem:[#allocation2 + %s2905]]
        %v2907 = vstv %s2906
        %v2908 = vmul.f32 %v215, %v2907
        %v2909 = vmul.f32 %v216, %v2907
        %v2910 = vmul.f32 %v217, %v2907
        %v2911 = vmul.f32 %v227, %v2907
        %v2912 = vmul.f32 %v228, %v2907
        %v2913 = vmul.f32 %v229, %v2907
        %v2920 = vrot.slane %v2908, 2
        %v2921 = vrot.slane %v2909, 2
        %v2922 = vsel %vm704, %v2920, %v2921
        %v2923 = vrot.slane %v2910, 2
        %v2924 = vsel %vm704, %v2921, %v2923
        %v2925 = vrot.slane %v2911, 2
        %v2926 = vrot.slane %v2912, 2
        %v2927 = vsel %vm704, %v2925, %v2926
        %v2928 = vrot.slane %v2913, 2
        %v2929 = vsel %vm704, %v2926, %v2928
        %v2936 = vadd.f32 %v2862, %v2922
        %v2937 = vadd.f32 %v2863, %v2924
        %v2938 = vadd.f32 %v2864, %v2923
        %v2939 = vadd.f32 %v2865, %v2927
        %v2940 = vadd.f32 %v2866, %v2929
        %v2941 = vadd.f32 %v2867, %v2928
        %s2942 = sadd.s32 %s230, 34
        %s2943 = sld [smem:[#allocation2 + %s2942]]
        %v2944 = vstv %s2943
        %v2945 = vmul.f32 %v215, %v2944
        %v2946 = vmul.f32 %v216, %v2944
        %v2947 = vmul.f32 %v217, %v2944
        %v2948 = vmul.f32 %v227, %v2944
        %v2949 = vmul.f32 %v228, %v2944
        %v2950 = vmul.f32 %v229, %v2944
        %v2957 = vrot.slane %v2945, 2
        %v2958 = vrot.slane %v2946, 2
        %v2959 = vsel %vm704, %v2957, %v2958
        %v2960 = vrot.slane %v2947, 2
        %v2961 = vsel %vm704, %v2958, %v2960
        %v2962 = vrot.slane %v2948, 2
        %v2963 = vrot.slane %v2949, 2
        %v2964 = vsel %vm704, %v2962, %v2963
        %v2965 = vrot.slane %v2950, 2
        %v2966 = vsel %vm704, %v2963, %v2965
        %2967 = vrot.lane.b32.xlu0 %v2959, 127
        %v2968 = vpop.permute.xlu0 %2967
        %2969 = vrot.lane.b32.xlu0 %v2961, 127
        %v2970 = vpop.permute.xlu0 %2969
        %2971 = vrot.lane.b32.xlu0 %v2960, 127
        %v2972 = vpop.permute.xlu0 %2971
        %2973 = vrot.lane.b32.xlu0 %v2964, 127
        %v2974 = vpop.permute.xlu0 %2973
        %2975 = vrot.lane.b32.xlu0 %v2966, 127
        %v2976 = vpop.permute.xlu0 %2975
        %2977 = vrot.lane.b32.xlu0 %v2965, 127
        %v2978 = vpop.permute.xlu0 %2977
        %v2985 = vadd.f32 %v2899, %v2968
        %v2986 = vadd.f32 %v2900, %v2970
        %v2987 = vadd.f32 %v2901, %v2972
        %v2988 = vadd.f32 %v2902, %v2974
        %v2989 = vadd.f32 %v2903, %v2976
        %v2990 = vadd.f32 %v2904, %v2978
        %s2991 = sadd.s32 %s247, 34
        %s2992 = sld [smem:[#allocation2 + %s2991]]
        %v2993 = vstv %s2992
        %v2994 = vmul.f32 %v215, %v2993
        %v2995 = vmul.f32 %v216, %v2993
        %v2996 = vmul.f32 %v217, %v2993
        %v2997 = vmul.f32 %v227, %v2993
        %v2998 = vmul.f32 %v228, %v2993
        %v2999 = vmul.f32 %v229, %v2993
        %v3006 = vrot.slane %v2994, 2
        %v3007 = vrot.slane %v2995, 2
        %v3008 = vsel %vm704, %v3006, %v3007
        %v3009 = vrot.slane %v2996, 2
        %v3010 = vsel %vm704, %v3007, %v3009
        %v3011 = vrot.slane %v2997, 2
        %v3012 = vrot.slane %v2998, 2
        %v3013 = vsel %vm704, %v3011, %v3012
        %v3014 = vrot.slane %v2999, 2
        %v3015 = vsel %vm704, %v3012, %v3014
        %3016 = vrot.lane.b32.xlu0 %v3008, 127
        %v3017 = vpop.permute.xlu0 %3016
        %3018 = vrot.lane.b32.xlu0 %v3010, 127
        %v3019 = vpop.permute.xlu0 %3018
        %3020 = vrot.lane.b32.xlu0 %v3009, 127
        %v3021 = vpop.permute.xlu0 %3020
        %3022 = vrot.lane.b32.xlu0 %v3013, 127
        %v3023 = vpop.permute.xlu0 %3022
        %3024 = vrot.lane.b32.xlu0 %v3015, 127
        %v3025 = vpop.permute.xlu0 %3024
        %3026 = vrot.lane.b32.xlu0 %v3014, 127
        %v3027 = vpop.permute.xlu0 %3026
        %v3034 = vadd.f32 %v2936, %v3017
        %v3035 = vadd.f32 %v2937, %v3019
        %v3036 = vadd.f32 %v2938, %v3021
        %v3037 = vadd.f32 %v2939, %v3023
        %v3038 = vadd.f32 %v2940, %v3025
        %v3039 = vadd.f32 %v2941, %v3027
        %s3040 = sadd.s32 %s230, 35
        %s3041 = sld [smem:[#allocation2 + %s3040]]
        %v3042 = vstv %s3041
        %v3043 = vmul.f32 %v215, %v3042
        %v3044 = vmul.f32 %v216, %v3042
        %v3045 = vmul.f32 %v217, %v3042
        %v3046 = vmul.f32 %v227, %v3042
        %v3047 = vmul.f32 %v228, %v3042
        %v3048 = vmul.f32 %v229, %v3042
        %v3055 = vrot.slane %v3043, 2
        %v3056 = vrot.slane %v3044, 2
        %v3057 = vsel %vm704, %v3055, %v3056
        %v3058 = vrot.slane %v3045, 2
        %v3059 = vsel %vm704, %v3056, %v3058
        %v3060 = vrot.slane %v3046, 2
        %v3061 = vrot.slane %v3047, 2
        %v3062 = vsel %vm704, %v3060, %v3061
        %v3063 = vrot.slane %v3048, 2
        %v3064 = vsel %vm704, %v3061, %v3063
        %3065 = vrot.lane.b32.xlu0 %v3057, 126
        %v3066 = vpop.permute.xlu0 %3065
        %3067 = vrot.lane.b32.xlu0 %v3059, 126
        %v3068 = vpop.permute.xlu0 %3067
        %3069 = vrot.lane.b32.xlu0 %v3058, 126
        %v3070 = vpop.permute.xlu0 %3069
        %3071 = vrot.lane.b32.xlu0 %v3062, 126
        %v3072 = vpop.permute.xlu0 %3071
        %3073 = vrot.lane.b32.xlu0 %v3064, 126
        %v3074 = vpop.permute.xlu0 %3073
        %3075 = vrot.lane.b32.xlu0 %v3063, 126
        %v3076 = vpop.permute.xlu0 %3075
        %v3083 = vadd.f32 %v2985, %v3066
        %v3084 = vadd.f32 %v2986, %v3068
        %v3085 = vadd.f32 %v2987, %v3070
        %v3086 = vadd.f32 %v2988, %v3072
        %v3087 = vadd.f32 %v2989, %v3074
        %v3088 = vadd.f32 %v2990, %v3076
        %s3089 = sadd.s32 %s247, 35
        %s3090 = sld [smem:[#allocation2 + %s3089]]
        %v3091 = vstv %s3090
        %v3092 = vmul.f32 %v215, %v3091
        %v3093 = vmul.f32 %v216, %v3091
        %v3094 = vmul.f32 %v217, %v3091
        %v3095 = vmul.f32 %v227, %v3091
        %v3096 = vmul.f32 %v228, %v3091
        %v3097 = vmul.f32 %v229, %v3091
        %v3104 = vrot.slane %v3092, 2
        %v3105 = vrot.slane %v3093, 2
        %v3106 = vsel %vm704, %v3104, %v3105
        %v3107 = vrot.slane %v3094, 2
        %v3108 = vsel %vm704, %v3105, %v3107
        %v3109 = vrot.slane %v3095, 2
        %v3110 = vrot.slane %v3096, 2
        %v3111 = vsel %vm704, %v3109, %v3110
        %v3112 = vrot.slane %v3097, 2
        %v3113 = vsel %vm704, %v3110, %v3112
        %3114 = vrot.lane.b32.xlu0 %v3106, 126
        %v3115 = vpop.permute.xlu0 %3114
        %3116 = vrot.lane.b32.xlu0 %v3108, 126
        %v3117 = vpop.permute.xlu0 %3116
        %3118 = vrot.lane.b32.xlu0 %v3107, 126
        %v3119 = vpop.permute.xlu0 %3118
        %3120 = vrot.lane.b32.xlu0 %v3111, 126
        %v3121 = vpop.permute.xlu0 %3120
        %3122 = vrot.lane.b32.xlu0 %v3113, 126
        %v3123 = vpop.permute.xlu0 %3122
        %3124 = vrot.lane.b32.xlu0 %v3112, 126
        %v3125 = vpop.permute.xlu0 %3124
        %v3132 = vadd.f32 %v3034, %v3115
        %v3133 = vadd.f32 %v3035, %v3117
        %v3134 = vadd.f32 %v3036, %v3119
        %v3135 = vadd.f32 %v3037, %v3121
        %v3136 = vadd.f32 %v3038, %v3123
        %v3137 = vadd.f32 %v3039, %v3125
        %vm3138 = vcmask 146432
        %v3139 = vsel %vm3138, %v3083, 0.0
        %v3140 = vsel %vm3138, %v3084, 0.0
        %v3141 = vadd.f32 %v3139, %v3140
        %vm3142 = vcmask 140288
        %v3143 = vsel %vm3142, %v3085, 0.0
        %v3144 = vadd.f32 %v3141, %v3143
        %v3145 = vsel %vm3138, %v3086, 0.0
        %v3146 = vadd.f32 %v3144, %v3145
        %v3147 = vsel %vm3138, %v3087, 0.0
        %v3148 = vadd.f32 %v3146, %v3147
        %v3149 = vsel %vm3142, %v3088, 0.0
        %v3150 = vadd.f32 %v3148, %v3149
        %3151 = vadd.xlane.f32.xlu0 %v3150
        %v3152 = vpop.xlane.xlu0 %3151
        %v3153 = vrot.slane %v3152, 4
        %v3154 = vadd.f32 %v3152, %v3153
        %v3155 = vrot.slane %v3154, 2
        %v3156 = vadd.f32 %v3154, %v3155
        %v3157 = vrot.slane %v3156, 1
        %v3158 = vadd.f32 %v3156, %v3157
        %s3159 = vtos %v3158
        %v3160 = vrcp.pop 217800.0
        %s3161 = vtos %v3160
        %s3162 = smul.f32 %s3159, %s3161
        %v3163 = vstv %s3162
        %v3164 = vsub.f32 %v3083, %v3163
        %v3165 = vsub.f32 %v3084, %v3163
        %v3166 = vsub.f32 %v3085, %v3163
        %v3167 = vsub.f32 %v3086, %v3163
        %v3168 = vsub.f32 %v3087, %v3163
        %v3169 = vsub.f32 %v3088, %v3163
        %v3170 = vmul.f32 %v3164, %v3164
        %v3171 = vmul.f32 %v3165, %v3165
        %v3172 = vmul.f32 %v3166, %v3166
        %v3173 = vmul.f32 %v3167, %v3167
        %v3174 = vmul.f32 %v3168, %v3168
        %v3175 = vmul.f32 %v3169, %v3169
        %v3176 = vsel %vm3138, %v3170, 0.0
        %v3177 = vsel %vm3138, %v3171, 0.0
        %v3178 = vadd.f32 %v3176, %v3177
        %v3179 = vsel %vm3142, %v3172, 0.0
        %v3180 = vadd.f32 %v3178, %v3179
        %v3181 = vsel %vm3138, %v3173, 0.0
        %v3182 = vadd.f32 %v3180, %v3181
        %v3183 = vsel %vm3138, %v3174, 0.0
        %v3184 = vadd.f32 %v3182, %v3183
        %v3185 = vsel %vm3142, %v3175, 0.0
        %v3186 = vadd.f32 %v3184, %v3185
        %3187 = vadd.xlane.f32.xlu0 %v3186
        %v3188 = vpop.xlane.xlu0 %3187
        %v3189 = vrot.slane %v3188, 4
        %v3190 = vadd.f32 %v3188, %v3189
        %v3191 = vrot.slane %v3190, 2
        %v3192 = vadd.f32 %v3190, %v3191
        %v3193 = vrot.slane %v3192, 1
        %v3194 = vadd.f32 %v3192, %v3193
        %s3195 = vtos %v3194
        %s3196 = smul.f32 %s3162, 217152.0
        %s3197 = smul.f32 %s3196, %s3162
        %s3198 = sadd.f32 %s3195, %s3197
        %v3199 = vrcp.pop 217800.0
        %s3200 = vtos %v3199
        %s3201 = smul.f32 %s3198, %s3200
        %s3202 = sadd.f32 %s3201, 1e-05
        %v3203 = vstv %s3202
        %v3204 = vrsqrt.pop %v3203
        %s3205 = vtos %v3204
        %s3206 = sld [smem:[#allocation4 + %s245]]
        %s3207 = smul.f32 %s3205, %s3206
        %s3208 = sld [smem:[#allocation6 + %s245]]
        %s3209 = smul.f32 %s3162, %s3207
        %s3210 = ssub.f32 %s3208, %s3209
        %s3211 = smax.f32 %s3210, 0.0
        %v3212 = vstv %s3211
        %3213 = vst [vmem:[%s204] sm:$0xff] %v3212
        %3214 = vst [vmem:[%s204 + $0x8] sm:$0xff] %v3212
        %vm3215 = vcmask 605184
        %3216 = vst.msk [vmem:[%s204 + $0x10] sm:$0xff] %vm3215, %v3212
        %3217 = vst [vmem:[%s204 + $0x18] sm:$0xff] %v3212
        %3218 = vst [vmem:[%s204 + $0x20] sm:$0xff] %v3212
        %3219 = vst.msk [vmem:[%s204 + $0x28] sm:$0xff] %vm3215, %v3212
        %3220 = vst [vmem:[%s204 + $0x30] sm:$0xff] %v3212
        %3221 = vst [vmem:[%s204 + $0x38] sm:$0xff] %v3212
        %3222 = vst.msk [vmem:[%s204 + $0x40] sm:$0xff] %vm3215, %v3212
        %3223 = vst [vmem:[%s204 + $0x48] sm:$0xff] %v3212
        %3224 = vst [vmem:[%s204 + $0x50] sm:$0xff] %v3212
        %3225 = vst.msk [vmem:[%s204 + $0x58] sm:$0xff] %vm3215, %v3212
        %3226 = vst [vmem:[%s204 + $0x60] sm:$0xff] %v3212
        %3227 = vst [vmem:[%s204 + $0x68] sm:$0xff] %v3212
        %3228 = vst.msk [vmem:[%s204 + $0x70] sm:$0xff] %vm3215, %v3212
        %3229 = vst [vmem:[%s204 + $0x78] sm:$0xff] %v3212
        %3230 = vst [vmem:[%s204 + $0x80] sm:$0xff] %v3212
        %3231 = vst.msk [vmem:[%s204 + $0x88] sm:$0xff] %vm3215, %v3212
        %3232 = vst [vmem:[%s204 + $0x90] sm:$0xff] %v3212
        %3233 = vst [vmem:[%s204 + $0x98] sm:$0xff] %v3212
        %3234 = vst.msk [vmem:[%s204 + $0xa0] sm:$0xff] %vm3215, %v3212
        %3235 = vst [vmem:[%s204 + $0xa8] sm:$0xff] %v3212
        %3236 = vst [vmem:[%s204 + $0xb0] sm:$0xff] %v3212
        %3237 = vst.msk [vmem:[%s204 + $0xb8] sm:$0xff] %vm3215, %v3212
        %3238 = vst [vmem:[%s204 + $0xc0] sm:$0xff] %v3212
        %3239 = vst [vmem:[%s204 + $0xc8] sm:$0xff] %v3212
        %3240 = vst.msk [vmem:[%s204 + $0xd0] sm:$0xff] %vm3215, %v3212
        %3241 = vst [vmem:[%s204 + $0xd8] sm:$0xff] %v3212
        %3242 = vst [vmem:[%s204 + $0xe0] sm:$0xff] %v3212
        %3243 = vst.msk [vmem:[%s204 + $0xe8] sm:$0xff] %vm3215, %v3212
        %3244 = vst [vmem:[%s204 + $0xf0] sm:$0xff] %v3212
        %3245 = vst [vmem:[%s204 + $0xf8] sm:$0xff] %v3212
        %3246 = vst.msk [vmem:[%s204 + $0x100] sm:$0xff] %vm3215, %v3212
        %3247 = vst [vmem:[%s204 + $0x108] sm:$0xff] %v3212
        %3248 = vst [vmem:[%s204 + $0x110] sm:$0xff] %v3212
        %3249 = vst.msk [vmem:[%s204 + $0x118] sm:$0xff] %vm3215, %v3212
        %3250 = vst [vmem:[%s204 + $0x120] sm:$0xff] %v3212
        %3251 = vst [vmem:[%s204 + $0x128] sm:$0xff] %v3212
        %3252 = vst.msk [vmem:[%s204 + $0x130] sm:$0xff] %vm3215, %v3212
        %3253 = vst [vmem:[%s204 + $0x138] sm:$0xff] %v3212
        %3254 = vst [vmem:[%s204 + $0x140] sm:$0xff] %v3212
        %3255 = vst.msk [vmem:[%s204 + $0x148] sm:$0xff] %vm3215, %v3212
        %3256 = vst [vmem:[%s204 + $0x150] sm:$0xff] %v3212
        %3257 = vst [vmem:[%s204 + $0x158] sm:$0xff] %v3212
        %3258 = vst.msk [vmem:[%s204 + $0x160] sm:$0xff] %vm3215, %v3212
        %3259 = vst [vmem:[%s204 + $0x168] sm:$0xff] %v3212
        %3260 = vst [vmem:[%s204 + $0x170] sm:$0xff] %v3212
        %3261 = vst.msk [vmem:[%s204 + $0x178] sm:$0xff] %vm3215, %v3212
        %3262 = vst [vmem:[%s204 + $0x180] sm:$0xff] %v3212
        %3263 = vst [vmem:[%s204 + $0x188] sm:$0xff] %v3212
        %3264 = vst.msk [vmem:[%s204 + $0x190] sm:$0xff] %vm3215, %v3212
        %3265 = vst [vmem:[%s204 + $0x198] sm:$0xff] %v3212
        %3266 = vst [vmem:[%s204 + $0x1a0] sm:$0xff] %v3212
        %3267 = vst.msk [vmem:[%s204 + $0x1a8] sm:$0xff] %vm3215, %v3212
        %3268 = vst [vmem:[%s204 + $0x1b0] sm:$0xff] %v3212
        %3269 = vst [vmem:[%s204 + $0x1b8] sm:$0xff] %v3212
        %3270 = vst.msk [vmem:[%s204 + $0x1c0] sm:$0xff] %vm3215, %v3212
        %3271 = vst [vmem:[%s204 + $0x1c8] sm:$0xff] %v3212
        %3272 = vst [vmem:[%s204 + $0x1d0] sm:$0xff] %v3212
        %3273 = vst.msk [vmem:[%s204 + $0x1d8] sm:$0xff] %vm3215, %v3212
        %3274 = vst [vmem:[%s204 + $0x1e0] sm:$0xff] %v3212
        %3275 = vst [vmem:[%s204 + $0x1e8] sm:$0xff] %v3212
        %3276 = vst.msk [vmem:[%s204 + $0x1f0] sm:$0xff] %vm3215, %v3212
        %3277 = vst [vmem:[%s204 + $0x1f8] sm:$0xff] %v3212
        %3278 = vst [vmem:[%s204 + $0x200] sm:$0xff] %v3212
        %3279 = vst.msk [vmem:[%s204 + $0x208] sm:$0xff] %vm3215, %v3212
        %3280 = vst [vmem:[%s204 + $0x210] sm:$0xff] %v3212
        %3281 = vst [vmem:[%s204 + $0x218] sm:$0xff] %v3212
        %3282 = vst.msk [vmem:[%s204 + $0x220] sm:$0xff] %vm3215, %v3212
        %3283 = vst [vmem:[%s204 + $0x228] sm:$0xff] %v3212
        %3284 = vst [vmem:[%s204 + $0x230] sm:$0xff] %v3212
        %3285 = vst.msk [vmem:[%s204 + $0x238] sm:$0xff] %vm3215, %v3212
        %3286 = vst [vmem:[%s204 + $0x240] sm:$0xff] %v3212
        %3287 = vst [vmem:[%s204 + $0x248] sm:$0xff] %v3212
        %3288 = vst.msk [vmem:[%s204 + $0x250] sm:$0xff] %vm3215, %v3212
        %3289 = vst [vmem:[%s204 + $0x258] sm:$0xff] %v3212
        %3290 = vst [vmem:[%s204 + $0x260] sm:$0xff] %v3212
        %3291 = vst.msk [vmem:[%s204 + $0x268] sm:$0xff] %vm3215, %v3212
        %3292 = vst [vmem:[%s204 + $0x270] sm:$0xff] %v3212
        %3293 = vst [vmem:[%s204 + $0x278] sm:$0xff] %v3212
        %3294 = vst.msk [vmem:[%s204 + $0x280] sm:$0xff] %vm3215, %v3212
        %3295 = vst [vmem:[%s204 + $0x288] sm:$0xff] %v3212
        %3296 = vst [vmem:[%s204 + $0x290] sm:$0xff] %v3212
        %3297 = vst.msk [vmem:[%s204 + $0x298] sm:$0xff] %vm3215, %v3212
        %3298 = vst [vmem:[%s204 + $0x2a0] sm:$0xff] %v3212
        %3299 = vst [vmem:[%s204 + $0x2a8] sm:$0xff] %v3212
        %3300 = vst.msk [vmem:[%s204 + $0x2b0] sm:$0xff] %vm3215, %v3212
        %3301 = vst [vmem:[%s204 + $0x2b8] sm:$0xff] %v3212
        %3302 = vst [vmem:[%s204 + $0x2c0] sm:$0xff] %v3212
        %3303 = vst.msk [vmem:[%s204 + $0x2c8] sm:$0xff] %vm3215, %v3212
        %3304 = vst [vmem:[%s204 + $0x2d0] sm:$0xff] %v3212
        %3305 = vst [vmem:[%s204 + $0x2d8] sm:$0xff] %v3212
        %3306 = vst.msk [vmem:[%s204 + $0x2e0] sm:$0xff] %vm3215, %v3212
        %3307 = vst [vmem:[%s204 + $0x2e8] sm:$0xff] %v3212
        %3308 = vst [vmem:[%s204 + $0x2f0] sm:$0xff] %v3212
        %3309 = vst.msk [vmem:[%s204 + $0x2f8] sm:$0xff] %vm3215, %v3212
        %3310 = vst [vmem:[%s204 + $0x300] sm:$0xff] %v3212
        %3311 = vst [vmem:[%s204 + $0x308] sm:$0xff] %v3212
        %3312 = vst.msk [vmem:[%s204 + $0x310] sm:$0xff] %vm3215, %v3212
        %3313 = vst [vmem:[%s204 + $0x318] sm:$0xff] %v3212
        %3314 = vst [vmem:[%s204 + $0x320] sm:$0xff] %v3212
        %3315 = vst.msk [vmem:[%s204 + $0x328] sm:$0xff] %vm3215, %v3212
        %3316 = vst [vmem:[%s204 + $0x330] sm:$0xff] %v3212
        %3317 = vst [vmem:[%s204 + $0x338] sm:$0xff] %v3212
        %3318 = vst.msk [vmem:[%s204 + $0x340] sm:$0xff] %vm3215, %v3212
        %3319 = vst [vmem:[%s204 + $0x348] sm:$0xff] %v3212
        %3320 = vst [vmem:[%s204 + $0x350] sm:$0xff] %v3212
        %3321 = vst.msk [vmem:[%s204 + $0x358] sm:$0xff] %vm3215, %v3212
        %3322 = vst [vmem:[%s204 + $0x360] sm:$0xff] %v3212
        %3323 = vst [vmem:[%s204 + $0x368] sm:$0xff] %v3212
        %3324 = vst.msk [vmem:[%s204 + $0x370] sm:$0xff] %vm3215, %v3212
        %3325 = vst [vmem:[%s204 + $0x378] sm:$0xff] %v3212
        %3326 = vst [vmem:[%s204 + $0x380] sm:$0xff] %v3212
        %3327 = vst.msk [vmem:[%s204 + $0x388] sm:$0xff] %vm3215, %v3212
        %3328 = vst [vmem:[%s204 + $0x390] sm:$0xff] %v3212
        %3329 = vst [vmem:[%s204 + $0x398] sm:$0xff] %v3212
        %3330 = vst.msk [vmem:[%s204 + $0x3a0] sm:$0xff] %vm3215, %v3212
        %3331 = vst [vmem:[%s204 + $0x3a8] sm:$0xff] %v3212
        %3332 = vst [vmem:[%s204 + $0x3b0] sm:$0xff] %v3212
        %3333 = vst.msk [vmem:[%s204 + $0x3b8] sm:$0xff] %vm3215, %v3212
        %3334 = vst [vmem:[%s204 + $0x3c0] sm:$0xff] %v3212
        %3335 = vst [vmem:[%s204 + $0x3c8] sm:$0xff] %v3212
        %3336 = vst.msk [vmem:[%s204 + $0x3d0] sm:$0xff] %vm3215, %v3212
        %3337 = vst [vmem:[%s204 + $0x3d8] sm:$0x3] %v3212
        %3338 = vst [vmem:[%s204 + $0x3e0] sm:$0x3] %v3212
        %vm3339 = vcmask 599040
        %3340 = vst.msk [vmem:[%s204 + $0x3e8] sm:$0x3] %vm3339, %v3212
        %3341 = vst [vmem:[%s204 + $0x7e0] sm:$0xff] %v3212
        %3342 = vst [vmem:[%s204 + $0x7e8] sm:$0xff] %v3212
        %3343 = vst.msk [vmem:[%s204 + $0x7f0] sm:$0xff] %vm3215, %v3212
        %3344 = vst [vmem:[%s204 + $0x7f8] sm:$0xff] %v3212
        %3345 = vst [vmem:[%s204 + $0x800] sm:$0xff] %v3212
        %3346 = vst.msk [vmem:[%s204 + $0x808] sm:$0xff] %vm3215, %v3212
        %3347 = vst [vmem:[%s204 + $0x810] sm:$0xff] %v3212
        %3348 = vst [vmem:[%s204 + $0x818] sm:$0xff] %v3212
        %3349 = vst.msk [vmem:[%s204 + $0x820] sm:$0xff] %vm3215, %v3212
        %3350 = vst [vmem:[%s204 + $0x828] sm:$0xff] %v3212
        %3351 = vst [vmem:[%s204 + $0x830] sm:$0xff] %v3212
        %3352 = vst.msk [vmem:[%s204 + $0x838] sm:$0xff] %vm3215, %v3212
        %3353 = vst [vmem:[%s204 + $0x840] sm:$0xff] %v3212
        %3354 = vst [vmem:[%s204 + $0x848] sm:$0xff] %v3212
        %3355 = vst.msk [vmem:[%s204 + $0x850] sm:$0xff] %vm3215, %v3212
        %3356 = vst [vmem:[%s204 + $0x858] sm:$0xff] %v3212
        %3357 = vst [vmem:[%s204 + $0x860] sm:$0xff] %v3212
        %3358 = vst.msk [vmem:[%s204 + $0x868] sm:$0xff] %vm3215, %v3212
        %3359 = vst [vmem:[%s204 + $0x870] sm:$0xff] %v3212
        %3360 = vst [vmem:[%s204 + $0x878] sm:$0xff] %v3212
        %3361 = vst.msk [vmem:[%s204 + $0x880] sm:$0xff] %vm3215, %v3212
        %3362 = vst [vmem:[%s204 + $0x888] sm:$0xff] %v3212
        %3363 = vst [vmem:[%s204 + $0x890] sm:$0xff] %v3212
        %3364 = vst.msk [vmem:[%s204 + $0x898] sm:$0xff] %vm3215, %v3212
        %3365 = vst [vmem:[%s204 + $0x8a0] sm:$0xff] %v3212
        %3366 = vst [vmem:[%s204 + $0x8a8] sm:$0xff] %v3212
        %3367 = vst.msk [vmem:[%s204 + $0x8b0] sm:$0xff] %vm3215, %v3212
        %3368 = vst [vmem:[%s204 + $0x8b8] sm:$0xff] %v3212
        %3369 = vst [vmem:[%s204 + $0x8c0] sm:$0xff] %v3212
        %3370 = vst.msk [vmem:[%s204 + $0x8c8] sm:$0xff] %vm3215, %v3212
        %3371 = vst [vmem:[%s204 + $0x8d0] sm:$0xff] %v3212
        %3372 = vst [vmem:[%s204 + $0x8d8] sm:$0xff] %v3212
        %3373 = vst.msk [vmem:[%s204 + $0x8e0] sm:$0xff] %vm3215, %v3212
        %3374 = vst [vmem:[%s204 + $0x8e8] sm:$0xff] %v3212
        %3375 = vst [vmem:[%s204 + $0x8f0] sm:$0xff] %v3212
        %3376 = vst.msk [vmem:[%s204 + $0x8f8] sm:$0xff] %vm3215, %v3212
        %3377 = vst [vmem:[%s204 + $0x900] sm:$0xff] %v3212
        %3378 = vst [vmem:[%s204 + $0x908] sm:$0xff] %v3212
        %3379 = vst.msk [vmem:[%s204 + $0x910] sm:$0xff] %vm3215, %v3212
        %3380 = vst [vmem:[%s204 + $0x918] sm:$0xff] %v3212
        %3381 = vst [vmem:[%s204 + $0x920] sm:$0xff] %v3212
        %3382 = vst.msk [vmem:[%s204 + $0x928] sm:$0xff] %vm3215, %v3212
        %3383 = vst [vmem:[%s204 + $0x930] sm:$0xff] %v3212
        %3384 = vst [vmem:[%s204 + $0x938] sm:$0xff] %v3212
        %3385 = vst.msk [vmem:[%s204 + $0x940] sm:$0xff] %vm3215, %v3212
        %3386 = vst [vmem:[%s204 + $0x948] sm:$0xff] %v3212
        %3387 = vst [vmem:[%s204 + $0x950] sm:$0xff] %v3212
        %3388 = vst.msk [vmem:[%s204 + $0x958] sm:$0xff] %vm3215, %v3212
        %3389 = vst [vmem:[%s204 + $0x960] sm:$0xff] %v3212
        %3390 = vst [vmem:[%s204 + $0x968] sm:$0xff] %v3212
        %3391 = vst.msk [vmem:[%s204 + $0x970] sm:$0xff] %vm3215, %v3212
        %3392 = vst [vmem:[%s204 + $0x978] sm:$0xff] %v3212
        %3393 = vst [vmem:[%s204 + $0x980] sm:$0xff] %v3212
        %3394 = vst.msk [vmem:[%s204 + $0x988] sm:$0xff] %vm3215, %v3212
        %3395 = vst [vmem:[%s204 + $0x990] sm:$0xff] %v3212
        %3396 = vst [vmem:[%s204 + $0x998] sm:$0xff] %v3212
        %3397 = vst.msk [vmem:[%s204 + $0x9a0] sm:$0xff] %vm3215, %v3212
        %3398 = vst [vmem:[%s204 + $0x9a8] sm:$0xff] %v3212
        %3399 = vst [vmem:[%s204 + $0x9b0] sm:$0xff] %v3212
        %3400 = vst.msk [vmem:[%s204 + $0x9b8] sm:$0xff] %vm3215, %v3212
        %3401 = vst [vmem:[%s204 + $0x9c0] sm:$0xff] %v3212
        %3402 = vst [vmem:[%s204 + $0x9c8] sm:$0xff] %v3212
        %3403 = vst.msk [vmem:[%s204 + $0x9d0] sm:$0xff] %vm3215, %v3212
        %3404 = vst [vmem:[%s204 + $0x9d8] sm:$0xff] %v3212
        %3405 = vst [vmem:[%s204 + $0x9e0] sm:$0xff] %v3212
        %3406 = vst.msk [vmem:[%s204 + $0x9e8] sm:$0xff] %vm3215, %v3212
        %3407 = vst [vmem:[%s204 + $0x9f0] sm:$0xff] %v3212
        %3408 = vst [vmem:[%s204 + $0x9f8] sm:$0xff] %v3212
        %3409 = vst.msk [vmem:[%s204 + $0xa00] sm:$0xff] %vm3215, %v3212
        %3410 = vst [vmem:[%s204 + $0xa08] sm:$0xff] %v3212
        %3411 = vst [vmem:[%s204 + $0xa10] sm:$0xff] %v3212
        %3412 = vst.msk [vmem:[%s204 + $0xa18] sm:$0xff] %vm3215, %v3212
        %3413 = vst [vmem:[%s204 + $0xa20] sm:$0xff] %v3212
        %3414 = vst [vmem:[%s204 + $0xa28] sm:$0xff] %v3212
        %3415 = vst.msk [vmem:[%s204 + $0xa30] sm:$0xff] %vm3215, %v3212
        %3416 = vst [vmem:[%s204 + $0xa38] sm:$0xff] %v3212
        %3417 = vst [vmem:[%s204 + $0xa40] sm:$0xff] %v3212
        %3418 = vst.msk [vmem:[%s204 + $0xa48] sm:$0xff] %vm3215, %v3212
        %3419 = vst [vmem:[%s204 + $0xa50] sm:$0xff] %v3212
        %3420 = vst [vmem:[%s204 + $0xa58] sm:$0xff] %v3212
        %3421 = vst.msk [vmem:[%s204 + $0xa60] sm:$0xff] %vm3215, %v3212
        %3422 = vst [vmem:[%s204 + $0xa68] sm:$0xff] %v3212
        %3423 = vst [vmem:[%s204 + $0xa70] sm:$0xff] %v3212
        %3424 = vst.msk [vmem:[%s204 + $0xa78] sm:$0xff] %vm3215, %v3212
        %3425 = vst [vmem:[%s204 + $0xa80] sm:$0xff] %v3212
        %3426 = vst [vmem:[%s204 + $0xa88] sm:$0xff] %v3212
        %3427 = vst.msk [vmem:[%s204 + $0xa90] sm:$0xff] %vm3215, %v3212
        %3428 = vst [vmem:[%s204 + $0xa98] sm:$0xff] %v3212
        %3429 = vst [vmem:[%s204 + $0xaa0] sm:$0xff] %v3212
        %3430 = vst.msk [vmem:[%s204 + $0xaa8] sm:$0xff] %vm3215, %v3212
        %3431 = vst [vmem:[%s204 + $0xab0] sm:$0xff] %v3212
        %3432 = vst [vmem:[%s204 + $0xab8] sm:$0xff] %v3212
        %3433 = vst.msk [vmem:[%s204 + $0xac0] sm:$0xff] %vm3215, %v3212
        %3434 = vst [vmem:[%s204 + $0xac8] sm:$0xff] %v3212
        %3435 = vst [vmem:[%s204 + $0xad0] sm:$0xff] %v3212
        %3436 = vst.msk [vmem:[%s204 + $0xad8] sm:$0xff] %vm3215, %v3212
        %3437 = vst [vmem:[%s204 + $0xae0] sm:$0xff] %v3212
        %3438 = vst [vmem:[%s204 + $0xae8] sm:$0xff] %v3212
        %3439 = vst.msk [vmem:[%s204 + $0xaf0] sm:$0xff] %vm3215, %v3212
        %3440 = vst [vmem:[%s204 + $0xaf8] sm:$0xff] %v3212
        %3441 = vst [vmem:[%s204 + $0xb00] sm:$0xff] %v3212
        %3442 = vst.msk [vmem:[%s204 + $0xb08] sm:$0xff] %vm3215, %v3212
        %3443 = vst [vmem:[%s204 + $0xb10] sm:$0xff] %v3212
        %3444 = vst [vmem:[%s204 + $0xb18] sm:$0xff] %v3212
        %3445 = vst.msk [vmem:[%s204 + $0xb20] sm:$0xff] %vm3215, %v3212
        %3446 = vst [vmem:[%s204 + $0xb28] sm:$0xff] %v3212
        %3447 = vst [vmem:[%s204 + $0xb30] sm:$0xff] %v3212
        %3448 = vst.msk [vmem:[%s204 + $0xb38] sm:$0xff] %vm3215, %v3212
        %3449 = vst [vmem:[%s204 + $0xb40] sm:$0xff] %v3212
        %3450 = vst [vmem:[%s204 + $0xb48] sm:$0xff] %v3212
        %3451 = vst.msk [vmem:[%s204 + $0xb50] sm:$0xff] %vm3215, %v3212
        %3452 = vst [vmem:[%s204 + $0xb58] sm:$0xff] %v3212
        %3453 = vst [vmem:[%s204 + $0xb60] sm:$0xff] %v3212
        %3454 = vst.msk [vmem:[%s204 + $0xb68] sm:$0xff] %vm3215, %v3212
        %3455 = vst [vmem:[%s204 + $0xb70] sm:$0xff] %v3212
        %3456 = vst [vmem:[%s204 + $0xb78] sm:$0xff] %v3212
        %3457 = vst.msk [vmem:[%s204 + $0xb80] sm:$0xff] %vm3215, %v3212
        %3458 = vst [vmem:[%s204 + $0xb88] sm:$0xff] %v3212
        %3459 = vst [vmem:[%s204 + $0xb90] sm:$0xff] %v3212
        %3460 = vst.msk [vmem:[%s204 + $0xb98] sm:$0xff] %vm3215, %v3212
        %3461 = vst [vmem:[%s204 + $0xba0] sm:$0xff] %v3212
        %3462 = vst [vmem:[%s204 + $0xba8] sm:$0xff] %v3212
        %3463 = vst.msk [vmem:[%s204 + $0xbb0] sm:$0xff] %vm3215, %v3212
        %3464 = vst [vmem:[%s204 + $0xbb8] sm:$0x3] %v3212
        %3465 = vst [vmem:[%s204 + $0xbc0] sm:$0x3] %v3212
        %3466 = vst.msk [vmem:[%s204 + $0xbc8] sm:$0x3] %vm3339, %v3212
        %v3467 = vstv %s3207
        %v3468 = vmul.f32 %v3083, %v3467
        %v3469 = vmul.f32 %v3084, %v3467
        %v3470 = vmul.f32 %v3085, %v3467
        %v3471 = vmul.f32 %v3086, %v3467
        %v3472 = vmul.f32 %v3087, %v3467
        %v3473 = vmul.f32 %v3088, %v3467
        %v3474 = vstv %s3210
        %v3475 = vadd.f32 %v3468, %v3474
        %v3476 = vadd.f32 %v3469, %v3474
        %v3477 = vadd.f32 %v3470, %v3474
        %v3478 = vadd.f32 %v3471, %v3474
        %v3479 = vadd.f32 %v3472, %v3474
        %v3480 = vadd.f32 %v3473, %v3474
        %v3481 = vmax.f32 %v3475, 0.0
        %v3482 = vmax.f32 %v3476, 0.0
        %v3483 = vmax.f32 %v3477, 0.0
        %v3484 = vmax.f32 %v3478, 0.0
        %v3485 = vmax.f32 %v3479, 0.0
        %v3486 = vmax.f32 %v3480, 0.0
        %vm3493 = vcmask 1043456
        %v3494 = vrot.slane %v3481, 4
        %v3495 = vrot.slane %v3482, 4
        %v3496 = vsel %vm3493, %v3494, %v3495
        %v3497 = vrot.slane %v3483, 4
        %v3498 = vsel %vm3493, %v3495, %v3497
        %v3499 = vrot.slane %v3484, 4
        %v3500 = vrot.slane %v3485, 4
        %v3501 = vsel %vm3493, %v3499, %v3500
        %v3502 = vrot.slane %v3486, 4
        %v3503 = vsel %vm3493, %v3500, %v3502
        %3504 = vrot.lane.b32.xlu0 %v3494, 28
        %v3505 = vpop.permute.xlu0 %3504
        %3506 = vrot.lane.b32.xlu0 %v3496, 28
        %v3507 = vpop.permute.xlu0 %3506
        %3508 = vrot.lane.b32.xlu0 %v3498, 28
        %v3509 = vpop.permute.xlu0 %3508
        %3510 = vrot.lane.b32.xlu0 %v3499, 28
        %v3511 = vpop.permute.xlu0 %3510
        %3512 = vrot.lane.b32.xlu0 %v3501, 28
        %v3513 = vpop.permute.xlu0 %3512
        %3514 = vrot.lane.b32.xlu0 %v3503, 28
        %v3515 = vpop.permute.xlu0 %3514
        %vm3522 = vcmask 376036
        %3523 = vst.msk [vmem:[%s204 + $0x1d0] sm:$0xf0] %vm3522, %v3505
        %vm3524 = vcmask 376032
        %3525 = vst.msk [vmem:[%s204 + $0x1e8] sm:$0xff] %vm3524, %v3507
        %vm3526 = vcmask 373984
        %3527 = vst.msk [vmem:[%s204 + $0x200] sm:$0x3f] %vm3526, %v3509
        %3528 = vst.msk [vmem:[%s204 + $0x9b0] sm:$0xf0] %vm3522, %v3511
        %3529 = vst.msk [vmem:[%s204 + $0x9c8] sm:$0xff] %vm3524, %v3513
        %3530 = vst.msk [vmem:[%s204 + $0x9e0] sm:$0x3f] %vm3526, %v3515
        %v3531 = vsel %vm3138, %v3132, 0.0
        %v3532 = vsel %vm3138, %v3133, 0.0
        %v3533 = vadd.f32 %v3531, %v3532
        %v3534 = vsel %vm3142, %v3134, 0.0
        %v3535 = vadd.f32 %v3533, %v3534
        %v3536 = vsel %vm3138, %v3135, 0.0
        %v3537 = vadd.f32 %v3535, %v3536
        %v3538 = vsel %vm3138, %v3136, 0.0
        %v3539 = vadd.f32 %v3537, %v3538
        %v3540 = vsel %vm3142, %v3137, 0.0
        %v3541 = vadd.f32 %v3539, %v3540
        %3542 = vadd.xlane.f32.xlu0 %v3541
        %v3543 = vpop.xlane.xlu0 %3542
        %v3544 = vrot.slane %v3543, 4
        %v3545 = vadd.f32 %v3543, %v3544
        %v3546 = vrot.slane %v3545, 2
        %v3547 = vadd.f32 %v3545, %v3546
        %v3548 = vrot.slane %v3547, 1
        %v3549 = vadd.f32 %v3547, %v3548
        %s3550 = vtos %v3549
        %v3551 = vrcp.pop 217800.0
        %s3552 = vtos %v3551
        %s3553 = smul.f32 %s3550, %s3552
        %v3554 = vstv %s3553
        %v3555 = vsub.f32 %v3132, %v3554
        %v3556 = vsub.f32 %v3133, %v3554
        %v3557 = vsub.f32 %v3134, %v3554
        %v3558 = vsub.f32 %v3135, %v3554
        %v3559 = vsub.f32 %v3136, %v3554
        %v3560 = vsub.f32 %v3137, %v3554
        %v3561 = vmul.f32 %v3555, %v3555
        %v3562 = vmul.f32 %v3556, %v3556
        %v3563 = vmul.f32 %v3557, %v3557
        %v3564 = vmul.f32 %v3558, %v3558
        %v3565 = vmul.f32 %v3559, %v3559
        %v3566 = vmul.f32 %v3560, %v3560
        %v3567 = vsel %vm3138, %v3561, 0.0
        %v3568 = vsel %vm3138, %v3562, 0.0
        %v3569 = vadd.f32 %v3567, %v3568
        %v3570 = vsel %vm3142, %v3563, 0.0
        %v3571 = vadd.f32 %v3569, %v3570
        %v3572 = vsel %vm3138, %v3564, 0.0
        %v3573 = vadd.f32 %v3571, %v3572
        %v3574 = vsel %vm3138, %v3565, 0.0
        %v3575 = vadd.f32 %v3573, %v3574
        %v3576 = vsel %vm3142, %v3566, 0.0
        %v3577 = vadd.f32 %v3575, %v3576
        %3578 = vadd.xlane.f32.xlu0 %v3577
        %v3579 = vpop.xlane.xlu0 %3578
        %v3580 = vrot.slane %v3579, 4
        %v3581 = vadd.f32 %v3579, %v3580
        %v3582 = vrot.slane %v3581, 2
        %v3583 = vadd.f32 %v3581, %v3582
        %v3584 = vrot.slane %v3583, 1
        %v3585 = vadd.f32 %v3583, %v3584
        %s3586 = vtos %v3585
        %s3587 = smul.f32 %s3553, 217152.0
        %s3588 = smul.f32 %s3587, %s3553
        %s3589 = sadd.f32 %s3586, %s3588
        %v3590 = vrcp.pop 217800.0
        %s3591 = vtos %v3590
        %s3592 = smul.f32 %s3589, %s3591
        %s3593 = sadd.f32 %s3592, 1e-05
        %v3594 = vstv %s3593
        %v3595 = vrsqrt.pop %v3594
        %s3596 = vtos %v3595
        %s3597 = sld [smem:[#allocation4 + %s246]]
        %s3598 = smul.f32 %s3596, %s3597
        %s3599 = sld [smem:[#allocation6 + %s246]]
        %s3600 = smul.f32 %s3553, %s3598
        %s3601 = ssub.f32 %s3599, %s3600
        %s3602 = smax.f32 %s3601, 0.0
        %v3603 = vstv %s3602
        %s3604 = scalar_lea.vmem %s204, 1008 [#allocation7]
        %3605 = vst [vmem:[%s3604] sm:$0xff] %v3603
        %3606 = vst [vmem:[%s3604 + $0x8] sm:$0xff] %v3603
        %3607 = vst.msk [vmem:[%s3604 + $0x10] sm:$0xff] %vm3215, %v3603
        %3608 = vst [vmem:[%s3604 + $0x18] sm:$0xff] %v3603
        %3609 = vst [vmem:[%s3604 + $0x20] sm:$0xff] %v3603
        %3610 = vst.msk [vmem:[%s3604 + $0x28] sm:$0xff] %vm3215, %v3603
        %3611 = vst [vmem:[%s3604 + $0x30] sm:$0xff] %v3603
        %3612 = vst [vmem:[%s3604 + $0x38] sm:$0xff] %v3603
        %3613 = vst.msk [vmem:[%s3604 + $0x40] sm:$0xff] %vm3215, %v3603
        %3614 = vst [vmem:[%s3604 + $0x48] sm:$0xff] %v3603
        %3615 = vst [vmem:[%s3604 + $0x50] sm:$0xff] %v3603
        %3616 = vst.msk [vmem:[%s3604 + $0x58] sm:$0xff] %vm3215, %v3603
        %3617 = vst [vmem:[%s3604 + $0x60] sm:$0xff] %v3603
        %3618 = vst [vmem:[%s3604 + $0x68] sm:$0xff] %v3603
        %3619 = vst.msk [vmem:[%s3604 + $0x70] sm:$0xff] %vm3215, %v3603
        %3620 = vst [vmem:[%s3604 + $0x78] sm:$0xff] %v3603
        %3621 = vst [vmem:[%s3604 + $0x80] sm:$0xff] %v3603
        %3622 = vst.msk [vmem:[%s3604 + $0x88] sm:$0xff] %vm3215, %v3603
        %3623 = vst [vmem:[%s3604 + $0x90] sm:$0xff] %v3603
        %3624 = vst [vmem:[%s3604 + $0x98] sm:$0xff] %v3603
        %3625 = vst.msk [vmem:[%s3604 + $0xa0] sm:$0xff] %vm3215, %v3603
        %3626 = vst [vmem:[%s3604 + $0xa8] sm:$0xff] %v3603
        %3627 = vst [vmem:[%s3604 + $0xb0] sm:$0xff] %v3603
        %3628 = vst.msk [vmem:[%s3604 + $0xb8] sm:$0xff] %vm3215, %v3603
        %3629 = vst [vmem:[%s3604 + $0xc0] sm:$0xff] %v3603
        %3630 = vst [vmem:[%s3604 + $0xc8] sm:$0xff] %v3603
        %3631 = vst.msk [vmem:[%s3604 + $0xd0] sm:$0xff] %vm3215, %v3603
        %3632 = vst [vmem:[%s3604 + $0xd8] sm:$0xff] %v3603
        %3633 = vst [vmem:[%s3604 + $0xe0] sm:$0xff] %v3603
        %3634 = vst.msk [vmem:[%s3604 + $0xe8] sm:$0xff] %vm3215, %v3603
        %3635 = vst [vmem:[%s3604 + $0xf0] sm:$0xff] %v3603
        %3636 = vst [vmem:[%s3604 + $0xf8] sm:$0xff] %v3603
        %3637 = vst.msk [vmem:[%s3604 + $0x100] sm:$0xff] %vm3215, %v3603
        %3638 = vst [vmem:[%s3604 + $0x108] sm:$0xff] %v3603
        %3639 = vst [vmem:[%s3604 + $0x110] sm:$0xff] %v3603
        %3640 = vst.msk [vmem:[%s3604 + $0x118] sm:$0xff] %vm3215, %v3603
        %3641 = vst [vmem:[%s3604 + $0x120] sm:$0xff] %v3603
        %3642 = vst [vmem:[%s3604 + $0x128] sm:$0xff] %v3603
        %3643 = vst.msk [vmem:[%s3604 + $0x130] sm:$0xff] %vm3215, %v3603
        %3644 = vst [vmem:[%s3604 + $0x138] sm:$0xff] %v3603
        %3645 = vst [vmem:[%s3604 + $0x140] sm:$0xff] %v3603
        %3646 = vst.msk [vmem:[%s3604 + $0x148] sm:$0xff] %vm3215, %v3603
        %3647 = vst [vmem:[%s3604 + $0x150] sm:$0xff] %v3603
        %3648 = vst [vmem:[%s3604 + $0x158] sm:$0xff] %v3603
        %3649 = vst.msk [vmem:[%s3604 + $0x160] sm:$0xff] %vm3215, %v3603
        %3650 = vst [vmem:[%s3604 + $0x168] sm:$0xff] %v3603
        %3651 = vst [vmem:[%s3604 + $0x170] sm:$0xff] %v3603
        %3652 = vst.msk [vmem:[%s3604 + $0x178] sm:$0xff] %vm3215, %v3603
        %3653 = vst [vmem:[%s3604 + $0x180] sm:$0xff] %v3603
        %3654 = vst [vmem:[%s3604 + $0x188] sm:$0xff] %v3603
        %3655 = vst.msk [vmem:[%s3604 + $0x190] sm:$0xff] %vm3215, %v3603
        %3656 = vst [vmem:[%s3604 + $0x198] sm:$0xff] %v3603
        %3657 = vst [vmem:[%s3604 + $0x1a0] sm:$0xff] %v3603
        %3658 = vst.msk [vmem:[%s3604 + $0x1a8] sm:$0xff] %vm3215, %v3603
        %3659 = vst [vmem:[%s3604 + $0x1b0] sm:$0xff] %v3603
        %3660 = vst [vmem:[%s3604 + $0x1b8] sm:$0xff] %v3603
        %3661 = vst.msk [vmem:[%s3604 + $0x1c0] sm:$0xff] %vm3215, %v3603
        %3662 = vst [vmem:[%s3604 + $0x1c8] sm:$0xff] %v3603
        %3663 = vst [vmem:[%s3604 + $0x1d0] sm:$0xff] %v3603
        %3664 = vst.msk [vmem:[%s3604 + $0x1d8] sm:$0xff] %vm3215, %v3603
        %3665 = vst [vmem:[%s3604 + $0x1e0] sm:$0xff] %v3603
        %3666 = vst [vmem:[%s3604 + $0x1e8] sm:$0xff] %v3603
        %3667 = vst.msk [vmem:[%s3604 + $0x1f0] sm:$0xff] %vm3215, %v3603
        %3668 = vst [vmem:[%s3604 + $0x1f8] sm:$0xff] %v3603
        %3669 = vst [vmem:[%s3604 + $0x200] sm:$0xff] %v3603
        %3670 = vst.msk [vmem:[%s3604 + $0x208] sm:$0xff] %vm3215, %v3603
        %3671 = vst [vmem:[%s3604 + $0x210] sm:$0xff] %v3603
        %3672 = vst [vmem:[%s3604 + $0x218] sm:$0xff] %v3603
        %3673 = vst.msk [vmem:[%s3604 + $0x220] sm:$0xff] %vm3215, %v3603
        %3674 = vst [vmem:[%s3604 + $0x228] sm:$0xff] %v3603
        %3675 = vst [vmem:[%s3604 + $0x230] sm:$0xff] %v3603
        %3676 = vst.msk [vmem:[%s3604 + $0x238] sm:$0xff] %vm3215, %v3603
        %3677 = vst [vmem:[%s3604 + $0x240] sm:$0xff] %v3603
        %3678 = vst [vmem:[%s3604 + $0x248] sm:$0xff] %v3603
        %3679 = vst.msk [vmem:[%s3604 + $0x250] sm:$0xff] %vm3215, %v3603
        %3680 = vst [vmem:[%s3604 + $0x258] sm:$0xff] %v3603
        %3681 = vst [vmem:[%s3604 + $0x260] sm:$0xff] %v3603
        %3682 = vst.msk [vmem:[%s3604 + $0x268] sm:$0xff] %vm3215, %v3603
        %3683 = vst [vmem:[%s3604 + $0x270] sm:$0xff] %v3603
        %3684 = vst [vmem:[%s3604 + $0x278] sm:$0xff] %v3603
        %3685 = vst.msk [vmem:[%s3604 + $0x280] sm:$0xff] %vm3215, %v3603
        %3686 = vst [vmem:[%s3604 + $0x288] sm:$0xff] %v3603
        %3687 = vst [vmem:[%s3604 + $0x290] sm:$0xff] %v3603
        %3688 = vst.msk [vmem:[%s3604 + $0x298] sm:$0xff] %vm3215, %v3603
        %3689 = vst [vmem:[%s3604 + $0x2a0] sm:$0xff] %v3603
        %3690 = vst [vmem:[%s3604 + $0x2a8] sm:$0xff] %v3603
        %3691 = vst.msk [vmem:[%s3604 + $0x2b0] sm:$0xff] %vm3215, %v3603
        %3692 = vst [vmem:[%s3604 + $0x2b8] sm:$0xff] %v3603
        %3693 = vst [vmem:[%s3604 + $0x2c0] sm:$0xff] %v3603
        %3694 = vst.msk [vmem:[%s3604 + $0x2c8] sm:$0xff] %vm3215, %v3603
        %3695 = vst [vmem:[%s3604 + $0x2d0] sm:$0xff] %v3603
        %3696 = vst [vmem:[%s3604 + $0x2d8] sm:$0xff] %v3603
        %3697 = vst.msk [vmem:[%s3604 + $0x2e0] sm:$0xff] %vm3215, %v3603
        %3698 = vst [vmem:[%s3604 + $0x2e8] sm:$0xff] %v3603
        %3699 = vst [vmem:[%s3604 + $0x2f0] sm:$0xff] %v3603
        %3700 = vst.msk [vmem:[%s3604 + $0x2f8] sm:$0xff] %vm3215, %v3603
        %3701 = vst [vmem:[%s3604 + $0x300] sm:$0xff] %v3603
        %3702 = vst [vmem:[%s3604 + $0x308] sm:$0xff] %v3603
        %3703 = vst.msk [vmem:[%s3604 + $0x310] sm:$0xff] %vm3215, %v3603
        %3704 = vst [vmem:[%s3604 + $0x318] sm:$0xff] %v3603
        %3705 = vst [vmem:[%s3604 + $0x320] sm:$0xff] %v3603
        %3706 = vst.msk [vmem:[%s3604 + $0x328] sm:$0xff] %vm3215, %v3603
        %3707 = vst [vmem:[%s3604 + $0x330] sm:$0xff] %v3603
        %3708 = vst [vmem:[%s3604 + $0x338] sm:$0xff] %v3603
        %3709 = vst.msk [vmem:[%s3604 + $0x340] sm:$0xff] %vm3215, %v3603
        %3710 = vst [vmem:[%s3604 + $0x348] sm:$0xff] %v3603
        %3711 = vst [vmem:[%s3604 + $0x350] sm:$0xff] %v3603
        %3712 = vst.msk [vmem:[%s3604 + $0x358] sm:$0xff] %vm3215, %v3603
        %3713 = vst [vmem:[%s3604 + $0x360] sm:$0xff] %v3603
        %3714 = vst [vmem:[%s3604 + $0x368] sm:$0xff] %v3603
        %3715 = vst.msk [vmem:[%s3604 + $0x370] sm:$0xff] %vm3215, %v3603
        %3716 = vst [vmem:[%s3604 + $0x378] sm:$0xff] %v3603
        %3717 = vst [vmem:[%s3604 + $0x380] sm:$0xff] %v3603
        %3718 = vst.msk [vmem:[%s3604 + $0x388] sm:$0xff] %vm3215, %v3603
        %3719 = vst [vmem:[%s3604 + $0x390] sm:$0xff] %v3603
        %3720 = vst [vmem:[%s3604 + $0x398] sm:$0xff] %v3603
        %3721 = vst.msk [vmem:[%s3604 + $0x3a0] sm:$0xff] %vm3215, %v3603
        %3722 = vst [vmem:[%s3604 + $0x3a8] sm:$0xff] %v3603
        %3723 = vst [vmem:[%s3604 + $0x3b0] sm:$0xff] %v3603
        %3724 = vst.msk [vmem:[%s3604 + $0x3b8] sm:$0xff] %vm3215, %v3603
        %3725 = vst [vmem:[%s3604 + $0x3c0] sm:$0xff] %v3603
        %3726 = vst [vmem:[%s3604 + $0x3c8] sm:$0xff] %v3603
        %3727 = vst.msk [vmem:[%s3604 + $0x3d0] sm:$0xff] %vm3215, %v3603
        %3728 = vst [vmem:[%s3604 + $0x3d8] sm:$0x3] %v3603
        %3729 = vst [vmem:[%s3604 + $0x3e0] sm:$0x3] %v3603
        %3730 = vst.msk [vmem:[%s3604 + $0x3e8] sm:$0x3] %vm3339, %v3603
        %3731 = vst [vmem:[%s3604 + $0x7e0] sm:$0xff] %v3603
        %3732 = vst [vmem:[%s3604 + $0x7e8] sm:$0xff] %v3603
        %3733 = vst.msk [vmem:[%s3604 + $0x7f0] sm:$0xff] %vm3215, %v3603
        %3734 = vst [vmem:[%s3604 + $0x7f8] sm:$0xff] %v3603
        %3735 = vst [vmem:[%s3604 + $0x800] sm:$0xff] %v3603
        %3736 = vst.msk [vmem:[%s3604 + $0x808] sm:$0xff] %vm3215, %v3603
        %3737 = vst [vmem:[%s3604 + $0x810] sm:$0xff] %v3603
        %3738 = vst [vmem:[%s3604 + $0x818] sm:$0xff] %v3603
        %3739 = vst.msk [vmem:[%s3604 + $0x820] sm:$0xff] %vm3215, %v3603
        %3740 = vst [vmem:[%s3604 + $0x828] sm:$0xff] %v3603
        %3741 = vst [vmem:[%s3604 + $0x830] sm:$0xff] %v3603
        %3742 = vst.msk [vmem:[%s3604 + $0x838] sm:$0xff] %vm3215, %v3603
        %3743 = vst [vmem:[%s3604 + $0x840] sm:$0xff] %v3603
        %3744 = vst [vmem:[%s3604 + $0x848] sm:$0xff] %v3603
        %3745 = vst.msk [vmem:[%s3604 + $0x850] sm:$0xff] %vm3215, %v3603
        %3746 = vst [vmem:[%s3604 + $0x858] sm:$0xff] %v3603
        %3747 = vst [vmem:[%s3604 + $0x860] sm:$0xff] %v3603
        %3748 = vst.msk [vmem:[%s3604 + $0x868] sm:$0xff] %vm3215, %v3603
        %3749 = vst [vmem:[%s3604 + $0x870] sm:$0xff] %v3603
        %3750 = vst [vmem:[%s3604 + $0x878] sm:$0xff] %v3603
        %3751 = vst.msk [vmem:[%s3604 + $0x880] sm:$0xff] %vm3215, %v3603
        %3752 = vst [vmem:[%s3604 + $0x888] sm:$0xff] %v3603
        %3753 = vst [vmem:[%s3604 + $0x890] sm:$0xff] %v3603
        %3754 = vst.msk [vmem:[%s3604 + $0x898] sm:$0xff] %vm3215, %v3603
        %3755 = vst [vmem:[%s3604 + $0x8a0] sm:$0xff] %v3603
        %3756 = vst [vmem:[%s3604 + $0x8a8] sm:$0xff] %v3603
        %3757 = vst.msk [vmem:[%s3604 + $0x8b0] sm:$0xff] %vm3215, %v3603
        %3758 = vst [vmem:[%s3604 + $0x8b8] sm:$0xff] %v3603
        %3759 = vst [vmem:[%s3604 + $0x8c0] sm:$0xff] %v3603
        %3760 = vst.msk [vmem:[%s3604 + $0x8c8] sm:$0xff] %vm3215, %v3603
        %3761 = vst [vmem:[%s3604 + $0x8d0] sm:$0xff] %v3603
        %3762 = vst [vmem:[%s3604 + $0x8d8] sm:$0xff] %v3603
        %3763 = vst.msk [vmem:[%s3604 + $0x8e0] sm:$0xff] %vm3215, %v3603
        %3764 = vst [vmem:[%s3604 + $0x8e8] sm:$0xff] %v3603
        %3765 = vst [vmem:[%s3604 + $0x8f0] sm:$0xff] %v3603
        %3766 = vst.msk [vmem:[%s3604 + $0x8f8] sm:$0xff] %vm3215, %v3603
        %3767 = vst [vmem:[%s3604 + $0x900] sm:$0xff] %v3603
        %3768 = vst [vmem:[%s3604 + $0x908] sm:$0xff] %v3603
        %3769 = vst.msk [vmem:[%s3604 + $0x910] sm:$0xff] %vm3215, %v3603
        %3770 = vst [vmem:[%s3604 + $0x918] sm:$0xff] %v3603
        %3771 = vst [vmem:[%s3604 + $0x920] sm:$0xff] %v3603
        %3772 = vst.msk [vmem:[%s3604 + $0x928] sm:$0xff] %vm3215, %v3603
        %3773 = vst [vmem:[%s3604 + $0x930] sm:$0xff] %v3603
        %3774 = vst [vmem:[%s3604 + $0x938] sm:$0xff] %v3603
        %3775 = vst.msk [vmem:[%s3604 + $0x940] sm:$0xff] %vm3215, %v3603
        %3776 = vst [vmem:[%s3604 + $0x948] sm:$0xff] %v3603
        %3777 = vst [vmem:[%s3604 + $0x950] sm:$0xff] %v3603
        %3778 = vst.msk [vmem:[%s3604 + $0x958] sm:$0xff] %vm3215, %v3603
        %3779 = vst [vmem:[%s3604 + $0x960] sm:$0xff] %v3603
        %3780 = vst [vmem:[%s3604 + $0x968] sm:$0xff] %v3603
        %3781 = vst.msk [vmem:[%s3604 + $0x970] sm:$0xff] %vm3215, %v3603
        %3782 = vst [vmem:[%s3604 + $0x978] sm:$0xff] %v3603
        %3783 = vst [vmem:[%s3604 + $0x980] sm:$0xff] %v3603
        %3784 = vst.msk [vmem:[%s3604 + $0x988] sm:$0xff] %vm3215, %v3603
        %3785 = vst [vmem:[%s3604 + $0x990] sm:$0xff] %v3603
        %3786 = vst [vmem:[%s3604 + $0x998] sm:$0xff] %v3603
        %3787 = vst.msk [vmem:[%s3604 + $0x9a0] sm:$0xff] %vm3215, %v3603
        %3788 = vst [vmem:[%s3604 + $0x9a8] sm:$0xff] %v3603
        %3789 = vst [vmem:[%s3604 + $0x9b0] sm:$0xff] %v3603
        %3790 = vst.msk [vmem:[%s3604 + $0x9b8] sm:$0xff] %vm3215, %v3603
        %3791 = vst [vmem:[%s3604 + $0x9c0] sm:$0xff] %v3603
        %3792 = vst [vmem:[%s3604 + $0x9c8] sm:$0xff] %v3603
        %3793 = vst.msk [vmem:[%s3604 + $0x9d0] sm:$0xff] %vm3215, %v3603
        %3794 = vst [vmem:[%s3604 + $0x9d8] sm:$0xff] %v3603
        %3795 = vst [vmem:[%s3604 + $0x9e0] sm:$0xff] %v3603
        %3796 = vst.msk [vmem:[%s3604 + $0x9e8] sm:$0xff] %vm3215, %v3603
        %3797 = vst [vmem:[%s3604 + $0x9f0] sm:$0xff] %v3603
        %3798 = vst [vmem:[%s3604 + $0x9f8] sm:$0xff] %v3603
        %3799 = vst.msk [vmem:[%s3604 + $0xa00] sm:$0xff] %vm3215, %v3603
        %3800 = vst [vmem:[%s3604 + $0xa08] sm:$0xff] %v3603
        %3801 = vst [vmem:[%s3604 + $0xa10] sm:$0xff] %v3603
        %3802 = vst.msk [vmem:[%s3604 + $0xa18] sm:$0xff] %vm3215, %v3603
        %3803 = vst [vmem:[%s3604 + $0xa20] sm:$0xff] %v3603
        %3804 = vst [vmem:[%s3604 + $0xa28] sm:$0xff] %v3603
        %3805 = vst.msk [vmem:[%s3604 + $0xa30] sm:$0xff] %vm3215, %v3603
        %3806 = vst [vmem:[%s3604 + $0xa38] sm:$0xff] %v3603
        %3807 = vst [vmem:[%s3604 + $0xa40] sm:$0xff] %v3603
        %3808 = vst.msk [vmem:[%s3604 + $0xa48] sm:$0xff] %vm3215, %v3603
        %3809 = vst [vmem:[%s3604 + $0xa50] sm:$0xff] %v3603
        %3810 = vst [vmem:[%s3604 + $0xa58] sm:$0xff] %v3603
        %3811 = vst.msk [vmem:[%s3604 + $0xa60] sm:$0xff] %vm3215, %v3603
        %3812 = vst [vmem:[%s3604 + $0xa68] sm:$0xff] %v3603
        %3813 = vst [vmem:[%s3604 + $0xa70] sm:$0xff] %v3603
        %3814 = vst.msk [vmem:[%s3604 + $0xa78] sm:$0xff] %vm3215, %v3603
        %3815 = vst [vmem:[%s3604 + $0xa80] sm:$0xff] %v3603
        %3816 = vst [vmem:[%s3604 + $0xa88] sm:$0xff] %v3603
        %3817 = vst.msk [vmem:[%s3604 + $0xa90] sm:$0xff] %vm3215, %v3603
        %3818 = vst [vmem:[%s3604 + $0xa98] sm:$0xff] %v3603
        %3819 = vst [vmem:[%s3604 + $0xaa0] sm:$0xff] %v3603
        %3820 = vst.msk [vmem:[%s3604 + $0xaa8] sm:$0xff] %vm3215, %v3603
        %3821 = vst [vmem:[%s3604 + $0xab0] sm:$0xff] %v3603
        %3822 = vst [vmem:[%s3604 + $0xab8] sm:$0xff] %v3603
        %3823 = vst.msk [vmem:[%s3604 + $0xac0] sm:$0xff] %vm3215, %v3603
        %3824 = vst [vmem:[%s3604 + $0xac8] sm:$0xff] %v3603
        %3825 = vst [vmem:[%s3604 + $0xad0] sm:$0xff] %v3603
        %3826 = vst.msk [vmem:[%s3604 + $0xad8] sm:$0xff] %vm3215, %v3603
        %3827 = vst [vmem:[%s3604 + $0xae0] sm:$0xff] %v3603
        %3828 = vst [vmem:[%s3604 + $0xae8] sm:$0xff] %v3603
        %3829 = vst.msk [vmem:[%s3604 + $0xaf0] sm:$0xff] %vm3215, %v3603
        %3830 = vst [vmem:[%s3604 + $0xaf8] sm:$0xff] %v3603
        %3831 = vst [vmem:[%s3604 + $0xb00] sm:$0xff] %v3603
        %3832 = vst.msk [vmem:[%s3604 + $0xb08] sm:$0xff] %vm3215, %v3603
        %3833 = vst [vmem:[%s3604 + $0xb10] sm:$0xff] %v3603
        %3834 = vst [vmem:[%s3604 + $0xb18] sm:$0xff] %v3603
        %3835 = vst.msk [vmem:[%s3604 + $0xb20] sm:$0xff] %vm3215, %v3603
        %3836 = vst [vmem:[%s3604 + $0xb28] sm:$0xff] %v3603
        %3837 = vst [vmem:[%s3604 + $0xb30] sm:$0xff] %v3603
        %3838 = vst.msk [vmem:[%s3604 + $0xb38] sm:$0xff] %vm3215, %v3603
        %3839 = vst [vmem:[%s3604 + $0xb40] sm:$0xff] %v3603
        %3840 = vst [vmem:[%s3604 + $0xb48] sm:$0xff] %v3603
        %3841 = vst.msk [vmem:[%s3604 + $0xb50] sm:$0xff] %vm3215, %v3603
        %3842 = vst [vmem:[%s3604 + $0xb58] sm:$0xff] %v3603
        %3843 = vst [vmem:[%s3604 + $0xb60] sm:$0xff] %v3603
        %3844 = vst.msk [vmem:[%s3604 + $0xb68] sm:$0xff] %vm3215, %v3603
        %3845 = vst [vmem:[%s3604 + $0xb70] sm:$0xff] %v3603
        %3846 = vst [vmem:[%s3604 + $0xb78] sm:$0xff] %v3603
        %3847 = vst.msk [vmem:[%s3604 + $0xb80] sm:$0xff] %vm3215, %v3603
        %3848 = vst [vmem:[%s3604 + $0xb88] sm:$0xff] %v3603
        %3849 = vst [vmem:[%s3604 + $0xb90] sm:$0xff] %v3603
        %3850 = vst.msk [vmem:[%s3604 + $0xb98] sm:$0xff] %vm3215, %v3603
        %3851 = vst [vmem:[%s3604 + $0xba0] sm:$0xff] %v3603
        %3852 = vst [vmem:[%s3604 + $0xba8] sm:$0xff] %v3603
        %3853 = vst.msk [vmem:[%s3604 + $0xbb0] sm:$0xff] %vm3215, %v3603
        %3854 = vst [vmem:[%s3604 + $0xbb8] sm:$0x3] %v3603
        %3855 = vst [vmem:[%s3604 + $0xbc0] sm:$0x3] %v3603
        %3856 = vst.msk [vmem:[%s3604 + $0xbc8] sm:$0x3] %vm3339, %v3603
        %v3857 = vstv %s3598
        %v3858 = vmul.f32 %v3132, %v3857
        %v3859 = vmul.f32 %v3133, %v3857
        %v3860 = vmul.f32 %v3134, %v3857
        %v3861 = vmul.f32 %v3135, %v3857
        %v3862 = vmul.f32 %v3136, %v3857
        %v3863 = vmul.f32 %v3137, %v3857
        %v3864 = vstv %s3601
        %v3865 = vadd.f32 %v3858, %v3864
        %v3866 = vadd.f32 %v3859, %v3864
        %v3867 = vadd.f32 %v3860, %v3864
        %v3868 = vadd.f32 %v3861, %v3864
        %v3869 = vadd.f32 %v3862, %v3864
        %v3870 = vadd.f32 %v3863, %v3864
        %v3871 = vmax.f32 %v3865, 0.0
        %v3872 = vmax.f32 %v3866, 0.0
        %v3873 = vmax.f32 %v3867, 0.0
        %v3874 = vmax.f32 %v3868, 0.0
        %v3875 = vmax.f32 %v3869, 0.0
        %v3876 = vmax.f32 %v3870, 0.0
        %v3883 = vrot.slane %v3871, 4
        %v3884 = vrot.slane %v3872, 4
        %v3885 = vsel %vm3493, %v3883, %v3884
        %v3886 = vrot.slane %v3873, 4
        %v3887 = vsel %vm3493, %v3884, %v3886
        %v3888 = vrot.slane %v3874, 4
        %v3889 = vrot.slane %v3875, 4
        %v3890 = vsel %vm3493, %v3888, %v3889
        %v3891 = vrot.slane %v3876, 4
        %v3892 = vsel %vm3493, %v3889, %v3891
        %3893 = vrot.lane.b32.xlu0 %v3883, 28
        %v3894 = vpop.permute.xlu0 %3893
        %3895 = vrot.lane.b32.xlu0 %v3885, 28
        %v3896 = vpop.permute.xlu0 %3895
        %3897 = vrot.lane.b32.xlu0 %v3887, 28
        %v3898 = vpop.permute.xlu0 %3897
        %3899 = vrot.lane.b32.xlu0 %v3888, 28
        %v3900 = vpop.permute.xlu0 %3899
        %3901 = vrot.lane.b32.xlu0 %v3890, 28
        %v3902 = vpop.permute.xlu0 %3901
        %3903 = vrot.lane.b32.xlu0 %v3892, 28
        %v3904 = vpop.permute.xlu0 %3903
        %3911 = vst.msk [vmem:[%s3604 + $0x1d0] sm:$0xf0] %vm3522, %v3894
        %3912 = vst.msk [vmem:[%s3604 + $0x1e8] sm:$0xff] %vm3524, %v3896
        %3913 = vst.msk [vmem:[%s3604 + $0x200] sm:$0x3f] %vm3526, %v3898
        %3914 = vst.msk [vmem:[%s3604 + $0x9b0] sm:$0xf0] %vm3522, %v3900
        %3915 = vst.msk [vmem:[%s3604 + $0x9c8] sm:$0xff] %vm3524, %v3902
        %3916 = vst.msk [vmem:[%s3604 + $0x9e0] sm:$0x3f] %vm3526, %v3904
        %s3917 = sand.u32 %s109, 1
        %s3918 = sand.u32 %s109, 1
        %s3919 = smul.addr %s3918, 4032
        %s3920 = scalar_lea.vmem [#allocation7], %s3919
        // Predicated region
        $region49: #{tpu_custom_call.1} parent=35 // pred_check
          %p3921 = pneg %p119
        $region50: #{tpu_custom_call.1} parent=35 // pred_check_branch
          %3923 = sbr.rel (%p3921) target = $region52
        $region51: #{tpu_custom_call.1} parent=35 // pred_region
          %s3924 = smul.u32 2, %s17
          %s3925 = smul.addr %s3924, 126
          %s3926 = smul.addr %s3925, 8
          %s3927 = scalar_lea.vmem %s4, %s3926
          // Predicated region
          $region53: #{tpu_custom_call.1} parent=51 // pred_check
            _
          $region54: #{tpu_custom_call.1} parent=51 // pred_check_branch
            %3929 = sbr.rel (0) target = $region56
          $region55: #{tpu_custom_call.1} parent=51 // pred_region
            // Predicated region
            $region57: #{tpu_custom_call.1} parent=55 // pred_check
              _
            $region58: #{tpu_custom_call.1} parent=55 // pred_check_branch
              %3931 = sbr.rel (0) target = $region60
            $region59: #{tpu_custom_call.1} parent=55 // pred_region
              loop: start=0, step=1, limit=1
              $region61: #{tpu_custom_call.1} parent=59 // loop_pre_header
                _
              $region62: #{tpu_custom_call.1} parent=59 // loop_header
                %s3933 = sphi 0, %s3937
                %p3934 = scmp.ge.s32.totalorder %s3933, 1
                %s3938 = sphi %s3920, %s3920
                %s3939 = sphi %s3927, %s3927
              $region63: #{tpu_custom_call.1} parent=59 // loop_header_branch
                %3936 = sbr.rel (%p3934) target = $region67
              $region64: #{tpu_custom_call.1} parent=59 // loop_body
                %v3940 = vld [vmem:[%s3938] sm:$0xff]
                %3941 = vst [vmem:[%s3939] sm:$0xff] %v3940
                %v3942 = vld [vmem:[%s3938 + $0x8] sm:$0xff]
                %3943 = vst [vmem:[%s3939 + $0x8] sm:$0xff] %v3942
                %v3944 = vld [vmem:[%s3938 + $0x10] sm:$0xff]
                %3945 = vst [vmem:[%s3939 + $0x10] sm:$0xff] %v3944
                %v3946 = vld [vmem:[%s3938 + $0x18] sm:$0xff]
                %3947 = vst [vmem:[%s3939 + $0x18] sm:$0xff] %v3946
                %v3948 = vld [vmem:[%s3938 + $0x20] sm:$0xff]
                %3949 = vst [vmem:[%s3939 + $0x20] sm:$0xff] %v3948
                %v3950 = vld [vmem:[%s3938 + $0x28] sm:$0xff]
                %3951 = vst [vmem:[%s3939 + $0x28] sm:$0xff] %v3950
                %v3952 = vld [vmem:[%s3938 + $0x30] sm:$0xff]
                %3953 = vst [vmem:[%s3939 + $0x30] sm:$0xff] %v3952
                %v3954 = vld [vmem:[%s3938 + $0x38] sm:$0xff]
                %3955 = vst [vmem:[%s3939 + $0x38] sm:$0xff] %v3954
                %v3956 = vld [vmem:[%s3938 + $0x40] sm:$0xff]
                %3957 = vst [vmem:[%s3939 + $0x40] sm:$0xff] %v3956
                %v3958 = vld [vmem:[%s3938 + $0x48] sm:$0xff]
                %3959 = vst [vmem:[%s3939 + $0x48] sm:$0xff] %v3958
                %v3960 = vld [vmem:[%s3938 + $0x50] sm:$0xff]
                %3961 = vst [vmem:[%s3939 + $0x50] sm:$0xff] %v3960
                %v3962 = vld [vmem:[%s3938 + $0x58] sm:$0xff]
                %3963 = vst [vmem:[%s3939 + $0x58] sm:$0xff] %v3962
                %v3964 = vld [vmem:[%s3938 + $0x60] sm:$0xff]
                %3965 = vst [vmem:[%s3939 + $0x60] sm:$0xff] %v3964
                %v3966 = vld [vmem:[%s3938 + $0x68] sm:$0xff]
                %3967 = vst [vmem:[%s3939 + $0x68] sm:$0xff] %v3966
                %v3968 = vld [vmem:[%s3938 + $0x70] sm:$0xff]
                %3969 = vst [vmem:[%s3939 + $0x70] sm:$0xff] %v3968
                %v3970 = vld [vmem:[%s3938 + $0x78] sm:$0xff]
                %3971 = vst [vmem:[%s3939 + $0x78] sm:$0xff] %v3970
                %v3972 = vld [vmem:[%s3938 + $0x80] sm:$0xff]
                %3973 = vst [vmem:[%s3939 + $0x80] sm:$0xff] %v3972
                %v3974 = vld [vmem:[%s3938 + $0x88] sm:$0xff]
                %3975 = vst [vmem:[%s3939 + $0x88] sm:$0xff] %v3974
                %v3976 = vld [vmem:[%s3938 + $0x90] sm:$0xff]
                %3977 = vst [vmem:[%s3939 + $0x90] sm:$0xff] %v3976
                %v3978 = vld [vmem:[%s3938 + $0x98] sm:$0xff]
                %3979 = vst [vmem:[%s3939 + $0x98] sm:$0xff] %v3978
                %v3980 = vld [vmem:[%s3938 + $0xa0] sm:$0xff]
                %3981 = vst [vmem:[%s3939 + $0xa0] sm:$0xff] %v3980
                %v3982 = vld [vmem:[%s3938 + $0xa8] sm:$0xff]
                %3983 = vst [vmem:[%s3939 + $0xa8] sm:$0xff] %v3982
                %v3984 = vld [vmem:[%s3938 + $0xb0] sm:$0xff]
                %3985 = vst [vmem:[%s3939 + $0xb0] sm:$0xff] %v3984
                %v3986 = vld [vmem:[%s3938 + $0xb8] sm:$0xff]
                %3987 = vst [vmem:[%s3939 + $0xb8] sm:$0xff] %v3986
                %v3988 = vld [vmem:[%s3938 + $0xc0] sm:$0xff]
                %3989 = vst [vmem:[%s3939 + $0xc0] sm:$0xff] %v3988
                %v3990 = vld [vmem:[%s3938 + $0xc8] sm:$0xff]
                %3991 = vst [vmem:[%s3939 + $0xc8] sm:$0xff] %v3990
                %v3992 = vld [vmem:[%s3938 + $0xd0] sm:$0xff]
                %3993 = vst [vmem:[%s3939 + $0xd0] sm:$0xff] %v3992
                %v3994 = vld [vmem:[%s3938 + $0xd8] sm:$0xff]
                %3995 = vst [vmem:[%s3939 + $0xd8] sm:$0xff] %v3994
                %v3996 = vld [vmem:[%s3938 + $0xe0] sm:$0xff]
                %3997 = vst [vmem:[%s3939 + $0xe0] sm:$0xff] %v3996
                %v3998 = vld [vmem:[%s3938 + $0xe8] sm:$0xff]
                %3999 = vst [vmem:[%s3939 + $0xe8] sm:$0xff] %v3998
                %v4000 = vld [vmem:[%s3938 + $0xf0] sm:$0xff]
                %4001 = vst [vmem:[%s3939 + $0xf0] sm:$0xff] %v4000
                %v4002 = vld [vmem:[%s3938 + $0xf8] sm:$0xff]
                %4003 = vst [vmem:[%s3939 + $0xf8] sm:$0xff] %v4002
                %v4004 = vld [vmem:[%s3938 + $0x100] sm:$0xff]
                %4005 = vst [vmem:[%s3939 + $0x100] sm:$0xff] %v4004
                %v4006 = vld [vmem:[%s3938 + $0x108] sm:$0xff]
                %4007 = vst [vmem:[%s3939 + $0x108] sm:$0xff] %v4006
                %v4008 = vld [vmem:[%s3938 + $0x110] sm:$0xff]
                %4009 = vst [vmem:[%s3939 + $0x110] sm:$0xff] %v4008
                %v4010 = vld [vmem:[%s3938 + $0x118] sm:$0xff]
                %4011 = vst [vmem:[%s3939 + $0x118] sm:$0xff] %v4010
                %v4012 = vld [vmem:[%s3938 + $0x120] sm:$0xff]
                %4013 = vst [vmem:[%s3939 + $0x120] sm:$0xff] %v4012
                %v4014 = vld [vmem:[%s3938 + $0x128] sm:$0xff]
                %4015 = vst [vmem:[%s3939 + $0x128] sm:$0xff] %v4014
                %v4016 = vld [vmem:[%s3938 + $0x130] sm:$0xff]
                %4017 = vst [vmem:[%s3939 + $0x130] sm:$0xff] %v4016
                %v4018 = vld [vmem:[%s3938 + $0x138] sm:$0xff]
                %4019 = vst [vmem:[%s3939 + $0x138] sm:$0xff] %v4018
                %v4020 = vld [vmem:[%s3938 + $0x140] sm:$0xff]
                %4021 = vst [vmem:[%s3939 + $0x140] sm:$0xff] %v4020
                %v4022 = vld [vmem:[%s3938 + $0x148] sm:$0xff]
                %4023 = vst [vmem:[%s3939 + $0x148] sm:$0xff] %v4022
                %v4024 = vld [vmem:[%s3938 + $0x150] sm:$0xff]
                %4025 = vst [vmem:[%s3939 + $0x150] sm:$0xff] %v4024
                %v4026 = vld [vmem:[%s3938 + $0x158] sm:$0xff]
                %4027 = vst [vmem:[%s3939 + $0x158] sm:$0xff] %v4026
                %v4028 = vld [vmem:[%s3938 + $0x160] sm:$0xff]
                %4029 = vst [vmem:[%s3939 + $0x160] sm:$0xff] %v4028
                %v4030 = vld [vmem:[%s3938 + $0x168] sm:$0xff]
                %4031 = vst [vmem:[%s3939 + $0x168] sm:$0xff] %v4030
                %v4032 = vld [vmem:[%s3938 + $0x170] sm:$0xff]
                %4033 = vst [vmem:[%s3939 + $0x170] sm:$0xff] %v4032
                %v4034 = vld [vmem:[%s3938 + $0x178] sm:$0xff]
                %4035 = vst [vmem:[%s3939 + $0x178] sm:$0xff] %v4034
                %v4036 = vld [vmem:[%s3938 + $0x180] sm:$0xff]
                %4037 = vst [vmem:[%s3939 + $0x180] sm:$0xff] %v4036
                %v4038 = vld [vmem:[%s3938 + $0x188] sm:$0xff]
                %4039 = vst [vmem:[%s3939 + $0x188] sm:$0xff] %v4038
                %v4040 = vld [vmem:[%s3938 + $0x190] sm:$0xff]
                %4041 = vst [vmem:[%s3939 + $0x190] sm:$0xff] %v4040
                %v4042 = vld [vmem:[%s3938 + $0x198] sm:$0xff]
                %4043 = vst [vmem:[%s3939 + $0x198] sm:$0xff] %v4042
                %v4044 = vld [vmem:[%s3938 + $0x1a0] sm:$0xff]
                %4045 = vst [vmem:[%s3939 + $0x1a0] sm:$0xff] %v4044
                %v4046 = vld [vmem:[%s3938 + $0x1a8] sm:$0xff]
                %4047 = vst [vmem:[%s3939 + $0x1a8] sm:$0xff] %v4046
                %v4048 = vld [vmem:[%s3938 + $0x1b0] sm:$0xff]
                %4049 = vst [vmem:[%s3939 + $0x1b0] sm:$0xff] %v4048
                %v4050 = vld [vmem:[%s3938 + $0x1b8] sm:$0xff]
                %4051 = vst [vmem:[%s3939 + $0x1b8] sm:$0xff] %v4050
                %v4052 = vld [vmem:[%s3938 + $0x1c0] sm:$0xff]
                %4053 = vst [vmem:[%s3939 + $0x1c0] sm:$0xff] %v4052
                %v4054 = vld [vmem:[%s3938 + $0x1c8] sm:$0xff]
                %4055 = vst [vmem:[%s3939 + $0x1c8] sm:$0xff] %v4054
                %v4056 = vld [vmem:[%s3938 + $0x1d0] sm:$0xff]
                %4057 = vst [vmem:[%s3939 + $0x1d0] sm:$0xff] %v4056
                %v4058 = vld [vmem:[%s3938 + $0x1d8] sm:$0xff]
                %4059 = vst [vmem:[%s3939 + $0x1d8] sm:$0xff] %v4058
                %v4060 = vld [vmem:[%s3938 + $0x1e0] sm:$0xff]
                %4061 = vst [vmem:[%s3939 + $0x1e0] sm:$0xff] %v4060
                %v4062 = vld [vmem:[%s3938 + $0x1e8] sm:$0xff]
                %4063 = vst [vmem:[%s3939 + $0x1e8] sm:$0xff] %v4062
                %v4064 = vld [vmem:[%s3938 + $0x1f0] sm:$0xff]
                %4065 = vst [vmem:[%s3939 + $0x1f0] sm:$0xff] %v4064
                %v4066 = vld [vmem:[%s3938 + $0x1f8] sm:$0xff]
                %4067 = vst [vmem:[%s3939 + $0x1f8] sm:$0xff] %v4066
                %v4068 = vld [vmem:[%s3938 + $0x200] sm:$0xff]
                %4069 = vst [vmem:[%s3939 + $0x200] sm:$0xff] %v4068
                %v4070 = vld [vmem:[%s3938 + $0x208] sm:$0xff]
                %4071 = vst [vmem:[%s3939 + $0x208] sm:$0xff] %v4070
                %v4072 = vld [vmem:[%s3938 + $0x210] sm:$0xff]
                %4073 = vst [vmem:[%s3939 + $0x210] sm:$0xff] %v4072
                %v4074 = vld [vmem:[%s3938 + $0x218] sm:$0xff]
                %4075 = vst [vmem:[%s3939 + $0x218] sm:$0xff] %v4074
                %v4076 = vld [vmem:[%s3938 + $0x220] sm:$0xff]
                %4077 = vst [vmem:[%s3939 + $0x220] sm:$0xff] %v4076
                %v4078 = vld [vmem:[%s3938 + $0x228] sm:$0xff]
                %4079 = vst [vmem:[%s3939 + $0x228] sm:$0xff] %v4078
                %v4080 = vld [vmem:[%s3938 + $0x230] sm:$0xff]
                %4081 = vst [vmem:[%s3939 + $0x230] sm:$0xff] %v4080
                %v4082 = vld [vmem:[%s3938 + $0x238] sm:$0xff]
                %4083 = vst [vmem:[%s3939 + $0x238] sm:$0xff] %v4082
                %v4084 = vld [vmem:[%s3938 + $0x240] sm:$0xff]
                %4085 = vst [vmem:[%s3939 + $0x240] sm:$0xff] %v4084
                %v4086 = vld [vmem:[%s3938 + $0x248] sm:$0xff]
                %4087 = vst [vmem:[%s3939 + $0x248] sm:$0xff] %v4086
                %v4088 = vld [vmem:[%s3938 + $0x250] sm:$0xff]
                %4089 = vst [vmem:[%s3939 + $0x250] sm:$0xff] %v4088
                %v4090 = vld [vmem:[%s3938 + $0x258] sm:$0xff]
                %4091 = vst [vmem:[%s3939 + $0x258] sm:$0xff] %v4090
                %v4092 = vld [vmem:[%s3938 + $0x260] sm:$0xff]
                %4093 = vst [vmem:[%s3939 + $0x260] sm:$0xff] %v4092
                %v4094 = vld [vmem:[%s3938 + $0x268] sm:$0xff]
                %4095 = vst [vmem:[%s3939 + $0x268] sm:$0xff] %v4094
                %v4096 = vld [vmem:[%s3938 + $0x270] sm:$0xff]
                %4097 = vst [vmem:[%s3939 + $0x270] sm:$0xff] %v4096
                %v4098 = vld [vmem:[%s3938 + $0x278] sm:$0xff]
                %4099 = vst [vmem:[%s3939 + $0x278] sm:$0xff] %v4098
                %v4100 = vld [vmem:[%s3938 + $0x280] sm:$0xff]
                %4101 = vst [vmem:[%s3939 + $0x280] sm:$0xff] %v4100
                %v4102 = vld [vmem:[%s3938 + $0x288] sm:$0xff]
                %4103 = vst [vmem:[%s3939 + $0x288] sm:$0xff] %v4102
                %v4104 = vld [vmem:[%s3938 + $0x290] sm:$0xff]
                %4105 = vst [vmem:[%s3939 + $0x290] sm:$0xff] %v4104
                %v4106 = vld [vmem:[%s3938 + $0x298] sm:$0xff]
                %4107 = vst [vmem:[%s3939 + $0x298] sm:$0xff] %v4106
                %v4108 = vld [vmem:[%s3938 + $0x2a0] sm:$0xff]
                %4109 = vst [vmem:[%s3939 + $0x2a0] sm:$0xff] %v4108
                %v4110 = vld [vmem:[%s3938 + $0x2a8] sm:$0xff]
                %4111 = vst [vmem:[%s3939 + $0x2a8] sm:$0xff] %v4110
                %v4112 = vld [vmem:[%s3938 + $0x2b0] sm:$0xff]
                %4113 = vst [vmem:[%s3939 + $0x2b0] sm:$0xff] %v4112
                %v4114 = vld [vmem:[%s3938 + $0x2b8] sm:$0xff]
                %4115 = vst [vmem:[%s3939 + $0x2b8] sm:$0xff] %v4114
                %v4116 = vld [vmem:[%s3938 + $0x2c0] sm:$0xff]
                %4117 = vst [vmem:[%s3939 + $0x2c0] sm:$0xff] %v4116
                %v4118 = vld [vmem:[%s3938 + $0x2c8] sm:$0xff]
                %4119 = vst [vmem:[%s3939 + $0x2c8] sm:$0xff] %v4118
                %v4120 = vld [vmem:[%s3938 + $0x2d0] sm:$0xff]
                %4121 = vst [vmem:[%s3939 + $0x2d0] sm:$0xff] %v4120
                %v4122 = vld [vmem:[%s3938 + $0x2d8] sm:$0xff]
                %4123 = vst [vmem:[%s3939 + $0x2d8] sm:$0xff] %v4122
                %v4124 = vld [vmem:[%s3938 + $0x2e0] sm:$0xff]
                %4125 = vst [vmem:[%s3939 + $0x2e0] sm:$0xff] %v4124
                %v4126 = vld [vmem:[%s3938 + $0x2e8] sm:$0xff]
                %4127 = vst [vmem:[%s3939 + $0x2e8] sm:$0xff] %v4126
                %v4128 = vld [vmem:[%s3938 + $0x2f0] sm:$0xff]
                %4129 = vst [vmem:[%s3939 + $0x2f0] sm:$0xff] %v4128
                %v4130 = vld [vmem:[%s3938 + $0x2f8] sm:$0xff]
                %4131 = vst [vmem:[%s3939 + $0x2f8] sm:$0xff] %v4130
                %v4132 = vld [vmem:[%s3938 + $0x300] sm:$0xff]
                %4133 = vst [vmem:[%s3939 + $0x300] sm:$0xff] %v4132
                %v4134 = vld [vmem:[%s3938 + $0x308] sm:$0xff]
                %4135 = vst [vmem:[%s3939 + $0x308] sm:$0xff] %v4134
                %v4136 = vld [vmem:[%s3938 + $0x310] sm:$0xff]
                %4137 = vst [vmem:[%s3939 + $0x310] sm:$0xff] %v4136
                %v4138 = vld [vmem:[%s3938 + $0x318] sm:$0xff]
                %4139 = vst [vmem:[%s3939 + $0x318] sm:$0xff] %v4138
                %v4140 = vld [vmem:[%s3938 + $0x320] sm:$0xff]
                %4141 = vst [vmem:[%s3939 + $0x320] sm:$0xff] %v4140
                %v4142 = vld [vmem:[%s3938 + $0x328] sm:$0xff]
                %4143 = vst [vmem:[%s3939 + $0x328] sm:$0xff] %v4142
                %v4144 = vld [vmem:[%s3938 + $0x330] sm:$0xff]
                %4145 = vst [vmem:[%s3939 + $0x330] sm:$0xff] %v4144
                %v4146 = vld [vmem:[%s3938 + $0x338] sm:$0xff]
                %4147 = vst [vmem:[%s3939 + $0x338] sm:$0xff] %v4146
                %v4148 = vld [vmem:[%s3938 + $0x340] sm:$0xff]
                %4149 = vst [vmem:[%s3939 + $0x340] sm:$0xff] %v4148
                %v4150 = vld [vmem:[%s3938 + $0x348] sm:$0xff]
                %4151 = vst [vmem:[%s3939 + $0x348] sm:$0xff] %v4150
                %v4152 = vld [vmem:[%s3938 + $0x350] sm:$0xff]
                %4153 = vst [vmem:[%s3939 + $0x350] sm:$0xff] %v4152
                %v4154 = vld [vmem:[%s3938 + $0x358] sm:$0xff]
                %4155 = vst [vmem:[%s3939 + $0x358] sm:$0xff] %v4154
                %v4156 = vld [vmem:[%s3938 + $0x360] sm:$0xff]
                %4157 = vst [vmem:[%s3939 + $0x360] sm:$0xff] %v4156
                %v4158 = vld [vmem:[%s3938 + $0x368] sm:$0xff]
                %4159 = vst [vmem:[%s3939 + $0x368] sm:$0xff] %v4158
                %v4160 = vld [vmem:[%s3938 + $0x370] sm:$0xff]
                %4161 = vst [vmem:[%s3939 + $0x370] sm:$0xff] %v4160
                %v4162 = vld [vmem:[%s3938 + $0x378] sm:$0xff]
                %4163 = vst [vmem:[%s3939 + $0x378] sm:$0xff] %v4162
                %v4164 = vld [vmem:[%s3938 + $0x380] sm:$0xff]
                %4165 = vst [vmem:[%s3939 + $0x380] sm:$0xff] %v4164
                %v4166 = vld [vmem:[%s3938 + $0x388] sm:$0xff]
                %4167 = vst [vmem:[%s3939 + $0x388] sm:$0xff] %v4166
                %v4168 = vld [vmem:[%s3938 + $0x390] sm:$0xff]
                %4169 = vst [vmem:[%s3939 + $0x390] sm:$0xff] %v4168
                %v4170 = vld [vmem:[%s3938 + $0x398] sm:$0xff]
                %4171 = vst [vmem:[%s3939 + $0x398] sm:$0xff] %v4170
                %v4172 = vld [vmem:[%s3938 + $0x3a0] sm:$0xff]
                %4173 = vst [vmem:[%s3939 + $0x3a0] sm:$0xff] %v4172
                %v4174 = vld [vmem:[%s3938 + $0x3a8] sm:$0xff]
                %4175 = vst [vmem:[%s3939 + $0x3a8] sm:$0xff] %v4174
                %v4176 = vld [vmem:[%s3938 + $0x3b0] sm:$0xff]
                %4177 = vst [vmem:[%s3939 + $0x3b0] sm:$0xff] %v4176
                %v4178 = vld [vmem:[%s3938 + $0x3b8] sm:$0xff]
                %4179 = vst [vmem:[%s3939 + $0x3b8] sm:$0xff] %v4178
                %v4180 = vld [vmem:[%s3938 + $0x3c0] sm:$0xff]
                %4181 = vst [vmem:[%s3939 + $0x3c0] sm:$0xff] %v4180
                %v4182 = vld [vmem:[%s3938 + $0x3c8] sm:$0xff]
                %4183 = vst [vmem:[%s3939 + $0x3c8] sm:$0xff] %v4182
                %v4184 = vld [vmem:[%s3938 + $0x3d0] sm:$0xff]
                %4185 = vst [vmem:[%s3939 + $0x3d0] sm:$0xff] %v4184
                %v4186 = vld [vmem:[%s3938 + $0x3d8] sm:$0xff]
                %4187 = vst [vmem:[%s3939 + $0x3d8] sm:$0xff] %v4186
                %v4188 = vld [vmem:[%s3938 + $0x3e0] sm:$0xff]
                %4189 = vst [vmem:[%s3939 + $0x3e0] sm:$0xff] %v4188
                %v4190 = vld [vmem:[%s3938 + $0x3e8] sm:$0xff]
                %4191 = vst [vmem:[%s3939 + $0x3e8] sm:$0xff] %v4190
                %v4192 = vld [vmem:[%s3938 + $0x3f0] sm:$0xff]
                %4193 = vst [vmem:[%s3939 + $0x3f0] sm:$0xff] %v4192
                %v4194 = vld [vmem:[%s3938 + $0x3f8] sm:$0xff]
                %4195 = vst [vmem:[%s3939 + $0x3f8] sm:$0xff] %v4194
                %v4196 = vld [vmem:[%s3938 + $0x400] sm:$0xff]
                %4197 = vst [vmem:[%s3939 + $0x400] sm:$0xff] %v4196
                %v4198 = vld [vmem:[%s3938 + $0x408] sm:$0xff]
                %4199 = vst [vmem:[%s3939 + $0x408] sm:$0xff] %v4198
                %v4200 = vld [vmem:[%s3938 + $0x410] sm:$0xff]
                %4201 = vst [vmem:[%s3939 + $0x410] sm:$0xff] %v4200
                %v4202 = vld [vmem:[%s3938 + $0x418] sm:$0xff]
                %4203 = vst [vmem:[%s3939 + $0x418] sm:$0xff] %v4202
                %v4204 = vld [vmem:[%s3938 + $0x420] sm:$0xff]
                %4205 = vst [vmem:[%s3939 + $0x420] sm:$0xff] %v4204
                %v4206 = vld [vmem:[%s3938 + $0x428] sm:$0xff]
                %4207 = vst [vmem:[%s3939 + $0x428] sm:$0xff] %v4206
                %v4208 = vld [vmem:[%s3938 + $0x430] sm:$0xff]
                %4209 = vst [vmem:[%s3939 + $0x430] sm:$0xff] %v4208
                %v4210 = vld [vmem:[%s3938 + $0x438] sm:$0xff]
                %4211 = vst [vmem:[%s3939 + $0x438] sm:$0xff] %v4210
                %v4212 = vld [vmem:[%s3938 + $0x440] sm:$0xff]
                %4213 = vst [vmem:[%s3939 + $0x440] sm:$0xff] %v4212
                %v4214 = vld [vmem:[%s3938 + $0x448] sm:$0xff]
                %4215 = vst [vmem:[%s3939 + $0x448] sm:$0xff] %v4214
                %v4216 = vld [vmem:[%s3938 + $0x450] sm:$0xff]
                %4217 = vst [vmem:[%s3939 + $0x450] sm:$0xff] %v4216
                %v4218 = vld [vmem:[%s3938 + $0x458] sm:$0xff]
                %4219 = vst [vmem:[%s3939 + $0x458] sm:$0xff] %v4218
                %v4220 = vld [vmem:[%s3938 + $0x460] sm:$0xff]
                %4221 = vst [vmem:[%s3939 + $0x460] sm:$0xff] %v4220
                %v4222 = vld [vmem:[%s3938 + $0x468] sm:$0xff]
                %4223 = vst [vmem:[%s3939 + $0x468] sm:$0xff] %v4222
                %v4224 = vld [vmem:[%s3938 + $0x470] sm:$0xff]
                %4225 = vst [vmem:[%s3939 + $0x470] sm:$0xff] %v4224
                %v4226 = vld [vmem:[%s3938 + $0x478] sm:$0xff]
                %4227 = vst [vmem:[%s3939 + $0x478] sm:$0xff] %v4226
                %v4228 = vld [vmem:[%s3938 + $0x480] sm:$0xff]
                %4229 = vst [vmem:[%s3939 + $0x480] sm:$0xff] %v4228
                %v4230 = vld [vmem:[%s3938 + $0x488] sm:$0xff]
                %4231 = vst [vmem:[%s3939 + $0x488] sm:$0xff] %v4230
                %v4232 = vld [vmem:[%s3938 + $0x490] sm:$0xff]
                %4233 = vst [vmem:[%s3939 + $0x490] sm:$0xff] %v4232
                %v4234 = vld [vmem:[%s3938 + $0x498] sm:$0xff]
                %4235 = vst [vmem:[%s3939 + $0x498] sm:$0xff] %v4234
                %v4236 = vld [vmem:[%s3938 + $0x4a0] sm:$0xff]
                %4237 = vst [vmem:[%s3939 + $0x4a0] sm:$0xff] %v4236
                %v4238 = vld [vmem:[%s3938 + $0x4a8] sm:$0xff]
                %4239 = vst [vmem:[%s3939 + $0x4a8] sm:$0xff] %v4238
                %v4240 = vld [vmem:[%s3938 + $0x4b0] sm:$0xff]
                %4241 = vst [vmem:[%s3939 + $0x4b0] sm:$0xff] %v4240
                %v4242 = vld [vmem:[%s3938 + $0x4b8] sm:$0xff]
                %4243 = vst [vmem:[%s3939 + $0x4b8] sm:$0xff] %v4242
                %v4244 = vld [vmem:[%s3938 + $0x4c0] sm:$0xff]
                %4245 = vst [vmem:[%s3939 + $0x4c0] sm:$0xff] %v4244
                %v4246 = vld [vmem:[%s3938 + $0x4c8] sm:$0xff]
                %4247 = vst [vmem:[%s3939 + $0x4c8] sm:$0xff] %v4246
                %v4248 = vld [vmem:[%s3938 + $0x4d0] sm:$0xff]
                %4249 = vst [vmem:[%s3939 + $0x4d0] sm:$0xff] %v4248
                %v4250 = vld [vmem:[%s3938 + $0x4d8] sm:$0xff]
                %4251 = vst [vmem:[%s3939 + $0x4d8] sm:$0xff] %v4250
                %v4252 = vld [vmem:[%s3938 + $0x4e0] sm:$0xff]
                %4253 = vst [vmem:[%s3939 + $0x4e0] sm:$0xff] %v4252
                %v4254 = vld [vmem:[%s3938 + $0x4e8] sm:$0xff]
                %4255 = vst [vmem:[%s3939 + $0x4e8] sm:$0xff] %v4254
                %v4256 = vld [vmem:[%s3938 + $0x4f0] sm:$0xff]
                %4257 = vst [vmem:[%s3939 + $0x4f0] sm:$0xff] %v4256
                %v4258 = vld [vmem:[%s3938 + $0x4f8] sm:$0xff]
                %4259 = vst [vmem:[%s3939 + $0x4f8] sm:$0xff] %v4258
                %v4260 = vld [vmem:[%s3938 + $0x500] sm:$0xff]
                %4261 = vst [vmem:[%s3939 + $0x500] sm:$0xff] %v4260
                %v4262 = vld [vmem:[%s3938 + $0x508] sm:$0xff]
                %4263 = vst [vmem:[%s3939 + $0x508] sm:$0xff] %v4262
                %v4264 = vld [vmem:[%s3938 + $0x510] sm:$0xff]
                %4265 = vst [vmem:[%s3939 + $0x510] sm:$0xff] %v4264
                %v4266 = vld [vmem:[%s3938 + $0x518] sm:$0xff]
                %4267 = vst [vmem:[%s3939 + $0x518] sm:$0xff] %v4266
                %v4268 = vld [vmem:[%s3938 + $0x520] sm:$0xff]
                %4269 = vst [vmem:[%s3939 + $0x520] sm:$0xff] %v4268
                %v4270 = vld [vmem:[%s3938 + $0x528] sm:$0xff]
                %4271 = vst [vmem:[%s3939 + $0x528] sm:$0xff] %v4270
                %v4272 = vld [vmem:[%s3938 + $0x530] sm:$0xff]
                %4273 = vst [vmem:[%s3939 + $0x530] sm:$0xff] %v4272
                %v4274 = vld [vmem:[%s3938 + $0x538] sm:$0xff]
                %4275 = vst [vmem:[%s3939 + $0x538] sm:$0xff] %v4274
                %v4276 = vld [vmem:[%s3938 + $0x540] sm:$0xff]
                %4277 = vst [vmem:[%s3939 + $0x540] sm:$0xff] %v4276
                %v4278 = vld [vmem:[%s3938 + $0x548] sm:$0xff]
                %4279 = vst [vmem:[%s3939 + $0x548] sm:$0xff] %v4278
                %v4280 = vld [vmem:[%s3938 + $0x550] sm:$0xff]
                %4281 = vst [vmem:[%s3939 + $0x550] sm:$0xff] %v4280
                %v4282 = vld [vmem:[%s3938 + $0x558] sm:$0xff]
                %4283 = vst [vmem:[%s3939 + $0x558] sm:$0xff] %v4282
                %v4284 = vld [vmem:[%s3938 + $0x560] sm:$0xff]
                %4285 = vst [vmem:[%s3939 + $0x560] sm:$0xff] %v4284
                %v4286 = vld [vmem:[%s3938 + $0x568] sm:$0xff]
                %4287 = vst [vmem:[%s3939 + $0x568] sm:$0xff] %v4286
                %v4288 = vld [vmem:[%s3938 + $0x570] sm:$0xff]
                %4289 = vst [vmem:[%s3939 + $0x570] sm:$0xff] %v4288
                %v4290 = vld [vmem:[%s3938 + $0x578] sm:$0xff]
                %4291 = vst [vmem:[%s3939 + $0x578] sm:$0xff] %v4290
                %v4292 = vld [vmem:[%s3938 + $0x580] sm:$0xff]
                %4293 = vst [vmem:[%s3939 + $0x580] sm:$0xff] %v4292
                %v4294 = vld [vmem:[%s3938 + $0x588] sm:$0xff]
                %4295 = vst [vmem:[%s3939 + $0x588] sm:$0xff] %v4294
                %v4296 = vld [vmem:[%s3938 + $0x590] sm:$0xff]
                %4297 = vst [vmem:[%s3939 + $0x590] sm:$0xff] %v4296
                %v4298 = vld [vmem:[%s3938 + $0x598] sm:$0xff]
                %4299 = vst [vmem:[%s3939 + $0x598] sm:$0xff] %v4298
                %v4300 = vld [vmem:[%s3938 + $0x5a0] sm:$0xff]
                %4301 = vst [vmem:[%s3939 + $0x5a0] sm:$0xff] %v4300
                %v4302 = vld [vmem:[%s3938 + $0x5a8] sm:$0xff]
                %4303 = vst [vmem:[%s3939 + $0x5a8] sm:$0xff] %v4302
                %v4304 = vld [vmem:[%s3938 + $0x5b0] sm:$0xff]
                %4305 = vst [vmem:[%s3939 + $0x5b0] sm:$0xff] %v4304
                %v4306 = vld [vmem:[%s3938 + $0x5b8] sm:$0xff]
                %4307 = vst [vmem:[%s3939 + $0x5b8] sm:$0xff] %v4306
                %v4308 = vld [vmem:[%s3938 + $0x5c0] sm:$0xff]
                %4309 = vst [vmem:[%s3939 + $0x5c0] sm:$0xff] %v4308
                %v4310 = vld [vmem:[%s3938 + $0x5c8] sm:$0xff]
                %4311 = vst [vmem:[%s3939 + $0x5c8] sm:$0xff] %v4310
                %v4312 = vld [vmem:[%s3938 + $0x5d0] sm:$0xff]
                %4313 = vst [vmem:[%s3939 + $0x5d0] sm:$0xff] %v4312
                %v4314 = vld [vmem:[%s3938 + $0x5d8] sm:$0xff]
                %4315 = vst [vmem:[%s3939 + $0x5d8] sm:$0xff] %v4314
                %v4316 = vld [vmem:[%s3938 + $0x5e0] sm:$0xff]
                %4317 = vst [vmem:[%s3939 + $0x5e0] sm:$0xff] %v4316
                %v4318 = vld [vmem:[%s3938 + $0x5e8] sm:$0xff]
                %4319 = vst [vmem:[%s3939 + $0x5e8] sm:$0xff] %v4318
                %v4320 = vld [vmem:[%s3938 + $0x5f0] sm:$0xff]
                %4321 = vst [vmem:[%s3939 + $0x5f0] sm:$0xff] %v4320
                %v4322 = vld [vmem:[%s3938 + $0x5f8] sm:$0xff]
                %4323 = vst [vmem:[%s3939 + $0x5f8] sm:$0xff] %v4322
                %v4324 = vld [vmem:[%s3938 + $0x600] sm:$0xff]
                %4325 = vst [vmem:[%s3939 + $0x600] sm:$0xff] %v4324
                %v4326 = vld [vmem:[%s3938 + $0x608] sm:$0xff]
                %4327 = vst [vmem:[%s3939 + $0x608] sm:$0xff] %v4326
                %v4328 = vld [vmem:[%s3938 + $0x610] sm:$0xff]
                %4329 = vst [vmem:[%s3939 + $0x610] sm:$0xff] %v4328
                %v4330 = vld [vmem:[%s3938 + $0x618] sm:$0xff]
                %4331 = vst [vmem:[%s3939 + $0x618] sm:$0xff] %v4330
                %v4332 = vld [vmem:[%s3938 + $0x620] sm:$0xff]
                %4333 = vst [vmem:[%s3939 + $0x620] sm:$0xff] %v4332
                %v4334 = vld [vmem:[%s3938 + $0x628] sm:$0xff]
                %4335 = vst [vmem:[%s3939 + $0x628] sm:$0xff] %v4334
                %v4336 = vld [vmem:[%s3938 + $0x630] sm:$0xff]
                %4337 = vst [vmem:[%s3939 + $0x630] sm:$0xff] %v4336
                %v4338 = vld [vmem:[%s3938 + $0x638] sm:$0xff]
                %4339 = vst [vmem:[%s3939 + $0x638] sm:$0xff] %v4338
                %v4340 = vld [vmem:[%s3938 + $0x640] sm:$0xff]
                %4341 = vst [vmem:[%s3939 + $0x640] sm:$0xff] %v4340
                %v4342 = vld [vmem:[%s3938 + $0x648] sm:$0xff]
                %4343 = vst [vmem:[%s3939 + $0x648] sm:$0xff] %v4342
                %v4344 = vld [vmem:[%s3938 + $0x650] sm:$0xff]
                %4345 = vst [vmem:[%s3939 + $0x650] sm:$0xff] %v4344
                %v4346 = vld [vmem:[%s3938 + $0x658] sm:$0xff]
                %4347 = vst [vmem:[%s3939 + $0x658] sm:$0xff] %v4346
                %v4348 = vld [vmem:[%s3938 + $0x660] sm:$0xff]
                %4349 = vst [vmem:[%s3939 + $0x660] sm:$0xff] %v4348
                %v4350 = vld [vmem:[%s3938 + $0x668] sm:$0xff]
                %4351 = vst [vmem:[%s3939 + $0x668] sm:$0xff] %v4350
                %v4352 = vld [vmem:[%s3938 + $0x670] sm:$0xff]
                %4353 = vst [vmem:[%s3939 + $0x670] sm:$0xff] %v4352
                %v4354 = vld [vmem:[%s3938 + $0x678] sm:$0xff]
                %4355 = vst [vmem:[%s3939 + $0x678] sm:$0xff] %v4354
                %v4356 = vld [vmem:[%s3938 + $0x680] sm:$0xff]
                %4357 = vst [vmem:[%s3939 + $0x680] sm:$0xff] %v4356
                %v4358 = vld [vmem:[%s3938 + $0x688] sm:$0xff]
                %4359 = vst [vmem:[%s3939 + $0x688] sm:$0xff] %v4358
                %v4360 = vld [vmem:[%s3938 + $0x690] sm:$0xff]
                %4361 = vst [vmem:[%s3939 + $0x690] sm:$0xff] %v4360
                %v4362 = vld [vmem:[%s3938 + $0x698] sm:$0xff]
                %4363 = vst [vmem:[%s3939 + $0x698] sm:$0xff] %v4362
                %v4364 = vld [vmem:[%s3938 + $0x6a0] sm:$0xff]
                %4365 = vst [vmem:[%s3939 + $0x6a0] sm:$0xff] %v4364
                %v4366 = vld [vmem:[%s3938 + $0x6a8] sm:$0xff]
                %4367 = vst [vmem:[%s3939 + $0x6a8] sm:$0xff] %v4366
                %v4368 = vld [vmem:[%s3938 + $0x6b0] sm:$0xff]
                %4369 = vst [vmem:[%s3939 + $0x6b0] sm:$0xff] %v4368
                %v4370 = vld [vmem:[%s3938 + $0x6b8] sm:$0xff]
                %4371 = vst [vmem:[%s3939 + $0x6b8] sm:$0xff] %v4370
                %v4372 = vld [vmem:[%s3938 + $0x6c0] sm:$0xff]
                %4373 = vst [vmem:[%s3939 + $0x6c0] sm:$0xff] %v4372
                %v4374 = vld [vmem:[%s3938 + $0x6c8] sm:$0xff]
                %4375 = vst [vmem:[%s3939 + $0x6c8] sm:$0xff] %v4374
                %v4376 = vld [vmem:[%s3938 + $0x6d0] sm:$0xff]
                %4377 = vst [vmem:[%s3939 + $0x6d0] sm:$0xff] %v4376
                %v4378 = vld [vmem:[%s3938 + $0x6d8] sm:$0xff]
                %4379 = vst [vmem:[%s3939 + $0x6d8] sm:$0xff] %v4378
                %v4380 = vld [vmem:[%s3938 + $0x6e0] sm:$0xff]
                %4381 = vst [vmem:[%s3939 + $0x6e0] sm:$0xff] %v4380
                %v4382 = vld [vmem:[%s3938 + $0x6e8] sm:$0xff]
                %4383 = vst [vmem:[%s3939 + $0x6e8] sm:$0xff] %v4382
                %v4384 = vld [vmem:[%s3938 + $0x6f0] sm:$0xff]
                %4385 = vst [vmem:[%s3939 + $0x6f0] sm:$0xff] %v4384
                %v4386 = vld [vmem:[%s3938 + $0x6f8] sm:$0xff]
                %4387 = vst [vmem:[%s3939 + $0x6f8] sm:$0xff] %v4386
                %v4388 = vld [vmem:[%s3938 + $0x700] sm:$0xff]
                %4389 = vst [vmem:[%s3939 + $0x700] sm:$0xff] %v4388
                %v4390 = vld [vmem:[%s3938 + $0x708] sm:$0xff]
                %4391 = vst [vmem:[%s3939 + $0x708] sm:$0xff] %v4390
                %v4392 = vld [vmem:[%s3938 + $0x710] sm:$0xff]
                %4393 = vst [vmem:[%s3939 + $0x710] sm:$0xff] %v4392
                %v4394 = vld [vmem:[%s3938 + $0x718] sm:$0xff]
                %4395 = vst [vmem:[%s3939 + $0x718] sm:$0xff] %v4394
                %v4396 = vld [vmem:[%s3938 + $0x720] sm:$0xff]
                %4397 = vst [vmem:[%s3939 + $0x720] sm:$0xff] %v4396
                %v4398 = vld [vmem:[%s3938 + $0x728] sm:$0xff]
                %4399 = vst [vmem:[%s3939 + $0x728] sm:$0xff] %v4398
                %v4400 = vld [vmem:[%s3938 + $0x730] sm:$0xff]
                %4401 = vst [vmem:[%s3939 + $0x730] sm:$0xff] %v4400
                %v4402 = vld [vmem:[%s3938 + $0x738] sm:$0xff]
                %4403 = vst [vmem:[%s3939 + $0x738] sm:$0xff] %v4402
                %v4404 = vld [vmem:[%s3938 + $0x740] sm:$0xff]
                %4405 = vst [vmem:[%s3939 + $0x740] sm:$0xff] %v4404
                %v4406 = vld [vmem:[%s3938 + $0x748] sm:$0xff]
                %4407 = vst [vmem:[%s3939 + $0x748] sm:$0xff] %v4406
                %v4408 = vld [vmem:[%s3938 + $0x750] sm:$0xff]
                %4409 = vst [vmem:[%s3939 + $0x750] sm:$0xff] %v4408
                %v4410 = vld [vmem:[%s3938 + $0x758] sm:$0xff]
                %4411 = vst [vmem:[%s3939 + $0x758] sm:$0xff] %v4410
                %v4412 = vld [vmem:[%s3938 + $0x760] sm:$0xff]
                %4413 = vst [vmem:[%s3939 + $0x760] sm:$0xff] %v4412
                %v4414 = vld [vmem:[%s3938 + $0x768] sm:$0xff]
                %4415 = vst [vmem:[%s3939 + $0x768] sm:$0xff] %v4414
                %v4416 = vld [vmem:[%s3938 + $0x770] sm:$0xff]
                %4417 = vst [vmem:[%s3939 + $0x770] sm:$0xff] %v4416
                %v4418 = vld [vmem:[%s3938 + $0x778] sm:$0xff]
                %4419 = vst [vmem:[%s3939 + $0x778] sm:$0xff] %v4418
                %v4420 = vld [vmem:[%s3938 + $0x780] sm:$0xff]
                %4421 = vst [vmem:[%s3939 + $0x780] sm:$0xff] %v4420
                %v4422 = vld [vmem:[%s3938 + $0x788] sm:$0xff]
                %4423 = vst [vmem:[%s3939 + $0x788] sm:$0xff] %v4422
                %v4424 = vld [vmem:[%s3938 + $0x790] sm:$0xff]
                %4425 = vst [vmem:[%s3939 + $0x790] sm:$0xff] %v4424
                %v4426 = vld [vmem:[%s3938 + $0x798] sm:$0xff]
                %4427 = vst [vmem:[%s3939 + $0x798] sm:$0xff] %v4426
                %v4428 = vld [vmem:[%s3938 + $0x7a0] sm:$0xff]
                %4429 = vst [vmem:[%s3939 + $0x7a0] sm:$0xff] %v4428
                %v4430 = vld [vmem:[%s3938 + $0x7a8] sm:$0xff]
                %4431 = vst [vmem:[%s3939 + $0x7a8] sm:$0xff] %v4430
                %v4432 = vld [vmem:[%s3938 + $0x7b0] sm:$0xff]
                %4433 = vst [vmem:[%s3939 + $0x7b0] sm:$0xff] %v4432
                %v4434 = vld [vmem:[%s3938 + $0x7b8] sm:$0xff]
                %4435 = vst [vmem:[%s3939 + $0x7b8] sm:$0xff] %v4434
                %v4436 = vld [vmem:[%s3938 + $0x7c0] sm:$0xff]
                %4437 = vst [vmem:[%s3939 + $0x7c0] sm:$0xff] %v4436
                %v4438 = vld [vmem:[%s3938 + $0x7c8] sm:$0xff]
                %4439 = vst [vmem:[%s3939 + $0x7c8] sm:$0xff] %v4438
                %v4440 = vld [vmem:[%s3938 + $0x7d0] sm:$0xff]
                %4441 = vst [vmem:[%s3939 + $0x7d0] sm:$0xff] %v4440
                %v4442 = vld [vmem:[%s3938 + $0x7d8] sm:$0xff]
                %4443 = vst [vmem:[%s3939 + $0x7d8] sm:$0xff] %v4442
                %v4444 = vld [vmem:[%s3938 + $0x7e0] sm:$0xff]
                %4445 = vst [vmem:[%s3939 + $0x1f80] sm:$0xff] %v4444
                %v4446 = vld [vmem:[%s3938 + $0x7e8] sm:$0xff]
                %4447 = vst [vmem:[%s3939 + $0x1f88] sm:$0xff] %v4446
                %v4448 = vld [vmem:[%s3938 + $0x7f0] sm:$0xff]
                %4449 = vst [vmem:[%s3939 + $0x1f90] sm:$0xff] %v4448
                %v4450 = vld [vmem:[%s3938 + $0x7f8] sm:$0xff]
                %4451 = vst [vmem:[%s3939 + $0x1f98] sm:$0xff] %v4450
                %v4452 = vld [vmem:[%s3938 + $0x800] sm:$0xff]
                %4453 = vst [vmem:[%s3939 + $0x1fa0] sm:$0xff] %v4452
                %v4454 = vld [vmem:[%s3938 + $0x808] sm:$0xff]
                %4455 = vst [vmem:[%s3939 + $0x1fa8] sm:$0xff] %v4454
                %v4456 = vld [vmem:[%s3938 + $0x810] sm:$0xff]
                %4457 = vst [vmem:[%s3939 + $0x1fb0] sm:$0xff] %v4456
                %v4458 = vld [vmem:[%s3938 + $0x818] sm:$0xff]
                %4459 = vst [vmem:[%s3939 + $0x1fb8] sm:$0xff] %v4458
                %v4460 = vld [vmem:[%s3938 + $0x820] sm:$0xff]
                %4461 = vst [vmem:[%s3939 + $0x1fc0] sm:$0xff] %v4460
                %v4462 = vld [vmem:[%s3938 + $0x828] sm:$0xff]
                %4463 = vst [vmem:[%s3939 + $0x1fc8] sm:$0xff] %v4462
                %v4464 = vld [vmem:[%s3938 + $0x830] sm:$0xff]
                %4465 = vst [vmem:[%s3939 + $0x1fd0] sm:$0xff] %v4464
                %v4466 = vld [vmem:[%s3938 + $0x838] sm:$0xff]
                %4467 = vst [vmem:[%s3939 + $0x1fd8] sm:$0xff] %v4466
                %v4468 = vld [vmem:[%s3938 + $0x840] sm:$0xff]
                %4469 = vst [vmem:[%s3939 + $0x1fe0] sm:$0xff] %v4468
                %v4470 = vld [vmem:[%s3938 + $0x848] sm:$0xff]
                %4471 = vst [vmem:[%s3939 + $0x1fe8] sm:$0xff] %v4470
                %v4472 = vld [vmem:[%s3938 + $0x850] sm:$0xff]
                %4473 = vst [vmem:[%s3939 + $0x1ff0] sm:$0xff] %v4472
                %v4474 = vld [vmem:[%s3938 + $0x858] sm:$0xff]
                %4475 = vst [vmem:[%s3939 + $0x1ff8] sm:$0xff] %v4474
                %v4476 = vld [vmem:[%s3938 + $0x860] sm:$0xff]
                %4477 = vst [vmem:[%s3939 + $0x2000] sm:$0xff] %v4476
                %v4478 = vld [vmem:[%s3938 + $0x868] sm:$0xff]
                %4479 = vst [vmem:[%s3939 + $0x2008] sm:$0xff] %v4478
                %v4480 = vld [vmem:[%s3938 + $0x870] sm:$0xff]
                %4481 = vst [vmem:[%s3939 + $0x2010] sm:$0xff] %v4480
                %v4482 = vld [vmem:[%s3938 + $0x878] sm:$0xff]
                %4483 = vst [vmem:[%s3939 + $0x2018] sm:$0xff] %v4482
                %v4484 = vld [vmem:[%s3938 + $0x880] sm:$0xff]
                %4485 = vst [vmem:[%s3939 + $0x2020] sm:$0xff] %v4484
                %v4486 = vld [vmem:[%s3938 + $0x888] sm:$0xff]
                %4487 = vst [vmem:[%s3939 + $0x2028] sm:$0xff] %v4486
                %v4488 = vld [vmem:[%s3938 + $0x890] sm:$0xff]
                %4489 = vst [vmem:[%s3939 + $0x2030] sm:$0xff] %v4488
                %v4490 = vld [vmem:[%s3938 + $0x898] sm:$0xff]
                %4491 = vst [vmem:[%s3939 + $0x2038] sm:$0xff] %v4490
                %v4492 = vld [vmem:[%s3938 + $0x8a0] sm:$0xff]
                %4493 = vst [vmem:[%s3939 + $0x2040] sm:$0xff] %v4492
                %v4494 = vld [vmem:[%s3938 + $0x8a8] sm:$0xff]
                %4495 = vst [vmem:[%s3939 + $0x2048] sm:$0xff] %v4494
                %v4496 = vld [vmem:[%s3938 + $0x8b0] sm:$0xff]
                %4497 = vst [vmem:[%s3939 + $0x2050] sm:$0xff] %v4496
                %v4498 = vld [vmem:[%s3938 + $0x8b8] sm:$0xff]
                %4499 = vst [vmem:[%s3939 + $0x2058] sm:$0xff] %v4498
                %v4500 = vld [vmem:[%s3938 + $0x8c0] sm:$0xff]
                %4501 = vst [vmem:[%s3939 + $0x2060] sm:$0xff] %v4500
                %v4502 = vld [vmem:[%s3938 + $0x8c8] sm:$0xff]
                %4503 = vst [vmem:[%s3939 + $0x2068] sm:$0xff] %v4502
                %v4504 = vld [vmem:[%s3938 + $0x8d0] sm:$0xff]
                %4505 = vst [vmem:[%s3939 + $0x2070] sm:$0xff] %v4504
                %v4506 = vld [vmem:[%s3938 + $0x8d8] sm:$0xff]
                %4507 = vst [vmem:[%s3939 + $0x2078] sm:$0xff] %v4506
                %v4508 = vld [vmem:[%s3938 + $0x8e0] sm:$0xff]
                %4509 = vst [vmem:[%s3939 + $0x2080] sm:$0xff] %v4508
                %v4510 = vld [vmem:[%s3938 + $0x8e8] sm:$0xff]
                %4511 = vst [vmem:[%s3939 + $0x2088] sm:$0xff] %v4510
                %v4512 = vld [vmem:[%s3938 + $0x8f0] sm:$0xff]
                %4513 = vst [vmem:[%s3939 + $0x2090] sm:$0xff] %v4512
                %v4514 = vld [vmem:[%s3938 + $0x8f8] sm:$0xff]
                %4515 = vst [vmem:[%s3939 + $0x2098] sm:$0xff] %v4514
                %v4516 = vld [vmem:[%s3938 + $0x900] sm:$0xff]
                %4517 = vst [vmem:[%s3939 + $0x20a0] sm:$0xff] %v4516
                %v4518 = vld [vmem:[%s3938 + $0x908] sm:$0xff]
                %4519 = vst [vmem:[%s3939 + $0x20a8] sm:$0xff] %v4518
                %v4520 = vld [vmem:[%s3938 + $0x910] sm:$0xff]
                %4521 = vst [vmem:[%s3939 + $0x20b0] sm:$0xff] %v4520
                %v4522 = vld [vmem:[%s3938 + $0x918] sm:$0xff]
                %4523 = vst [vmem:[%s3939 + $0x20b8] sm:$0xff] %v4522
                %v4524 = vld [vmem:[%s3938 + $0x920] sm:$0xff]
                %4525 = vst [vmem:[%s3939 + $0x20c0] sm:$0xff] %v4524
                %v4526 = vld [vmem:[%s3938 + $0x928] sm:$0xff]
                %4527 = vst [vmem:[%s3939 + $0x20c8] sm:$0xff] %v4526
                %v4528 = vld [vmem:[%s3938 + $0x930] sm:$0xff]
                %4529 = vst [vmem:[%s3939 + $0x20d0] sm:$0xff] %v4528
                %v4530 = vld [vmem:[%s3938 + $0x938] sm:$0xff]
                %4531 = vst [vmem:[%s3939 + $0x20d8] sm:$0xff] %v4530
                %v4532 = vld [vmem:[%s3938 + $0x940] sm:$0xff]
                %4533 = vst [vmem:[%s3939 + $0x20e0] sm:$0xff] %v4532
                %v4534 = vld [vmem:[%s3938 + $0x948] sm:$0xff]
                %4535 = vst [vmem:[%s3939 + $0x20e8] sm:$0xff] %v4534
                %v4536 = vld [vmem:[%s3938 + $0x950] sm:$0xff]
                %4537 = vst [vmem:[%s3939 + $0x20f0] sm:$0xff] %v4536
                %v4538 = vld [vmem:[%s3938 + $0x958] sm:$0xff]
                %4539 = vst [vmem:[%s3939 + $0x20f8] sm:$0xff] %v4538
                %v4540 = vld [vmem:[%s3938 + $0x960] sm:$0xff]
                %4541 = vst [vmem:[%s3939 + $0x2100] sm:$0xff] %v4540
                %v4542 = vld [vmem:[%s3938 + $0x968] sm:$0xff]
                %4543 = vst [vmem:[%s3939 + $0x2108] sm:$0xff] %v4542
                %v4544 = vld [vmem:[%s3938 + $0x970] sm:$0xff]
                %4545 = vst [vmem:[%s3939 + $0x2110] sm:$0xff] %v4544
                %v4546 = vld [vmem:[%s3938 + $0x978] sm:$0xff]
                %4547 = vst [vmem:[%s3939 + $0x2118] sm:$0xff] %v4546
                %v4548 = vld [vmem:[%s3938 + $0x980] sm:$0xff]
                %4549 = vst [vmem:[%s3939 + $0x2120] sm:$0xff] %v4548
                %v4550 = vld [vmem:[%s3938 + $0x988] sm:$0xff]
                %4551 = vst [vmem:[%s3939 + $0x2128] sm:$0xff] %v4550
                %v4552 = vld [vmem:[%s3938 + $0x990] sm:$0xff]
                %4553 = vst [vmem:[%s3939 + $0x2130] sm:$0xff] %v4552
                %v4554 = vld [vmem:[%s3938 + $0x998] sm:$0xff]
                %4555 = vst [vmem:[%s3939 + $0x2138] sm:$0xff] %v4554
                %v4556 = vld [vmem:[%s3938 + $0x9a0] sm:$0xff]
                %4557 = vst [vmem:[%s3939 + $0x2140] sm:$0xff] %v4556
                %v4558 = vld [vmem:[%s3938 + $0x9a8] sm:$0xff]
                %4559 = vst [vmem:[%s3939 + $0x2148] sm:$0xff] %v4558
                %v4560 = vld [vmem:[%s3938 + $0x9b0] sm:$0xff]
                %4561 = vst [vmem:[%s3939 + $0x2150] sm:$0xff] %v4560
                %v4562 = vld [vmem:[%s3938 + $0x9b8] sm:$0xff]
                %4563 = vst [vmem:[%s3939 + $0x2158] sm:$0xff] %v4562
                %v4564 = vld [vmem:[%s3938 + $0x9c0] sm:$0xff]
                %4565 = vst [vmem:[%s3939 + $0x2160] sm:$0xff] %v4564
                %v4566 = vld [vmem:[%s3938 + $0x9c8] sm:$0xff]
                %4567 = vst [vmem:[%s3939 + $0x2168] sm:$0xff] %v4566
                %v4568 = vld [vmem:[%s3938 + $0x9d0] sm:$0xff]
                %4569 = vst [vmem:[%s3939 + $0x2170] sm:$0xff] %v4568
                %v4570 = vld [vmem:[%s3938 + $0x9d8] sm:$0xff]
                %4571 = vst [vmem:[%s3939 + $0x2178] sm:$0xff] %v4570
                %v4572 = vld [vmem:[%s3938 + $0x9e0] sm:$0xff]
                %4573 = vst [vmem:[%s3939 + $0x2180] sm:$0xff] %v4572
                %v4574 = vld [vmem:[%s3938 + $0x9e8] sm:$0xff]
                %4575 = vst [vmem:[%s3939 + $0x2188] sm:$0xff] %v4574
                %v4576 = vld [vmem:[%s3938 + $0x9f0] sm:$0xff]
                %4577 = vst [vmem:[%s3939 + $0x2190] sm:$0xff] %v4576
                %v4578 = vld [vmem:[%s3938 + $0x9f8] sm:$0xff]
                %4579 = vst [vmem:[%s3939 + $0x2198] sm:$0xff] %v4578
                %v4580 = vld [vmem:[%s3938 + $0xa00] sm:$0xff]
                %4581 = vst [vmem:[%s3939 + $0x21a0] sm:$0xff] %v4580
                %v4582 = vld [vmem:[%s3938 + $0xa08] sm:$0xff]
                %4583 = vst [vmem:[%s3939 + $0x21a8] sm:$0xff] %v4582
                %v4584 = vld [vmem:[%s3938 + $0xa10] sm:$0xff]
                %4585 = vst [vmem:[%s3939 + $0x21b0] sm:$0xff] %v4584
                %v4586 = vld [vmem:[%s3938 + $0xa18] sm:$0xff]
                %4587 = vst [vmem:[%s3939 + $0x21b8] sm:$0xff] %v4586
                %v4588 = vld [vmem:[%s3938 + $0xa20] sm:$0xff]
                %4589 = vst [vmem:[%s3939 + $0x21c0] sm:$0xff] %v4588
                %v4590 = vld [vmem:[%s3938 + $0xa28] sm:$0xff]
                %4591 = vst [vmem:[%s3939 + $0x21c8] sm:$0xff] %v4590
                %v4592 = vld [vmem:[%s3938 + $0xa30] sm:$0xff]
                %4593 = vst [vmem:[%s3939 + $0x21d0] sm:$0xff] %v4592
                %v4594 = vld [vmem:[%s3938 + $0xa38] sm:$0xff]
                %4595 = vst [vmem:[%s3939 + $0x21d8] sm:$0xff] %v4594
                %v4596 = vld [vmem:[%s3938 + $0xa40] sm:$0xff]
                %4597 = vst [vmem:[%s3939 + $0x21e0] sm:$0xff] %v4596
                %v4598 = vld [vmem:[%s3938 + $0xa48] sm:$0xff]
                %4599 = vst [vmem:[%s3939 + $0x21e8] sm:$0xff] %v4598
                %v4600 = vld [vmem:[%s3938 + $0xa50] sm:$0xff]
                %4601 = vst [vmem:[%s3939 + $0x21f0] sm:$0xff] %v4600
                %v4602 = vld [vmem:[%s3938 + $0xa58] sm:$0xff]
                %4603 = vst [vmem:[%s3939 + $0x21f8] sm:$0xff] %v4602
                %v4604 = vld [vmem:[%s3938 + $0xa60] sm:$0xff]
                %4605 = vst [vmem:[%s3939 + $0x2200] sm:$0xff] %v4604
                %v4606 = vld [vmem:[%s3938 + $0xa68] sm:$0xff]
                %4607 = vst [vmem:[%s3939 + $0x2208] sm:$0xff] %v4606
                %v4608 = vld [vmem:[%s3938 + $0xa70] sm:$0xff]
                %4609 = vst [vmem:[%s3939 + $0x2210] sm:$0xff] %v4608
                %v4610 = vld [vmem:[%s3938 + $0xa78] sm:$0xff]
                %4611 = vst [vmem:[%s3939 + $0x2218] sm:$0xff] %v4610
                %v4612 = vld [vmem:[%s3938 + $0xa80] sm:$0xff]
                %4613 = vst [vmem:[%s3939 + $0x2220] sm:$0xff] %v4612
                %v4614 = vld [vmem:[%s3938 + $0xa88] sm:$0xff]
                %4615 = vst [vmem:[%s3939 + $0x2228] sm:$0xff] %v4614
                %v4616 = vld [vmem:[%s3938 + $0xa90] sm:$0xff]
                %4617 = vst [vmem:[%s3939 + $0x2230] sm:$0xff] %v4616
                %v4618 = vld [vmem:[%s3938 + $0xa98] sm:$0xff]
                %4619 = vst [vmem:[%s3939 + $0x2238] sm:$0xff] %v4618
                %v4620 = vld [vmem:[%s3938 + $0xaa0] sm:$0xff]
                %4621 = vst [vmem:[%s3939 + $0x2240] sm:$0xff] %v4620
                %v4622 = vld [vmem:[%s3938 + $0xaa8] sm:$0xff]
                %4623 = vst [vmem:[%s3939 + $0x2248] sm:$0xff] %v4622
                %v4624 = vld [vmem:[%s3938 + $0xab0] sm:$0xff]
                %4625 = vst [vmem:[%s3939 + $0x2250] sm:$0xff] %v4624
                %v4626 = vld [vmem:[%s3938 + $0xab8] sm:$0xff]
                %4627 = vst [vmem:[%s3939 + $0x2258] sm:$0xff] %v4626
                %v4628 = vld [vmem:[%s3938 + $0xac0] sm:$0xff]
                %4629 = vst [vmem:[%s3939 + $0x2260] sm:$0xff] %v4628
                %v4630 = vld [vmem:[%s3938 + $0xac8] sm:$0xff]
                %4631 = vst [vmem:[%s3939 + $0x2268] sm:$0xff] %v4630
                %v4632 = vld [vmem:[%s3938 + $0xad0] sm:$0xff]
                %4633 = vst [vmem:[%s3939 + $0x2270] sm:$0xff] %v4632
                %v4634 = vld [vmem:[%s3938 + $0xad8] sm:$0xff]
                %4635 = vst [vmem:[%s3939 + $0x2278] sm:$0xff] %v4634
                %v4636 = vld [vmem:[%s3938 + $0xae0] sm:$0xff]
                %4637 = vst [vmem:[%s3939 + $0x2280] sm:$0xff] %v4636
                %v4638 = vld [vmem:[%s3938 + $0xae8] sm:$0xff]
                %4639 = vst [vmem:[%s3939 + $0x2288] sm:$0xff] %v4638
                %v4640 = vld [vmem:[%s3938 + $0xaf0] sm:$0xff]
                %4641 = vst [vmem:[%s3939 + $0x2290] sm:$0xff] %v4640
                %v4642 = vld [vmem:[%s3938 + $0xaf8] sm:$0xff]
                %4643 = vst [vmem:[%s3939 + $0x2298] sm:$0xff] %v4642
                %v4644 = vld [vmem:[%s3938 + $0xb00] sm:$0xff]
                %4645 = vst [vmem:[%s3939 + $0x22a0] sm:$0xff] %v4644
                %v4646 = vld [vmem:[%s3938 + $0xb08] sm:$0xff]
                %4647 = vst [vmem:[%s3939 + $0x22a8] sm:$0xff] %v4646
                %v4648 = vld [vmem:[%s3938 + $0xb10] sm:$0xff]
                %4649 = vst [vmem:[%s3939 + $0x22b0] sm:$0xff] %v4648
                %v4650 = vld [vmem:[%s3938 + $0xb18] sm:$0xff]
                %4651 = vst [vmem:[%s3939 + $0x22b8] sm:$0xff] %v4650
                %v4652 = vld [vmem:[%s3938 + $0xb20] sm:$0xff]
                %4653 = vst [vmem:[%s3939 + $0x22c0] sm:$0xff] %v4652
                %v4654 = vld [vmem:[%s3938 + $0xb28] sm:$0xff]
                %4655 = vst [vmem:[%s3939 + $0x22c8] sm:$0xff] %v4654
                %v4656 = vld [vmem:[%s3938 + $0xb30] sm:$0xff]
                %4657 = vst [vmem:[%s3939 + $0x22d0] sm:$0xff] %v4656
                %v4658 = vld [vmem:[%s3938 + $0xb38] sm:$0xff]
                %4659 = vst [vmem:[%s3939 + $0x22d8] sm:$0xff] %v4658
                %v4660 = vld [vmem:[%s3938 + $0xb40] sm:$0xff]
                %4661 = vst [vmem:[%s3939 + $0x22e0] sm:$0xff] %v4660
                %v4662 = vld [vmem:[%s3938 + $0xb48] sm:$0xff]
                %4663 = vst [vmem:[%s3939 + $0x22e8] sm:$0xff] %v4662
                %v4664 = vld [vmem:[%s3938 + $0xb50] sm:$0xff]
                %4665 = vst [vmem:[%s3939 + $0x22f0] sm:$0xff] %v4664
                %v4666 = vld [vmem:[%s3938 + $0xb58] sm:$0xff]
                %4667 = vst [vmem:[%s3939 + $0x22f8] sm:$0xff] %v4666
                %v4668 = vld [vmem:[%s3938 + $0xb60] sm:$0xff]
                %4669 = vst [vmem:[%s3939 + $0x2300] sm:$0xff] %v4668
                %v4670 = vld [vmem:[%s3938 + $0xb68] sm:$0xff]
                %4671 = vst [vmem:[%s3939 + $0x2308] sm:$0xff] %v4670
                %v4672 = vld [vmem:[%s3938 + $0xb70] sm:$0xff]
                %4673 = vst [vmem:[%s3939 + $0x2310] sm:$0xff] %v4672
                %v4674 = vld [vmem:[%s3938 + $0xb78] sm:$0xff]
                %4675 = vst [vmem:[%s3939 + $0x2318] sm:$0xff] %v4674
                %v4676 = vld [vmem:[%s3938 + $0xb80] sm:$0xff]
                %4677 = vst [vmem:[%s3939 + $0x2320] sm:$0xff] %v4676
                %v4678 = vld [vmem:[%s3938 + $0xb88] sm:$0xff]
                %4679 = vst [vmem:[%s3939 + $0x2328] sm:$0xff] %v4678
                %v4680 = vld [vmem:[%s3938 + $0xb90] sm:$0xff]
                %4681 = vst [vmem:[%s3939 + $0x2330] sm:$0xff] %v4680
                %v4682 = vld [vmem:[%s3938 + $0xb98] sm:$0xff]
                %4683 = vst [vmem:[%s3939 + $0x2338] sm:$0xff] %v4682
                %v4684 = vld [vmem:[%s3938 + $0xba0] sm:$0xff]
                %4685 = vst [vmem:[%s3939 + $0x2340] sm:$0xff] %v4684
                %v4686 = vld [vmem:[%s3938 + $0xba8] sm:$0xff]
                %4687 = vst [vmem:[%s3939 + $0x2348] sm:$0xff] %v4686
                %v4688 = vld [vmem:[%s3938 + $0xbb0] sm:$0xff]
                %4689 = vst [vmem:[%s3939 + $0x2350] sm:$0xff] %v4688
                %v4690 = vld [vmem:[%s3938 + $0xbb8] sm:$0xff]
                %4691 = vst [vmem:[%s3939 + $0x2358] sm:$0xff] %v4690
                %v4692 = vld [vmem:[%s3938 + $0xbc0] sm:$0xff]
                %4693 = vst [vmem:[%s3939 + $0x2360] sm:$0xff] %v4692
                %v4694 = vld [vmem:[%s3938 + $0xbc8] sm:$0xff]
                %4695 = vst [vmem:[%s3939 + $0x2368] sm:$0xff] %v4694
                %v4696 = vld [vmem:[%s3938 + $0xbd0] sm:$0xff]
                %4697 = vst [vmem:[%s3939 + $0x2370] sm:$0xff] %v4696
                %v4698 = vld [vmem:[%s3938 + $0xbd8] sm:$0xff]
                %4699 = vst [vmem:[%s3939 + $0x2378] sm:$0xff] %v4698
                %v4700 = vld [vmem:[%s3938 + $0xbe0] sm:$0xff]
                %4701 = vst [vmem:[%s3939 + $0x2380] sm:$0xff] %v4700
                %v4702 = vld [vmem:[%s3938 + $0xbe8] sm:$0xff]
                %4703 = vst [vmem:[%s3939 + $0x2388] sm:$0xff] %v4702
                %v4704 = vld [vmem:[%s3938 + $0xbf0] sm:$0xff]
                %4705 = vst [vmem:[%s3939 + $0x2390] sm:$0xff] %v4704
                %v4706 = vld [vmem:[%s3938 + $0xbf8] sm:$0xff]
                %4707 = vst [vmem:[%s3939 + $0x2398] sm:$0xff] %v4706
                %v4708 = vld [vmem:[%s3938 + $0xc00] sm:$0xff]
                %4709 = vst [vmem:[%s3939 + $0x23a0] sm:$0xff] %v4708
                %v4710 = vld [vmem:[%s3938 + $0xc08] sm:$0xff]
                %4711 = vst [vmem:[%s3939 + $0x23a8] sm:$0xff] %v4710
                %v4712 = vld [vmem:[%s3938 + $0xc10] sm:$0xff]
                %4713 = vst [vmem:[%s3939 + $0x23b0] sm:$0xff] %v4712
                %v4714 = vld [vmem:[%s3938 + $0xc18] sm:$0xff]
                %4715 = vst [vmem:[%s3939 + $0x23b8] sm:$0xff] %v4714
                %v4716 = vld [vmem:[%s3938 + $0xc20] sm:$0xff]
                %4717 = vst [vmem:[%s3939 + $0x23c0] sm:$0xff] %v4716
                %v4718 = vld [vmem:[%s3938 + $0xc28] sm:$0xff]
                %4719 = vst [vmem:[%s3939 + $0x23c8] sm:$0xff] %v4718
                %v4720 = vld [vmem:[%s3938 + $0xc30] sm:$0xff]
                %4721 = vst [vmem:[%s3939 + $0x23d0] sm:$0xff] %v4720
                %v4722 = vld [vmem:[%s3938 + $0xc38] sm:$0xff]
                %4723 = vst [vmem:[%s3939 + $0x23d8] sm:$0xff] %v4722
                %v4724 = vld [vmem:[%s3938 + $0xc40] sm:$0xff]
                %4725 = vst [vmem:[%s3939 + $0x23e0] sm:$0xff] %v4724
                %v4726 = vld [vmem:[%s3938 + $0xc48] sm:$0xff]
                %4727 = vst [vmem:[%s3939 + $0x23e8] sm:$0xff] %v4726
                %v4728 = vld [vmem:[%s3938 + $0xc50] sm:$0xff]
                %4729 = vst [vmem:[%s3939 + $0x23f0] sm:$0xff] %v4728
                %v4730 = vld [vmem:[%s3938 + $0xc58] sm:$0xff]
                %4731 = vst [vmem:[%s3939 + $0x23f8] sm:$0xff] %v4730
                %v4732 = vld [vmem:[%s3938 + $0xc60] sm:$0xff]
                %4733 = vst [vmem:[%s3939 + $0x2400] sm:$0xff] %v4732
                %v4734 = vld [vmem:[%s3938 + $0xc68] sm:$0xff]
                %4735 = vst [vmem:[%s3939 + $0x2408] sm:$0xff] %v4734
                %v4736 = vld [vmem:[%s3938 + $0xc70] sm:$0xff]
                %4737 = vst [vmem:[%s3939 + $0x2410] sm:$0xff] %v4736
                %v4738 = vld [vmem:[%s3938 + $0xc78] sm:$0xff]
                %4739 = vst [vmem:[%s3939 + $0x2418] sm:$0xff] %v4738
                %v4740 = vld [vmem:[%s3938 + $0xc80] sm:$0xff]
                %4741 = vst [vmem:[%s3939 + $0x2420] sm:$0xff] %v4740
                %v4742 = vld [vmem:[%s3938 + $0xc88] sm:$0xff]
                %4743 = vst [vmem:[%s3939 + $0x2428] sm:$0xff] %v4742
                %v4744 = vld [vmem:[%s3938 + $0xc90] sm:$0xff]
                %4745 = vst [vmem:[%s3939 + $0x2430] sm:$0xff] %v4744
                %v4746 = vld [vmem:[%s3938 + $0xc98] sm:$0xff]
                %4747 = vst [vmem:[%s3939 + $0x2438] sm:$0xff] %v4746
                %v4748 = vld [vmem:[%s3938 + $0xca0] sm:$0xff]
                %4749 = vst [vmem:[%s3939 + $0x2440] sm:$0xff] %v4748
                %v4750 = vld [vmem:[%s3938 + $0xca8] sm:$0xff]
                %4751 = vst [vmem:[%s3939 + $0x2448] sm:$0xff] %v4750
                %v4752 = vld [vmem:[%s3938 + $0xcb0] sm:$0xff]
                %4753 = vst [vmem:[%s3939 + $0x2450] sm:$0xff] %v4752
                %v4754 = vld [vmem:[%s3938 + $0xcb8] sm:$0xff]
                %4755 = vst [vmem:[%s3939 + $0x2458] sm:$0xff] %v4754
                %v4756 = vld [vmem:[%s3938 + $0xcc0] sm:$0xff]
                %4757 = vst [vmem:[%s3939 + $0x2460] sm:$0xff] %v4756
                %v4758 = vld [vmem:[%s3938 + $0xcc8] sm:$0xff]
                %4759 = vst [vmem:[%s3939 + $0x2468] sm:$0xff] %v4758
                %v4760 = vld [vmem:[%s3938 + $0xcd0] sm:$0xff]
                %4761 = vst [vmem:[%s3939 + $0x2470] sm:$0xff] %v4760
                %v4762 = vld [vmem:[%s3938 + $0xcd8] sm:$0xff]
                %4763 = vst [vmem:[%s3939 + $0x2478] sm:$0xff] %v4762
                %v4764 = vld [vmem:[%s3938 + $0xce0] sm:$0xff]
                %4765 = vst [vmem:[%s3939 + $0x2480] sm:$0xff] %v4764
                %v4766 = vld [vmem:[%s3938 + $0xce8] sm:$0xff]
                %4767 = vst [vmem:[%s3939 + $0x2488] sm:$0xff] %v4766
                %v4768 = vld [vmem:[%s3938 + $0xcf0] sm:$0xff]
                %4769 = vst [vmem:[%s3939 + $0x2490] sm:$0xff] %v4768
                %v4770 = vld [vmem:[%s3938 + $0xcf8] sm:$0xff]
                %4771 = vst [vmem:[%s3939 + $0x2498] sm:$0xff] %v4770
                %v4772 = vld [vmem:[%s3938 + $0xd00] sm:$0xff]
                %4773 = vst [vmem:[%s3939 + $0x24a0] sm:$0xff] %v4772
                %v4774 = vld [vmem:[%s3938 + $0xd08] sm:$0xff]
                %4775 = vst [vmem:[%s3939 + $0x24a8] sm:$0xff] %v4774
                %v4776 = vld [vmem:[%s3938 + $0xd10] sm:$0xff]
                %4777 = vst [vmem:[%s3939 + $0x24b0] sm:$0xff] %v4776
                %v4778 = vld [vmem:[%s3938 + $0xd18] sm:$0xff]
                %4779 = vst [vmem:[%s3939 + $0x24b8] sm:$0xff] %v4778
                %v4780 = vld [vmem:[%s3938 + $0xd20] sm:$0xff]
                %4781 = vst [vmem:[%s3939 + $0x24c0] sm:$0xff] %v4780
                %v4782 = vld [vmem:[%s3938 + $0xd28] sm:$0xff]
                %4783 = vst [vmem:[%s3939 + $0x24c8] sm:$0xff] %v4782
                %v4784 = vld [vmem:[%s3938 + $0xd30] sm:$0xff]
                %4785 = vst [vmem:[%s3939 + $0x24d0] sm:$0xff] %v4784
                %v4786 = vld [vmem:[%s3938 + $0xd38] sm:$0xff]
                %4787 = vst [vmem:[%s3939 + $0x24d8] sm:$0xff] %v4786
                %v4788 = vld [vmem:[%s3938 + $0xd40] sm:$0xff]
                %4789 = vst [vmem:[%s3939 + $0x24e0] sm:$0xff] %v4788
                %v4790 = vld [vmem:[%s3938 + $0xd48] sm:$0xff]
                %4791 = vst [vmem:[%s3939 + $0x24e8] sm:$0xff] %v4790
                %v4792 = vld [vmem:[%s3938 + $0xd50] sm:$0xff]
                %4793 = vst [vmem:[%s3939 + $0x24f0] sm:$0xff] %v4792
                %v4794 = vld [vmem:[%s3938 + $0xd58] sm:$0xff]
                %4795 = vst [vmem:[%s3939 + $0x24f8] sm:$0xff] %v4794
                %v4796 = vld [vmem:[%s3938 + $0xd60] sm:$0xff]
                %4797 = vst [vmem:[%s3939 + $0x2500] sm:$0xff] %v4796
                %v4798 = vld [vmem:[%s3938 + $0xd68] sm:$0xff]
                %4799 = vst [vmem:[%s3939 + $0x2508] sm:$0xff] %v4798
                %v4800 = vld [vmem:[%s3938 + $0xd70] sm:$0xff]
                %4801 = vst [vmem:[%s3939 + $0x2510] sm:$0xff] %v4800
                %v4802 = vld [vmem:[%s3938 + $0xd78] sm:$0xff]
                %4803 = vst [vmem:[%s3939 + $0x2518] sm:$0xff] %v4802
                %v4804 = vld [vmem:[%s3938 + $0xd80] sm:$0xff]
                %4805 = vst [vmem:[%s3939 + $0x2520] sm:$0xff] %v4804
                %v4806 = vld [vmem:[%s3938 + $0xd88] sm:$0xff]
                %4807 = vst [vmem:[%s3939 + $0x2528] sm:$0xff] %v4806
                %v4808 = vld [vmem:[%s3938 + $0xd90] sm:$0xff]
                %4809 = vst [vmem:[%s3939 + $0x2530] sm:$0xff] %v4808
                %v4810 = vld [vmem:[%s3938 + $0xd98] sm:$0xff]
                %4811 = vst [vmem:[%s3939 + $0x2538] sm:$0xff] %v4810
                %v4812 = vld [vmem:[%s3938 + $0xda0] sm:$0xff]
                %4813 = vst [vmem:[%s3939 + $0x2540] sm:$0xff] %v4812
                %v4814 = vld [vmem:[%s3938 + $0xda8] sm:$0xff]
                %4815 = vst [vmem:[%s3939 + $0x2548] sm:$0xff] %v4814
                %v4816 = vld [vmem:[%s3938 + $0xdb0] sm:$0xff]
                %4817 = vst [vmem:[%s3939 + $0x2550] sm:$0xff] %v4816
                %v4818 = vld [vmem:[%s3938 + $0xdb8] sm:$0xff]
                %4819 = vst [vmem:[%s3939 + $0x2558] sm:$0xff] %v4818
                %v4820 = vld [vmem:[%s3938 + $0xdc0] sm:$0xff]
                %4821 = vst [vmem:[%s3939 + $0x2560] sm:$0xff] %v4820
                %v4822 = vld [vmem:[%s3938 + $0xdc8] sm:$0xff]
                %4823 = vst [vmem:[%s3939 + $0x2568] sm:$0xff] %v4822
                %v4824 = vld [vmem:[%s3938 + $0xdd0] sm:$0xff]
                %4825 = vst [vmem:[%s3939 + $0x2570] sm:$0xff] %v4824
                %v4826 = vld [vmem:[%s3938 + $0xdd8] sm:$0xff]
                %4827 = vst [vmem:[%s3939 + $0x2578] sm:$0xff] %v4826
                %v4828 = vld [vmem:[%s3938 + $0xde0] sm:$0xff]
                %4829 = vst [vmem:[%s3939 + $0x2580] sm:$0xff] %v4828
                %v4830 = vld [vmem:[%s3938 + $0xde8] sm:$0xff]
                %4831 = vst [vmem:[%s3939 + $0x2588] sm:$0xff] %v4830
                %v4832 = vld [vmem:[%s3938 + $0xdf0] sm:$0xff]
                %4833 = vst [vmem:[%s3939 + $0x2590] sm:$0xff] %v4832
                %v4834 = vld [vmem:[%s3938 + $0xdf8] sm:$0xff]
                %4835 = vst [vmem:[%s3939 + $0x2598] sm:$0xff] %v4834
                %v4836 = vld [vmem:[%s3938 + $0xe00] sm:$0xff]
                %4837 = vst [vmem:[%s3939 + $0x25a0] sm:$0xff] %v4836
                %v4838 = vld [vmem:[%s3938 + $0xe08] sm:$0xff]
                %4839 = vst [vmem:[%s3939 + $0x25a8] sm:$0xff] %v4838
                %v4840 = vld [vmem:[%s3938 + $0xe10] sm:$0xff]
                %4841 = vst [vmem:[%s3939 + $0x25b0] sm:$0xff] %v4840
                %v4842 = vld [vmem:[%s3938 + $0xe18] sm:$0xff]
                %4843 = vst [vmem:[%s3939 + $0x25b8] sm:$0xff] %v4842
                %v4844 = vld [vmem:[%s3938 + $0xe20] sm:$0xff]
                %4845 = vst [vmem:[%s3939 + $0x25c0] sm:$0xff] %v4844
                %v4846 = vld [vmem:[%s3938 + $0xe28] sm:$0xff]
                %4847 = vst [vmem:[%s3939 + $0x25c8] sm:$0xff] %v4846
                %v4848 = vld [vmem:[%s3938 + $0xe30] sm:$0xff]
                %4849 = vst [vmem:[%s3939 + $0x25d0] sm:$0xff] %v4848
                %v4850 = vld [vmem:[%s3938 + $0xe38] sm:$0xff]
                %4851 = vst [vmem:[%s3939 + $0x25d8] sm:$0xff] %v4850
                %v4852 = vld [vmem:[%s3938 + $0xe40] sm:$0xff]
                %4853 = vst [vmem:[%s3939 + $0x25e0] sm:$0xff] %v4852
                %v4854 = vld [vmem:[%s3938 + $0xe48] sm:$0xff]
                %4855 = vst [vmem:[%s3939 + $0x25e8] sm:$0xff] %v4854
                %v4856 = vld [vmem:[%s3938 + $0xe50] sm:$0xff]
                %4857 = vst [vmem:[%s3939 + $0x25f0] sm:$0xff] %v4856
                %v4858 = vld [vmem:[%s3938 + $0xe58] sm:$0xff]
                %4859 = vst [vmem:[%s3939 + $0x25f8] sm:$0xff] %v4858
                %v4860 = vld [vmem:[%s3938 + $0xe60] sm:$0xff]
                %4861 = vst [vmem:[%s3939 + $0x2600] sm:$0xff] %v4860
                %v4862 = vld [vmem:[%s3938 + $0xe68] sm:$0xff]
                %4863 = vst [vmem:[%s3939 + $0x2608] sm:$0xff] %v4862
                %v4864 = vld [vmem:[%s3938 + $0xe70] sm:$0xff]
                %4865 = vst [vmem:[%s3939 + $0x2610] sm:$0xff] %v4864
                %v4866 = vld [vmem:[%s3938 + $0xe78] sm:$0xff]
                %4867 = vst [vmem:[%s3939 + $0x2618] sm:$0xff] %v4866
                %v4868 = vld [vmem:[%s3938 + $0xe80] sm:$0xff]
                %4869 = vst [vmem:[%s3939 + $0x2620] sm:$0xff] %v4868
                %v4870 = vld [vmem:[%s3938 + $0xe88] sm:$0xff]
                %4871 = vst [vmem:[%s3939 + $0x2628] sm:$0xff] %v4870
                %v4872 = vld [vmem:[%s3938 + $0xe90] sm:$0xff]
                %4873 = vst [vmem:[%s3939 + $0x2630] sm:$0xff] %v4872
                %v4874 = vld [vmem:[%s3938 + $0xe98] sm:$0xff]
                %4875 = vst [vmem:[%s3939 + $0x2638] sm:$0xff] %v4874
                %v4876 = vld [vmem:[%s3938 + $0xea0] sm:$0xff]
                %4877 = vst [vmem:[%s3939 + $0x2640] sm:$0xff] %v4876
                %v4878 = vld [vmem:[%s3938 + $0xea8] sm:$0xff]
                %4879 = vst [vmem:[%s3939 + $0x2648] sm:$0xff] %v4878
                %v4880 = vld [vmem:[%s3938 + $0xeb0] sm:$0xff]
                %4881 = vst [vmem:[%s3939 + $0x2650] sm:$0xff] %v4880
                %v4882 = vld [vmem:[%s3938 + $0xeb8] sm:$0xff]
                %4883 = vst [vmem:[%s3939 + $0x2658] sm:$0xff] %v4882
                %v4884 = vld [vmem:[%s3938 + $0xec0] sm:$0xff]
                %4885 = vst [vmem:[%s3939 + $0x2660] sm:$0xff] %v4884
                %v4886 = vld [vmem:[%s3938 + $0xec8] sm:$0xff]
                %4887 = vst [vmem:[%s3939 + $0x2668] sm:$0xff] %v4886
                %v4888 = vld [vmem:[%s3938 + $0xed0] sm:$0xff]
                %4889 = vst [vmem:[%s3939 + $0x2670] sm:$0xff] %v4888
                %v4890 = vld [vmem:[%s3938 + $0xed8] sm:$0xff]
                %4891 = vst [vmem:[%s3939 + $0x2678] sm:$0xff] %v4890
                %v4892 = vld [vmem:[%s3938 + $0xee0] sm:$0xff]
                %4893 = vst [vmem:[%s3939 + $0x2680] sm:$0xff] %v4892
                %v4894 = vld [vmem:[%s3938 + $0xee8] sm:$0xff]
                %4895 = vst [vmem:[%s3939 + $0x2688] sm:$0xff] %v4894
                %v4896 = vld [vmem:[%s3938 + $0xef0] sm:$0xff]
                %4897 = vst [vmem:[%s3939 + $0x2690] sm:$0xff] %v4896
                %v4898 = vld [vmem:[%s3938 + $0xef8] sm:$0xff]
                %4899 = vst [vmem:[%s3939 + $0x2698] sm:$0xff] %v4898
                %v4900 = vld [vmem:[%s3938 + $0xf00] sm:$0xff]
                %4901 = vst [vmem:[%s3939 + $0x26a0] sm:$0xff] %v4900
                %v4902 = vld [vmem:[%s3938 + $0xf08] sm:$0xff]
                %4903 = vst [vmem:[%s3939 + $0x26a8] sm:$0xff] %v4902
                %v4904 = vld [vmem:[%s3938 + $0xf10] sm:$0xff]
                %4905 = vst [vmem:[%s3939 + $0x26b0] sm:$0xff] %v4904
                %v4906 = vld [vmem:[%s3938 + $0xf18] sm:$0xff]
                %4907 = vst [vmem:[%s3939 + $0x26b8] sm:$0xff] %v4906
                %v4908 = vld [vmem:[%s3938 + $0xf20] sm:$0xff]
                %4909 = vst [vmem:[%s3939 + $0x26c0] sm:$0xff] %v4908
                %v4910 = vld [vmem:[%s3938 + $0xf28] sm:$0xff]
                %4911 = vst [vmem:[%s3939 + $0x26c8] sm:$0xff] %v4910
                %v4912 = vld [vmem:[%s3938 + $0xf30] sm:$0xff]
                %4913 = vst [vmem:[%s3939 + $0x26d0] sm:$0xff] %v4912
                %v4914 = vld [vmem:[%s3938 + $0xf38] sm:$0xff]
                %4915 = vst [vmem:[%s3939 + $0x26d8] sm:$0xff] %v4914
                %v4916 = vld [vmem:[%s3938 + $0xf40] sm:$0xff]
                %4917 = vst [vmem:[%s3939 + $0x26e0] sm:$0xff] %v4916
                %v4918 = vld [vmem:[%s3938 + $0xf48] sm:$0xff]
                %4919 = vst [vmem:[%s3939 + $0x26e8] sm:$0xff] %v4918
                %v4920 = vld [vmem:[%s3938 + $0xf50] sm:$0xff]
                %4921 = vst [vmem:[%s3939 + $0x26f0] sm:$0xff] %v4920
                %v4922 = vld [vmem:[%s3938 + $0xf58] sm:$0xff]
                %4923 = vst [vmem:[%s3939 + $0x26f8] sm:$0xff] %v4922
                %v4924 = vld [vmem:[%s3938 + $0xf60] sm:$0xff]
                %4925 = vst [vmem:[%s3939 + $0x2700] sm:$0xff] %v4924
                %v4926 = vld [vmem:[%s3938 + $0xf68] sm:$0xff]
                %4927 = vst [vmem:[%s3939 + $0x2708] sm:$0xff] %v4926
                %v4928 = vld [vmem:[%s3938 + $0xf70] sm:$0xff]
                %4929 = vst [vmem:[%s3939 + $0x2710] sm:$0xff] %v4928
                %v4930 = vld [vmem:[%s3938 + $0xf78] sm:$0xff]
                %4931 = vst [vmem:[%s3939 + $0x2718] sm:$0xff] %v4930
                %v4932 = vld [vmem:[%s3938 + $0xf80] sm:$0xff]
                %4933 = vst [vmem:[%s3939 + $0x2720] sm:$0xff] %v4932
                %v4934 = vld [vmem:[%s3938 + $0xf88] sm:$0xff]
                %4935 = vst [vmem:[%s3939 + $0x2728] sm:$0xff] %v4934
                %v4936 = vld [vmem:[%s3938 + $0xf90] sm:$0xff]
                %4937 = vst [vmem:[%s3939 + $0x2730] sm:$0xff] %v4936
                %v4938 = vld [vmem:[%s3938 + $0xf98] sm:$0xff]
                %4939 = vst [vmem:[%s3939 + $0x2738] sm:$0xff] %v4938
                %v4940 = vld [vmem:[%s3938 + $0xfa0] sm:$0xff]
                %4941 = vst [vmem:[%s3939 + $0x2740] sm:$0xff] %v4940
                %v4942 = vld [vmem:[%s3938 + $0xfa8] sm:$0xff]
                %4943 = vst [vmem:[%s3939 + $0x2748] sm:$0xff] %v4942
                %v4944 = vld [vmem:[%s3938 + $0xfb0] sm:$0xff]
                %4945 = vst [vmem:[%s3939 + $0x2750] sm:$0xff] %v4944
                %v4946 = vld [vmem:[%s3938 + $0xfb8] sm:$0xff]
                %4947 = vst [vmem:[%s3939 + $0x2758] sm:$0xff] %v4946
              $region65: #{tpu_custom_call.1} parent=59 // loop_footer
                %s3937 = sadd.s32 1, %s3933
              $region66: #{tpu_custom_call.1} parent=59 // loop_footer_branch
                %3932 = sbr.rel target = $region62
              $region67: #{tpu_custom_call.1} parent=59 // loop_exit
                _
            $region60: #{tpu_custom_call.1} parent=55 // pred_fallthru
              _
            // Predicated region
            $region68: #{tpu_custom_call.1} parent=55 // pred_check
              _
            $region69: #{tpu_custom_call.1} parent=55 // pred_check_branch
              %4949 = sbr.rel target = $region71
            $region70: #{tpu_custom_call.1} parent=55 // pred_region
              _
            $region71: #{tpu_custom_call.1} parent=55 // pred_fallthru
              _
          $region56: #{tpu_custom_call.1} parent=51 // pred_fallthru
            _
          %4950 = vnop
        $region52: #{tpu_custom_call.1} parent=35 // pred_fallthru
          _
      $region36: #{tpu_custom_call.1} parent=5 // pred_fallthru
        _
      %p4951 = scmp.le.s32.totalorder 2, %s12
      // Predicated region
      $region72: #{tpu_custom_call.1} parent=5 // pred_check
        %p4952 = pneg %p4951
      $region73: #{tpu_custom_call.1} parent=5 // pred_check_branch
        %4954 = sbr.rel (%p4952) target = $region75
      $region74: #{tpu_custom_call.1} parent=5 // pred_region
        %s4955 = ssub.s32 %s12, 2
        // Predicated region
        $region76: #{tpu_custom_call.1} parent=74 // pred_check
          %p4956 = pneg %p125
        $region77: #{tpu_custom_call.1} parent=74 // pred_check_branch
          %4958 = sbr.rel (%p4956) target = $region79
        $region78: #{tpu_custom_call.1} parent=74 // pred_region
          %s4959 = sand.u32 %s110, 1
          %s4960 = sand.u32 %s110, 1
          %s4961 = smul.addr %s4960, 4032
          %s4962 = scalar_lea.vmem [#allocation7], %s4961
        $region79: #{tpu_custom_call.1} parent=74 // pred_fallthru
          _
      $region75: #{tpu_custom_call.1} parent=5 // pred_fallthru
        _
    $region6: #{tpu_custom_call.1} parent=1 // loop_footer
      %s16 = sadd.s32 1, %s12
    $region7: #{tpu_custom_call.1} parent=1 // loop_footer_branch
      %11 = sbr.rel target = $region3
    $region8: #{tpu_custom_call.1} parent=1 // loop_exit
      _
    %4963 = vsyncpa [#allocation3], 1
    %s4964 = scalar_lea.sflag [#allocation3], 1
    %4965 = vsyncpa %s4964, 1
    %4966 = vsyncpa [#allocation5], 1

</llo_original>
